<compile_context>
chip_gen: v7x
topology: tpu7x:2x2x1
jax: 0.10.0
libtpu: 0.0.40
codegen_flags: <defaults>
</compile_context>

<pallas_src>
import jax
import jax.numpy as jnp
from jax import lax
from jax.experimental import pallas as pl
from jax.experimental.pallas import tpu as pltpu


# ----------------------------- Pallas kernels ------------------------------ #

def _conv_relu_pool_kernel(x_ref, w_ref, b_ref, o_ref):
    """o = max_{q<4} relu(x[q] @ w + b)  — conv matmul with fused bias/ReLU/2x2-pool.

    x_ref: (4, Mt, K) bf16, the 4 pool-phase im2col chunks; w_ref: (K, N) bf16;
    b_ref: (1, N) f32; o_ref: (Mt, N) bf16.
    """
    w = w_ref[...]
    b = b_ref[...]

    def tap(q):
        acc = jnp.dot(x_ref[q], w, preferred_element_type=jnp.float32)
        return jnp.maximum(acc + b, 0.0)

    o_ref[...] = jnp.maximum(jnp.maximum(tap(0), tap(1)),
                             jnp.maximum(tap(2), tap(3))).astype(o_ref.dtype)


def conv_relu_pool(cols, w, b):
    """cols: (4, Mp, K) bf16 (pool-phase major); w: (K, N) bf16; b: (1, N) f32.
    Returns (Mp, N) bf16 = 2x2-maxpool(relu(conv))."""
    _, Mp, K = cols.shape
    N = w.shape[1]
    # Small parallel grid over pooled rows (feeds v7x's 2nd TensorCore);
    # single tile when Mp is too small / not 16-aligned (e.g. conv2, Mp=36).
    n_tiles = 2 if Mp % 16 == 0 else 1
    mt = Mp // n_tiles
    return pl.pallas_call(
        _conv_relu_pool_kernel,
        out_shape=jax.ShapeDtypeStruct((Mp, N), jnp.bfloat16),
        grid=(n_tiles,),
        in_specs=[
            pl.BlockSpec((4, mt, K), lambda i: (0, i, 0)),
            pl.BlockSpec((K, N), lambda i: (0, 0)),
            pl.BlockSpec((1, N), lambda i: (0, 0)),
        ],
        out_specs=pl.BlockSpec((mt, N), lambda i: (i, 0)),
        compiler_params=pltpu.CompilerParams(
            dimension_semantics=("parallel",)),
    )(cols, w, b)


def _conv3_linear_kernel(x_ref, w3_ref, b3_ref, wl_ref, bl_ref, o_ref):
    """Fused tail:  feat_q = relu(x[q] @ w3 + b3)  (q = branch 0/1);
    o = feat_0 @ wl[0] + feat_1 @ wl[1] + bl  (== concat + linear1)."""
    w3 = w3_ref[...]
    b3 = b3_ref[...]
    f0 = jnp.maximum(
        jnp.dot(x_ref[0], w3, preferred_element_type=jnp.float32) + b3, 0.0)
    f1 = jnp.maximum(
        jnp.dot(x_ref[1], w3, preferred_element_type=jnp.float32) + b3, 0.0)
    out = (jnp.dot(f0.astype(jnp.bfloat16), wl_ref[0],
                   preferred_element_type=jnp.float32)
           + jnp.dot(f1.astype(jnp.bfloat16), wl_ref[1],
                     preferred_element_type=jnp.float32)
           + bl_ref[...])
    o_ref[...] = out.astype(o_ref.dtype)


def conv3_linear(cols3, w3, b3, wl, bl):
    """cols3: (2, B, 1728) bf16; w3: (1728, 256) bf16; b3: (1, 256) f32;
    wl: (2, 256, 512) bf16; bl: (1, 512) f32. Returns (B, 512) f32."""
    _, B, K3 = cols3.shape
    N3 = w3.shape[1]
    NL = wl.shape[2]
    return pl.pallas_call(
        _conv3_linear_kernel,
        out_shape=jax.ShapeDtypeStruct((B, NL), jnp.float32),
        grid=(1,),
        in_specs=[
            pl.BlockSpec((2, B, K3), lambda i: (0, 0, 0)),
            pl.BlockSpec((K3, N3), lambda i: (0, 0)),
            pl.BlockSpec((1, N3), lambda i: (0, 0)),
            pl.BlockSpec((2, N3, NL), lambda i: (0, 0, 0)),
            pl.BlockSpec((1, NL), lambda i: (0, 0)),
        ],
        out_specs=pl.BlockSpec((B, NL), lambda i: (0, 0)),
        compiler_params=pltpu.CompilerParams(
            dimension_semantics=("arbitrary",)),
    )(cols3, w3, b3, wl, bl)


# --------------------------- one-time weight pack --------------------------- #

def pack_params(params):
    """Transpose weights to im2col layout, pad conv1 Cout 96->128 (carried into
    conv2 Cin as zero rows), split linear1 into its two 256-row halves, cast
    matmul operands to bf16.  Called once, outside the jitted forward."""
    bf = jnp.bfloat16
    # conv1: (96,1,7,7) -> (7,7,1,96) -> (49,96) -> pad N to 128 lanes
    w1 = jnp.transpose(params["conv1_w"], (2, 3, 1, 0)).reshape(49, 96)
    w1 = jnp.pad(w1, ((0, 0), (0, 32)))
    b1 = jnp.pad(params["conv1_b"], (0, 32)).reshape(1, 128)
    # conv2: (192,96,5,5) -> (5,5,96,192) -> pad Cin to 128 -> (3200,192)
    w2 = jnp.transpose(params["conv2_w"], (2, 3, 1, 0))
    w2 = jnp.pad(w2, ((0, 0), (0, 0), (0, 32), (0, 0))).reshape(25 * 128, 192)
    b2 = params["conv2_b"].reshape(1, 192)
    # conv3: (256,192,3,3) -> (3,3,192,256) -> (1728,256)
    w3 = jnp.transpose(params["conv3_w"], (2, 3, 1, 0)).reshape(9 * 192, 256)
    b3 = params["conv3_b"].reshape(1, 256)
    # linear1:  [f1,f2] @ W.T + b  ==  f1 @ W[:, :256].T + f2 @ W[:, 256:].T + b
    wl = jnp.stack([params["linear1_w"][:, :256].T,
                    params["linear1_w"][:, 256:].T], axis=0)      # (2,256,512)
    bl = params["linear1_b"].reshape(1, 512)
    return {
        "w1": w1.astype(bf), "b1": b1.astype(jnp.float32),
        "w2": w2.astype(bf), "b2": b2.astype(jnp.float32),
        "w3": w3.astype(bf), "b3": b3.astype(jnp.float32),
        "wl": wl.astype(bf), "bl": bl.astype(jnp.float32),
    }


# ------------------------------ model forward ------------------------------ #

def siamese_forward(packed, patch1, patch2):
    """patch1, patch2: NCHW (B, 1, 64, 64), like the PyTorch module."""
    B = patch1.shape[0]
    BB = 2 * B
    # Batch both branches in one pass (weights fetched once, MXU rows doubled).
    x = jnp.concatenate([patch1, patch2], axis=0)[:, 0, :, :]    # (2B, 64, 64)
    x = x.astype(jnp.bfloat16)

    # ---- conv1 (7x7, stride 3) im2col, rows ordered by 2x2-pool phase ----
    cols = [x[:, ki:ki + 58:3, kj:kj + 58:3]
            for ki in range(7) for kj in range(7)]
    p1 = jnp.stack(cols, axis=-1)                                # (2B,20,20,49)
    p1 = (p1.reshape(BB, 10, 2, 10, 2, 49)
            .transpose(2, 4, 0, 1, 3, 5)                         # (di,dj,b,hp,wp,p)
            .reshape(4, BB * 100, 49))
    a1 = conv_relu_pool(p1, packed["w1"], packed["b1"])          # (2B*100, 128)
    a1 = a1.reshape(BB, 10, 10, 128)

    # ---- conv2 (5x5) im2col, pool-phase ordered --------------------------
    cols = [a1[:, ki:ki + 6, kj:kj + 6, :]
            for ki in range(5) for kj in range(5)]
    p2 = jnp.stack(cols, axis=3)                                 # (2B,6,6,25,128)
    p2 = (p2.reshape(BB, 3, 2, 3, 2, 25 * 128)
            .transpose(2, 4, 0, 1, 3, 5)
            .reshape(4, BB * 9, 25 * 128))
    a2 = conv_relu_pool(p2, packed["w2"], packed["b2"])          # (2B*9, 192)

    # ---- conv3 (3x3 over 3x3 input): im2col is just a reshape ------------
    cols3 = a2.reshape(2, B, 9 * 192)                            # (branch, B, 1728)
    return conv3_linear(cols3, packed["w3"], packed["b3"],
                        packed["wl"], packed["bl"])              # (B, 512) f32


# ----------------------------- params / reference -------------------------- #

def init_params(key):
    ks = jax.random.split(key, 8)

    def u(k, shape, fan_in):
        bound = 1.0 / jnp.sqrt(jnp.float32(fan_in))
        return jax.random.uniform(k, shape, jnp.float32, -bound, bound)

    return {
        "conv1_w": u(ks[0], (96, 1, 7, 7), 1 * 7 * 7),
        "conv1_b": u(ks[1], (96,), 1 * 7 * 7),
        "conv2_w": u(ks[2], (192, 96, 5, 5), 96 * 5 * 5),
        "conv2_b": u(ks[3], (192,), 96 * 5 * 5),
        "conv3_w": u(ks[4], (256, 192, 3, 3), 192 * 3 * 3),
        "conv3_b": u(ks[5], (256,), 192 * 3 * 3),
        "linear1_w": u(ks[6], (512, 512), 512),
        "linear1_b": u(ks[7], (512,), 512),
    }


def reference_forward(params, patch1, patch2):
    """Pure-JAX (XLA, f32) reference mirroring the PyTorch semantics in NCHW."""
    def conv(x, w, b, stride):
        y = lax.conv_general_dilated(x, w, (stride, stride), "VALID",
                                     dimension_numbers=("NCHW", "OIHW", "NCHW"))
        return y + b[None, :, None, None]

    def pool(x):
        return lax.reduce_window(x, -jnp.inf, lax.max,
                                 (1, 1, 2, 2), (1, 1, 2, 2), "VALID")

    def branch(x):
        o = conv(x, params["conv1_w"], params["conv1_b"], 3)
        o = pool(jnp.maximum(o, 0.0))
        o = conv(o, params["conv2_w"], params["conv2_b"], 1)
        o = pool(jnp.maximum(o, 0.0))
        o = conv(o, params["conv3_w"], params["conv3_b"], 1)
        o = jnp.maximum(o, 0.0)
        return o.reshape(o.shape[0], -1)

    o = jnp.concatenate([branch(patch1), branch(patch2)], axis=1)
    return o @ params["linear1_w"].T + params["linear1_b"]


# ---------------------------------- main ------------------------------------ #

if __name__ == "__main__":
    key = jax.random.PRNGKey(0)
    pkey, d1, d2 = jax.random.split(key, 3)
    params = init_params(pkey)
    packed = pack_params(params)            # one-time transpose / pad / bf16 cast

    patch1 = jax.random.normal(d1, (2, 1, 64, 64), jnp.float32)
    patch2 = jax.random.normal(d2, (2, 1, 64, 64), jnp.float32)

    fwd = jax.jit(siamese_forward)
    out = jax.block_until_ready(fwd(packed, patch1, patch2))
    assert out.shape == (2, 512), out.shape

    ref = reference_forward(params, patch1, patch2)
    # bf16 matmul operands (f32 accumulation) -> relax tolerance vs f32 reference.
    assert jnp.allclose(out, ref, rtol=2e-2, atol=2e-2), \
        float(jnp.max(jnp.abs(out - ref)))

    print("KERNEL_OK")
</pallas_src>

<mosaic_0001>
module attributes {stable_mosaic.version = 11 : i64} {
  func.func @_conv_relu_pool_kernel(%arg0: i32, %arg1: memref<4x200x49xbf16, #tpu.memory_space<vmem>>, %arg2: memref<49x128xbf16, #tpu.memory_space<vmem>>, %arg3: memref<1x128xf32, #tpu.memory_space<vmem>>, %arg4: memref<200x128xbf16, #tpu.memory_space<vmem>>) attributes {dimension_semantics = [#tpu.dimension_semantics<parallel>], iteration_bounds = array<i64: 2>, scalar_prefetch = 0 : i64, scratch_operands = 0 : i64, tpu.core_type = #tpu.core_type<tc>, window_params = [{transform_indices = @transform_0, window_bounds = array<i64: 4, 200, 49>}, {pipeline_mode = #tpu.pipeline_mode<synchronous>, transform_indices = @transform_1, window_bounds = array<i64: 49, 128>}, {pipeline_mode = #tpu.pipeline_mode<synchronous>, transform_indices = @transform_2, window_bounds = array<i64: 1, 128>}, {transform_indices = @transform_3, window_bounds = array<i64: 200, 128>}]} {
    %c0 = arith.constant 0 : index
    %c0_0 = arith.constant 0 : index
    %0 = vector.load %arg2[%c0, %c0_0] : memref<49x128xbf16, #tpu.memory_space<vmem>>, vector<49x128xbf16>
    %c0_1 = arith.constant 0 : index
    %c0_2 = arith.constant 0 : index
    %1 = vector.load %arg3[%c0_1, %c0_2] : memref<1x128xf32, #tpu.memory_space<vmem>>, vector<1x128xf32>
    %c0_3 = arith.constant 0 : index
    %c0_4 = arith.constant 0 : index
    %c0_5 = arith.constant 0 : index
    %2 = vector.load %arg1[%c0_3, %c0_4, %c0_5] : memref<4x200x49xbf16, #tpu.memory_space<vmem>>, vector<1x200x49xbf16>
    %3 = vector.shape_cast %2 : vector<1x200x49xbf16> to vector<200x49xbf16>
    %cst = arith.constant dense<0.000000e+00> : vector<200x128xf32>
    %4 = tpu.matmul %3, %0, %cst {dimension_numbers = #tpu.dot_dimension_numbers<[1], [0], [0], [1], [0, 0, 1, 1], [], []>} : vector<200x49xbf16>, vector<49x128xbf16>, vector<200x128xf32> -> vector<200x128xf32>
    %5 = vector.broadcast %1 : vector<1x128xf32> to vector<200x128xf32>
    %6 = arith.addf %4, %5 : vector<200x128xf32>
    %cst_6 = arith.constant 0.000000e+00 : f32
    %7 = vector.broadcast %cst_6 : f32 to vector<200x128xf32>
    %8 = arith.maximumf %6, %7 : vector<200x128xf32>
    %c1 = arith.constant 1 : index
    %c0_7 = arith.constant 0 : index
    %c0_8 = arith.constant 0 : index
    %9 = vector.load %arg1[%c1, %c0_7, %c0_8] : memref<4x200x49xbf16, #tpu.memory_space<vmem>>, vector<1x200x49xbf16>
    %10 = vector.shape_cast %9 : vector<1x200x49xbf16> to vector<200x49xbf16>
    %cst_9 = arith.constant dense<0.000000e+00> : vector<200x128xf32>
    %11 = tpu.matmul %10, %0, %cst_9 {dimension_numbers = #tpu.dot_dimension_numbers<[1], [0], [0], [1], [0, 0, 1, 1], [], []>} : vector<200x49xbf16>, vector<49x128xbf16>, vector<200x128xf32> -> vector<200x128xf32>
    %12 = vector.broadcast %1 : vector<1x128xf32> to vector<200x128xf32>
    %13 = arith.addf %11, %12 : vector<200x128xf32>
    %cst_10 = arith.constant 0.000000e+00 : f32
    %14 = vector.broadcast %cst_10 : f32 to vector<200x128xf32>
    %15 = arith.maximumf %13, %14 : vector<200x128xf32>
    %16 = arith.maximumf %8, %15 : vector<200x128xf32>
    %c2 = arith.constant 2 : index
    %c0_11 = arith.constant 0 : index
    %c0_12 = arith.constant 0 : index
    %17 = vector.load %arg1[%c2, %c0_11, %c0_12] : memref<4x200x49xbf16, #tpu.memory_space<vmem>>, vector<1x200x49xbf16>
    %18 = vector.shape_cast %17 : vector<1x200x49xbf16> to vector<200x49xbf16>
    %cst_13 = arith.constant dense<0.000000e+00> : vector<200x128xf32>
    %19 = tpu.matmul %18, %0, %cst_13 {dimension_numbers = #tpu.dot_dimension_numbers<[1], [0], [0], [1], [0, 0, 1, 1], [], []>} : vector<200x49xbf16>, vector<49x128xbf16>, vector<200x128xf32> -> vector<200x128xf32>
    %20 = vector.broadcast %1 : vector<1x128xf32> to vector<200x128xf32>
    %21 = arith.addf %19, %20 : vector<200x128xf32>
    %cst_14 = arith.constant 0.000000e+00 : f32
    %22 = vector.broadcast %cst_14 : f32 to vector<200x128xf32>
    %23 = arith.maximumf %21, %22 : vector<200x128xf32>
    %c3 = arith.constant 3 : index
    %c0_15 = arith.constant 0 : index
    %c0_16 = arith.constant 0 : index
    %24 = vector.load %arg1[%c3, %c0_15, %c0_16] : memref<4x200x49xbf16, #tpu.memory_space<vmem>>, vector<1x200x49xbf16>
    %25 = vector.shape_cast %24 : vector<1x200x49xbf16> to vector<200x49xbf16>
    %cst_17 = arith.constant dense<0.000000e+00> : vector<200x128xf32>
    %26 = tpu.matmul %25, %0, %cst_17 {dimension_numbers = #tpu.dot_dimension_numbers<[1], [0], [0], [1], [0, 0, 1, 1], [], []>} : vector<200x49xbf16>, vector<49x128xbf16>, vector<200x128xf32> -> vector<200x128xf32>
    %27 = vector.broadcast %1 : vector<1x128xf32> to vector<200x128xf32>
    %28 = arith.addf %26, %27 : vector<200x128xf32>
    %cst_18 = arith.constant 0.000000e+00 : f32
    %29 = vector.broadcast %cst_18 : f32 to vector<200x128xf32>
    %30 = arith.maximumf %28, %29 : vector<200x128xf32>
    %31 = arith.maximumf %23, %30 : vector<200x128xf32>
    %32 = arith.maximumf %16, %31 : vector<200x128xf32>
    %33 = arith.truncf %32 : vector<200x128xf32> to vector<200x128xbf16>
    %c0_19 = arith.constant 0 : index
    %c0_20 = arith.constant 0 : index
    %34 = vector.load %arg4[%c0_19, %c0_20] : memref<200x128xbf16, #tpu.memory_space<vmem>>, vector<200x128xbf16>
    tpu.vector_store %arg4[%c0_19, %c0_20], %33 {strides = array<i32>} : memref<200x128xbf16, #tpu.memory_space<vmem>>, vector<200x128xbf16>,
    return
  }
  func.func @transform_0(%arg0: i32) -> (i32, i32, i32) {
    %c0_i32 = arith.constant 0 : i32
    %c0_i32_0 = arith.constant 0 : i32
    %c0_i32_1 = arith.constant 0 : i32
    return %c0_i32, %arg0, %c0_i32_0 : i32, i32, i32
  }
  func.func @transform_1(%arg0: i32) -> (i32, i32) {
    %c0_i32 = arith.constant 0 : i32
    %c0_i32_0 = arith.constant 0 : i32
    %c0_i32_1 = arith.constant 0 : i32
    return %c0_i32, %c0_i32_0 : i32, i32
  }
  func.func @transform_2(%arg0: i32) -> (i32, i32) {
    %c0_i32 = arith.constant 0 : i32
    %c0_i32_0 = arith.constant 0 : i32
    %c0_i32_1 = arith.constant 0 : i32
    return %c0_i32, %c0_i32_0 : i32, i32
  }
  func.func @transform_3(%arg0: i32) -> (i32, i32) {
    %c0_i32 = arith.constant 0 : i32
    %c0_i32_0 = arith.constant 0 : i32
    return %arg0, %c0_i32 : i32, i32
  }
}

module attributes {stable_mosaic.version = 11 : i64} {
  func.func @_conv_relu_pool_kernel(%arg0: i32, %arg1: memref<4x36x3200xbf16, #tpu.memory_space<vmem>>, %arg2: memref<3200x192xbf16, #tpu.memory_space<vmem>>, %arg3: memref<1x192xf32, #tpu.memory_space<vmem>>, %arg4: memref<36x192xbf16, #tpu.memory_space<vmem>>) attributes {dimension_semantics = [#tpu.dimension_semantics<parallel>], iteration_bounds = array<i64: 1>, scalar_prefetch = 0 : i64, scratch_operands = 0 : i64, tpu.core_type = #tpu.core_type<tc>, window_params = [{transform_indices = @transform_0, window_bounds = array<i64: 4, 36, 3200>}, {pipeline_mode = #tpu.pipeline_mode<synchronous>, transform_indices = @transform_1, window_bounds = array<i64: 3200, 192>}, {pipeline_mode = #tpu.pipeline_mode<synchronous>, transform_indices = @transform_2, window_bounds = array<i64: 1, 192>}, {transform_indices = @transform_3, window_bounds = array<i64: 36, 192>}]} {
    %c0 = arith.constant 0 : index
    %c0_0 = arith.constant 0 : index
    %0 = vector.load %arg2[%c0, %c0_0] : memref<3200x192xbf16, #tpu.memory_space<vmem>>, vector<3200x192xbf16>
    %c0_1 = arith.constant 0 : index
    %c0_2 = arith.constant 0 : index
    %1 = vector.load %arg3[%c0_1, %c0_2] : memref<1x192xf32, #tpu.memory_space<vmem>>, vector<1x192xf32>
    %c0_3 = arith.constant 0 : index
    %c0_4 = arith.constant 0 : index
    %c0_5 = arith.constant 0 : index
    %2 = vector.load %arg1[%c0_3, %c0_4, %c0_5] : memref<4x36x3200xbf16, #tpu.memory_space<vmem>>, vector<1x36x3200xbf16>
    %3 = vector.shape_cast %2 : vector<1x36x3200xbf16> to vector<36x3200xbf16>
    %cst = arith.constant dense<0.000000e+00> : vector<36x192xf32>
    %4 = tpu.matmul %3, %0, %cst {dimension_numbers = #tpu.dot_dimension_numbers<[1], [0], [0], [1], [0, 0, 1, 1], [], []>} : vector<36x3200xbf16>, vector<3200x192xbf16>, vector<36x192xf32> -> vector<36x192xf32>
    %5 = vector.broadcast %1 : vector<1x192xf32> to vector<36x192xf32>
    %6 = arith.addf %4, %5 : vector<36x192xf32>
    %cst_6 = arith.constant 0.000000e+00 : f32
    %7 = vector.broadcast %cst_6 : f32 to vector<36x192xf32>
    %8 = arith.maximumf %6, %7 : vector<36x192xf32>
    %c1 = arith.constant 1 : index
    %c0_7 = arith.constant 0 : index
    %c0_8 = arith.constant 0 : index
    %9 = vector.load %arg1[%c1, %c0_7, %c0_8] : memref<4x36x3200xbf16, #tpu.memory_space<vmem>>, vector<1x36x3200xbf16>
    %10 = vector.shape_cast %9 : vector<1x36x3200xbf16> to vector<36x3200xbf16>
    %cst_9 = arith.constant dense<0.000000e+00> : vector<36x192xf32>
    %11 = tpu.matmul %10, %0, %cst_9 {dimension_numbers = #tpu.dot_dimension_numbers<[1], [0], [0], [1], [0, 0, 1, 1], [], []>} : vector<36x3200xbf16>, vector<3200x192xbf16>, vector<36x192xf32> -> vector<36x192xf32>
    %12 = vector.broadcast %1 : vector<1x192xf32> to vector<36x192xf32>
    %13 = arith.addf %11, %12 : vector<36x192xf32>
    %cst_10 = arith.constant 0.000000e+00 : f32
    %14 = vector.broadcast %cst_10 : f32 to vector<36x192xf32>
    %15 = arith.maximumf %13, %14 : vector<36x192xf32>
    %16 = arith.maximumf %8, %15 : vector<36x192xf32>
    %c2 = arith.constant 2 : index
    %c0_11 = arith.constant 0 : index
    %c0_12 = arith.constant 0 : index
    %17 = vector.load %arg1[%c2, %c0_11, %c0_12] : memref<4x36x3200xbf16, #tpu.memory_space<vmem>>, vector<1x36x3200xbf16>
    %18 = vector.shape_cast %17 : vector<1x36x3200xbf16> to vector<36x3200xbf16>
    %cst_13 = arith.constant dense<0.000000e+00> : vector<36x192xf32>
    %19 = tpu.matmul %18, %0, %cst_13 {dimension_numbers = #tpu.dot_dimension_numbers<[1], [0], [0], [1], [0, 0, 1, 1], [], []>} : vector<36x3200xbf16>, vector<3200x192xbf16>, vector<36x192xf32> -> vector<36x192xf32>
    %20 = vector.broadcast %1 : vector<1x192xf32> to vector<36x192xf32>
    %21 = arith.addf %19, %20 : vector<36x192xf32>
    %cst_14 = arith.constant 0.000000e+00 : f32
    %22 = vector.broadcast %cst_14 : f32 to vector<36x192xf32>
    %23 = arith.maximumf %21, %22 : vector<36x192xf32>
    %c3 = arith.constant 3 : index
    %c0_15 = arith.constant 0 : index
    %c0_16 = arith.constant 0 : index
    %24 = vector.load %arg1[%c3, %c0_15, %c0_16] : memref<4x36x3200xbf16, #tpu.memory_space<vmem>>, vector<1x36x3200xbf16>
    %25 = vector.shape_cast %24 : vector<1x36x3200xbf16> to vector<36x3200xbf16>
    %cst_17 = arith.constant dense<0.000000e+00> : vector<36x192xf32>
    %26 = tpu.matmul %25, %0, %cst_17 {dimension_numbers = #tpu.dot_dimension_numbers<[1], [0], [0], [1], [0, 0, 1, 1], [], []>} : vector<36x3200xbf16>, vector<3200x192xbf16>, vector<36x192xf32> -> vector<36x192xf32>
    %27 = vector.broadcast %1 : vector<1x192xf32> to vector<36x192xf32>
    %28 = arith.addf %26, %27 : vector<36x192xf32>
    %cst_18 = arith.constant 0.000000e+00 : f32
    %29 = vector.broadcast %cst_18 : f32 to vector<36x192xf32>
    %30 = arith.maximumf %28, %29 : vector<36x192xf32>
    %31 = arith.maximumf %23, %30 : vector<36x192xf32>
    %32 = arith.maximumf %16, %31 : vector<36x192xf32>
    %33 = arith.truncf %32 : vector<36x192xf32> to vector<36x192xbf16>
    %c0_19 = arith.constant 0 : index
    %c0_20 = arith.constant 0 : index
    %34 = vector.load %arg4[%c0_19, %c0_20] : memref<36x192xbf16, #tpu.memory_space<vmem>>, vector<36x192xbf16>
    tpu.vector_store %arg4[%c0_19, %c0_20], %33 {strides = array<i32>} : memref<36x192xbf16, #tpu.memory_space<vmem>>, vector<36x192xbf16>,
    return
  }
  func.func @transform_0(%arg0: i32) -> (i32, i32, i32) {
    %c0_i32 = arith.constant 0 : i32
    %c0_i32_0 = arith.constant 0 : i32
    %c0_i32_1 = arith.constant 0 : i32
    return %c0_i32, %arg0, %c0_i32_0 : i32, i32, i32
  }
  func.func @transform_1(%arg0: i32) -> (i32, i32) {
    %c0_i32 = arith.constant 0 : i32
    %c0_i32_0 = arith.constant 0 : i32
    %c0_i32_1 = arith.constant 0 : i32
    return %c0_i32, %c0_i32_0 : i32, i32
  }
  func.func @transform_2(%arg0: i32) -> (i32, i32) {
    %c0_i32 = arith.constant 0 : i32
    %c0_i32_0 = arith.constant 0 : i32
    %c0_i32_1 = arith.constant 0 : i32
    return %c0_i32, %c0_i32_0 : i32, i32
  }
  func.func @transform_3(%arg0: i32) -> (i32, i32) {
    %c0_i32 = arith.constant 0 : i32
    %c0_i32_0 = arith.constant 0 : i32
    return %arg0, %c0_i32 : i32, i32
  }
}

module attributes {stable_mosaic.version = 11 : i64} {
  func.func @_conv3_linear_kernel(%arg0: i32, %arg1: memref<2x2x1728xbf16, #tpu.memory_space<vmem>>, %arg2: memref<1728x256xbf16, #tpu.memory_space<vmem>>, %arg3: memref<1x256xf32, #tpu.memory_space<vmem>>, %arg4: memref<2x256x512xbf16, #tpu.memory_space<vmem>>, %arg5: memref<1x512xf32, #tpu.memory_space<vmem>>, %arg6: memref<2x512xf32, #tpu.memory_space<vmem>>) attributes {dimension_semantics = [#tpu.dimension_semantics<arbitrary>], iteration_bounds = array<i64: 1>, scalar_prefetch = 0 : i64, scratch_operands = 0 : i64, tpu.core_type = #tpu.core_type<tc>, window_params = [{pipeline_mode = #tpu.pipeline_mode<synchronous>, transform_indices = @transform_0, window_bounds = array<i64: 2, 2, 1728>}, {pipeline_mode = #tpu.pipeline_mode<synchronous>, transform_indices = @transform_1, window_bounds = array<i64: 1728, 256>}, {pipeline_mode = #tpu.pipeline_mode<synchronous>, transform_indices = @transform_2, window_bounds = array<i64: 1, 256>}, {pipeline_mode = #tpu.pipeline_mode<synchronous>, transform_indices = @transform_3, window_bounds = array<i64: 2, 256, 512>}, {pipeline_mode = #tpu.pipeline_mode<synchronous>, transform_indices = @transform_4, window_bounds = array<i64: 1, 512>}, {pipeline_mode = #tpu.pipeline_mode<synchronous>, transform_indices = @transform_5, window_bounds = array<i64: 2, 512>}]} {
    %c0 = arith.constant 0 : index
    %c0_0 = arith.constant 0 : index
    %0 = vector.load %arg2[%c0, %c0_0] : memref<1728x256xbf16, #tpu.memory_space<vmem>>, vector<1728x256xbf16>
    %c0_1 = arith.constant 0 : index
    %c0_2 = arith.constant 0 : index
    %1 = vector.load %arg3[%c0_1, %c0_2] : memref<1x256xf32, #tpu.memory_space<vmem>>, vector<1x256xf32>
    %c0_3 = arith.constant 0 : index
    %c0_4 = arith.constant 0 : index
    %c0_5 = arith.constant 0 : index
    %2 = vector.load %arg1[%c0_3, %c0_4, %c0_5] : memref<2x2x1728xbf16, #tpu.memory_space<vmem>>, vector<1x2x1728xbf16>
    %3 = vector.shape_cast %2 : vector<1x2x1728xbf16> to vector<2x1728xbf16>
    %cst = arith.constant dense<0.000000e+00> : vector<2x256xf32>
    %4 = tpu.matmul %3, %0, %cst {dimension_numbers = #tpu.dot_dimension_numbers<[1], [0], [0], [1], [0, 0, 1, 1], [], []>} : vector<2x1728xbf16>, vector<1728x256xbf16>, vector<2x256xf32> -> vector<2x256xf32>
    %5 = vector.broadcast %1 : vector<1x256xf32> to vector<2x256xf32>
    %6 = arith.addf %4, %5 : vector<2x256xf32>
    %cst_6 = arith.constant 0.000000e+00 : f32
    %7 = vector.broadcast %cst_6 : f32 to vector<2x256xf32>
    %8 = arith.maximumf %6, %7 : vector<2x256xf32>
    %c1 = arith.constant 1 : index
    %c0_7 = arith.constant 0 : index
    %c0_8 = arith.constant 0 : index
    %9 = vector.load %arg1[%c1, %c0_7, %c0_8] : memref<2x2x1728xbf16, #tpu.memory_space<vmem>>, vector<1x2x1728xbf16>
    %10 = vector.shape_cast %9 : vector<1x2x1728xbf16> to vector<2x1728xbf16>
    %cst_9 = arith.constant dense<0.000000e+00> : vector<2x256xf32>
    %11 = tpu.matmul %10, %0, %cst_9 {dimension_numbers = #tpu.dot_dimension_numbers<[1], [0], [0], [1], [0, 0, 1, 1], [], []>} : vector<2x1728xbf16>, vector<1728x256xbf16>, vector<2x256xf32> -> vector<2x256xf32>
    %12 = vector.broadcast %1 : vector<1x256xf32> to vector<2x256xf32>
    %13 = arith.addf %11, %12 : vector<2x256xf32>
    %cst_10 = arith.constant 0.000000e+00 : f32
    %14 = vector.broadcast %cst_10 : f32 to vector<2x256xf32>
    %15 = arith.maximumf %13, %14 : vector<2x256xf32>
    %16 = arith.truncf %8 : vector<2x256xf32> to vector<2x256xbf16>
    %c0_11 = arith.constant 0 : index
    %c0_12 = arith.constant 0 : index
    %c0_13 = arith.constant 0 : index
    %17 = vector.load %arg4[%c0_11, %c0_12, %c0_13] : memref<2x256x512xbf16, #tpu.memory_space<vmem>>, vector<1x256x512xbf16>
    %18 = vector.shape_cast %17 : vector<1x256x512xbf16> to vector<256x512xbf16>
    %cst_14 = arith.constant dense<0.000000e+00> : vector<2x512xf32>
    %19 = tpu.matmul %16, %18, %cst_14 {dimension_numbers = #tpu.dot_dimension_numbers<[1], [0], [0], [1], [0, 0, 1, 1], [], []>} : vector<2x256xbf16>, vector<256x512xbf16>, vector<2x512xf32> -> vector<2x512xf32>
    %20 = arith.truncf %15 : vector<2x256xf32> to vector<2x256xbf16>
    %c1_15 = arith.constant 1 : index
    %c0_16 = arith.constant 0 : index
    %c0_17 = arith.constant 0 : index
    %21 = vector.load %arg4[%c1_15, %c0_16, %c0_17] : memref<2x256x512xbf16, #tpu.memory_space<vmem>>, vector<1x256x512xbf16>
    %22 = vector.shape_cast %21 : vector<1x256x512xbf16> to vector<256x512xbf16>
    %cst_18 = arith.constant dense<0.000000e+00> : vector<2x512xf32>
    %23 = tpu.matmul %20, %22, %cst_18 {dimension_numbers = #tpu.dot_dimension_numbers<[1], [0], [0], [1], [0, 0, 1, 1], [], []>} : vector<2x256xbf16>, vector<256x512xbf16>, vector<2x512xf32> -> vector<2x512xf32>
    %24 = arith.addf %19, %23 : vector<2x512xf32>
    %c0_19 = arith.constant 0 : index
    %c0_20 = arith.constant 0 : index
    %25 = vector.load %arg5[%c0_19, %c0_20] : memref<1x512xf32, #tpu.memory_space<vmem>>, vector<1x512xf32>
    %26 = vector.broadcast %25 : vector<1x512xf32> to vector<2x512xf32>
    %27 = arith.addf %24, %26 : vector<2x512xf32>
    %c0_21 = arith.constant 0 : index
    %c0_22 = arith.constant 0 : index
    %28 = vector.load %arg6[%c0_21, %c0_22] : memref<2x512xf32, #tpu.memory_space<vmem>>, vector<2x512xf32>
    tpu.vector_store %arg6[%c0_21, %c0_22], %27 {strides = array<i32>} : memref<2x512xf32, #tpu.memory_space<vmem>>, vector<2x512xf32>,
    return
  }
  func.func @transform_0(%arg0: i32) -> (i32, i32, i32) {
    %c0_i32 = arith.constant 0 : i32
    %c0_i32_0 = arith.constant 0 : i32
    %c0_i32_1 = arith.constant 0 : i32
    %c0_i32_2 = arith.constant 0 : i32
    return %c0_i32, %c0_i32_0, %c0_i32_1 : i32, i32, i32
  }
  func.func @transform_1(%arg0: i32) -> (i32, i32) {
    %c0_i32 = arith.constant 0 : i32
    %c0_i32_0 = arith.constant 0 : i32
    %c0_i32_1 = arith.constant 0 : i32
    return %c0_i32, %c0_i32_0 : i32, i32
  }
  func.func @transform_2(%arg0: i32) -> (i32, i32) {
    %c0_i32 = arith.constant 0 : i32
    %c0_i32_0 = arith.constant 0 : i32
    %c0_i32_1 = arith.constant 0 : i32
    return %c0_i32, %c0_i32_0 : i32, i32
  }
  func.func @transform_3(%arg0: i32) -> (i32, i32, i32) {
    %c0_i32 = arith.constant 0 : i32
    %c0_i32_0 = arith.constant 0 : i32
    %c0_i32_1 = arith.constant 0 : i32
    %c0_i32_2 = arith.constant 0 : i32
    return %c0_i32, %c0_i32_0, %c0_i32_1 : i32, i32, i32
  }
  func.func @transform_4(%arg0: i32) -> (i32, i32) {
    %c0_i32 = arith.constant 0 : i32
    %c0_i32_0 = arith.constant 0 : i32
    %c0_i32_1 = arith.constant 0 : i32
    return %c0_i32, %c0_i32_0 : i32, i32
  }
  func.func @transform_5(%arg0: i32) -> (i32, i32) {
    %c0_i32 = arith.constant 0 : i32
    %c0_i32_0 = arith.constant 0 : i32
    %c0_i32_1 = arith.constant 0 : i32
    return %c0_i32, %c0_i32_0 : i32, i32
  }
}

</mosaic_0001>

<llo_original>
// kernel: siamese_forward.3
$region0: #{siamese_forward.3}
  #allocation0 [shape = 'u32[]', space=smem, size = 0x4, offset = 0x4, fixed_abs, tag = 'smem constant byte address 0x4 - core index']
  #allocation1 [shape = 'u32[144,128]{1,0:T(1,128)}', space=vmem, size = 0x12000, scoped, tag = 'internal scratch']
  %s0 = inlined_call_operand.vmem [shape: bf16[4,400,49], index: 0, kind: input, shape index: {}]
  %s1 = inlined_call_operand.vmem [shape: bf16[49,128], index: 1, kind: input, shape index: {}]
  %s2 = inlined_call_operand.vmem [shape: f32[1,128], index: 2, kind: input, shape index: {}]
  %s3 = inlined_call_operand.vmem [shape: bf16[400,128], index: 3, kind: output, shape index: {}]
  %s4 = sld [smem:[#allocation0]]
  $region86: #{siamese_forward.3} parent=0
    _
  %s6 = ssub.s32 1, %s4
  %s7 = scalar_select 0, %s6, %s4
  $region1: #{siamese_forward.3} parent=0
    #allocation2 [shape = 'u8[409600]{0}', space=vmem, size = 0x64000, scoped, tag = 'input window, operand 0']
    loop: start=0, step=1, limit=4
    $region2: #{siamese_forward.3} parent=1 // loop_pre_header
      _
    $region3: #{siamese_forward.3} parent=1 // loop_header
      %s9 = sphi 0, %s13
      %p10 = scmp.ge.s32.totalorder %s9, 4
      %s19 = sphi 0, %s21
      %s22 = sphi 0, %s19
      %s23 = sphi 0, %s22
      %s39 = sphi 0, %s23
      %s43 = sphi 0, %s43
      %s45 = sphi 0, %s43
      %s46 = sphi 0, %s45
      %s60 = sphi 0, %s46
      %s64 = sphi 0, %s64
      %s66 = sphi 0, %s64
      %s67 = sphi 0, %s66
      %s81 = sphi 0, %s67
      %s87 = sphi 0, %s89
      %s90 = sphi 0, %s87
      %s91 = sphi 0, %s90
      %s107 = sphi 0, %s91
    $region4: #{siamese_forward.3} parent=1 // loop_header_branch
      %12 = sbr.rel (%p10) target = $region8
    $region5: #{siamese_forward.3} parent=1 // loop_body
      %s14 = ssub.s32 %s9, 1
      %s15 = ssub.s32 %s9, 2
      %s16 = sadd.s32 %s9, 1
      %s17 = ssub.s32 %s9, %s16
      %p18 = scmp.eq.s32.totalorder %s17, 0
      %s20 = sadd.s32 %s19, 1
      %s21 = scalar_select %p18, %s19, %s20
      %p24 = pneg %p18
      %p25 = scmp.eq.s32.totalorder %s9, 1
      %p26 = por %p24, %p25
      %p27 = scmp.ne.s32.totalorder %s19, %s22
      %p28 = scmp.eq.s32.totalorder %s9, 0
      %p29 = por %p27, %p28
      %p30 = scmp.ne.s32.totalorder %s19, %s22
      %p31 = scmp.eq.s32.totalorder %s14, 1
      %p32 = por %p30, %p31
      %p33 = scmp.ne.s32.totalorder %s22, %s23
      %p34 = scmp.eq.s32.totalorder %s14, 0
      %p35 = por %p33, %p34
      %p36 = scmp.ne.s32.totalorder %s22, %s23
      %p37 = scmp.eq.s32.totalorder %s15, 1
      %p38 = por %p36, %p37
      %p40 = scmp.ne.s32.totalorder %s23, %s39
      %p41 = scmp.eq.s32.totalorder %s15, 0
      %p42 = por %p40, %p41
      %s44 = sadd.s32 %s43, 1
      %p47 = scmp.eq.s32.totalorder %s9, 1
      %p48 = scmp.ne.s32.totalorder %s43, %s45
      %p49 = scmp.eq.s32.totalorder %s9, 0
      %p50 = por %p48, %p49
      %p51 = scmp.ne.s32.totalorder %s43, %s45
      %p52 = scmp.eq.s32.totalorder %s14, 1
      %p53 = por %p51, %p52
      %p54 = scmp.ne.s32.totalorder %s45, %s46
      %p55 = scmp.eq.s32.totalorder %s14, 0
      %p56 = por %p54, %p55
      %p57 = scmp.ne.s32.totalorder %s45, %s46
      %p58 = scmp.eq.s32.totalorder %s15, 1
      %p59 = por %p57, %p58
      %p61 = scmp.ne.s32.totalorder %s46, %s60
      %p62 = scmp.eq.s32.totalorder %s15, 0
      %p63 = por %p61, %p62
      %s65 = sadd.s32 %s64, 1
      %p68 = scmp.eq.s32.totalorder %s9, 1
      %p69 = scmp.ne.s32.totalorder %s64, %s66
      %p70 = scmp.eq.s32.totalorder %s9, 0
      %p71 = por %p69, %p70
      %p72 = scmp.ne.s32.totalorder %s64, %s66
      %p73 = scmp.eq.s32.totalorder %s14, 1
      %p74 = por %p72, %p73
      %p75 = scmp.ne.s32.totalorder %s66, %s67
      %p76 = scmp.eq.s32.totalorder %s14, 0
      %p77 = por %p75, %p76
      %p78 = scmp.ne.s32.totalorder %s66, %s67
      %p79 = scmp.eq.s32.totalorder %s15, 1
      %p80 = por %p78, %p79
      %p82 = scmp.ne.s32.totalorder %s67, %s81
      %p83 = scmp.eq.s32.totalorder %s15, 0
      %p84 = por %p82, %p83
      %s85 = ssub.s32 %s9, %s16
      %p86 = scmp.eq.s32.totalorder %s85, 0
      %s88 = sadd.s32 %s87, 1
      %s89 = scalar_select %p86, %s87, %s88
      %p92 = pneg %p86
      %p93 = scmp.eq.s32.totalorder %s9, 1
      %p94 = por %p92, %p93
      %p95 = scmp.ne.s32.totalorder %s87, %s90
      %p96 = scmp.eq.s32.totalorder %s9, 0
      %p97 = por %p95, %p96
      %p98 = scmp.ne.s32.totalorder %s87, %s90
      %p99 = scmp.eq.s32.totalorder %s14, 1
      %p100 = por %p98, %p99
      %p101 = scmp.ne.s32.totalorder %s90, %s91
      %p102 = scmp.eq.s32.totalorder %s14, 0
      %p103 = por %p101, %p102
      %p104 = scmp.ne.s32.totalorder %s90, %s91
      %p105 = scmp.eq.s32.totalorder %s15, 1
      %p106 = por %p104, %p105
      %p108 = scmp.ne.s32.totalorder %s91, %s107
      %p109 = scmp.eq.s32.totalorder %s15, 0
      %p110 = por %p108, %p109
      %p111 = scmp.le.s32.totalorder 1, %s9
      %p112 = scmp.lt.s32.totalorder %s9, 3
      %p113 = pnand %p111, %p112
      %p114 = pneg %p113
      // Predicated region
      $region9: #{siamese_forward.3} parent=5 // pred_check
        _
      $region10: #{siamese_forward.3} parent=5 // pred_check_branch
        %116 = sbr.rel (%p113) target = $region12
      $region11: #{siamese_forward.3} parent=5 // pred_region
        %s117 = ssub.s32 %s9, 1
        // Predicated region
        $region13: #{siamese_forward.3} parent=11 // pred_check
          %p118 = pneg %p56
        $region14: #{siamese_forward.3} parent=11 // pred_check_branch
          %120 = sbr.rel (%p118) target = $region16
        $region15: #{siamese_forward.3} parent=11 // pred_region
          _
        $region16: #{siamese_forward.3} parent=11 // pred_fallthru
          _
        // Predicated region
        $region17: #{siamese_forward.3} parent=11 // pred_check
          %p121 = pneg %p77
        $region18: #{siamese_forward.3} parent=11 // pred_check_branch
          %123 = sbr.rel (%p121) target = $region20
        $region19: #{siamese_forward.3} parent=11 // pred_region
          _
        $region20: #{siamese_forward.3} parent=11 // pred_fallthru
          _
      $region12: #{siamese_forward.3} parent=5 // pred_fallthru
        _
      %p124 = scmp.lt.s32.totalorder %s9, 2
      // Predicated region
      $region21: #{siamese_forward.3} parent=5 // pred_check
        %p125 = pneg %p124
      $region22: #{siamese_forward.3} parent=5 // pred_check_branch
        %127 = sbr.rel (%p125) target = $region24
      $region23: #{siamese_forward.3} parent=5 // pred_region
        // Predicated region
        $region25: #{siamese_forward.3} parent=23 // pred_check
          %p128 = pneg %p29
        $region26: #{siamese_forward.3} parent=23 // pred_check_branch
          %130 = sbr.rel (%p128) target = $region28
        $region27: #{siamese_forward.3} parent=23 // pred_region
          %s131 = sand.u32 %s19, 1
          %s132 = sand.u32 %s19, 1
          %s133 = smul.addr %s132, 400
          %s134 = scalar_lea.vmem [#allocation2], %s133
          %s135 = smul.u32 25, %s9
          %s136 = smul.addr %s135, 4
          %s137 = scalar_lea.vmem %s0, %s136
          // Predicated region
          $region29: #{siamese_forward.3} parent=27 // pred_check
            _
          $region30: #{siamese_forward.3} parent=27 // pred_check_branch
            %139 = sbr.rel (0) target = $region32
          $region31: #{siamese_forward.3} parent=27 // pred_region
            // Predicated region
            $region33: #{siamese_forward.3} parent=31 // pred_check
              _
            $region34: #{siamese_forward.3} parent=31 // pred_check_branch
              %141 = sbr.rel target = $region36
            $region35: #{siamese_forward.3} parent=31 // pred_region
              // Predicated region
              $region48: #{siamese_forward.3} parent=35 // pred_check
                _
              $region49: #{siamese_forward.3} parent=35 // pred_check_branch
                %354 = sbr.rel (0) target = $region51
              $region50: #{siamese_forward.3} parent=35 // pred_region
                loop: start=0, step=1, limit=1
                $region52: #{siamese_forward.3} parent=50 // loop_pre_header
                  _
                $region53: #{siamese_forward.3} parent=50 // loop_header
                  %s356 = sphi 0, %s360
                  %p357 = scmp.ge.s32.totalorder %s356, 1
                  %s361 = sphi %s137, %s137
                  %s362 = sphi %s134, %s134
                $region54: #{siamese_forward.3} parent=50 // loop_header_branch
                  %359 = sbr.rel (%p357) target = $region58
                $region55: #{siamese_forward.3} parent=50 // loop_body
                  _
                $region56: #{siamese_forward.3} parent=50 // loop_footer
                  %s360 = sadd.s32 1, %s356
                $region57: #{siamese_forward.3} parent=50 // loop_footer_branch
                  %355 = sbr.rel target = $region53
                $region58: #{siamese_forward.3} parent=50 // loop_exit
                  _
                loop: start=0, step=1, limit=1
                $region59: #{siamese_forward.3} parent=50 // loop_pre_header
                  _
                $region60: #{siamese_forward.3} parent=50 // loop_header
                  %s365 = sphi 0, %s369
                  %p366 = scmp.ge.s32.totalorder %s365, 1
                  %s370 = sphi %s137, %s137
                  %s371 = sphi %s134, %s134
                $region61: #{siamese_forward.3} parent=50 // loop_header_branch
                  %368 = sbr.rel (%p366) target = $region65
                $region62: #{siamese_forward.3} parent=50 // loop_body
                  %v372 = vld [vmem:[%s370] sm:$0xf]
                  %373 = vst [vmem:[%s371] sm:$0xf] %v372
                  %v374 = vld [vmem:[%s370 + $0x4] sm:$0xf]
                  %375 = vst [vmem:[%s371 + $0x4] sm:$0xf] %v374
                  %v376 = vld [vmem:[%s370 + $0x8] sm:$0xf]
                  %377 = vst [vmem:[%s371 + $0x8] sm:$0xf] %v376
                  %v378 = vld [vmem:[%s370 + $0xc] sm:$0xf]
                  %379 = vst [vmem:[%s371 + $0xc] sm:$0xf] %v378
                  %v380 = vld [vmem:[%s370 + $0x10] sm:$0xf]
                  %381 = vst [vmem:[%s371 + $0x10] sm:$0xf] %v380
                  %v382 = vld [vmem:[%s370 + $0x14] sm:$0xf]
                  %383 = vst [vmem:[%s371 + $0x14] sm:$0xf] %v382
                  %v384 = vld [vmem:[%s370 + $0x18] sm:$0xf]
                  %385 = vst [vmem:[%s371 + $0x18] sm:$0xf] %v384
                  %v386 = vld [vmem:[%s370 + $0x1c] sm:$0xf]
                  %387 = vst [vmem:[%s371 + $0x1c] sm:$0xf] %v386
                  %v388 = vld [vmem:[%s370 + $0x20] sm:$0xf]
                  %389 = vst [vmem:[%s371 + $0x20] sm:$0xf] %v388
                  %v390 = vld [vmem:[%s370 + $0x24] sm:$0xf]
                  %391 = vst [vmem:[%s371 + $0x24] sm:$0xf] %v390
                  %v392 = vld [vmem:[%s370 + $0x28] sm:$0xf]
                  %393 = vst [vmem:[%s371 + $0x28] sm:$0xf] %v392
                  %v394 = vld [vmem:[%s370 + $0x2c] sm:$0xf]
                  %395 = vst [vmem:[%s371 + $0x2c] sm:$0xf] %v394
                  %v396 = vld [vmem:[%s370 + $0x30] sm:$0xf]
                  %397 = vst [vmem:[%s371 + $0x30] sm:$0xf] %v396
                  %v398 = vld [vmem:[%s370 + $0x34] sm:$0xf]
                  %399 = vst [vmem:[%s371 + $0x34] sm:$0xf] %v398
                  %v400 = vld [vmem:[%s370 + $0x38] sm:$0xf]
                  %401 = vst [vmem:[%s371 + $0x38] sm:$0xf] %v400
                  %v402 = vld [vmem:[%s370 + $0x3c] sm:$0xf]
                  %403 = vst [vmem:[%s371 + $0x3c] sm:$0xf] %v402
                  %v404 = vld [vmem:[%s370 + $0x40] sm:$0xf]
                  %405 = vst [vmem:[%s371 + $0x40] sm:$0xf] %v404
                  %v406 = vld [vmem:[%s370 + $0x44] sm:$0xf]
                  %407 = vst [vmem:[%s371 + $0x44] sm:$0xf] %v406
                  %v408 = vld [vmem:[%s370 + $0x48] sm:$0xf]
                  %409 = vst [vmem:[%s371 + $0x48] sm:$0xf] %v408
                  %v410 = vld [vmem:[%s370 + $0x4c] sm:$0xf]
                  %411 = vst [vmem:[%s371 + $0x4c] sm:$0xf] %v410
                  %v412 = vld [vmem:[%s370 + $0x50] sm:$0xf]
                  %413 = vst [vmem:[%s371 + $0x50] sm:$0xf] %v412
                  %v414 = vld [vmem:[%s370 + $0x54] sm:$0xf]
                  %415 = vst [vmem:[%s371 + $0x54] sm:$0xf] %v414
                  %v416 = vld [vmem:[%s370 + $0x58] sm:$0xf]
                  %417 = vst [vmem:[%s371 + $0x58] sm:$0xf] %v416
                  %v418 = vld [vmem:[%s370 + $0x5c] sm:$0xf]
                  %419 = vst [vmem:[%s371 + $0x5c] sm:$0xf] %v418
                  %v420 = vld [vmem:[%s370 + $0x60] sm:$0xf]
                  %421 = vst [vmem:[%s371 + $0x60] sm:$0xf] %v420
                  %v422 = vld [vmem:[%s370 + $0xc8] sm:$0xf]
                  %423 = vst [vmem:[%s371 + $0x64] sm:$0xf] %v422
                  %v424 = vld [vmem:[%s370 + $0xcc] sm:$0xf]
                  %425 = vst [vmem:[%s371 + $0x68] sm:$0xf] %v424
                  %v426 = vld [vmem:[%s370 + $0xd0] sm:$0xf]
                  %427 = vst [vmem:[%s371 + $0x6c] sm:$0xf] %v426
                  %v428 = vld [vmem:[%s370 + $0xd4] sm:$0xf]
                  %429 = vst [vmem:[%s371 + $0x70] sm:$0xf] %v428
                  %v430 = vld [vmem:[%s370 + $0xd8] sm:$0xf]
                  %431 = vst [vmem:[%s371 + $0x74] sm:$0xf] %v430
                  %v432 = vld [vmem:[%s370 + $0xdc] sm:$0xf]
                  %433 = vst [vmem:[%s371 + $0x78] sm:$0xf] %v432
                  %v434 = vld [vmem:[%s370 + $0xe0] sm:$0xf]
                  %435 = vst [vmem:[%s371 + $0x7c] sm:$0xf] %v434
                  %v436 = vld [vmem:[%s370 + $0xe4] sm:$0xf]
                  %437 = vst [vmem:[%s371 + $0x80] sm:$0xf] %v436
                  %v438 = vld [vmem:[%s370 + $0xe8] sm:$0xf]
                  %439 = vst [vmem:[%s371 + $0x84] sm:$0xf] %v438
                  %v440 = vld [vmem:[%s370 + $0xec] sm:$0xf]
                  %441 = vst [vmem:[%s371 + $0x88] sm:$0xf] %v440
                  %v442 = vld [vmem:[%s370 + $0xf0] sm:$0xf]
                  %443 = vst [vmem:[%s371 + $0x8c] sm:$0xf] %v442
                  %v444 = vld [vmem:[%s370 + $0xf4] sm:$0xf]
                  %445 = vst [vmem:[%s371 + $0x90] sm:$0xf] %v444
                  %v446 = vld [vmem:[%s370 + $0xf8] sm:$0xf]
                  %447 = vst [vmem:[%s371 + $0x94] sm:$0xf] %v446
                  %v448 = vld [vmem:[%s370 + $0xfc] sm:$0xf]
                  %449 = vst [vmem:[%s371 + $0x98] sm:$0xf] %v448
                  %v450 = vld [vmem:[%s370 + $0x100] sm:$0xf]
                  %451 = vst [vmem:[%s371 + $0x9c] sm:$0xf] %v450
                  %v452 = vld [vmem:[%s370 + $0x104] sm:$0xf]
                  %453 = vst [vmem:[%s371 + $0xa0] sm:$0xf] %v452
                  %v454 = vld [vmem:[%s370 + $0x108] sm:$0xf]
                  %455 = vst [vmem:[%s371 + $0xa4] sm:$0xf] %v454
                  %v456 = vld [vmem:[%s370 + $0x10c] sm:$0xf]
                  %457 = vst [vmem:[%s371 + $0xa8] sm:$0xf] %v456
                  %v458 = vld [vmem:[%s370 + $0x110] sm:$0xf]
                  %459 = vst [vmem:[%s371 + $0xac] sm:$0xf] %v458
                  %v460 = vld [vmem:[%s370 + $0x114] sm:$0xf]
                  %461 = vst [vmem:[%s371 + $0xb0] sm:$0xf] %v460
                  %v462 = vld [vmem:[%s370 + $0x118] sm:$0xf]
                  %463 = vst [vmem:[%s371 + $0xb4] sm:$0xf] %v462
                  %v464 = vld [vmem:[%s370 + $0x11c] sm:$0xf]
                  %465 = vst [vmem:[%s371 + $0xb8] sm:$0xf] %v464
                  %v466 = vld [vmem:[%s370 + $0x120] sm:$0xf]
                  %467 = vst [vmem:[%s371 + $0xbc] sm:$0xf] %v466
                  %v468 = vld [vmem:[%s370 + $0x124] sm:$0xf]
                  %469 = vst [vmem:[%s371 + $0xc0] sm:$0xf] %v468
                  %v470 = vld [vmem:[%s370 + $0x128] sm:$0xf]
                  %471 = vst [vmem:[%s371 + $0xc4] sm:$0xf] %v470
                  %v472 = vld [vmem:[%s370 + $0x190] sm:$0xf]
                  %473 = vst [vmem:[%s371 + $0xc8] sm:$0xf] %v472
                  %v474 = vld [vmem:[%s370 + $0x194] sm:$0xf]
                  %475 = vst [vmem:[%s371 + $0xcc] sm:$0xf] %v474
                  %v476 = vld [vmem:[%s370 + $0x198] sm:$0xf]
                  %477 = vst [vmem:[%s371 + $0xd0] sm:$0xf] %v476
                  %v478 = vld [vmem:[%s370 + $0x19c] sm:$0xf]
                  %479 = vst [vmem:[%s371 + $0xd4] sm:$0xf] %v478
                  %v480 = vld [vmem:[%s370 + $0x1a0] sm:$0xf]
                  %481 = vst [vmem:[%s371 + $0xd8] sm:$0xf] %v480
                  %v482 = vld [vmem:[%s370 + $0x1a4] sm:$0xf]
                  %483 = vst [vmem:[%s371 + $0xdc] sm:$0xf] %v482
                  %v484 = vld [vmem:[%s370 + $0x1a8] sm:$0xf]
                  %485 = vst [vmem:[%s371 + $0xe0] sm:$0xf] %v484
                  %v486 = vld [vmem:[%s370 + $0x1ac] sm:$0xf]
                  %487 = vst [vmem:[%s371 + $0xe4] sm:$0xf] %v486
                  %v488 = vld [vmem:[%s370 + $0x1b0] sm:$0xf]
                  %489 = vst [vmem:[%s371 + $0xe8] sm:$0xf] %v488
                  %v490 = vld [vmem:[%s370 + $0x1b4] sm:$0xf]
                  %491 = vst [vmem:[%s371 + $0xec] sm:$0xf] %v490
                  %v492 = vld [vmem:[%s370 + $0x1b8] sm:$0xf]
                  %493 = vst [vmem:[%s371 + $0xf0] sm:$0xf] %v492
                  %v494 = vld [vmem:[%s370 + $0x1bc] sm:$0xf]
                  %495 = vst [vmem:[%s371 + $0xf4] sm:$0xf] %v494
                  %v496 = vld [vmem:[%s370 + $0x1c0] sm:$0xf]
                  %497 = vst [vmem:[%s371 + $0xf8] sm:$0xf] %v496
                  %v498 = vld [vmem:[%s370 + $0x1c4] sm:$0xf]
                  %499 = vst [vmem:[%s371 + $0xfc] sm:$0xf] %v498
                  %v500 = vld [vmem:[%s370 + $0x1c8] sm:$0xf]
                  %501 = vst [vmem:[%s371 + $0x100] sm:$0xf] %v500
                  %v502 = vld [vmem:[%s370 + $0x1cc] sm:$0xf]
                  %503 = vst [vmem:[%s371 + $0x104] sm:$0xf] %v502
                  %v504 = vld [vmem:[%s370 + $0x1d0] sm:$0xf]
                  %505 = vst [vmem:[%s371 + $0x108] sm:$0xf] %v504
                  %v506 = vld [vmem:[%s370 + $0x1d4] sm:$0xf]
                  %507 = vst [vmem:[%s371 + $0x10c] sm:$0xf] %v506
                  %v508 = vld [vmem:[%s370 + $0x1d8] sm:$0xf]
                  %509 = vst [vmem:[%s371 + $0x110] sm:$0xf] %v508
                  %v510 = vld [vmem:[%s370 + $0x1dc] sm:$0xf]
                  %511 = vst [vmem:[%s371 + $0x114] sm:$0xf] %v510
                  %v512 = vld [vmem:[%s370 + $0x1e0] sm:$0xf]
                  %513 = vst [vmem:[%s371 + $0x118] sm:$0xf] %v512
                  %v514 = vld [vmem:[%s370 + $0x1e4] sm:$0xf]
                  %515 = vst [vmem:[%s371 + $0x11c] sm:$0xf] %v514
                  %v516 = vld [vmem:[%s370 + $0x1e8] sm:$0xf]
                  %517 = vst [vmem:[%s371 + $0x120] sm:$0xf] %v516
                  %v518 = vld [vmem:[%s370 + $0x1ec] sm:$0xf]
                  %519 = vst [vmem:[%s371 + $0x124] sm:$0xf] %v518
                  %v520 = vld [vmem:[%s370 + $0x1f0] sm:$0xf]
                  %521 = vst [vmem:[%s371 + $0x128] sm:$0xf] %v520
                  %v522 = vld [vmem:[%s370 + $0x258] sm:$0xf]
                  %523 = vst [vmem:[%s371 + $0x12c] sm:$0xf] %v522
                  %v524 = vld [vmem:[%s370 + $0x25c] sm:$0xf]
                  %525 = vst [vmem:[%s371 + $0x130] sm:$0xf] %v524
                  %v526 = vld [vmem:[%s370 + $0x260] sm:$0xf]
                  %527 = vst [vmem:[%s371 + $0x134] sm:$0xf] %v526
                  %v528 = vld [vmem:[%s370 + $0x264] sm:$0xf]
                  %529 = vst [vmem:[%s371 + $0x138] sm:$0xf] %v528
                  %v530 = vld [vmem:[%s370 + $0x268] sm:$0xf]
                  %531 = vst [vmem:[%s371 + $0x13c] sm:$0xf] %v530
                  %v532 = vld [vmem:[%s370 + $0x26c] sm:$0xf]
                  %533 = vst [vmem:[%s371 + $0x140] sm:$0xf] %v532
                  %v534 = vld [vmem:[%s370 + $0x270] sm:$0xf]
                  %535 = vst [vmem:[%s371 + $0x144] sm:$0xf] %v534
                  %v536 = vld [vmem:[%s370 + $0x274] sm:$0xf]
                  %537 = vst [vmem:[%s371 + $0x148] sm:$0xf] %v536
                  %v538 = vld [vmem:[%s370 + $0x278] sm:$0xf]
                  %539 = vst [vmem:[%s371 + $0x14c] sm:$0xf] %v538
                  %v540 = vld [vmem:[%s370 + $0x27c] sm:$0xf]
                  %541 = vst [vmem:[%s371 + $0x150] sm:$0xf] %v540
                  %v542 = vld [vmem:[%s370 + $0x280] sm:$0xf]
                  %543 = vst [vmem:[%s371 + $0x154] sm:$0xf] %v542
                  %v544 = vld [vmem:[%s370 + $0x284] sm:$0xf]
                  %545 = vst [vmem:[%s371 + $0x158] sm:$0xf] %v544
                  %v546 = vld [vmem:[%s370 + $0x288] sm:$0xf]
                  %547 = vst [vmem:[%s371 + $0x15c] sm:$0xf] %v546
                  %v548 = vld [vmem:[%s370 + $0x28c] sm:$0xf]
                  %549 = vst [vmem:[%s371 + $0x160] sm:$0xf] %v548
                  %v550 = vld [vmem:[%s370 + $0x290] sm:$0xf]
                  %551 = vst [vmem:[%s371 + $0x164] sm:$0xf] %v550
                  %v552 = vld [vmem:[%s370 + $0x294] sm:$0xf]
                  %553 = vst [vmem:[%s371 + $0x168] sm:$0xf] %v552
                  %v554 = vld [vmem:[%s370 + $0x298] sm:$0xf]
                  %555 = vst [vmem:[%s371 + $0x16c] sm:$0xf] %v554
                  %v556 = vld [vmem:[%s370 + $0x29c] sm:$0xf]
                  %557 = vst [vmem:[%s371 + $0x170] sm:$0xf] %v556
                  %v558 = vld [vmem:[%s370 + $0x2a0] sm:$0xf]
                  %559 = vst [vmem:[%s371 + $0x174] sm:$0xf] %v558
                  %v560 = vld [vmem:[%s370 + $0x2a4] sm:$0xf]
                  %561 = vst [vmem:[%s371 + $0x178] sm:$0xf] %v560
                  %v562 = vld [vmem:[%s370 + $0x2a8] sm:$0xf]
                  %563 = vst [vmem:[%s371 + $0x17c] sm:$0xf] %v562
                  %v564 = vld [vmem:[%s370 + $0x2ac] sm:$0xf]
                  %565 = vst [vmem:[%s371 + $0x180] sm:$0xf] %v564
                  %v566 = vld [vmem:[%s370 + $0x2b0] sm:$0xf]
                  %567 = vst [vmem:[%s371 + $0x184] sm:$0xf] %v566
                  %v568 = vld [vmem:[%s370 + $0x2b4] sm:$0xf]
                  %569 = vst [vmem:[%s371 + $0x188] sm:$0xf] %v568
                  %v570 = vld [vmem:[%s370 + $0x2b8] sm:$0xf]
                  %571 = vst [vmem:[%s371 + $0x18c] sm:$0xf] %v570
                $region63: #{siamese_forward.3} parent=50 // loop_footer
                  %s369 = sadd.s32 1, %s365
                $region64: #{siamese_forward.3} parent=50 // loop_footer_branch
                  %364 = sbr.rel target = $region60
                $region65: #{siamese_forward.3} parent=50 // loop_exit
                  _
              $region51: #{siamese_forward.3} parent=35 // pred_fallthru
                _
            $region36: #{siamese_forward.3} parent=31 // pred_fallthru
              _
            // Predicated region
            $region37: #{siamese_forward.3} parent=31 // pred_check
              _
            $region38: #{siamese_forward.3} parent=31 // pred_check_branch
              %143 = sbr.rel (0) target = $region40
            $region39: #{siamese_forward.3} parent=31 // pred_region
              loop: start=0, step=1, limit=1
              $region41: #{siamese_forward.3} parent=39 // loop_pre_header
                _
              $region42: #{siamese_forward.3} parent=39 // loop_header
                %s146 = sphi 0, %s150
                %p147 = scmp.ge.s32.totalorder %s146, 1
                %s151 = sphi %s137, %s137
                %s152 = sphi %s134, %s134
              $region43: #{siamese_forward.3} parent=39 // loop_header_branch
                %149 = sbr.rel (%p147) target = $region47
              $region44: #{siamese_forward.3} parent=39 // loop_body
                %v153 = vld [vmem:[%s151] sm:$0xf]
                %154 = vst [vmem:[%s152] sm:$0xf] %v153
                %v155 = vld [vmem:[%s151 + $0x4] sm:$0xf]
                %156 = vst [vmem:[%s152 + $0x4] sm:$0xf] %v155
                %v157 = vld [vmem:[%s151 + $0x8] sm:$0xf]
                %158 = vst [vmem:[%s152 + $0x8] sm:$0xf] %v157
                %v159 = vld [vmem:[%s151 + $0xc] sm:$0xf]
                %160 = vst [vmem:[%s152 + $0xc] sm:$0xf] %v159
                %v161 = vld [vmem:[%s151 + $0x10] sm:$0xf]
                %162 = vst [vmem:[%s152 + $0x10] sm:$0xf] %v161
                %v163 = vld [vmem:[%s151 + $0x14] sm:$0xf]
                %164 = vst [vmem:[%s152 + $0x14] sm:$0xf] %v163
                %v165 = vld [vmem:[%s151 + $0x18] sm:$0xf]
                %166 = vst [vmem:[%s152 + $0x18] sm:$0xf] %v165
                %v167 = vld [vmem:[%s151 + $0x1c] sm:$0xf]
                %168 = vst [vmem:[%s152 + $0x1c] sm:$0xf] %v167
                %v169 = vld [vmem:[%s151 + $0x20] sm:$0xf]
                %170 = vst [vmem:[%s152 + $0x20] sm:$0xf] %v169
                %v171 = vld [vmem:[%s151 + $0x24] sm:$0xf]
                %172 = vst [vmem:[%s152 + $0x24] sm:$0xf] %v171
                %v173 = vld [vmem:[%s151 + $0x28] sm:$0xf]
                %174 = vst [vmem:[%s152 + $0x28] sm:$0xf] %v173
                %v175 = vld [vmem:[%s151 + $0x2c] sm:$0xf]
                %176 = vst [vmem:[%s152 + $0x2c] sm:$0xf] %v175
                %v177 = vld [vmem:[%s151 + $0x30] sm:$0xf]
                %178 = vst [vmem:[%s152 + $0x30] sm:$0xf] %v177
                %v179 = vld [vmem:[%s151 + $0x34] sm:$0xf]
                %180 = vst [vmem:[%s152 + $0x34] sm:$0xf] %v179
                %v181 = vld [vmem:[%s151 + $0x38] sm:$0xf]
                %182 = vst [vmem:[%s152 + $0x38] sm:$0xf] %v181
                %v183 = vld [vmem:[%s151 + $0x3c] sm:$0xf]
                %184 = vst [vmem:[%s152 + $0x3c] sm:$0xf] %v183
                %v185 = vld [vmem:[%s151 + $0x40] sm:$0xf]
                %186 = vst [vmem:[%s152 + $0x40] sm:$0xf] %v185
                %v187 = vld [vmem:[%s151 + $0x44] sm:$0xf]
                %188 = vst [vmem:[%s152 + $0x44] sm:$0xf] %v187
                %v189 = vld [vmem:[%s151 + $0x48] sm:$0xf]
                %190 = vst [vmem:[%s152 + $0x48] sm:$0xf] %v189
                %v191 = vld [vmem:[%s151 + $0x4c] sm:$0xf]
                %192 = vst [vmem:[%s152 + $0x4c] sm:$0xf] %v191
                %v193 = vld [vmem:[%s151 + $0x50] sm:$0xf]
                %194 = vst [vmem:[%s152 + $0x50] sm:$0xf] %v193
                %v195 = vld [vmem:[%s151 + $0x54] sm:$0xf]
                %196 = vst [vmem:[%s152 + $0x54] sm:$0xf] %v195
                %v197 = vld [vmem:[%s151 + $0x58] sm:$0xf]
                %198 = vst [vmem:[%s152 + $0x58] sm:$0xf] %v197
                %v199 = vld [vmem:[%s151 + $0x5c] sm:$0xf]
                %200 = vst [vmem:[%s152 + $0x5c] sm:$0xf] %v199
                %v201 = vld [vmem:[%s151 + $0x60] sm:$0xf]
                %202 = vst [vmem:[%s152 + $0x60] sm:$0xf] %v201
                %v203 = vld [vmem:[%s151 + $0xc8] sm:$0xf]
                %204 = vst [vmem:[%s152 + $0x64] sm:$0xf] %v203
                %v205 = vld [vmem:[%s151 + $0xcc] sm:$0xf]
                %206 = vst [vmem:[%s152 + $0x68] sm:$0xf] %v205
                %v207 = vld [vmem:[%s151 + $0xd0] sm:$0xf]
                %208 = vst [vmem:[%s152 + $0x6c] sm:$0xf] %v207
                %v209 = vld [vmem:[%s151 + $0xd4] sm:$0xf]
                %210 = vst [vmem:[%s152 + $0x70] sm:$0xf] %v209
                %v211 = vld [vmem:[%s151 + $0xd8] sm:$0xf]
                %212 = vst [vmem:[%s152 + $0x74] sm:$0xf] %v211
                %v213 = vld [vmem:[%s151 + $0xdc] sm:$0xf]
                %214 = vst [vmem:[%s152 + $0x78] sm:$0xf] %v213
                %v215 = vld [vmem:[%s151 + $0xe0] sm:$0xf]
                %216 = vst [vmem:[%s152 + $0x7c] sm:$0xf] %v215
                %v217 = vld [vmem:[%s151 + $0xe4] sm:$0xf]
                %218 = vst [vmem:[%s152 + $0x80] sm:$0xf] %v217
                %v219 = vld [vmem:[%s151 + $0xe8] sm:$0xf]
                %220 = vst [vmem:[%s152 + $0x84] sm:$0xf] %v219
                %v221 = vld [vmem:[%s151 + $0xec] sm:$0xf]
                %222 = vst [vmem:[%s152 + $0x88] sm:$0xf] %v221
                %v223 = vld [vmem:[%s151 + $0xf0] sm:$0xf]
                %224 = vst [vmem:[%s152 + $0x8c] sm:$0xf] %v223
                %v225 = vld [vmem:[%s151 + $0xf4] sm:$0xf]
                %226 = vst [vmem:[%s152 + $0x90] sm:$0xf] %v225
                %v227 = vld [vmem:[%s151 + $0xf8] sm:$0xf]
                %228 = vst [vmem:[%s152 + $0x94] sm:$0xf] %v227
                %v229 = vld [vmem:[%s151 + $0xfc] sm:$0xf]
                %230 = vst [vmem:[%s152 + $0x98] sm:$0xf] %v229
                %v231 = vld [vmem:[%s151 + $0x100] sm:$0xf]
                %232 = vst [vmem:[%s152 + $0x9c] sm:$0xf] %v231
                %v233 = vld [vmem:[%s151 + $0x104] sm:$0xf]
                %234 = vst [vmem:[%s152 + $0xa0] sm:$0xf] %v233
                %v235 = vld [vmem:[%s151 + $0x108] sm:$0xf]
                %236 = vst [vmem:[%s152 + $0xa4] sm:$0xf] %v235
                %v237 = vld [vmem:[%s151 + $0x10c] sm:$0xf]
                %238 = vst [vmem:[%s152 + $0xa8] sm:$0xf] %v237
                %v239 = vld [vmem:[%s151 + $0x110] sm:$0xf]
                %240 = vst [vmem:[%s152 + $0xac] sm:$0xf] %v239
                %v241 = vld [vmem:[%s151 + $0x114] sm:$0xf]
                %242 = vst [vmem:[%s152 + $0xb0] sm:$0xf] %v241
                %v243 = vld [vmem:[%s151 + $0x118] sm:$0xf]
                %244 = vst [vmem:[%s152 + $0xb4] sm:$0xf] %v243
                %v245 = vld [vmem:[%s151 + $0x11c] sm:$0xf]
                %246 = vst [vmem:[%s152 + $0xb8] sm:$0xf] %v245
                %v247 = vld [vmem:[%s151 + $0x120] sm:$0xf]
                %248 = vst [vmem:[%s152 + $0xbc] sm:$0xf] %v247
                %v249 = vld [vmem:[%s151 + $0x124] sm:$0xf]
                %250 = vst [vmem:[%s152 + $0xc0] sm:$0xf] %v249
                %v251 = vld [vmem:[%s151 + $0x128] sm:$0xf]
                %252 = vst [vmem:[%s152 + $0xc4] sm:$0xf] %v251
                %v253 = vld [vmem:[%s151 + $0x190] sm:$0xf]
                %254 = vst [vmem:[%s152 + $0xc8] sm:$0xf] %v253
                %v255 = vld [vmem:[%s151 + $0x194] sm:$0xf]
                %256 = vst [vmem:[%s152 + $0xcc] sm:$0xf] %v255
                %v257 = vld [vmem:[%s151 + $0x198] sm:$0xf]
                %258 = vst [vmem:[%s152 + $0xd0] sm:$0xf] %v257
                %v259 = vld [vmem:[%s151 + $0x19c] sm:$0xf]
                %260 = vst [vmem:[%s152 + $0xd4] sm:$0xf] %v259
                %v261 = vld [vmem:[%s151 + $0x1a0] sm:$0xf]
                %262 = vst [vmem:[%s152 + $0xd8] sm:$0xf] %v261
                %v263 = vld [vmem:[%s151 + $0x1a4] sm:$0xf]
                %264 = vst [vmem:[%s152 + $0xdc] sm:$0xf] %v263
                %v265 = vld [vmem:[%s151 + $0x1a8] sm:$0xf]
                %266 = vst [vmem:[%s152 + $0xe0] sm:$0xf] %v265
                %v267 = vld [vmem:[%s151 + $0x1ac] sm:$0xf]
                %268 = vst [vmem:[%s152 + $0xe4] sm:$0xf] %v267
                %v269 = vld [vmem:[%s151 + $0x1b0] sm:$0xf]
                %270 = vst [vmem:[%s152 + $0xe8] sm:$0xf] %v269
                %v271 = vld [vmem:[%s151 + $0x1b4] sm:$0xf]
                %272 = vst [vmem:[%s152 + $0xec] sm:$0xf] %v271
                %v273 = vld [vmem:[%s151 + $0x1b8] sm:$0xf]
                %274 = vst [vmem:[%s152 + $0xf0] sm:$0xf] %v273
                %v275 = vld [vmem:[%s151 + $0x1bc] sm:$0xf]
                %276 = vst [vmem:[%s152 + $0xf4] sm:$0xf] %v275
                %v277 = vld [vmem:[%s151 + $0x1c0] sm:$0xf]
                %278 = vst [vmem:[%s152 + $0xf8] sm:$0xf] %v277
                %v279 = vld [vmem:[%s151 + $0x1c4] sm:$0xf]
                %280 = vst [vmem:[%s152 + $0xfc] sm:$0xf] %v279
                %v281 = vld [vmem:[%s151 + $0x1c8] sm:$0xf]
                %282 = vst [vmem:[%s152 + $0x100] sm:$0xf] %v281
                %v283 = vld [vmem:[%s151 + $0x1cc] sm:$0xf]
                %284 = vst [vmem:[%s152 + $0x104] sm:$0xf] %v283
                %v285 = vld [vmem:[%s151 + $0x1d0] sm:$0xf]
                %286 = vst [vmem:[%s152 + $0x108] sm:$0xf] %v285
                %v287 = vld [vmem:[%s151 + $0x1d4] sm:$0xf]
                %288 = vst [vmem:[%s152 + $0x10c] sm:$0xf] %v287
                %v289 = vld [vmem:[%s151 + $0x1d8] sm:$0xf]
                %290 = vst [vmem:[%s152 + $0x110] sm:$0xf] %v289
                %v291 = vld [vmem:[%s151 + $0x1dc] sm:$0xf]
                %292 = vst [vmem:[%s152 + $0x114] sm:$0xf] %v291
                %v293 = vld [vmem:[%s151 + $0x1e0] sm:$0xf]
                %294 = vst [vmem:[%s152 + $0x118] sm:$0xf] %v293
                %v295 = vld [vmem:[%s151 + $0x1e4] sm:$0xf]
                %296 = vst [vmem:[%s152 + $0x11c] sm:$0xf] %v295
                %v297 = vld [vmem:[%s151 + $0x1e8] sm:$0xf]
                %298 = vst [vmem:[%s152 + $0x120] sm:$0xf] %v297
                %v299 = vld [vmem:[%s151 + $0x1ec] sm:$0xf]
                %300 = vst [vmem:[%s152 + $0x124] sm:$0xf] %v299
                %v301 = vld [vmem:[%s151 + $0x1f0] sm:$0xf]
                %302 = vst [vmem:[%s152 + $0x128] sm:$0xf] %v301
                %v303 = vld [vmem:[%s151 + $0x258] sm:$0xf]
                %304 = vst [vmem:[%s152 + $0x12c] sm:$0xf] %v303
                %v305 = vld [vmem:[%s151 + $0x25c] sm:$0xf]
                %306 = vst [vmem:[%s152 + $0x130] sm:$0xf] %v305
                %v307 = vld [vmem:[%s151 + $0x260] sm:$0xf]
                %308 = vst [vmem:[%s152 + $0x134] sm:$0xf] %v307
                %v309 = vld [vmem:[%s151 + $0x264] sm:$0xf]
                %310 = vst [vmem:[%s152 + $0x138] sm:$0xf] %v309
                %v311 = vld [vmem:[%s151 + $0x268] sm:$0xf]
                %312 = vst [vmem:[%s152 + $0x13c] sm:$0xf] %v311
                %v313 = vld [vmem:[%s151 + $0x26c] sm:$0xf]
                %314 = vst [vmem:[%s152 + $0x140] sm:$0xf] %v313
                %v315 = vld [vmem:[%s151 + $0x270] sm:$0xf]
                %316 = vst [vmem:[%s152 + $0x144] sm:$0xf] %v315
                %v317 = vld [vmem:[%s151 + $0x274] sm:$0xf]
                %318 = vst [vmem:[%s152 + $0x148] sm:$0xf] %v317
                %v319 = vld [vmem:[%s151 + $0x278] sm:$0xf]
                %320 = vst [vmem:[%s152 + $0x14c] sm:$0xf] %v319
                %v321 = vld [vmem:[%s151 + $0x27c] sm:$0xf]
                %322 = vst [vmem:[%s152 + $0x150] sm:$0xf] %v321
                %v323 = vld [vmem:[%s151 + $0x280] sm:$0xf]
                %324 = vst [vmem:[%s152 + $0x154] sm:$0xf] %v323
                %v325 = vld [vmem:[%s151 + $0x284] sm:$0xf]
                %326 = vst [vmem:[%s152 + $0x158] sm:$0xf] %v325
                %v327 = vld [vmem:[%s151 + $0x288] sm:$0xf]
                %328 = vst [vmem:[%s152 + $0x15c] sm:$0xf] %v327
                %v329 = vld [vmem:[%s151 + $0x28c] sm:$0xf]
                %330 = vst [vmem:[%s152 + $0x160] sm:$0xf] %v329
                %v331 = vld [vmem:[%s151 + $0x290] sm:$0xf]
                %332 = vst [vmem:[%s152 + $0x164] sm:$0xf] %v331
                %v333 = vld [vmem:[%s151 + $0x294] sm:$0xf]
                %334 = vst [vmem:[%s152 + $0x168] sm:$0xf] %v333
                %v335 = vld [vmem:[%s151 + $0x298] sm:$0xf]
                %336 = vst [vmem:[%s152 + $0x16c] sm:$0xf] %v335
                %v337 = vld [vmem:[%s151 + $0x29c] sm:$0xf]
                %338 = vst [vmem:[%s152 + $0x170] sm:$0xf] %v337
                %v339 = vld [vmem:[%s151 + $0x2a0] sm:$0xf]
                %340 = vst [vmem:[%s152 + $0x174] sm:$0xf] %v339
                %v341 = vld [vmem:[%s151 + $0x2a4] sm:$0xf]
                %342 = vst [vmem:[%s152 + $0x178] sm:$0xf] %v341
                %v343 = vld [vmem:[%s151 + $0x2a8] sm:$0xf]
                %344 = vst [vmem:[%s152 + $0x17c] sm:$0xf] %v343
                %v345 = vld [vmem:[%s151 + $0x2ac] sm:$0xf]
                %346 = vst [vmem:[%s152 + $0x180] sm:$0xf] %v345
                %v347 = vld [vmem:[%s151 + $0x2b0] sm:$0xf]
                %348 = vst [vmem:[%s152 + $0x184] sm:$0xf] %v347
                %v349 = vld [vmem:[%s151 + $0x2b4] sm:$0xf]
                %350 = vst [vmem:[%s152 + $0x188] sm:$0xf] %v349
                %v351 = vld [vmem:[%s151 + $0x2b8] sm:$0xf]
                %352 = vst [vmem:[%s152 + $0x18c] sm:$0xf] %v351
              $region45: #{siamese_forward.3} parent=39 // loop_footer
                %s150 = sadd.s32 1, %s146
              $region46: #{siamese_forward.3} parent=39 // loop_footer_branch
                %145 = sbr.rel target = $region42
              $region47: #{siamese_forward.3} parent=39 // loop_exit
                _
            $region40: #{siamese_forward.3} parent=31 // pred_fallthru
              _
          $region32: #{siamese_forward.3} parent=27 // pred_fallthru
            _
          %572 = vnop
        $region28: #{siamese_forward.3} parent=23 // pred_fallthru
          _
      $region24: #{siamese_forward.3} parent=5 // pred_fallthru
        _
      %p573 = scmp.le.s32.totalorder 1, %s9
      %p574 = scmp.lt.s32.totalorder %s9, 3
      %p575 = pnand %p573, %p574
      %p576 = pneg %p575
      // Predicated region
      $region66: #{siamese_forward.3} parent=5 // pred_check
        _
      $region67: #{siamese_forward.3} parent=5 // pred_check_branch
        %578 = sbr.rel (%p575) target = $region69
      $region68: #{siamese_forward.3} parent=5 // pred_region
        %s579 = ssub.s32 %s9, 1
        %s580 = sand.u32 %s22, 1
        %s581 = sand.u32 %s22, 1
        %s582 = smul.addr %s581, 400
        %s583 = scalar_lea.vmem [#allocation2], %s582
        // Predicated region
        $region70: #{siamese_forward.3} parent=68 // pred_check
          %p584 = pneg %p35
        $region71: #{siamese_forward.3} parent=68 // pred_check_branch
          %586 = sbr.rel (%p584) target = $region73
        $region72: #{siamese_forward.3} parent=68 // pred_region
          _
        $region73: #{siamese_forward.3} parent=68 // pred_fallthru
          _
        %s587 = sand.u32 %s22, 1
        %s588 = sand.u32 %s22, 1
        %s589 = smul.addr %s588, 400
        %s590 = scalar_lea.vmem [#allocation2], %s589
        %p591 = pneg %p35
        %p592 = pneg %p32
        %p593 = pneg %p56
        %p594 = pneg %p53
        %p595 = pneg %p77
        %p596 = pneg %p74
        %p597 = pneg %p103
        %p598 = pneg %p100
        %s599 = smul.u32 25, %s14
        %p600 = scmp.lt.s32.totalorder %s599, 49
        %s601 = scalar_select %p600, %s599, 49
        %s602 = smul.addr %s601, 4
        %s603 = scalar_lea.vmem %s3, %s602
        %s604 = smul.u32 25, %s14
        %s605 = smul.u32 25, %s14
        %p606 = scmp.lt.s32.totalorder %s605, 49
        %s607 = scalar_select %p606, %s605, 49
        %s608 = smul.addr %s607, 4
        %s609 = scalar_lea.vmem %s3, %s608
        %s610 = smul.u32 25, %s14
        %v612 = vld [vmem:[%s1] sm:$0xf]
        %v613 = vld [vmem:[%s1 + $0x4] sm:$0xf]
        %v614 = vld [vmem:[%s1 + $0x8] sm:$0xf]
        %v615 = vld [vmem:[%s1 + $0xc] sm:$0xf]
        %v616 = vld [vmem:[%s1 + $0x10] sm:$0xf]
        %v617 = vld [vmem:[%s1 + $0x14] sm:$0xf]
        %v618 = vld [vmem:[%s1 + $0x18] sm:$0x1]
        %v619 = vld [vmem:[%s2] sm:$0x1]
        %v620 = vld [vmem:[%s583] sm:$0xf]
        %v621 = vld [vmem:[%s583 + $0x4] sm:$0xf]
        %v622 = vld [vmem:[%s583 + $0x8] sm:$0xf]
        %v623 = vld [vmem:[%s583 + $0xc] sm:$0xf]
        %v624 = vld [vmem:[%s583 + $0x10] sm:$0xf]
        %v625 = vld [vmem:[%s583 + $0x14] sm:$0xf]
        %v626 = vld [vmem:[%s583 + $0x18] sm:$0xf]
        %v627 = vld [vmem:[%s583 + $0x1c] sm:$0xf]
        %v628 = vld [vmem:[%s583 + $0x20] sm:$0xf]
        %v629 = vld [vmem:[%s583 + $0x24] sm:$0xf]
        %v630 = vld [vmem:[%s583 + $0x28] sm:$0xf]
        %v631 = vld [vmem:[%s583 + $0x2c] sm:$0xf]
        %v632 = vld [vmem:[%s583 + $0x30] sm:$0xf]
        %v633 = vld [vmem:[%s583 + $0x34] sm:$0xf]
        %v634 = vld [vmem:[%s583 + $0x38] sm:$0xf]
        %v635 = vld [vmem:[%s583 + $0x3c] sm:$0xf]
        %v636 = vld [vmem:[%s583 + $0x40] sm:$0xf]
        %v637 = vld [vmem:[%s583 + $0x44] sm:$0xf]
        %v638 = vld [vmem:[%s583 + $0x48] sm:$0xf]
        %v639 = vld [vmem:[%s583 + $0x4c] sm:$0xf]
        %v640 = vld [vmem:[%s583 + $0x50] sm:$0xf]
        %v641 = vld [vmem:[%s583 + $0x54] sm:$0xf]
        %v642 = vld [vmem:[%s583 + $0x58] sm:$0xf]
        %v643 = vld [vmem:[%s583 + $0x5c] sm:$0xf]
        %v644 = vld [vmem:[%s583 + $0x60] sm:$0xf]
        %v646 = vlaneseq
        %v647 = vshrl.u32 %v646, 7
        %v648 = vsub.s32 0, %v647
        %v649 = vrot.slane %v619, %v648
        %v676 = vunpack.c.l.b16 %v620
        %v677 = vunpack.c.l.b16 %v621
        %v678 = vunpack.c.l.b16 %v622
        %v679 = vunpack.c.l.b16 %v623
        %v680 = vunpack.c.l.b16 %v624
        %v681 = vunpack.c.l.b16 %v625
        %v682 = vunpack.c.l.b16 %v626
        %v683 = vunpack.c.l.b16 %v627
        %v684 = vunpack.c.l.b16 %v628
        %v685 = vunpack.c.l.b16 %v629
        %v686 = vunpack.c.l.b16 %v630
        %v687 = vunpack.c.l.b16 %v631
        %v688 = vunpack.c.l.b16 %v632
        %v689 = vunpack.c.l.b16 %v633
        %v690 = vunpack.c.l.b16 %v634
        %v691 = vunpack.c.l.b16 %v635
        %v692 = vunpack.c.l.b16 %v636
        %v693 = vunpack.c.l.b16 %v637
        %v694 = vunpack.c.l.b16 %v638
        %v695 = vunpack.c.l.b16 %v639
        %v696 = vunpack.c.l.b16 %v640
        %v697 = vunpack.c.l.b16 %v641
        %v698 = vunpack.c.l.b16 %v642
        %v699 = vunpack.c.l.b16 %v643
        %v700 = vunpack.c.l.b16 %v644
        %v701 = vpack.c.b16 %v677, %v676
        %v702 = vpack.c.b16 %v679, %v678
        %v703 = vpack.c.b16 %v681, %v680
        %v704 = vpack.c.b16 %v683, %v682
        %v705 = vpack.c.b16 %v685, %v684
        %v706 = vpack.c.b16 %v687, %v686
        %v707 = vpack.c.b16 %v689, %v688
        %v708 = vpack.c.b16 %v691, %v690
        %v709 = vpack.c.b16 %v693, %v692
        %v710 = vpack.c.b16 %v695, %v694
        %v711 = vpack.c.b16 %v697, %v696
        %v712 = vpack.c.b16 %v699, %v698
        %v713 = vpack.c.b16 %v700, %v700
        %v721 = vunpack.c.l.b16 %v612
        %v722 = vunpack.c.l.b16 %v613
        %v723 = vunpack.c.l.b16 %v614
        %v724 = vunpack.c.l.b16 %v615
        %v725 = vunpack.c.l.b16 %v616
        %v726 = vunpack.c.l.b16 %v617
        %v727 = vunpack.c.l.b16 %v618
        %v728 = vpack.c.b16 %v722, %v721
        %v729 = vpack.c.b16 %v724, %v723
        %v730 = vpack.c.b16 %v726, %v725
        %v731 = vpack.c.b16 %v727, %v727
        %vm735 = vcmask 400384
        %v737 = vsel %vm735, %v701, 0
        %v740 = vsel %vm735, %v702, 0
        %v743 = vsel %vm735, %v703, 0
        %v746 = vsel %vm735, %v704, 0
        %v749 = vsel %vm735, %v705, 0
        %v752 = vsel %vm735, %v706, 0
        %v755 = vsel %vm735, %v707, 0
        %v758 = vsel %vm735, %v708, 0
        %v761 = vsel %vm735, %v709, 0
        %v764 = vsel %vm735, %v710, 0
        %v767 = vsel %vm735, %v711, 0
        %v770 = vsel %vm735, %v712, 0
        %v773 = vsel %vm735, %v713, 0
        %vm775 = vcmask 1040384
        %v776 = vsel 0, 4294967295, 65535
        %v777 = vsel %vm775, %v776, 0
        %v779 = vand.u32 %v731, %v777
        %781 = vmatprep.subr.bf16.mxu0 0
        %782 = vmatpush1.bf16.msra.mxu0 %v728
        %783 = vmatprep.subr.bf16.mxu0 0
        %784 = vmatpush1.bf16.msra.mxu0 %v729
        %785 = vmatprep.subr.bf16.mxu0 0
        %786 = vmatpush1.bf16.msra.mxu0 %v730
        %787 = vmatprep.subr.bf16.mxu0 0
        %788 = vmatpush1.bf16.msra.mxu0 %v779
        %789 = vmatprep.subr.bf16.mxu0 0
        %790 = vmatpush1.bf16.msra.mxu0 0
        %791 = vmatprep.subr.bf16.mxu0 0
        %792 = vmatpush1.bf16.msra.mxu0 0
        %793 = vmatprep.subr.bf16.mxu0 0
        %794 = vmatpush1.bf16.msra.mxu0 0
        %795 = vmatprep.subr.bf16.mxu0 0
        %796 = vmatpush1.bf16.msra.mxu0 0
        %797 = vmatprep.subr.bf16.mxu0 0
        %798 = vmatpush1.bf16.msra.mxu0 0
        %799 = vmatprep.subr.bf16.mxu0 0
        %800 = vmatpush1.bf16.msra.mxu0 0
        %801 = vmatprep.subr.bf16.mxu0 0
        %802 = vmatpush1.bf16.msra.mxu0 0
        %803 = vmatprep.subr.bf16.mxu0 0
        %804 = vmatpush1.bf16.msra.mxu0 0
        %805 = vmatprep.subr.bf16.mxu0 0
        %806 = vmatpush1.bf16.msra.mxu0 0
        %807 = vmatprep.subr.bf16.mxu0 0
        %808 = vmatpush1.bf16.msra.mxu0 0
        %809 = vmatprep.subr.bf16.mxu0 0
        %810 = vmatpush1.bf16.msra.mxu0 0
        %811 = vmatprep.subr.bf16.mxu0 0
        %812 = vmatpush1.bf16.msra.mxu0 0
        %813 = vmatprep.mubr.bf16.mxu0 0
        %814 = vmatmul.mubr.bf16.gmra.mrb[0].mxu0 %v737
        %v815 = vpop.f32.mrb[0].mxu0
        %v816 = vadd.f32 %v649, %v815
        %v817 = vpop.f32.mrb[0].mxu0
        %v818 = vpop.f32.mrb[0].mxu0
        %v819 = vadd.f32 %v649, %v818
        %v820 = vpop.f32.mrb[0].mxu0
        %821 = vmatprep.mubr.bf16.mxu0 0
        %822 = vmatmul.mubr.bf16.gmra.mrb[0].mxu0 %v740
        %v823 = vpop.f32.mrb[0].mxu0
        %v824 = vadd.f32 %v649, %v823
        %v825 = vpop.f32.mrb[0].mxu0
        %v826 = vpop.f32.mrb[0].mxu0
        %v827 = vadd.f32 %v649, %v826
        %v828 = vpop.f32.mrb[0].mxu0
        %829 = vmatprep.mubr.bf16.mxu0 0
        %830 = vmatmul.mubr.bf16.gmra.mrb[0].mxu0 %v743
        %v831 = vpop.f32.mrb[0].mxu0
        %v832 = vadd.f32 %v649, %v831
        %v833 = vpop.f32.mrb[0].mxu0
        %v834 = vpop.f32.mrb[0].mxu0
        %v835 = vadd.f32 %v649, %v834
        %v836 = vpop.f32.mrb[0].mxu0
        %837 = vmatprep.mubr.bf16.mxu0 0
        %838 = vmatmul.mubr.bf16.gmra.mrb[0].mxu0 %v746
        %v839 = vpop.f32.mrb[0].mxu0
        %v840 = vadd.f32 %v649, %v839
        %v841 = vpop.f32.mrb[0].mxu0
        %v842 = vpop.f32.mrb[0].mxu0
        %v843 = vadd.f32 %v649, %v842
        %v844 = vpop.f32.mrb[0].mxu0
        %845 = vmatprep.mubr.bf16.mxu0 0
        %846 = vmatmul.mubr.bf16.gmra.mrb[0].mxu0 %v749
        %v847 = vpop.f32.mrb[0].mxu0
        %v848 = vadd.f32 %v649, %v847
        %v849 = vpop.f32.mrb[0].mxu0
        %v850 = vpop.f32.mrb[0].mxu0
        %v851 = vadd.f32 %v649, %v850
        %v852 = vpop.f32.mrb[0].mxu0
        %853 = vmatprep.mubr.bf16.mxu0 0
        %854 = vmatmul.mubr.bf16.gmra.mrb[0].mxu0 %v752
        %v855 = vpop.f32.mrb[0].mxu0
        %v856 = vadd.f32 %v649, %v855
        %v857 = vpop.f32.mrb[0].mxu0
        %v858 = vpop.f32.mrb[0].mxu0
        %v859 = vadd.f32 %v649, %v858
        %v860 = vpop.f32.mrb[0].mxu0
        %861 = vmatprep.mubr.bf16.mxu0 0
        %862 = vmatmul.mubr.bf16.gmra.mrb[0].mxu0 %v755
        %v863 = vpop.f32.mrb[0].mxu0
        %v864 = vadd.f32 %v649, %v863
        %v865 = vpop.f32.mrb[0].mxu0
        %v866 = vpop.f32.mrb[0].mxu0
        %v867 = vadd.f32 %v649, %v866
        %v868 = vpop.f32.mrb[0].mxu0
        %869 = vmatprep.mubr.bf16.mxu0 0
        %870 = vmatmul.mubr.bf16.gmra.mrb[0].mxu0 %v758
        %v871 = vpop.f32.mrb[0].mxu0
        %v872 = vadd.f32 %v649, %v871
        %v873 = vpop.f32.mrb[0].mxu0
        %v874 = vpop.f32.mrb[0].mxu0
        %v875 = vadd.f32 %v649, %v874
        %v876 = vpop.f32.mrb[0].mxu0
        %877 = vmatprep.mubr.bf16.mxu0 0
        %878 = vmatmul.mubr.bf16.gmra.mrb[0].mxu0 %v761
        %v879 = vpop.f32.mrb[0].mxu0
        %v880 = vadd.f32 %v649, %v879
        %v881 = vpop.f32.mrb[0].mxu0
        %v882 = vpop.f32.mrb[0].mxu0
        %v883 = vadd.f32 %v649, %v882
        %v884 = vpop.f32.mrb[0].mxu0
        %885 = vmatprep.mubr.bf16.mxu0 0
        %886 = vmatmul.mubr.bf16.gmra.mrb[0].mxu0 %v764
        %v887 = vpop.f32.mrb[0].mxu0
        %v888 = vadd.f32 %v649, %v887
        %v889 = vpop.f32.mrb[0].mxu0
        %v890 = vpop.f32.mrb[0].mxu0
        %v891 = vadd.f32 %v649, %v890
        %v892 = vpop.f32.mrb[0].mxu0
        %893 = vmatprep.mubr.bf16.mxu0 0
        %894 = vmatmul.mubr.bf16.gmra.mrb[0].mxu0 %v767
        %v895 = vpop.f32.mrb[0].mxu0
        %v896 = vadd.f32 %v649, %v895
        %v897 = vpop.f32.mrb[0].mxu0
        %v898 = vpop.f32.mrb[0].mxu0
        %v899 = vadd.f32 %v649, %v898
        %v900 = vpop.f32.mrb[0].mxu0
        %901 = vmatprep.mubr.bf16.mxu0 0
        %902 = vmatmul.mubr.bf16.gmra.mrb[0].mxu0 %v770
        %v903 = vpop.f32.mrb[0].mxu0
        %v904 = vadd.f32 %v649, %v903
        %v905 = vpop.f32.mrb[0].mxu0
        %v906 = vpop.f32.mrb[0].mxu0
        %v907 = vadd.f32 %v649, %v906
        %v908 = vpop.f32.mrb[0].mxu0
        %909 = vmatprep.mubr.bf16.mxu0 0
        %910 = vmatmul.mubr.bf16.gmra.mrb[0].mxu0 %v773
        %v911 = vpop.f32.mrb[0].mxu0
        %v912 = vadd.f32 %v649, %v911
        %v913 = vpop.f32.mrb[0].mxu0
        %v914 = vpop.f32.mrb[0].mxu0
        %v915 = vpop.f32.mrb[0].mxu0
        %916 = vdwg.mxu0
        %v917 = vmax.f32 %v816, 0.0
        %v918 = vmax.f32 %v819, 0.0
        %v919 = vmax.f32 %v824, 0.0
        %v920 = vmax.f32 %v827, 0.0
        %v921 = vmax.f32 %v832, 0.0
        %v922 = vmax.f32 %v835, 0.0
        %v923 = vmax.f32 %v840, 0.0
        %v924 = vmax.f32 %v843, 0.0
        %v925 = vmax.f32 %v848, 0.0
        %v926 = vmax.f32 %v851, 0.0
        %v927 = vmax.f32 %v856, 0.0
        %v928 = vmax.f32 %v859, 0.0
        %v929 = vmax.f32 %v864, 0.0
        %v930 = vmax.f32 %v867, 0.0
        %v931 = vmax.f32 %v872, 0.0
        %v932 = vmax.f32 %v875, 0.0
        %v933 = vmax.f32 %v880, 0.0
        %v934 = vmax.f32 %v883, 0.0
        %v935 = vmax.f32 %v888, 0.0
        %v936 = vmax.f32 %v891, 0.0
        %v937 = vmax.f32 %v896, 0.0
        %v938 = vmax.f32 %v899, 0.0
        %v939 = vmax.f32 %v904, 0.0
        %v940 = vmax.f32 %v907, 0.0
        %v941 = vmax.f32 %v912, 0.0
        %s942 = scalar_lea.vmem %s583, 100 [#allocation2]
        %v943 = vld [vmem:[%s942] sm:$0xf]
        %v944 = vld [vmem:[%s942 + $0x4] sm:$0xf]
        %v945 = vld [vmem:[%s942 + $0x8] sm:$0xf]
        %v946 = vld [vmem:[%s942 + $0xc] sm:$0xf]
        %v947 = vld [vmem:[%s942 + $0x10] sm:$0xf]
        %v948 = vld [vmem:[%s942 + $0x14] sm:$0xf]
        %v949 = vld [vmem:[%s942 + $0x18] sm:$0xf]
        %v950 = vld [vmem:[%s942 + $0x1c] sm:$0xf]
        %v951 = vld [vmem:[%s942 + $0x20] sm:$0xf]
        %v952 = vld [vmem:[%s942 + $0x24] sm:$0xf]
        %v953 = vld [vmem:[%s942 + $0x28] sm:$0xf]
        %v954 = vld [vmem:[%s942 + $0x2c] sm:$0xf]
        %v955 = vld [vmem:[%s942 + $0x30] sm:$0xf]
        %v956 = vld [vmem:[%s942 + $0x34] sm:$0xf]
        %v957 = vld [vmem:[%s942 + $0x38] sm:$0xf]
        %v958 = vld [vmem:[%s942 + $0x3c] sm:$0xf]
        %v959 = vld [vmem:[%s942 + $0x40] sm:$0xf]
        %v960 = vld [vmem:[%s942 + $0x44] sm:$0xf]
        %v961 = vld [vmem:[%s942 + $0x48] sm:$0xf]
        %v962 = vld [vmem:[%s942 + $0x4c] sm:$0xf]
        %v963 = vld [vmem:[%s942 + $0x50] sm:$0xf]
        %v964 = vld [vmem:[%s942 + $0x54] sm:$0xf]
        %v965 = vld [vmem:[%s942 + $0x58] sm:$0xf]
        %v966 = vld [vmem:[%s942 + $0x5c] sm:$0xf]
        %v967 = vld [vmem:[%s942 + $0x60] sm:$0xf]
        %v993 = vunpack.c.l.b16 %v943
        %v994 = vunpack.c.l.b16 %v944
        %v995 = vunpack.c.l.b16 %v945
        %v996 = vunpack.c.l.b16 %v946
        %v997 = vunpack.c.l.b16 %v947
        %v998 = vunpack.c.l.b16 %v948
        %v999 = vunpack.c.l.b16 %v949
        %v1000 = vunpack.c.l.b16 %v950
        %v1001 = vunpack.c.l.b16 %v951
        %v1002 = vunpack.c.l.b16 %v952
        %v1003 = vunpack.c.l.b16 %v953
        %v1004 = vunpack.c.l.b16 %v954
        %v1005 = vunpack.c.l.b16 %v955
        %v1006 = vunpack.c.l.b16 %v956
        %v1007 = vunpack.c.l.b16 %v957
        %v1008 = vunpack.c.l.b16 %v958
        %v1009 = vunpack.c.l.b16 %v959
        %v1010 = vunpack.c.l.b16 %v960
        %v1011 = vunpack.c.l.b16 %v961
        %v1012 = vunpack.c.l.b16 %v962
        %v1013 = vunpack.c.l.b16 %v963
        %v1014 = vunpack.c.l.b16 %v964
        %v1015 = vunpack.c.l.b16 %v965
        %v1016 = vunpack.c.l.b16 %v966
        %v1017 = vunpack.c.l.b16 %v967
        %v1018 = vpack.c.b16 %v994, %v993
        %v1019 = vpack.c.b16 %v996, %v995
        %v1020 = vpack.c.b16 %v998, %v997
        %v1021 = vpack.c.b16 %v1000, %v999
        %v1022 = vpack.c.b16 %v1002, %v1001
        %v1023 = vpack.c.b16 %v1004, %v1003
        %v1024 = vpack.c.b16 %v1006, %v1005
        %v1025 = vpack.c.b16 %v1008, %v1007
        %v1026 = vpack.c.b16 %v1010, %v1009
        %v1027 = vpack.c.b16 %v1012, %v1011
        %v1028 = vpack.c.b16 %v1014, %v1013
        %v1029 = vpack.c.b16 %v1016, %v1015
        %v1030 = vpack.c.b16 %v1017, %v1017
        %v1032 = vsel %vm735, %v1018, 0
        %v1035 = vsel %vm735, %v1019, 0
        %v1038 = vsel %vm735, %v1020, 0
        %v1041 = vsel %vm735, %v1021, 0
        %v1044 = vsel %vm735, %v1022, 0
        %v1047 = vsel %vm735, %v1023, 0
        %v1050 = vsel %vm735, %v1024, 0
        %v1053 = vsel %vm735, %v1025, 0
        %v1056 = vsel %vm735, %v1026, 0
        %v1059 = vsel %vm735, %v1027, 0
        %v1062 = vsel %vm735, %v1028, 0
        %v1065 = vsel %vm735, %v1029, 0
        %v1068 = vsel %vm735, %v1030, 0
        %1070 = vmatprep.subr.bf16.mxu0 0
        %1071 = vmatpush1.bf16.msra.mxu0 %v728
        %1072 = vmatprep.subr.bf16.mxu0 0
        %1073 = vmatpush1.bf16.msra.mxu0 %v729
        %1074 = vmatprep.subr.bf16.mxu0 0
        %1075 = vmatpush1.bf16.msra.mxu0 %v730
        %1076 = vmatprep.subr.bf16.mxu0 0
        %1077 = vmatpush1.bf16.msra.mxu0 %v779
        %1078 = vmatprep.subr.bf16.mxu0 0
        %1079 = vmatpush1.bf16.msra.mxu0 0
        %1080 = vmatprep.subr.bf16.mxu0 0
        %1081 = vmatpush1.bf16.msra.mxu0 0
        %1082 = vmatprep.subr.bf16.mxu0 0
        %1083 = vmatpush1.bf16.msra.mxu0 0
        %1084 = vmatprep.subr.bf16.mxu0 0
        %1085 = vmatpush1.bf16.msra.mxu0 0
        %1086 = vmatprep.subr.bf16.mxu0 0
        %1087 = vmatpush1.bf16.msra.mxu0 0
        %1088 = vmatprep.subr.bf16.mxu0 0
        %1089 = vmatpush1.bf16.msra.mxu0 0
        %1090 = vmatprep.subr.bf16.mxu0 0
        %1091 = vmatpush1.bf16.msra.mxu0 0
        %1092 = vmatprep.subr.bf16.mxu0 0
        %1093 = vmatpush1.bf16.msra.mxu0 0
        %1094 = vmatprep.subr.bf16.mxu0 0
        %1095 = vmatpush1.bf16.msra.mxu0 0
        %1096 = vmatprep.subr.bf16.mxu0 0
        %1097 = vmatpush1.bf16.msra.mxu0 0
        %1098 = vmatprep.subr.bf16.mxu0 0
        %1099 = vmatpush1.bf16.msra.mxu0 0
        %1100 = vmatprep.subr.bf16.mxu0 0
        %1101 = vmatpush1.bf16.msra.mxu0 0
        %1102 = vmatprep.mubr.bf16.mxu0 0
        %1103 = vmatmul.mubr.bf16.gmra.mrb[0].mxu0 %v1032
        %v1104 = vpop.f32.mrb[0].mxu0
        %v1105 = vadd.f32 %v649, %v1104
        %v1106 = vpop.f32.mrb[0].mxu0
        %v1107 = vpop.f32.mrb[0].mxu0
        %v1108 = vadd.f32 %v649, %v1107
        %v1109 = vpop.f32.mrb[0].mxu0
        %1110 = vmatprep.mubr.bf16.mxu0 0
        %1111 = vmatmul.mubr.bf16.gmra.mrb[0].mxu0 %v1035
        %v1112 = vpop.f32.mrb[0].mxu0
        %v1113 = vadd.f32 %v649, %v1112
        %v1114 = vpop.f32.mrb[0].mxu0
        %v1115 = vpop.f32.mrb[0].mxu0
        %v1116 = vadd.f32 %v649, %v1115
        %v1117 = vpop.f32.mrb[0].mxu0
        %1118 = vmatprep.mubr.bf16.mxu0 0
        %1119 = vmatmul.mubr.bf16.gmra.mrb[0].mxu0 %v1038
        %v1120 = vpop.f32.mrb[0].mxu0
        %v1121 = vadd.f32 %v649, %v1120
        %v1122 = vpop.f32.mrb[0].mxu0
        %v1123 = vpop.f32.mrb[0].mxu0
        %v1124 = vadd.f32 %v649, %v1123
        %v1125 = vpop.f32.mrb[0].mxu0
        %1126 = vmatprep.mubr.bf16.mxu0 0
        %1127 = vmatmul.mubr.bf16.gmra.mrb[0].mxu0 %v1041
        %v1128 = vpop.f32.mrb[0].mxu0
        %v1129 = vadd.f32 %v649, %v1128
        %v1130 = vpop.f32.mrb[0].mxu0
        %v1131 = vpop.f32.mrb[0].mxu0
        %v1132 = vadd.f32 %v649, %v1131
        %v1133 = vpop.f32.mrb[0].mxu0
        %1134 = vmatprep.mubr.bf16.mxu0 0
        %1135 = vmatmul.mubr.bf16.gmra.mrb[0].mxu0 %v1044
        %v1136 = vpop.f32.mrb[0].mxu0
        %v1137 = vadd.f32 %v649, %v1136
        %v1138 = vpop.f32.mrb[0].mxu0
        %v1139 = vpop.f32.mrb[0].mxu0
        %v1140 = vadd.f32 %v649, %v1139
        %v1141 = vpop.f32.mrb[0].mxu0
        %1142 = vmatprep.mubr.bf16.mxu0 0
        %1143 = vmatmul.mubr.bf16.gmra.mrb[0].mxu0 %v1047
        %v1144 = vpop.f32.mrb[0].mxu0
        %v1145 = vadd.f32 %v649, %v1144
        %v1146 = vpop.f32.mrb[0].mxu0
        %v1147 = vpop.f32.mrb[0].mxu0
        %v1148 = vadd.f32 %v649, %v1147
        %v1149 = vpop.f32.mrb[0].mxu0
        %1150 = vmatprep.mubr.bf16.mxu0 0
        %1151 = vmatmul.mubr.bf16.gmra.mrb[0].mxu0 %v1050
        %v1152 = vpop.f32.mrb[0].mxu0
        %v1153 = vadd.f32 %v649, %v1152
        %v1154 = vpop.f32.mrb[0].mxu0
        %v1155 = vpop.f32.mrb[0].mxu0
        %v1156 = vadd.f32 %v649, %v1155
        %v1157 = vpop.f32.mrb[0].mxu0
        %1158 = vmatprep.mubr.bf16.mxu0 0
        %1159 = vmatmul.mubr.bf16.gmra.mrb[0].mxu0 %v1053
        %v1160 = vpop.f32.mrb[0].mxu0
        %v1161 = vadd.f32 %v649, %v1160
        %v1162 = vpop.f32.mrb[0].mxu0
        %v1163 = vpop.f32.mrb[0].mxu0
        %v1164 = vadd.f32 %v649, %v1163
        %v1165 = vpop.f32.mrb[0].mxu0
        %1166 = vmatprep.mubr.bf16.mxu0 0
        %1167 = vmatmul.mubr.bf16.gmra.mrb[0].mxu0 %v1056
        %v1168 = vpop.f32.mrb[0].mxu0
        %v1169 = vadd.f32 %v649, %v1168
        %v1170 = vpop.f32.mrb[0].mxu0
        %v1171 = vpop.f32.mrb[0].mxu0
        %v1172 = vadd.f32 %v649, %v1171
        %v1173 = vpop.f32.mrb[0].mxu0
        %1174 = vmatprep.mubr.bf16.mxu0 0
        %1175 = vmatmul.mubr.bf16.gmra.mrb[0].mxu0 %v1059
        %v1176 = vpop.f32.mrb[0].mxu0
        %v1177 = vadd.f32 %v649, %v1176
        %v1178 = vpop.f32.mrb[0].mxu0
        %v1179 = vpop.f32.mrb[0].mxu0
        %v1180 = vadd.f32 %v649, %v1179
        %v1181 = vpop.f32.mrb[0].mxu0
        %1182 = vmatprep.mubr.bf16.mxu0 0
        %1183 = vmatmul.mubr.bf16.gmra.mrb[0].mxu0 %v1062
        %v1184 = vpop.f32.mrb[0].mxu0
        %v1185 = vadd.f32 %v649, %v1184
        %v1186 = vpop.f32.mrb[0].mxu0
        %v1187 = vpop.f32.mrb[0].mxu0
        %v1188 = vadd.f32 %v649, %v1187
        %v1189 = vpop.f32.mrb[0].mxu0
        %1190 = vmatprep.mubr.bf16.mxu0 0
        %1191 = vmatmul.mubr.bf16.gmra.mrb[0].mxu0 %v1065
        %v1192 = vpop.f32.mrb[0].mxu0
        %v1193 = vadd.f32 %v649, %v1192
        %v1194 = vpop.f32.mrb[0].mxu0
        %v1195 = vpop.f32.mrb[0].mxu0
        %v1196 = vadd.f32 %v649, %v1195
        %v1197 = vpop.f32.mrb[0].mxu0
        %1198 = vmatprep.mubr.bf16.mxu0 0
        %1199 = vmatmul.mubr.bf16.gmra.mrb[0].mxu0 %v1068
        %v1200 = vpop.f32.mrb[0].mxu0
        %v1201 = vadd.f32 %v649, %v1200
        %v1202 = vpop.f32.mrb[0].mxu0
        %v1203 = vpop.f32.mrb[0].mxu0
        %v1204 = vpop.f32.mrb[0].mxu0
        %1205 = vdwg.mxu0
        %v1206 = vmax.f32 %v1105, 0.0
        %v1207 = vmax.f32 %v1108, 0.0
        %v1208 = vmax.f32 %v1113, 0.0
        %v1209 = vmax.f32 %v1116, 0.0
        %v1210 = vmax.f32 %v1121, 0.0
        %v1211 = vmax.f32 %v1124, 0.0
        %v1212 = vmax.f32 %v1129, 0.0
        %v1213 = vmax.f32 %v1132, 0.0
        %v1214 = vmax.f32 %v1137, 0.0
        %v1215 = vmax.f32 %v1140, 0.0
        %v1216 = vmax.f32 %v1145, 0.0
        %v1217 = vmax.f32 %v1148, 0.0
        %v1218 = vmax.f32 %v1153, 0.0
        %v1219 = vmax.f32 %v1156, 0.0
        %v1220 = vmax.f32 %v1161, 0.0
        %v1221 = vmax.f32 %v1164, 0.0
        %v1222 = vmax.f32 %v1169, 0.0
        %v1223 = vmax.f32 %v1172, 0.0
        %v1224 = vmax.f32 %v1177, 0.0
        %v1225 = vmax.f32 %v1180, 0.0
        %v1226 = vmax.f32 %v1185, 0.0
        %v1227 = vmax.f32 %v1188, 0.0
        %v1228 = vmax.f32 %v1193, 0.0
        %v1229 = vmax.f32 %v1196, 0.0
        %v1230 = vmax.f32 %v1201, 0.0
        %v1231 = vmax.f32 %v917, %v1206
        %v1232 = vmax.f32 %v918, %v1207
        %v1233 = vmax.f32 %v919, %v1208
        %v1234 = vmax.f32 %v920, %v1209
        %v1235 = vmax.f32 %v921, %v1210
        %v1236 = vmax.f32 %v922, %v1211
        %v1237 = vmax.f32 %v923, %v1212
        %v1238 = vmax.f32 %v924, %v1213
        %v1239 = vmax.f32 %v925, %v1214
        %v1240 = vmax.f32 %v926, %v1215
        %v1241 = vmax.f32 %v927, %v1216
        %v1242 = vmax.f32 %v928, %v1217
        %v1243 = vmax.f32 %v929, %v1218
        %v1244 = vmax.f32 %v930, %v1219
        %v1245 = vmax.f32 %v931, %v1220
        %v1246 = vmax.f32 %v932, %v1221
        %v1247 = vmax.f32 %v933, %v1222
        %v1248 = vmax.f32 %v934, %v1223
        %v1249 = vmax.f32 %v935, %v1224
        %v1250 = vmax.f32 %v936, %v1225
        %v1251 = vmax.f32 %v937, %v1226
        %v1252 = vmax.f32 %v938, %v1227
        %v1253 = vmax.f32 %v939, %v1228
        %v1254 = vmax.f32 %v940, %v1229
        %v1255 = vmax.f32 %v941, %v1230
        %s1256 = scalar_lea.vmem %s583, 200 [#allocation2]
        %v1257 = vld [vmem:[%s1256] sm:$0xf]
        %v1258 = vld [vmem:[%s1256 + $0x4] sm:$0xf]
        %v1259 = vld [vmem:[%s1256 + $0x8] sm:$0xf]
        %v1260 = vld [vmem:[%s1256 + $0xc] sm:$0xf]
        %v1261 = vld [vmem:[%s1256 + $0x10] sm:$0xf]
        %v1262 = vld [vmem:[%s1256 + $0x14] sm:$0xf]
        %v1263 = vld [vmem:[%s1256 + $0x18] sm:$0xf]
        %v1264 = vld [vmem:[%s1256 + $0x1c] sm:$0xf]
        %v1265 = vld [vmem:[%s1256 + $0x20] sm:$0xf]
        %v1266 = vld [vmem:[%s1256 + $0x24] sm:$0xf]
        %v1267 = vld [vmem:[%s1256 + $0x28] sm:$0xf]
        %v1268 = vld [vmem:[%s1256 + $0x2c] sm:$0xf]
        %v1269 = vld [vmem:[%s1256 + $0x30] sm:$0xf]
        %v1270 = vld [vmem:[%s1256 + $0x34] sm:$0xf]
        %v1271 = vld [vmem:[%s1256 + $0x38] sm:$0xf]
        %v1272 = vld [vmem:[%s1256 + $0x3c] sm:$0xf]
        %v1273 = vld [vmem:[%s1256 + $0x40] sm:$0xf]
        %v1274 = vld [vmem:[%s1256 + $0x44] sm:$0xf]
        %v1275 = vld [vmem:[%s1256 + $0x48] sm:$0xf]
        %v1276 = vld [vmem:[%s1256 + $0x4c] sm:$0xf]
        %v1277 = vld [vmem:[%s1256 + $0x50] sm:$0xf]
        %v1278 = vld [vmem:[%s1256 + $0x54] sm:$0xf]
        %v1279 = vld [vmem:[%s1256 + $0x58] sm:$0xf]
        %v1280 = vld [vmem:[%s1256 + $0x5c] sm:$0xf]
        %v1281 = vld [vmem:[%s1256 + $0x60] sm:$0xf]
        %v1307 = vunpack.c.l.b16 %v1257
        %v1308 = vunpack.c.l.b16 %v1258
        %v1309 = vunpack.c.l.b16 %v1259
        %v1310 = vunpack.c.l.b16 %v1260
        %v1311 = vunpack.c.l.b16 %v1261
        %v1312 = vunpack.c.l.b16 %v1262
        %v1313 = vunpack.c.l.b16 %v1263
        %v1314 = vunpack.c.l.b16 %v1264
        %v1315 = vunpack.c.l.b16 %v1265
        %v1316 = vunpack.c.l.b16 %v1266
        %v1317 = vunpack.c.l.b16 %v1267
        %v1318 = vunpack.c.l.b16 %v1268
        %v1319 = vunpack.c.l.b16 %v1269
        %v1320 = vunpack.c.l.b16 %v1270
        %v1321 = vunpack.c.l.b16 %v1271
        %v1322 = vunpack.c.l.b16 %v1272
        %v1323 = vunpack.c.l.b16 %v1273
        %v1324 = vunpack.c.l.b16 %v1274
        %v1325 = vunpack.c.l.b16 %v1275
        %v1326 = vunpack.c.l.b16 %v1276
        %v1327 = vunpack.c.l.b16 %v1277
        %v1328 = vunpack.c.l.b16 %v1278
        %v1329 = vunpack.c.l.b16 %v1279
        %v1330 = vunpack.c.l.b16 %v1280
        %v1331 = vunpack.c.l.b16 %v1281
        %v1332 = vpack.c.b16 %v1308, %v1307
        %v1333 = vpack.c.b16 %v1310, %v1309
        %v1334 = vpack.c.b16 %v1312, %v1311
        %v1335 = vpack.c.b16 %v1314, %v1313
        %v1336 = vpack.c.b16 %v1316, %v1315
        %v1337 = vpack.c.b16 %v1318, %v1317
        %v1338 = vpack.c.b16 %v1320, %v1319
        %v1339 = vpack.c.b16 %v1322, %v1321
        %v1340 = vpack.c.b16 %v1324, %v1323
        %v1341 = vpack.c.b16 %v1326, %v1325
        %v1342 = vpack.c.b16 %v1328, %v1327
        %v1343 = vpack.c.b16 %v1330, %v1329
        %v1344 = vpack.c.b16 %v1331, %v1331
        %v1346 = vsel %vm735, %v1332, 0
        %v1349 = vsel %vm735, %v1333, 0
        %v1352 = vsel %vm735, %v1334, 0
        %v1355 = vsel %vm735, %v1335, 0
        %v1358 = vsel %vm735, %v1336, 0
        %v1361 = vsel %vm735, %v1337, 0
        %v1364 = vsel %vm735, %v1338, 0
        %v1367 = vsel %vm735, %v1339, 0
        %v1370 = vsel %vm735, %v1340, 0
        %v1373 = vsel %vm735, %v1341, 0
        %v1376 = vsel %vm735, %v1342, 0
        %v1379 = vsel %vm735, %v1343, 0
        %v1382 = vsel %vm735, %v1344, 0
        %1384 = vmatprep.subr.bf16.mxu0 0
        %1385 = vmatpush1.bf16.msra.mxu0 %v728
        %1386 = vmatprep.subr.bf16.mxu0 0
        %1387 = vmatpush1.bf16.msra.mxu0 %v729
        %1388 = vmatprep.subr.bf16.mxu0 0
        %1389 = vmatpush1.bf16.msra.mxu0 %v730
        %1390 = vmatprep.subr.bf16.mxu0 0
        %1391 = vmatpush1.bf16.msra.mxu0 %v779
        %1392 = vmatprep.subr.bf16.mxu0 0
        %1393 = vmatpush1.bf16.msra.mxu0 0
        %1394 = vmatprep.subr.bf16.mxu0 0
        %1395 = vmatpush1.bf16.msra.mxu0 0
        %1396 = vmatprep.subr.bf16.mxu0 0
        %1397 = vmatpush1.bf16.msra.mxu0 0
        %1398 = vmatprep.subr.bf16.mxu0 0
        %1399 = vmatpush1.bf16.msra.mxu0 0
        %1400 = vmatprep.subr.bf16.mxu0 0
        %1401 = vmatpush1.bf16.msra.mxu0 0
        %1402 = vmatprep.subr.bf16.mxu0 0
        %1403 = vmatpush1.bf16.msra.mxu0 0
        %1404 = vmatprep.subr.bf16.mxu0 0
        %1405 = vmatpush1.bf16.msra.mxu0 0
        %1406 = vmatprep.subr.bf16.mxu0 0
        %1407 = vmatpush1.bf16.msra.mxu0 0
        %1408 = vmatprep.subr.bf16.mxu0 0
        %1409 = vmatpush1.bf16.msra.mxu0 0
        %1410 = vmatprep.subr.bf16.mxu0 0
        %1411 = vmatpush1.bf16.msra.mxu0 0
        %1412 = vmatprep.subr.bf16.mxu0 0
        %1413 = vmatpush1.bf16.msra.mxu0 0
        %1414 = vmatprep.subr.bf16.mxu0 0
        %1415 = vmatpush1.bf16.msra.mxu0 0
        %1416 = vmatprep.mubr.bf16.mxu0 0
        %1417 = vmatmul.mubr.bf16.gmra.mrb[0].mxu0 %v1346
        %v1418 = vpop.f32.mrb[0].mxu0
        %v1419 = vadd.f32 %v649, %v1418
        %v1420 = vpop.f32.mrb[0].mxu0
        %v1421 = vpop.f32.mrb[0].mxu0
        %v1422 = vadd.f32 %v649, %v1421
        %v1423 = vpop.f32.mrb[0].mxu0
        %1424 = vmatprep.mubr.bf16.mxu0 0
        %1425 = vmatmul.mubr.bf16.gmra.mrb[0].mxu0 %v1349
        %v1426 = vpop.f32.mrb[0].mxu0
        %v1427 = vadd.f32 %v649, %v1426
        %v1428 = vpop.f32.mrb[0].mxu0
        %v1429 = vpop.f32.mrb[0].mxu0
        %v1430 = vadd.f32 %v649, %v1429
        %v1431 = vpop.f32.mrb[0].mxu0
        %1432 = vmatprep.mubr.bf16.mxu0 0
        %1433 = vmatmul.mubr.bf16.gmra.mrb[0].mxu0 %v1352
        %v1434 = vpop.f32.mrb[0].mxu0
        %v1435 = vadd.f32 %v649, %v1434
        %v1436 = vpop.f32.mrb[0].mxu0
        %v1437 = vpop.f32.mrb[0].mxu0
        %v1438 = vadd.f32 %v649, %v1437
        %v1439 = vpop.f32.mrb[0].mxu0
        %1440 = vmatprep.mubr.bf16.mxu0 0
        %1441 = vmatmul.mubr.bf16.gmra.mrb[0].mxu0 %v1355
        %v1442 = vpop.f32.mrb[0].mxu0
        %v1443 = vadd.f32 %v649, %v1442
        %v1444 = vpop.f32.mrb[0].mxu0
        %v1445 = vpop.f32.mrb[0].mxu0
        %v1446 = vadd.f32 %v649, %v1445
        %v1447 = vpop.f32.mrb[0].mxu0
        %1448 = vmatprep.mubr.bf16.mxu0 0
        %1449 = vmatmul.mubr.bf16.gmra.mrb[0].mxu0 %v1358
        %v1450 = vpop.f32.mrb[0].mxu0
        %v1451 = vadd.f32 %v649, %v1450
        %v1452 = vpop.f32.mrb[0].mxu0
        %v1453 = vpop.f32.mrb[0].mxu0
        %v1454 = vadd.f32 %v649, %v1453
        %v1455 = vpop.f32.mrb[0].mxu0
        %1456 = vmatprep.mubr.bf16.mxu0 0
        %1457 = vmatmul.mubr.bf16.gmra.mrb[0].mxu0 %v1361
        %v1458 = vpop.f32.mrb[0].mxu0
        %v1459 = vadd.f32 %v649, %v1458
        %v1460 = vpop.f32.mrb[0].mxu0
        %v1461 = vpop.f32.mrb[0].mxu0
        %v1462 = vadd.f32 %v649, %v1461
        %v1463 = vpop.f32.mrb[0].mxu0
        %1464 = vmatprep.mubr.bf16.mxu0 0
        %1465 = vmatmul.mubr.bf16.gmra.mrb[0].mxu0 %v1364
        %v1466 = vpop.f32.mrb[0].mxu0
        %v1467 = vadd.f32 %v649, %v1466
        %v1468 = vpop.f32.mrb[0].mxu0
        %v1469 = vpop.f32.mrb[0].mxu0
        %v1470 = vadd.f32 %v649, %v1469
        %v1471 = vpop.f32.mrb[0].mxu0
        %1472 = vmatprep.mubr.bf16.mxu0 0
        %1473 = vmatmul.mubr.bf16.gmra.mrb[0].mxu0 %v1367
        %v1474 = vpop.f32.mrb[0].mxu0
        %v1475 = vadd.f32 %v649, %v1474
        %v1476 = vpop.f32.mrb[0].mxu0
        %v1477 = vpop.f32.mrb[0].mxu0
        %v1478 = vadd.f32 %v649, %v1477
        %v1479 = vpop.f32.mrb[0].mxu0
        %1480 = vmatprep.mubr.bf16.mxu0 0
        %1481 = vmatmul.mubr.bf16.gmra.mrb[0].mxu0 %v1370
        %v1482 = vpop.f32.mrb[0].mxu0
        %v1483 = vadd.f32 %v649, %v1482
        %v1484 = vpop.f32.mrb[0].mxu0
        %v1485 = vpop.f32.mrb[0].mxu0
        %v1486 = vadd.f32 %v649, %v1485
        %v1487 = vpop.f32.mrb[0].mxu0
        %1488 = vmatprep.mubr.bf16.mxu0 0
        %1489 = vmatmul.mubr.bf16.gmra.mrb[0].mxu0 %v1373
        %v1490 = vpop.f32.mrb[0].mxu0
        %v1491 = vadd.f32 %v649, %v1490
        %v1492 = vpop.f32.mrb[0].mxu0
        %v1493 = vpop.f32.mrb[0].mxu0
        %v1494 = vadd.f32 %v649, %v1493
        %v1495 = vpop.f32.mrb[0].mxu0
        %1496 = vmatprep.mubr.bf16.mxu0 0
        %1497 = vmatmul.mubr.bf16.gmra.mrb[0].mxu0 %v1376
        %v1498 = vpop.f32.mrb[0].mxu0
        %v1499 = vadd.f32 %v649, %v1498
        %v1500 = vpop.f32.mrb[0].mxu0
        %v1501 = vpop.f32.mrb[0].mxu0
        %v1502 = vadd.f32 %v649, %v1501
        %v1503 = vpop.f32.mrb[0].mxu0
        %1504 = vmatprep.mubr.bf16.mxu0 0
        %1505 = vmatmul.mubr.bf16.gmra.mrb[0].mxu0 %v1379
        %v1506 = vpop.f32.mrb[0].mxu0
        %v1507 = vadd.f32 %v649, %v1506
        %v1508 = vpop.f32.mrb[0].mxu0
        %v1509 = vpop.f32.mrb[0].mxu0
        %v1510 = vadd.f32 %v649, %v1509
        %v1511 = vpop.f32.mrb[0].mxu0
        %1512 = vmatprep.mubr.bf16.mxu0 0
        %1513 = vmatmul.mubr.bf16.gmra.mrb[0].mxu0 %v1382
        %v1514 = vpop.f32.mrb[0].mxu0
        %v1515 = vadd.f32 %v649, %v1514
        %v1516 = vpop.f32.mrb[0].mxu0
        %v1517 = vpop.f32.mrb[0].mxu0
        %v1518 = vpop.f32.mrb[0].mxu0
        %1519 = vdwg.mxu0
        %v1520 = vmax.f32 %v1419, 0.0
        %v1521 = vmax.f32 %v1422, 0.0
        %v1522 = vmax.f32 %v1427, 0.0
        %v1523 = vmax.f32 %v1430, 0.0
        %v1524 = vmax.f32 %v1435, 0.0
        %v1525 = vmax.f32 %v1438, 0.0
        %v1526 = vmax.f32 %v1443, 0.0
        %v1527 = vmax.f32 %v1446, 0.0
        %v1528 = vmax.f32 %v1451, 0.0
        %v1529 = vmax.f32 %v1454, 0.0
        %v1530 = vmax.f32 %v1459, 0.0
        %v1531 = vmax.f32 %v1462, 0.0
        %v1532 = vmax.f32 %v1467, 0.0
        %v1533 = vmax.f32 %v1470, 0.0
        %v1534 = vmax.f32 %v1475, 0.0
        %v1535 = vmax.f32 %v1478, 0.0
        %v1536 = vmax.f32 %v1483, 0.0
        %v1537 = vmax.f32 %v1486, 0.0
        %v1538 = vmax.f32 %v1491, 0.0
        %v1539 = vmax.f32 %v1494, 0.0
        %v1540 = vmax.f32 %v1499, 0.0
        %v1541 = vmax.f32 %v1502, 0.0
        %v1542 = vmax.f32 %v1507, 0.0
        %v1543 = vmax.f32 %v1510, 0.0
        %v1544 = vmax.f32 %v1515, 0.0
        %s1545 = scalar_lea.vmem %s583, 300 [#allocation2]
        %v1546 = vld [vmem:[%s1545] sm:$0xf]
        %v1547 = vld [vmem:[%s1545 + $0x4] sm:$0xf]
        %v1548 = vld [vmem:[%s1545 + $0x8] sm:$0xf]
        %v1549 = vld [vmem:[%s1545 + $0xc] sm:$0xf]
        %v1550 = vld [vmem:[%s1545 + $0x10] sm:$0xf]
        %v1551 = vld [vmem:[%s1545 + $0x14] sm:$0xf]
        %v1552 = vld [vmem:[%s1545 + $0x18] sm:$0xf]
        %v1553 = vld [vmem:[%s1545 + $0x1c] sm:$0xf]
        %v1554 = vld [vmem:[%s1545 + $0x20] sm:$0xf]
        %v1555 = vld [vmem:[%s1545 + $0x24] sm:$0xf]
        %v1556 = vld [vmem:[%s1545 + $0x28] sm:$0xf]
        %v1557 = vld [vmem:[%s1545 + $0x2c] sm:$0xf]
        %v1558 = vld [vmem:[%s1545 + $0x30] sm:$0xf]
        %v1559 = vld [vmem:[%s1545 + $0x34] sm:$0xf]
        %v1560 = vld [vmem:[%s1545 + $0x38] sm:$0xf]
        %v1561 = vld [vmem:[%s1545 + $0x3c] sm:$0xf]
        %v1562 = vld [vmem:[%s1545 + $0x40] sm:$0xf]
        %v1563 = vld [vmem:[%s1545 + $0x44] sm:$0xf]
        %v1564 = vld [vmem:[%s1545 + $0x48] sm:$0xf]
        %v1565 = vld [vmem:[%s1545 + $0x4c] sm:$0xf]
        %v1566 = vld [vmem:[%s1545 + $0x50] sm:$0xf]
        %v1567 = vld [vmem:[%s1545 + $0x54] sm:$0xf]
        %v1568 = vld [vmem:[%s1545 + $0x58] sm:$0xf]
        %v1569 = vld [vmem:[%s1545 + $0x5c] sm:$0xf]
        %v1570 = vld [vmem:[%s1545 + $0x60] sm:$0xf]
        %v1596 = vunpack.c.l.b16 %v1546
        %v1597 = vunpack.c.l.b16 %v1547
        %v1598 = vunpack.c.l.b16 %v1548
        %v1599 = vunpack.c.l.b16 %v1549
        %v1600 = vunpack.c.l.b16 %v1550
        %v1601 = vunpack.c.l.b16 %v1551
        %v1602 = vunpack.c.l.b16 %v1552
        %v1603 = vunpack.c.l.b16 %v1553
        %v1604 = vunpack.c.l.b16 %v1554
        %v1605 = vunpack.c.l.b16 %v1555
        %v1606 = vunpack.c.l.b16 %v1556
        %v1607 = vunpack.c.l.b16 %v1557
        %v1608 = vunpack.c.l.b16 %v1558
        %v1609 = vunpack.c.l.b16 %v1559
        %v1610 = vunpack.c.l.b16 %v1560
        %v1611 = vunpack.c.l.b16 %v1561
        %v1612 = vunpack.c.l.b16 %v1562
        %v1613 = vunpack.c.l.b16 %v1563
        %v1614 = vunpack.c.l.b16 %v1564
        %v1615 = vunpack.c.l.b16 %v1565
        %v1616 = vunpack.c.l.b16 %v1566
        %v1617 = vunpack.c.l.b16 %v1567
        %v1618 = vunpack.c.l.b16 %v1568
        %v1619 = vunpack.c.l.b16 %v1569
        %v1620 = vunpack.c.l.b16 %v1570
        %v1621 = vpack.c.b16 %v1597, %v1596
        %v1622 = vpack.c.b16 %v1599, %v1598
        %v1623 = vpack.c.b16 %v1601, %v1600
        %v1624 = vpack.c.b16 %v1603, %v1602
        %v1625 = vpack.c.b16 %v1605, %v1604
        %v1626 = vpack.c.b16 %v1607, %v1606
        %v1627 = vpack.c.b16 %v1609, %v1608
        %v1628 = vpack.c.b16 %v1611, %v1610
        %v1629 = vpack.c.b16 %v1613, %v1612
        %v1630 = vpack.c.b16 %v1615, %v1614
        %v1631 = vpack.c.b16 %v1617, %v1616
        %v1632 = vpack.c.b16 %v1619, %v1618
        %v1633 = vpack.c.b16 %v1620, %v1620
        %v1635 = vsel %vm735, %v1621, 0
        %v1638 = vsel %vm735, %v1622, 0
        %v1641 = vsel %vm735, %v1623, 0
        %v1644 = vsel %vm735, %v1624, 0
        %v1647 = vsel %vm735, %v1625, 0
        %v1650 = vsel %vm735, %v1626, 0
        %v1653 = vsel %vm735, %v1627, 0
        %v1656 = vsel %vm735, %v1628, 0
        %v1659 = vsel %vm735, %v1629, 0
        %v1662 = vsel %vm735, %v1630, 0
        %v1665 = vsel %vm735, %v1631, 0
        %v1668 = vsel %vm735, %v1632, 0
        %v1671 = vsel %vm735, %v1633, 0
        %1673 = vmatprep.subr.bf16.mxu0 0
        %1674 = vmatpush1.bf16.msra.mxu0 %v728
        %1675 = vmatprep.subr.bf16.mxu0 0
        %1676 = vmatpush1.bf16.msra.mxu0 %v729
        %1677 = vmatprep.subr.bf16.mxu0 0
        %1678 = vmatpush1.bf16.msra.mxu0 %v730
        %1679 = vmatprep.subr.bf16.mxu0 0
        %1680 = vmatpush1.bf16.msra.mxu0 %v779
        %1681 = vmatprep.subr.bf16.mxu0 0
        %1682 = vmatpush1.bf16.msra.mxu0 0
        %1683 = vmatprep.subr.bf16.mxu0 0
        %1684 = vmatpush1.bf16.msra.mxu0 0
        %1685 = vmatprep.subr.bf16.mxu0 0
        %1686 = vmatpush1.bf16.msra.mxu0 0
        %1687 = vmatprep.subr.bf16.mxu0 0
        %1688 = vmatpush1.bf16.msra.mxu0 0
        %1689 = vmatprep.subr.bf16.mxu0 0
        %1690 = vmatpush1.bf16.msra.mxu0 0
        %1691 = vmatprep.subr.bf16.mxu0 0
        %1692 = vmatpush1.bf16.msra.mxu0 0
        %1693 = vmatprep.subr.bf16.mxu0 0
        %1694 = vmatpush1.bf16.msra.mxu0 0
        %1695 = vmatprep.subr.bf16.mxu0 0
        %1696 = vmatpush1.bf16.msra.mxu0 0
        %1697 = vmatprep.subr.bf16.mxu0 0
        %1698 = vmatpush1.bf16.msra.mxu0 0
        %1699 = vmatprep.subr.bf16.mxu0 0
        %1700 = vmatpush1.bf16.msra.mxu0 0
        %1701 = vmatprep.subr.bf16.mxu0 0
        %1702 = vmatpush1.bf16.msra.mxu0 0
        %1703 = vmatprep.subr.bf16.mxu0 0
        %1704 = vmatpush1.bf16.msra.mxu0 0
        %1705 = vmatprep.mubr.bf16.mxu0 0
        %1706 = vmatmul.mubr.bf16.gmra.mrb[0].mxu0 %v1635
        %v1707 = vpop.f32.mrb[0].mxu0
        %v1708 = vadd.f32 %v649, %v1707
        %v1709 = vpop.f32.mrb[0].mxu0
        %v1710 = vpop.f32.mrb[0].mxu0
        %v1711 = vadd.f32 %v649, %v1710
        %v1712 = vpop.f32.mrb[0].mxu0
        %1713 = vmatprep.mubr.bf16.mxu0 0
        %1714 = vmatmul.mubr.bf16.gmra.mrb[0].mxu0 %v1638
        %v1715 = vpop.f32.mrb[0].mxu0
        %v1716 = vadd.f32 %v649, %v1715
        %v1717 = vpop.f32.mrb[0].mxu0
        %v1718 = vpop.f32.mrb[0].mxu0
        %v1719 = vadd.f32 %v649, %v1718
        %v1720 = vpop.f32.mrb[0].mxu0
        %1721 = vmatprep.mubr.bf16.mxu0 0
        %1722 = vmatmul.mubr.bf16.gmra.mrb[0].mxu0 %v1641
        %v1723 = vpop.f32.mrb[0].mxu0
        %v1724 = vadd.f32 %v649, %v1723
        %v1725 = vpop.f32.mrb[0].mxu0
        %v1726 = vpop.f32.mrb[0].mxu0
        %v1727 = vadd.f32 %v649, %v1726
        %v1728 = vpop.f32.mrb[0].mxu0
        %1729 = vmatprep.mubr.bf16.mxu0 0
        %1730 = vmatmul.mubr.bf16.gmra.mrb[0].mxu0 %v1644
        %v1731 = vpop.f32.mrb[0].mxu0
        %v1732 = vadd.f32 %v649, %v1731
        %v1733 = vpop.f32.mrb[0].mxu0
        %v1734 = vpop.f32.mrb[0].mxu0
        %v1735 = vadd.f32 %v649, %v1734
        %v1736 = vpop.f32.mrb[0].mxu0
        %1737 = vmatprep.mubr.bf16.mxu0 0
        %1738 = vmatmul.mubr.bf16.gmra.mrb[0].mxu0 %v1647
        %v1739 = vpop.f32.mrb[0].mxu0
        %v1740 = vadd.f32 %v649, %v1739
        %v1741 = vpop.f32.mrb[0].mxu0
        %v1742 = vpop.f32.mrb[0].mxu0
        %v1743 = vadd.f32 %v649, %v1742
        %v1744 = vpop.f32.mrb[0].mxu0
        %1745 = vmatprep.mubr.bf16.mxu0 0
        %1746 = vmatmul.mubr.bf16.gmra.mrb[0].mxu0 %v1650
        %v1747 = vpop.f32.mrb[0].mxu0
        %v1748 = vadd.f32 %v649, %v1747
        %v1749 = vpop.f32.mrb[0].mxu0
        %v1750 = vpop.f32.mrb[0].mxu0
        %v1751 = vadd.f32 %v649, %v1750
        %v1752 = vpop.f32.mrb[0].mxu0
        %1753 = vmatprep.mubr.bf16.mxu0 0
        %1754 = vmatmul.mubr.bf16.gmra.mrb[0].mxu0 %v1653
        %v1755 = vpop.f32.mrb[0].mxu0
        %v1756 = vadd.f32 %v649, %v1755
        %v1757 = vpop.f32.mrb[0].mxu0
        %v1758 = vpop.f32.mrb[0].mxu0
        %v1759 = vadd.f32 %v649, %v1758
        %v1760 = vpop.f32.mrb[0].mxu0
        %1761 = vmatprep.mubr.bf16.mxu0 0
        %1762 = vmatmul.mubr.bf16.gmra.mrb[0].mxu0 %v1656
        %v1763 = vpop.f32.mrb[0].mxu0
        %v1764 = vadd.f32 %v649, %v1763
        %v1765 = vpop.f32.mrb[0].mxu0
        %v1766 = vpop.f32.mrb[0].mxu0
        %v1767 = vadd.f32 %v649, %v1766
        %v1768 = vpop.f32.mrb[0].mxu0
        %1769 = vmatprep.mubr.bf16.mxu0 0
        %1770 = vmatmul.mubr.bf16.gmra.mrb[0].mxu0 %v1659
        %v1771 = vpop.f32.mrb[0].mxu0
        %v1772 = vadd.f32 %v649, %v1771
        %v1773 = vpop.f32.mrb[0].mxu0
        %v1774 = vpop.f32.mrb[0].mxu0
        %v1775 = vadd.f32 %v649, %v1774
        %v1776 = vpop.f32.mrb[0].mxu0
        %1777 = vmatprep.mubr.bf16.mxu0 0
        %1778 = vmatmul.mubr.bf16.gmra.mrb[0].mxu0 %v1662
        %v1779 = vpop.f32.mrb[0].mxu0
        %v1780 = vadd.f32 %v649, %v1779
        %v1781 = vpop.f32.mrb[0].mxu0
        %v1782 = vpop.f32.mrb[0].mxu0
        %v1783 = vadd.f32 %v649, %v1782
        %v1784 = vpop.f32.mrb[0].mxu0
        %1785 = vmatprep.mubr.bf16.mxu0 0
        %1786 = vmatmul.mubr.bf16.gmra.mrb[0].mxu0 %v1665
        %v1787 = vpop.f32.mrb[0].mxu0
        %v1788 = vadd.f32 %v649, %v1787
        %v1789 = vpop.f32.mrb[0].mxu0
        %v1790 = vpop.f32.mrb[0].mxu0
        %v1791 = vadd.f32 %v649, %v1790
        %v1792 = vpop.f32.mrb[0].mxu0
        %1793 = vmatprep.mubr.bf16.mxu0 0
        %1794 = vmatmul.mubr.bf16.gmra.mrb[0].mxu0 %v1668
        %v1795 = vpop.f32.mrb[0].mxu0
        %v1796 = vadd.f32 %v649, %v1795
        %v1797 = vpop.f32.mrb[0].mxu0
        %v1798 = vpop.f32.mrb[0].mxu0
        %v1799 = vadd.f32 %v649, %v1798
        %v1800 = vpop.f32.mrb[0].mxu0
        %1801 = vmatprep.mubr.bf16.mxu0 0
        %1802 = vmatmul.mubr.bf16.gmra.mrb[0].mxu0 %v1671
        %v1803 = vpop.f32.mrb[0].mxu0
        %v1804 = vadd.f32 %v649, %v1803
        %v1805 = vpop.f32.mrb[0].mxu0
        %v1806 = vpop.f32.mrb[0].mxu0
        %v1807 = vpop.f32.mrb[0].mxu0
        %1808 = vdwg.mxu0
        %v1809 = vmax.f32 %v1708, 0.0
        %v1810 = vmax.f32 %v1711, 0.0
        %v1811 = vmax.f32 %v1716, 0.0
        %v1812 = vmax.f32 %v1719, 0.0
        %v1813 = vmax.f32 %v1724, 0.0
        %v1814 = vmax.f32 %v1727, 0.0
        %v1815 = vmax.f32 %v1732, 0.0
        %v1816 = vmax.f32 %v1735, 0.0
        %v1817 = vmax.f32 %v1740, 0.0
        %v1818 = vmax.f32 %v1743, 0.0
        %v1819 = vmax.f32 %v1748, 0.0
        %v1820 = vmax.f32 %v1751, 0.0
        %v1821 = vmax.f32 %v1756, 0.0
        %v1822 = vmax.f32 %v1759, 0.0
        %v1823 = vmax.f32 %v1764, 0.0
        %v1824 = vmax.f32 %v1767, 0.0
        %v1825 = vmax.f32 %v1772, 0.0
        %v1826 = vmax.f32 %v1775, 0.0
        %v1827 = vmax.f32 %v1780, 0.0
        %v1828 = vmax.f32 %v1783, 0.0
        %v1829 = vmax.f32 %v1788, 0.0
        %v1830 = vmax.f32 %v1791, 0.0
        %v1831 = vmax.f32 %v1796, 0.0
        %v1832 = vmax.f32 %v1799, 0.0
        %v1833 = vmax.f32 %v1804, 0.0
        %v1834 = vmax.f32 %v1520, %v1809
        %v1835 = vmax.f32 %v1521, %v1810
        %v1836 = vmax.f32 %v1522, %v1811
        %v1837 = vmax.f32 %v1523, %v1812
        %v1838 = vmax.f32 %v1524, %v1813
        %v1839 = vmax.f32 %v1525, %v1814
        %v1840 = vmax.f32 %v1526, %v1815
        %v1841 = vmax.f32 %v1527, %v1816
        %v1842 = vmax.f32 %v1528, %v1817
        %v1843 = vmax.f32 %v1529, %v1818
        %v1844 = vmax.f32 %v1530, %v1819
        %v1845 = vmax.f32 %v1531, %v1820
        %v1846 = vmax.f32 %v1532, %v1821
        %v1847 = vmax.f32 %v1533, %v1822
        %v1848 = vmax.f32 %v1534, %v1823
        %v1849 = vmax.f32 %v1535, %v1824
        %v1850 = vmax.f32 %v1536, %v1825
        %v1851 = vmax.f32 %v1537, %v1826
        %v1852 = vmax.f32 %v1538, %v1827
        %v1853 = vmax.f32 %v1539, %v1828
        %v1854 = vmax.f32 %v1540, %v1829
        %v1855 = vmax.f32 %v1541, %v1830
        %v1856 = vmax.f32 %v1542, %v1831
        %v1857 = vmax.f32 %v1543, %v1832
        %v1858 = vmax.f32 %v1544, %v1833
        %v1859 = vmax.f32 %v1231, %v1834
        %v1860 = vmax.f32 %v1232, %v1835
        %v1861 = vmax.f32 %v1233, %v1836
        %v1862 = vmax.f32 %v1234, %v1837
        %v1863 = vmax.f32 %v1235, %v1838
        %v1864 = vmax.f32 %v1236, %v1839
        %v1865 = vmax.f32 %v1237, %v1840
        %v1866 = vmax.f32 %v1238, %v1841
        %v1867 = vmax.f32 %v1239, %v1842
        %v1868 = vmax.f32 %v1240, %v1843
        %v1869 = vmax.f32 %v1241, %v1844
        %v1870 = vmax.f32 %v1242, %v1845
        %v1871 = vmax.f32 %v1243, %v1846
        %v1872 = vmax.f32 %v1244, %v1847
        %v1873 = vmax.f32 %v1245, %v1848
        %v1874 = vmax.f32 %v1246, %v1849
        %v1875 = vmax.f32 %v1247, %v1850
        %v1876 = vmax.f32 %v1248, %v1851
        %v1877 = vmax.f32 %v1249, %v1852
        %v1878 = vmax.f32 %v1250, %v1853
        %v1879 = vmax.f32 %v1251, %v1854
        %v1880 = vmax.f32 %v1252, %v1855
        %v1881 = vmax.f32 %v1253, %v1856
        %v1882 = vmax.f32 %v1254, %v1857
        %v1883 = vmax.f32 %v1255, %v1858
        %v1884 = vpack.c.bf16 %v1860, %v1859
        %v1885 = vpack.c.bf16 %v1862, %v1861
        %v1886 = vpack.c.bf16 %v1864, %v1863
        %v1887 = vpack.c.bf16 %v1866, %v1865
        %v1888 = vpack.c.bf16 %v1868, %v1867
        %v1889 = vpack.c.bf16 %v1870, %v1869
        %v1890 = vpack.c.bf16 %v1872, %v1871
        %v1891 = vpack.c.bf16 %v1874, %v1873
        %v1892 = vpack.c.bf16 %v1876, %v1875
        %v1893 = vpack.c.bf16 %v1878, %v1877
        %v1894 = vpack.c.bf16 %v1880, %v1879
        %v1895 = vpack.c.bf16 %v1882, %v1881
        %v1896 = vpack.c.bf16 %v1883, %v1883
        %v1910 = vunpack.c.l.b16 %v1884
        %v1911 = vunpack.c.h.b16 %v1884
        %v1912 = vunpack.c.l.b16 %v1885
        %v1913 = vunpack.c.h.b16 %v1885
        %v1914 = vunpack.c.l.b16 %v1886
        %v1915 = vunpack.c.h.b16 %v1886
        %v1916 = vunpack.c.l.b16 %v1887
        %v1917 = vunpack.c.h.b16 %v1887
        %v1918 = vunpack.c.l.b16 %v1888
        %v1919 = vunpack.c.h.b16 %v1888
        %v1920 = vunpack.c.l.b16 %v1889
        %v1921 = vunpack.c.h.b16 %v1889
        %v1922 = vunpack.c.l.b16 %v1890
        %v1923 = vunpack.c.h.b16 %v1890
        %v1924 = vunpack.c.l.b16 %v1891
        %v1925 = vunpack.c.h.b16 %v1891
        %v1926 = vunpack.c.l.b16 %v1892
        %v1927 = vunpack.c.h.b16 %v1892
        %v1928 = vunpack.c.l.b16 %v1893
        %v1929 = vunpack.c.h.b16 %v1893
        %v1930 = vunpack.c.l.b16 %v1894
        %v1931 = vunpack.c.h.b16 %v1894
        %v1932 = vunpack.c.l.b16 %v1895
        %v1933 = vunpack.c.h.b16 %v1895
        %v1934 = vunpack.c.l.b16 %v1896
        %v1935 = vpack.c.b16 %v1910, %v1910
        %v1936 = vpack.c.b16 %v1911, %v1911
        %v1937 = vpack.c.b16 %v1912, %v1912
        %v1938 = vpack.c.b16 %v1913, %v1913
        %v1939 = vpack.c.b16 %v1914, %v1914
        %v1940 = vpack.c.b16 %v1915, %v1915
        %v1941 = vpack.c.b16 %v1916, %v1916
        %v1942 = vpack.c.b16 %v1917, %v1917
        %v1943 = vpack.c.b16 %v1918, %v1918
        %v1944 = vpack.c.b16 %v1919, %v1919
        %v1945 = vpack.c.b16 %v1920, %v1920
        %v1946 = vpack.c.b16 %v1921, %v1921
        %v1947 = vpack.c.b16 %v1922, %v1922
        %v1948 = vpack.c.b16 %v1923, %v1923
        %v1949 = vpack.c.b16 %v1924, %v1924
        %v1950 = vpack.c.b16 %v1925, %v1925
        %v1951 = vpack.c.b16 %v1926, %v1926
        %v1952 = vpack.c.b16 %v1927, %v1927
        %v1953 = vpack.c.b16 %v1928, %v1928
        %v1954 = vpack.c.b16 %v1929, %v1929
        %v1955 = vpack.c.b16 %v1930, %v1930
        %v1956 = vpack.c.b16 %v1931, %v1931
        %v1957 = vpack.c.b16 %v1932, %v1932
        %v1958 = vpack.c.b16 %v1933, %v1933
        %v1959 = vpack.c.b16 %v1934, %v1934
        %1985 = vst [vmem:[%s609] sm:$0xf] %v1935
        %1986 = vst [vmem:[%s609 + $0x4] sm:$0xf] %v1936
        %1987 = vst [vmem:[%s609 + $0x8] sm:$0xf] %v1937
        %1988 = vst [vmem:[%s609 + $0xc] sm:$0xf] %v1938
        %1989 = vst [vmem:[%s609 + $0x10] sm:$0xf] %v1939
        %1990 = vst [vmem:[%s609 + $0x14] sm:$0xf] %v1940
        %1991 = vst [vmem:[%s609 + $0x18] sm:$0xf] %v1941
        %1992 = vst [vmem:[%s609 + $0x1c] sm:$0xf] %v1942
        %1993 = vst [vmem:[%s609 + $0x20] sm:$0xf] %v1943
        %1994 = vst [vmem:[%s609 + $0x24] sm:$0xf] %v1944
        %1995 = vst [vmem:[%s609 + $0x28] sm:$0xf] %v1945
        %1996 = vst [vmem:[%s609 + $0x2c] sm:$0xf] %v1946
        %1997 = vst [vmem:[%s609 + $0x30] sm:$0xf] %v1947
        %1998 = vst [vmem:[%s609 + $0x34] sm:$0xf] %v1948
        %1999 = vst [vmem:[%s609 + $0x38] sm:$0xf] %v1949
        %2000 = vst [vmem:[%s609 + $0x3c] sm:$0xf] %v1950
        %2001 = vst [vmem:[%s609 + $0x40] sm:$0xf] %v1951
        %2002 = vst [vmem:[%s609 + $0x44] sm:$0xf] %v1952
        %2003 = vst [vmem:[%s609 + $0x48] sm:$0xf] %v1953
        %2004 = vst [vmem:[%s609 + $0x4c] sm:$0xf] %v1954
        %2005 = vst [vmem:[%s609 + $0x50] sm:$0xf] %v1955
        %2006 = vst [vmem:[%s609 + $0x54] sm:$0xf] %v1956
        %2007 = vst [vmem:[%s609 + $0x58] sm:$0xf] %v1957
        %2008 = vst [vmem:[%s609 + $0x5c] sm:$0xf] %v1958
        %2009 = vst [vmem:[%s609 + $0x60] sm:$0xf] %v1959
        %s2010 = smul.u32 25, %s14
        %p2011 = scmp.lt.s32.totalorder %s2010, 49
        %s2012 = scalar_select %p2011, %s2010, 49
        %s2013 = smul.addr %s2012, 4
        %s2014 = scalar_lea.vmem %s3, %s2013
        // Predicated region
        $region74: #{siamese_forward.3} parent=68 // pred_check
          %p2015 = pneg %p100
        $region75: #{siamese_forward.3} parent=68 // pred_check_branch
          %2017 = sbr.rel (%p2015) target = $region77
        $region76: #{siamese_forward.3} parent=68 // pred_region
          %s2018 = smul.u32 25, %s14
        $region77: #{siamese_forward.3} parent=68 // pred_fallthru
          _
      $region69: #{siamese_forward.3} parent=5 // pred_fallthru
        _
      %p2019 = scmp.le.s32.totalorder 2, %s9
      // Predicated region
      $region78: #{siamese_forward.3} parent=5 // pred_check
        %p2020 = pneg %p2019
      $region79: #{siamese_forward.3} parent=5 // pred_check_branch
        %2022 = sbr.rel (%p2020) target = $region81
      $region80: #{siamese_forward.3} parent=5 // pred_region
        %s2023 = ssub.s32 %s9, 2
        // Predicated region
        $region82: #{siamese_forward.3} parent=80 // pred_check
          %p2024 = pneg %p106
        $region83: #{siamese_forward.3} parent=80 // pred_check_branch
          %2026 = sbr.rel (%p2024) target = $region85
        $region84: #{siamese_forward.3} parent=80 // pred_region
          %s2027 = smul.u32 25, %s15
          %p2028 = scmp.lt.s32.totalorder %s2027, 49
          %s2029 = scalar_select %p2028, %s2027, 49
          %s2030 = smul.addr %s2029, 4
          %s2031 = scalar_lea.vmem %s3, %s2030
        $region85: #{siamese_forward.3} parent=80 // pred_fallthru
          _
      $region81: #{siamese_forward.3} parent=5 // pred_fallthru
        _
    $region6: #{siamese_forward.3} parent=1 // loop_footer
      %s13 = sadd.s32 1, %s9
    $region7: #{siamese_forward.3} parent=1 // loop_footer_branch
      %8 = sbr.rel target = $region3
    $region8: #{siamese_forward.3} parent=1 // loop_exit
      _

// kernel: siamese_forward.5
$region0: #{siamese_forward.5}
  #allocation0 [shape = 'u32[]', space=smem, size = 0x4, offset = 0x4, fixed_abs, tag = 'smem constant byte address 0x4 - core index']
  #allocation1 [shape = 'u32[144,128]{1,0:T(1,128)}', space=vmem, size = 0x12000, scoped, tag = 'internal scratch']
  %s0 = inlined_call_operand.vmem [shape: bf16[2,2,1728], index: 0, kind: input, shape index: {}]
  %s1 = inlined_call_operand.vmem [shape: bf16[1728,256], index: 1, kind: input, shape index: {}]
  %s2 = inlined_call_operand.vmem [shape: f32[1,256], index: 2, kind: input, shape index: {}]
  %s3 = inlined_call_operand.vmem [shape: bf16[2,256,512], index: 3, kind: input, shape index: {}]
  %s4 = inlined_call_operand.vmem [shape: f32[1,512], index: 4, kind: input, shape index: {}]
  %s5 = inlined_call_operand.hbm [shape: f32[2,512], index: 5, kind: output, shape index: {}]
  %s6 = sld [smem:[#allocation0]]
  $region30: #{siamese_forward.5} parent=0
    _
  %s8 = ssub.s32 1, %s6
  %s9 = scalar_select 0, %s8, %s6
  $region1: #{siamese_forward.5} parent=0
    #allocation2 [shape = 'u8[4096]{0}', space=vmem, size = 0x1000, scoped, tag = 'output window, operand 0, single buffered']
    #allocation3 [shape = 's32[1]{0}', space=sflag, size = 0x4, scoped, tag = 'scoped memory for siamese_forward.5']
    %10 = vsyncpa [#allocation3], 0
    // Predicated region
    $region2: #{siamese_forward.5} parent=1 // pred_check
      _
    $region3: #{siamese_forward.5} parent=1 // pred_check_branch
      %12 = sbr.rel (0) target = $region5
    $region4: #{siamese_forward.5} parent=1 // pred_region
      _
    $region5: #{siamese_forward.5} parent=1 // pred_fallthru
      _
    // Predicated region
    $region6: #{siamese_forward.5} parent=1 // pred_check
      _
    $region7: #{siamese_forward.5} parent=1 // pred_check_branch
      %14 = sbr.rel (0) target = $region9
    $region8: #{siamese_forward.5} parent=1 // pred_region
      _
    $region9: #{siamese_forward.5} parent=1 // pred_fallthru
      _
    // Predicated region
    $region10: #{siamese_forward.5} parent=1 // pred_check
      _
    $region11: #{siamese_forward.5} parent=1 // pred_check_branch
      %16 = sbr.rel (0) target = $region13
    $region12: #{siamese_forward.5} parent=1 // pred_region
      _
    $region13: #{siamese_forward.5} parent=1 // pred_fallthru
      _
    // Predicated region
    $region14: #{siamese_forward.5} parent=1 // pred_check
      _
    $region15: #{siamese_forward.5} parent=1 // pred_check_branch
      %18 = sbr.rel (0) target = $region17
    $region16: #{siamese_forward.5} parent=1 // pred_region
      _
    $region17: #{siamese_forward.5} parent=1 // pred_fallthru
      _
    // Predicated region
    $region18: #{siamese_forward.5} parent=1 // pred_check
      _
    $region19: #{siamese_forward.5} parent=1 // pred_check_branch
      %20 = sbr.rel (0) target = $region21
    $region20: #{siamese_forward.5} parent=1 // pred_region
      _
    $region21: #{siamese_forward.5} parent=1 // pred_fallthru
      _
    %v22 = vld [vmem:[%s1] sm:$0xff]
    %v23 = vld [vmem:[%s1 + $0x8] sm:$0xff]
    %v24 = vld [vmem:[%s1 + $0x10] sm:$0xff]
    %v25 = vld [vmem:[%s1 + $0x18] sm:$0xff]
    %v26 = vld [vmem:[%s1 + $0x20] sm:$0xff]
    %v27 = vld [vmem:[%s1 + $0x28] sm:$0xff]
    %v28 = vld [vmem:[%s1 + $0x30] sm:$0xff]
    %v29 = vld [vmem:[%s1 + $0x38] sm:$0xff]
    %v30 = vld [vmem:[%s1 + $0x40] sm:$0xff]
    %v31 = vld [vmem:[%s1 + $0x48] sm:$0xff]
    %v32 = vld [vmem:[%s1 + $0x50] sm:$0xff]
    %v33 = vld [vmem:[%s1 + $0x58] sm:$0xff]
    %v34 = vld [vmem:[%s1 + $0x60] sm:$0xff]
    %v35 = vld [vmem:[%s1 + $0x68] sm:$0xff]
    %v36 = vld [vmem:[%s1 + $0x70] sm:$0xff]
    %v37 = vld [vmem:[%s1 + $0x78] sm:$0xff]
    %v38 = vld [vmem:[%s1 + $0x80] sm:$0xff]
    %v39 = vld [vmem:[%s1 + $0x88] sm:$0xff]
    %v40 = vld [vmem:[%s1 + $0x90] sm:$0xff]
    %v41 = vld [vmem:[%s1 + $0x98] sm:$0xff]
    %v42 = vld [vmem:[%s1 + $0xa0] sm:$0xff]
    %v43 = vld [vmem:[%s1 + $0xa8] sm:$0xff]
    %v44 = vld [vmem:[%s1 + $0xb0] sm:$0xff]
    %v45 = vld [vmem:[%s1 + $0xb8] sm:$0xff]
    %v46 = vld [vmem:[%s1 + $0xc0] sm:$0xff]
    %v47 = vld [vmem:[%s1 + $0xc8] sm:$0xff]
    %v48 = vld [vmem:[%s1 + $0xd0] sm:$0xff]
    %v49 = vld [vmem:[%s1 + $0xd8] sm:$0xff]
    %v50 = vld [vmem:[%s1 + $0xe0] sm:$0xff]
    %v51 = vld [vmem:[%s1 + $0xe8] sm:$0xff]
    %v52 = vld [vmem:[%s1 + $0xf0] sm:$0xff]
    %v53 = vld [vmem:[%s1 + $0xf8] sm:$0xff]
    %v54 = vld [vmem:[%s1 + $0x100] sm:$0xff]
    %v55 = vld [vmem:[%s1 + $0x108] sm:$0xff]
    %v56 = vld [vmem:[%s1 + $0x110] sm:$0xff]
    %v57 = vld [vmem:[%s1 + $0x118] sm:$0xff]
    %v58 = vld [vmem:[%s1 + $0x120] sm:$0xff]
    %v59 = vld [vmem:[%s1 + $0x128] sm:$0xff]
    %v60 = vld [vmem:[%s1 + $0x130] sm:$0xff]
    %v61 = vld [vmem:[%s1 + $0x138] sm:$0xff]
    %v62 = vld [vmem:[%s1 + $0x140] sm:$0xff]
    %v63 = vld [vmem:[%s1 + $0x148] sm:$0xff]
    %v64 = vld [vmem:[%s1 + $0x150] sm:$0xff]
    %v65 = vld [vmem:[%s1 + $0x158] sm:$0xff]
    %v66 = vld [vmem:[%s1 + $0x160] sm:$0xff]
    %v67 = vld [vmem:[%s1 + $0x168] sm:$0xff]
    %v68 = vld [vmem:[%s1 + $0x170] sm:$0xff]
    %v69 = vld [vmem:[%s1 + $0x178] sm:$0xff]
    %v70 = vld [vmem:[%s1 + $0x180] sm:$0xff]
    %v71 = vld [vmem:[%s1 + $0x188] sm:$0xff]
    %v72 = vld [vmem:[%s1 + $0x190] sm:$0xff]
    %v73 = vld [vmem:[%s1 + $0x198] sm:$0xff]
    %v74 = vld [vmem:[%s1 + $0x1a0] sm:$0xff]
    %v75 = vld [vmem:[%s1 + $0x1a8] sm:$0xff]
    %v76 = vld [vmem:[%s1 + $0x1b0] sm:$0xff]
    %v77 = vld [vmem:[%s1 + $0x1b8] sm:$0xff]
    %v78 = vld [vmem:[%s1 + $0x1c0] sm:$0xff]
    %v79 = vld [vmem:[%s1 + $0x1c8] sm:$0xff]
    %v80 = vld [vmem:[%s1 + $0x1d0] sm:$0xff]
    %v81 = vld [vmem:[%s1 + $0x1d8] sm:$0xff]
    %v82 = vld [vmem:[%s1 + $0x1e0] sm:$0xff]
    %v83 = vld [vmem:[%s1 + $0x1e8] sm:$0xff]
    %v84 = vld [vmem:[%s1 + $0x1f0] sm:$0xff]
    %v85 = vld [vmem:[%s1 + $0x1f8] sm:$0xff]
    %v86 = vld [vmem:[%s1 + $0x200] sm:$0xff]
    %v87 = vld [vmem:[%s1 + $0x208] sm:$0xff]
    %v88 = vld [vmem:[%s1 + $0x210] sm:$0xff]
    %v89 = vld [vmem:[%s1 + $0x218] sm:$0xff]
    %v90 = vld [vmem:[%s1 + $0x220] sm:$0xff]
    %v91 = vld [vmem:[%s1 + $0x228] sm:$0xff]
    %v92 = vld [vmem:[%s1 + $0x230] sm:$0xff]
    %v93 = vld [vmem:[%s1 + $0x238] sm:$0xff]
    %v94 = vld [vmem:[%s1 + $0x240] sm:$0xff]
    %v95 = vld [vmem:[%s1 + $0x248] sm:$0xff]
    %v96 = vld [vmem:[%s1 + $0x250] sm:$0xff]
    %v97 = vld [vmem:[%s1 + $0x258] sm:$0xff]
    %v98 = vld [vmem:[%s1 + $0x260] sm:$0xff]
    %v99 = vld [vmem:[%s1 + $0x268] sm:$0xff]
    %v100 = vld [vmem:[%s1 + $0x270] sm:$0xff]
    %v101 = vld [vmem:[%s1 + $0x278] sm:$0xff]
    %v102 = vld [vmem:[%s1 + $0x280] sm:$0xff]
    %v103 = vld [vmem:[%s1 + $0x288] sm:$0xff]
    %v104 = vld [vmem:[%s1 + $0x290] sm:$0xff]
    %v105 = vld [vmem:[%s1 + $0x298] sm:$0xff]
    %v106 = vld [vmem:[%s1 + $0x2a0] sm:$0xff]
    %v107 = vld [vmem:[%s1 + $0x2a8] sm:$0xff]
    %v108 = vld [vmem:[%s1 + $0x2b0] sm:$0xff]
    %v109 = vld [vmem:[%s1 + $0x2b8] sm:$0xff]
    %v110 = vld [vmem:[%s1 + $0x2c0] sm:$0xff]
    %v111 = vld [vmem:[%s1 + $0x2c8] sm:$0xff]
    %v112 = vld [vmem:[%s1 + $0x2d0] sm:$0xff]
    %v113 = vld [vmem:[%s1 + $0x2d8] sm:$0xff]
    %v114 = vld [vmem:[%s1 + $0x2e0] sm:$0xff]
    %v115 = vld [vmem:[%s1 + $0x2e8] sm:$0xff]
    %v116 = vld [vmem:[%s1 + $0x2f0] sm:$0xff]
    %v117 = vld [vmem:[%s1 + $0x2f8] sm:$0xff]
    %v118 = vld [vmem:[%s1 + $0x300] sm:$0xff]
    %v119 = vld [vmem:[%s1 + $0x308] sm:$0xff]
    %v120 = vld [vmem:[%s1 + $0x310] sm:$0xff]
    %v121 = vld [vmem:[%s1 + $0x318] sm:$0xff]
    %v122 = vld [vmem:[%s1 + $0x320] sm:$0xff]
    %v123 = vld [vmem:[%s1 + $0x328] sm:$0xff]
    %v124 = vld [vmem:[%s1 + $0x330] sm:$0xff]
    %v125 = vld [vmem:[%s1 + $0x338] sm:$0xff]
    %v126 = vld [vmem:[%s1 + $0x340] sm:$0xff]
    %v127 = vld [vmem:[%s1 + $0x348] sm:$0xff]
    %v128 = vld [vmem:[%s1 + $0x350] sm:$0xff]
    %v129 = vld [vmem:[%s1 + $0x358] sm:$0xff]
    %v130 = vld [vmem:[%s1 + $0x360] sm:$0xff]
    %v131 = vld [vmem:[%s1 + $0x368] sm:$0xff]
    %v132 = vld [vmem:[%s1 + $0x370] sm:$0xff]
    %v133 = vld [vmem:[%s1 + $0x378] sm:$0xff]
    %v134 = vld [vmem:[%s1 + $0x380] sm:$0xff]
    %v135 = vld [vmem:[%s1 + $0x388] sm:$0xff]
    %v136 = vld [vmem:[%s1 + $0x390] sm:$0xff]
    %v137 = vld [vmem:[%s1 + $0x398] sm:$0xff]
    %v138 = vld [vmem:[%s1 + $0x3a0] sm:$0xff]
    %v139 = vld [vmem:[%s1 + $0x3a8] sm:$0xff]
    %v140 = vld [vmem:[%s1 + $0x3b0] sm:$0xff]
    %v141 = vld [vmem:[%s1 + $0x3b8] sm:$0xff]
    %v142 = vld [vmem:[%s1 + $0x3c0] sm:$0xff]
    %v143 = vld [vmem:[%s1 + $0x3c8] sm:$0xff]
    %v144 = vld [vmem:[%s1 + $0x3d0] sm:$0xff]
    %v145 = vld [vmem:[%s1 + $0x3d8] sm:$0xff]
    %v146 = vld [vmem:[%s1 + $0x3e0] sm:$0xff]
    %v147 = vld [vmem:[%s1 + $0x3e8] sm:$0xff]
    %v148 = vld [vmem:[%s1 + $0x3f0] sm:$0xff]
    %v149 = vld [vmem:[%s1 + $0x3f8] sm:$0xff]
    %v150 = vld [vmem:[%s1 + $0x400] sm:$0xff]
    %v151 = vld [vmem:[%s1 + $0x408] sm:$0xff]
    %v152 = vld [vmem:[%s1 + $0x410] sm:$0xff]
    %v153 = vld [vmem:[%s1 + $0x418] sm:$0xff]
    %v154 = vld [vmem:[%s1 + $0x420] sm:$0xff]
    %v155 = vld [vmem:[%s1 + $0x428] sm:$0xff]
    %v156 = vld [vmem:[%s1 + $0x430] sm:$0xff]
    %v157 = vld [vmem:[%s1 + $0x438] sm:$0xff]
    %v158 = vld [vmem:[%s1 + $0x440] sm:$0xff]
    %v159 = vld [vmem:[%s1 + $0x448] sm:$0xff]
    %v160 = vld [vmem:[%s1 + $0x450] sm:$0xff]
    %v161 = vld [vmem:[%s1 + $0x458] sm:$0xff]
    %v162 = vld [vmem:[%s1 + $0x460] sm:$0xff]
    %v163 = vld [vmem:[%s1 + $0x468] sm:$0xff]
    %v164 = vld [vmem:[%s1 + $0x470] sm:$0xff]
    %v165 = vld [vmem:[%s1 + $0x478] sm:$0xff]
    %v166 = vld [vmem:[%s1 + $0x480] sm:$0xff]
    %v167 = vld [vmem:[%s1 + $0x488] sm:$0xff]
    %v168 = vld [vmem:[%s1 + $0x490] sm:$0xff]
    %v169 = vld [vmem:[%s1 + $0x498] sm:$0xff]
    %v170 = vld [vmem:[%s1 + $0x4a0] sm:$0xff]
    %v171 = vld [vmem:[%s1 + $0x4a8] sm:$0xff]
    %v172 = vld [vmem:[%s1 + $0x4b0] sm:$0xff]
    %v173 = vld [vmem:[%s1 + $0x4b8] sm:$0xff]
    %v174 = vld [vmem:[%s1 + $0x4c0] sm:$0xff]
    %v175 = vld [vmem:[%s1 + $0x4c8] sm:$0xff]
    %v176 = vld [vmem:[%s1 + $0x4d0] sm:$0xff]
    %v177 = vld [vmem:[%s1 + $0x4d8] sm:$0xff]
    %v178 = vld [vmem:[%s1 + $0x4e0] sm:$0xff]
    %v179 = vld [vmem:[%s1 + $0x4e8] sm:$0xff]
    %v180 = vld [vmem:[%s1 + $0x4f0] sm:$0xff]
    %v181 = vld [vmem:[%s1 + $0x4f8] sm:$0xff]
    %v182 = vld [vmem:[%s1 + $0x500] sm:$0xff]
    %v183 = vld [vmem:[%s1 + $0x508] sm:$0xff]
    %v184 = vld [vmem:[%s1 + $0x510] sm:$0xff]
    %v185 = vld [vmem:[%s1 + $0x518] sm:$0xff]
    %v186 = vld [vmem:[%s1 + $0x520] sm:$0xff]
    %v187 = vld [vmem:[%s1 + $0x528] sm:$0xff]
    %v188 = vld [vmem:[%s1 + $0x530] sm:$0xff]
    %v189 = vld [vmem:[%s1 + $0x538] sm:$0xff]
    %v190 = vld [vmem:[%s1 + $0x540] sm:$0xff]
    %v191 = vld [vmem:[%s1 + $0x548] sm:$0xff]
    %v192 = vld [vmem:[%s1 + $0x550] sm:$0xff]
    %v193 = vld [vmem:[%s1 + $0x558] sm:$0xff]
    %v194 = vld [vmem:[%s1 + $0x560] sm:$0xff]
    %v195 = vld [vmem:[%s1 + $0x568] sm:$0xff]
    %v196 = vld [vmem:[%s1 + $0x570] sm:$0xff]
    %v197 = vld [vmem:[%s1 + $0x578] sm:$0xff]
    %v198 = vld [vmem:[%s1 + $0x580] sm:$0xff]
    %v199 = vld [vmem:[%s1 + $0x588] sm:$0xff]
    %v200 = vld [vmem:[%s1 + $0x590] sm:$0xff]
    %v201 = vld [vmem:[%s1 + $0x598] sm:$0xff]
    %v202 = vld [vmem:[%s1 + $0x5a0] sm:$0xff]
    %v203 = vld [vmem:[%s1 + $0x5a8] sm:$0xff]
    %v204 = vld [vmem:[%s1 + $0x5b0] sm:$0xff]
    %v205 = vld [vmem:[%s1 + $0x5b8] sm:$0xff]
    %v206 = vld [vmem:[%s1 + $0x5c0] sm:$0xff]
    %v207 = vld [vmem:[%s1 + $0x5c8] sm:$0xff]
    %v208 = vld [vmem:[%s1 + $0x5d0] sm:$0xff]
    %v209 = vld [vmem:[%s1 + $0x5d8] sm:$0xff]
    %v210 = vld [vmem:[%s1 + $0x5e0] sm:$0xff]
    %v211 = vld [vmem:[%s1 + $0x5e8] sm:$0xff]
    %v212 = vld [vmem:[%s1 + $0x5f0] sm:$0xff]
    %v213 = vld [vmem:[%s1 + $0x5f8] sm:$0xff]
    %v214 = vld [vmem:[%s1 + $0x600] sm:$0xff]
    %v215 = vld [vmem:[%s1 + $0x608] sm:$0xff]
    %v216 = vld [vmem:[%s1 + $0x610] sm:$0xff]
    %v217 = vld [vmem:[%s1 + $0x618] sm:$0xff]
    %v218 = vld [vmem:[%s1 + $0x620] sm:$0xff]
    %v219 = vld [vmem:[%s1 + $0x628] sm:$0xff]
    %v220 = vld [vmem:[%s1 + $0x630] sm:$0xff]
    %v221 = vld [vmem:[%s1 + $0x638] sm:$0xff]
    %v222 = vld [vmem:[%s1 + $0x640] sm:$0xff]
    %v223 = vld [vmem:[%s1 + $0x648] sm:$0xff]
    %v224 = vld [vmem:[%s1 + $0x650] sm:$0xff]
    %v225 = vld [vmem:[%s1 + $0x658] sm:$0xff]
    %v226 = vld [vmem:[%s1 + $0x660] sm:$0xff]
    %v227 = vld [vmem:[%s1 + $0x668] sm:$0xff]
    %v228 = vld [vmem:[%s1 + $0x670] sm:$0xff]
    %v229 = vld [vmem:[%s1 + $0x678] sm:$0xff]
    %v230 = vld [vmem:[%s1 + $0x680] sm:$0xff]
    %v231 = vld [vmem:[%s1 + $0x688] sm:$0xff]
    %v232 = vld [vmem:[%s1 + $0x690] sm:$0xff]
    %v233 = vld [vmem:[%s1 + $0x698] sm:$0xff]
    %v234 = vld [vmem:[%s1 + $0x6a0] sm:$0xff]
    %v235 = vld [vmem:[%s1 + $0x6a8] sm:$0xff]
    %v236 = vld [vmem:[%s1 + $0x6b0] sm:$0xff]
    %v237 = vld [vmem:[%s1 + $0x6b8] sm:$0xff]
    %v238 = vld [vmem:[%s2] sm:$0x3]
    %v239 = vld [vmem:[%s0] sm:$0xff]
    %v240 = vld [vmem:[%s0 + $0x8] sm:$0x3f]
    %v242 = vlaneseq
    %v243 = vshrl.u32 %v242, 7
    %v244 = vsub.s32 0, %v243
    %v245 = vrot.slane %v238, %v244
    %v246 = vlaneseq
    %v247 = vshrl.u32 %v246, 7
    %v248 = vsub.s32 1, %v247
    %v249 = vrot.slane %v238, %v248
    %v254 = vcombine.high %v239, %v239
    %v256 = vunpack.c.l.s4 1966171168
    %v257 = vunpack.c.0.s8 %v256
    %v258 = vlaneseq
    %v259 = vshrl.u32 %v258, 7
    %v260 = vsub.s32 %v257, %v259
    %v261 = vrot.slane %v239, %v260
    %v263 = vunpack.c.l.s4 1966171168
    %v264 = vunpack.c.0.s8 %v263
    %v265 = vlaneseq
    %v266 = vshrl.u32 %v265, 7
    %v267 = vsub.s32 %v264, %v266
    %v268 = vrot.slane %v254, %v267
    %v269 = vcombine.high %v261, %v261
    %v270 = vcombine.high %v268, %v268
    %v272 = vunpack.c.l.s4 1966171168
    %v273 = vunpack.c.0.s8 %v272
    %v274 = vlaneseq
    %v275 = vshrl.u32 %v274, 7
    %v276 = vsub.s32 %v273, %v275
    %v277 = vrot.slane %v261, %v276
    %v279 = vunpack.c.l.s4 1966171168
    %v280 = vunpack.c.0.s8 %v279
    %v281 = vlaneseq
    %v282 = vshrl.u32 %v281, 7
    %v283 = vsub.s32 %v280, %v282
    %v284 = vrot.slane %v268, %v283
    %v286 = vunpack.c.l.s4 1966171168
    %v287 = vunpack.c.0.s8 %v286
    %v288 = vlaneseq
    %v289 = vshrl.u32 %v288, 7
    %v290 = vsub.s32 %v287, %v289
    %v291 = vrot.slane %v269, %v290
    %v293 = vunpack.c.l.s4 1966171168
    %v294 = vunpack.c.0.s8 %v293
    %v295 = vlaneseq
    %v296 = vshrl.u32 %v295, 7
    %v297 = vsub.s32 %v294, %v296
    %v298 = vrot.slane %v270, %v297
    %v299 = vcombine.high %v277, %v277
    %v300 = vcombine.high %v284, %v284
    %v301 = vcombine.high %v291, %v291
    %v302 = vcombine.high %v298, %v298
    %v303 = vcombine.high %v240, %v240
    %v305 = vunpack.c.l.s4 1966171168
    %v306 = vunpack.c.0.s8 %v305
    %v307 = vlaneseq
    %v308 = vshrl.u32 %v307, 7
    %v309 = vsub.s32 %v306, %v308
    %v310 = vrot.slane %v240, %v309
    %v312 = vunpack.c.l.s4 1966171168
    %v313 = vunpack.c.0.s8 %v312
    %v314 = vlaneseq
    %v315 = vshrl.u32 %v314, 7
    %v316 = vsub.s32 %v313, %v315
    %v317 = vrot.slane %v303, %v316
    %v318 = vcombine.high %v310, %v310
    %v319 = vcombine.high %v317, %v317
    %v321 = vunpack.c.l.s4 1966171168
    %v322 = vunpack.c.0.s8 %v321
    %v323 = vlaneseq
    %v324 = vshrl.u32 %v323, 7
    %v325 = vsub.s32 %v322, %v324
    %v326 = vrot.slane %v310, %v325
    %v328 = vunpack.c.l.s4 1966171168
    %v329 = vunpack.c.0.s8 %v328
    %v330 = vlaneseq
    %v331 = vshrl.u32 %v330, 7
    %v332 = vsub.s32 %v329, %v331
    %v333 = vrot.slane %v317, %v332
    %v335 = vunpack.c.l.s4 1966171168
    %v336 = vunpack.c.0.s8 %v335
    %v337 = vlaneseq
    %v338 = vshrl.u32 %v337, 7
    %v339 = vsub.s32 %v336, %v338
    %v340 = vrot.slane %v318, %v339
    %v342 = vunpack.c.l.s4 1966171168
    %v343 = vunpack.c.0.s8 %v342
    %v344 = vlaneseq
    %v345 = vshrl.u32 %v344, 7
    %v346 = vsub.s32 %v343, %v345
    %v347 = vrot.slane %v319, %v346
    %v348 = vcombine.high %v326, %v326
    %v349 = vcombine.high %v340, %v340
    %v579 = vunpack.c.l.b16 %v22
    %v580 = vunpack.c.h.b16 %v22
    %v581 = vunpack.c.l.b16 %v23
    %v582 = vunpack.c.h.b16 %v23
    %v583 = vunpack.c.l.b16 %v24
    %v584 = vunpack.c.h.b16 %v24
    %v585 = vunpack.c.l.b16 %v25
    %v586 = vunpack.c.h.b16 %v25
    %v587 = vunpack.c.l.b16 %v26
    %v588 = vunpack.c.h.b16 %v26
    %v589 = vunpack.c.l.b16 %v27
    %v590 = vunpack.c.h.b16 %v27
    %v591 = vunpack.c.l.b16 %v28
    %v592 = vunpack.c.h.b16 %v28
    %v593 = vunpack.c.l.b16 %v29
    %v594 = vunpack.c.h.b16 %v29
    %v595 = vunpack.c.l.b16 %v30
    %v596 = vunpack.c.h.b16 %v30
    %v597 = vunpack.c.l.b16 %v31
    %v598 = vunpack.c.h.b16 %v31
    %v599 = vunpack.c.l.b16 %v32
    %v600 = vunpack.c.h.b16 %v32
    %v601 = vunpack.c.l.b16 %v33
    %v602 = vunpack.c.h.b16 %v33
    %v603 = vunpack.c.l.b16 %v34
    %v604 = vunpack.c.h.b16 %v34
    %v605 = vunpack.c.l.b16 %v35
    %v606 = vunpack.c.h.b16 %v35
    %v607 = vunpack.c.l.b16 %v36
    %v608 = vunpack.c.h.b16 %v36
    %v609 = vunpack.c.l.b16 %v37
    %v610 = vunpack.c.h.b16 %v37
    %v611 = vunpack.c.l.b16 %v38
    %v612 = vunpack.c.h.b16 %v38
    %v613 = vunpack.c.l.b16 %v39
    %v614 = vunpack.c.h.b16 %v39
    %v615 = vunpack.c.l.b16 %v40
    %v616 = vunpack.c.h.b16 %v40
    %v617 = vunpack.c.l.b16 %v41
    %v618 = vunpack.c.h.b16 %v41
    %v619 = vunpack.c.l.b16 %v42
    %v620 = vunpack.c.h.b16 %v42
    %v621 = vunpack.c.l.b16 %v43
    %v622 = vunpack.c.h.b16 %v43
    %v623 = vunpack.c.l.b16 %v44
    %v624 = vunpack.c.h.b16 %v44
    %v625 = vunpack.c.l.b16 %v45
    %v626 = vunpack.c.h.b16 %v45
    %v627 = vunpack.c.l.b16 %v46
    %v628 = vunpack.c.h.b16 %v46
    %v629 = vunpack.c.l.b16 %v47
    %v630 = vunpack.c.h.b16 %v47
    %v631 = vunpack.c.l.b16 %v48
    %v632 = vunpack.c.h.b16 %v48
    %v633 = vunpack.c.l.b16 %v49
    %v634 = vunpack.c.h.b16 %v49
    %v635 = vunpack.c.l.b16 %v50
    %v636 = vunpack.c.h.b16 %v50
    %v637 = vunpack.c.l.b16 %v51
    %v638 = vunpack.c.h.b16 %v51
    %v639 = vunpack.c.l.b16 %v52
    %v640 = vunpack.c.h.b16 %v52
    %v641 = vunpack.c.l.b16 %v53
    %v642 = vunpack.c.h.b16 %v53
    %v643 = vunpack.c.l.b16 %v54
    %v644 = vunpack.c.h.b16 %v54
    %v645 = vunpack.c.l.b16 %v55
    %v646 = vunpack.c.h.b16 %v55
    %v647 = vunpack.c.l.b16 %v56
    %v648 = vunpack.c.h.b16 %v56
    %v649 = vunpack.c.l.b16 %v57
    %v650 = vunpack.c.h.b16 %v57
    %v651 = vunpack.c.l.b16 %v58
    %v652 = vunpack.c.h.b16 %v58
    %v653 = vunpack.c.l.b16 %v59
    %v654 = vunpack.c.h.b16 %v59
    %v655 = vunpack.c.l.b16 %v60
    %v656 = vunpack.c.h.b16 %v60
    %v657 = vunpack.c.l.b16 %v61
    %v658 = vunpack.c.h.b16 %v61
    %v659 = vunpack.c.l.b16 %v62
    %v660 = vunpack.c.h.b16 %v62
    %v661 = vunpack.c.l.b16 %v63
    %v662 = vunpack.c.h.b16 %v63
    %v663 = vunpack.c.l.b16 %v64
    %v664 = vunpack.c.h.b16 %v64
    %v665 = vunpack.c.l.b16 %v65
    %v666 = vunpack.c.h.b16 %v65
    %v667 = vunpack.c.l.b16 %v66
    %v668 = vunpack.c.h.b16 %v66
    %v669 = vunpack.c.l.b16 %v67
    %v670 = vunpack.c.h.b16 %v67
    %v671 = vunpack.c.l.b16 %v68
    %v672 = vunpack.c.h.b16 %v68
    %v673 = vunpack.c.l.b16 %v69
    %v674 = vunpack.c.h.b16 %v69
    %v675 = vunpack.c.l.b16 %v70
    %v676 = vunpack.c.h.b16 %v70
    %v677 = vunpack.c.l.b16 %v71
    %v678 = vunpack.c.h.b16 %v71
    %v679 = vunpack.c.l.b16 %v72
    %v680 = vunpack.c.h.b16 %v72
    %v681 = vunpack.c.l.b16 %v73
    %v682 = vunpack.c.h.b16 %v73
    %v683 = vunpack.c.l.b16 %v74
    %v684 = vunpack.c.h.b16 %v74
    %v685 = vunpack.c.l.b16 %v75
    %v686 = vunpack.c.h.b16 %v75
    %v687 = vunpack.c.l.b16 %v76
    %v688 = vunpack.c.h.b16 %v76
    %v689 = vunpack.c.l.b16 %v77
    %v690 = vunpack.c.h.b16 %v77
    %v691 = vunpack.c.l.b16 %v78
    %v692 = vunpack.c.h.b16 %v78
    %v693 = vunpack.c.l.b16 %v79
    %v694 = vunpack.c.h.b16 %v79
    %v695 = vunpack.c.l.b16 %v80
    %v696 = vunpack.c.h.b16 %v80
    %v697 = vunpack.c.l.b16 %v81
    %v698 = vunpack.c.h.b16 %v81
    %v699 = vunpack.c.l.b16 %v82
    %v700 = vunpack.c.h.b16 %v82
    %v701 = vunpack.c.l.b16 %v83
    %v702 = vunpack.c.h.b16 %v83
    %v703 = vunpack.c.l.b16 %v84
    %v704 = vunpack.c.h.b16 %v84
    %v705 = vunpack.c.l.b16 %v85
    %v706 = vunpack.c.h.b16 %v85
    %v707 = vunpack.c.l.b16 %v86
    %v708 = vunpack.c.h.b16 %v86
    %v709 = vunpack.c.l.b16 %v87
    %v710 = vunpack.c.h.b16 %v87
    %v711 = vunpack.c.l.b16 %v88
    %v712 = vunpack.c.h.b16 %v88
    %v713 = vunpack.c.l.b16 %v89
    %v714 = vunpack.c.h.b16 %v89
    %v715 = vunpack.c.l.b16 %v90
    %v716 = vunpack.c.h.b16 %v90
    %v717 = vunpack.c.l.b16 %v91
    %v718 = vunpack.c.h.b16 %v91
    %v719 = vunpack.c.l.b16 %v92
    %v720 = vunpack.c.h.b16 %v92
    %v721 = vunpack.c.l.b16 %v93
    %v722 = vunpack.c.h.b16 %v93
    %v723 = vunpack.c.l.b16 %v94
    %v724 = vunpack.c.h.b16 %v94
    %v725 = vunpack.c.l.b16 %v95
    %v726 = vunpack.c.h.b16 %v95
    %v727 = vunpack.c.l.b16 %v96
    %v728 = vunpack.c.h.b16 %v96
    %v729 = vunpack.c.l.b16 %v97
    %v730 = vunpack.c.h.b16 %v97
    %v731 = vunpack.c.l.b16 %v98
    %v732 = vunpack.c.h.b16 %v98
    %v733 = vunpack.c.l.b16 %v99
    %v734 = vunpack.c.h.b16 %v99
    %v735 = vunpack.c.l.b16 %v100
    %v736 = vunpack.c.h.b16 %v100
    %v737 = vunpack.c.l.b16 %v101
    %v738 = vunpack.c.h.b16 %v101
    %v739 = vunpack.c.l.b16 %v102
    %v740 = vunpack.c.h.b16 %v102
    %v741 = vunpack.c.l.b16 %v103
    %v742 = vunpack.c.h.b16 %v103
    %v743 = vunpack.c.l.b16 %v104
    %v744 = vunpack.c.h.b16 %v104
    %v745 = vunpack.c.l.b16 %v105
    %v746 = vunpack.c.h.b16 %v105
    %v747 = vunpack.c.l.b16 %v106
    %v748 = vunpack.c.h.b16 %v106
    %v749 = vunpack.c.l.b16 %v107
    %v750 = vunpack.c.h.b16 %v107
    %v751 = vunpack.c.l.b16 %v108
    %v752 = vunpack.c.h.b16 %v108
    %v753 = vunpack.c.l.b16 %v109
    %v754 = vunpack.c.h.b16 %v109
    %v755 = vunpack.c.l.b16 %v110
    %v756 = vunpack.c.h.b16 %v110
    %v757 = vunpack.c.l.b16 %v111
    %v758 = vunpack.c.h.b16 %v111
    %v759 = vunpack.c.l.b16 %v112
    %v760 = vunpack.c.h.b16 %v112
    %v761 = vunpack.c.l.b16 %v113
    %v762 = vunpack.c.h.b16 %v113
    %v763 = vunpack.c.l.b16 %v114
    %v764 = vunpack.c.h.b16 %v114
    %v765 = vunpack.c.l.b16 %v115
    %v766 = vunpack.c.h.b16 %v115
    %v767 = vunpack.c.l.b16 %v116
    %v768 = vunpack.c.h.b16 %v116
    %v769 = vunpack.c.l.b16 %v117
    %v770 = vunpack.c.h.b16 %v117
    %v771 = vunpack.c.l.b16 %v118
    %v772 = vunpack.c.h.b16 %v118
    %v773 = vunpack.c.l.b16 %v119
    %v774 = vunpack.c.h.b16 %v119
    %v775 = vunpack.c.l.b16 %v120
    %v776 = vunpack.c.h.b16 %v120
    %v777 = vunpack.c.l.b16 %v121
    %v778 = vunpack.c.h.b16 %v121
    %v779 = vunpack.c.l.b16 %v122
    %v780 = vunpack.c.h.b16 %v122
    %v781 = vunpack.c.l.b16 %v123
    %v782 = vunpack.c.h.b16 %v123
    %v783 = vunpack.c.l.b16 %v124
    %v784 = vunpack.c.h.b16 %v124
    %v785 = vunpack.c.l.b16 %v125
    %v786 = vunpack.c.h.b16 %v125
    %v787 = vunpack.c.l.b16 %v126
    %v788 = vunpack.c.h.b16 %v126
    %v789 = vunpack.c.l.b16 %v127
    %v790 = vunpack.c.h.b16 %v127
    %v791 = vunpack.c.l.b16 %v128
    %v792 = vunpack.c.h.b16 %v128
    %v793 = vunpack.c.l.b16 %v129
    %v794 = vunpack.c.h.b16 %v129
    %v795 = vunpack.c.l.b16 %v130
    %v796 = vunpack.c.h.b16 %v130
    %v797 = vunpack.c.l.b16 %v131
    %v798 = vunpack.c.h.b16 %v131
    %v799 = vunpack.c.l.b16 %v132
    %v800 = vunpack.c.h.b16 %v132
    %v801 = vunpack.c.l.b16 %v133
    %v802 = vunpack.c.h.b16 %v133
    %v803 = vunpack.c.l.b16 %v134
    %v804 = vunpack.c.h.b16 %v134
    %v805 = vunpack.c.l.b16 %v135
    %v806 = vunpack.c.h.b16 %v135
    %v807 = vunpack.c.l.b16 %v136
    %v808 = vunpack.c.h.b16 %v136
    %v809 = vunpack.c.l.b16 %v137
    %v810 = vunpack.c.h.b16 %v137
    %v811 = vunpack.c.l.b16 %v138
    %v812 = vunpack.c.h.b16 %v138
    %v813 = vunpack.c.l.b16 %v139
    %v814 = vunpack.c.h.b16 %v139
    %v815 = vunpack.c.l.b16 %v140
    %v816 = vunpack.c.h.b16 %v140
    %v817 = vunpack.c.l.b16 %v141
    %v818 = vunpack.c.h.b16 %v141
    %v819 = vunpack.c.l.b16 %v142
    %v820 = vunpack.c.h.b16 %v142
    %v821 = vunpack.c.l.b16 %v143
    %v822 = vunpack.c.h.b16 %v143
    %v823 = vunpack.c.l.b16 %v144
    %v824 = vunpack.c.h.b16 %v144
    %v825 = vunpack.c.l.b16 %v145
    %v826 = vunpack.c.h.b16 %v145
    %v827 = vunpack.c.l.b16 %v146
    %v828 = vunpack.c.h.b16 %v146
    %v829 = vunpack.c.l.b16 %v147
    %v830 = vunpack.c.h.b16 %v147
    %v831 = vunpack.c.l.b16 %v148
    %v832 = vunpack.c.h.b16 %v148
    %v833 = vunpack.c.l.b16 %v149
    %v834 = vunpack.c.h.b16 %v149
    %v835 = vunpack.c.l.b16 %v150
    %v836 = vunpack.c.h.b16 %v150
    %v837 = vunpack.c.l.b16 %v151
    %v838 = vunpack.c.h.b16 %v151
    %v839 = vunpack.c.l.b16 %v152
    %v840 = vunpack.c.h.b16 %v152
    %v841 = vunpack.c.l.b16 %v153
    %v842 = vunpack.c.h.b16 %v153
    %v843 = vunpack.c.l.b16 %v154
    %v844 = vunpack.c.h.b16 %v154
    %v845 = vunpack.c.l.b16 %v155
    %v846 = vunpack.c.h.b16 %v155
    %v847 = vunpack.c.l.b16 %v156
    %v848 = vunpack.c.h.b16 %v156
    %v849 = vunpack.c.l.b16 %v157
    %v850 = vunpack.c.h.b16 %v157
    %v851 = vunpack.c.l.b16 %v158
    %v852 = vunpack.c.h.b16 %v158
    %v853 = vunpack.c.l.b16 %v159
    %v854 = vunpack.c.h.b16 %v159
    %v855 = vunpack.c.l.b16 %v160
    %v856 = vunpack.c.h.b16 %v160
    %v857 = vunpack.c.l.b16 %v161
    %v858 = vunpack.c.h.b16 %v161
    %v859 = vunpack.c.l.b16 %v162
    %v860 = vunpack.c.h.b16 %v162
    %v861 = vunpack.c.l.b16 %v163
    %v862 = vunpack.c.h.b16 %v163
    %v863 = vunpack.c.l.b16 %v164
    %v864 = vunpack.c.h.b16 %v164
    %v865 = vunpack.c.l.b16 %v165
    %v866 = vunpack.c.h.b16 %v165
    %v867 = vunpack.c.l.b16 %v166
    %v868 = vunpack.c.h.b16 %v166
    %v869 = vunpack.c.l.b16 %v167
    %v870 = vunpack.c.h.b16 %v167
    %v871 = vunpack.c.l.b16 %v168
    %v872 = vunpack.c.h.b16 %v168
    %v873 = vunpack.c.l.b16 %v169
    %v874 = vunpack.c.h.b16 %v169
    %v875 = vunpack.c.l.b16 %v170
    %v876 = vunpack.c.h.b16 %v170
    %v877 = vunpack.c.l.b16 %v171
    %v878 = vunpack.c.h.b16 %v171
    %v879 = vunpack.c.l.b16 %v172
    %v880 = vunpack.c.h.b16 %v172
    %v881 = vunpack.c.l.b16 %v173
    %v882 = vunpack.c.h.b16 %v173
    %v883 = vunpack.c.l.b16 %v174
    %v884 = vunpack.c.h.b16 %v174
    %v885 = vunpack.c.l.b16 %v175
    %v886 = vunpack.c.h.b16 %v175
    %v887 = vunpack.c.l.b16 %v176
    %v888 = vunpack.c.h.b16 %v176
    %v889 = vunpack.c.l.b16 %v177
    %v890 = vunpack.c.h.b16 %v177
    %v891 = vunpack.c.l.b16 %v178
    %v892 = vunpack.c.h.b16 %v178
    %v893 = vunpack.c.l.b16 %v179
    %v894 = vunpack.c.h.b16 %v179
    %v895 = vunpack.c.l.b16 %v180
    %v896 = vunpack.c.h.b16 %v180
    %v897 = vunpack.c.l.b16 %v181
    %v898 = vunpack.c.h.b16 %v181
    %v899 = vunpack.c.l.b16 %v182
    %v900 = vunpack.c.h.b16 %v182
    %v901 = vunpack.c.l.b16 %v183
    %v902 = vunpack.c.h.b16 %v183
    %v903 = vunpack.c.l.b16 %v184
    %v904 = vunpack.c.h.b16 %v184
    %v905 = vunpack.c.l.b16 %v185
    %v906 = vunpack.c.h.b16 %v185
    %v907 = vunpack.c.l.b16 %v186
    %v908 = vunpack.c.h.b16 %v186
    %v909 = vunpack.c.l.b16 %v187
    %v910 = vunpack.c.h.b16 %v187
    %v911 = vunpack.c.l.b16 %v188
    %v912 = vunpack.c.h.b16 %v188
    %v913 = vunpack.c.l.b16 %v189
    %v914 = vunpack.c.h.b16 %v189
    %v915 = vunpack.c.l.b16 %v190
    %v916 = vunpack.c.h.b16 %v190
    %v917 = vunpack.c.l.b16 %v191
    %v918 = vunpack.c.h.b16 %v191
    %v919 = vunpack.c.l.b16 %v192
    %v920 = vunpack.c.h.b16 %v192
    %v921 = vunpack.c.l.b16 %v193
    %v922 = vunpack.c.h.b16 %v193
    %v923 = vunpack.c.l.b16 %v194
    %v924 = vunpack.c.h.b16 %v194
    %v925 = vunpack.c.l.b16 %v195
    %v926 = vunpack.c.h.b16 %v195
    %v927 = vunpack.c.l.b16 %v196
    %v928 = vunpack.c.h.b16 %v196
    %v929 = vunpack.c.l.b16 %v197
    %v930 = vunpack.c.h.b16 %v197
    %v931 = vunpack.c.l.b16 %v198
    %v932 = vunpack.c.h.b16 %v198
    %v933 = vunpack.c.l.b16 %v199
    %v934 = vunpack.c.h.b16 %v199
    %v935 = vunpack.c.l.b16 %v200
    %v936 = vunpack.c.h.b16 %v200
    %v937 = vunpack.c.l.b16 %v201
    %v938 = vunpack.c.h.b16 %v201
    %v939 = vunpack.c.l.b16 %v202
    %v940 = vunpack.c.h.b16 %v202
    %v941 = vunpack.c.l.b16 %v203
    %v942 = vunpack.c.h.b16 %v203
    %v943 = vunpack.c.l.b16 %v204
    %v944 = vunpack.c.h.b16 %v204
    %v945 = vunpack.c.l.b16 %v205
    %v946 = vunpack.c.h.b16 %v205
    %v947 = vunpack.c.l.b16 %v206
    %v948 = vunpack.c.h.b16 %v206
    %v949 = vunpack.c.l.b16 %v207
    %v950 = vunpack.c.h.b16 %v207
    %v951 = vunpack.c.l.b16 %v208
    %v952 = vunpack.c.h.b16 %v208
    %v953 = vunpack.c.l.b16 %v209
    %v954 = vunpack.c.h.b16 %v209
    %v955 = vunpack.c.l.b16 %v210
    %v956 = vunpack.c.h.b16 %v210
    %v957 = vunpack.c.l.b16 %v211
    %v958 = vunpack.c.h.b16 %v211
    %v959 = vunpack.c.l.b16 %v212
    %v960 = vunpack.c.h.b16 %v212
    %v961 = vunpack.c.l.b16 %v213
    %v962 = vunpack.c.h.b16 %v213
    %v963 = vunpack.c.l.b16 %v214
    %v964 = vunpack.c.h.b16 %v214
    %v965 = vunpack.c.l.b16 %v215
    %v966 = vunpack.c.h.b16 %v215
    %v967 = vunpack.c.l.b16 %v216
    %v968 = vunpack.c.h.b16 %v216
    %v969 = vunpack.c.l.b16 %v217
    %v970 = vunpack.c.h.b16 %v217
    %v971 = vunpack.c.l.b16 %v218
    %v972 = vunpack.c.h.b16 %v218
    %v973 = vunpack.c.l.b16 %v219
    %v974 = vunpack.c.h.b16 %v219
    %v975 = vunpack.c.l.b16 %v220
    %v976 = vunpack.c.h.b16 %v220
    %v977 = vunpack.c.l.b16 %v221
    %v978 = vunpack.c.h.b16 %v221
    %v979 = vunpack.c.l.b16 %v222
    %v980 = vunpack.c.h.b16 %v222
    %v981 = vunpack.c.l.b16 %v223
    %v982 = vunpack.c.h.b16 %v223
    %v983 = vunpack.c.l.b16 %v224
    %v984 = vunpack.c.h.b16 %v224
    %v985 = vunpack.c.l.b16 %v225
    %v986 = vunpack.c.h.b16 %v225
    %v987 = vunpack.c.l.b16 %v226
    %v988 = vunpack.c.h.b16 %v226
    %v989 = vunpack.c.l.b16 %v227
    %v990 = vunpack.c.h.b16 %v227
    %v991 = vunpack.c.l.b16 %v228
    %v992 = vunpack.c.h.b16 %v228
    %v993 = vunpack.c.l.b16 %v229
    %v994 = vunpack.c.h.b16 %v229
    %v995 = vunpack.c.l.b16 %v230
    %v996 = vunpack.c.h.b16 %v230
    %v997 = vunpack.c.l.b16 %v231
    %v998 = vunpack.c.h.b16 %v231
    %v999 = vunpack.c.l.b16 %v232
    %v1000 = vunpack.c.h.b16 %v232
    %v1001 = vunpack.c.l.b16 %v233
    %v1002 = vunpack.c.h.b16 %v233
    %v1003 = vunpack.c.l.b16 %v234
    %v1004 = vunpack.c.h.b16 %v234
    %v1005 = vunpack.c.l.b16 %v235
    %v1006 = vunpack.c.h.b16 %v235
    %v1007 = vunpack.c.l.b16 %v236
    %v1008 = vunpack.c.h.b16 %v236
    %v1009 = vunpack.c.l.b16 %v237
    %v1010 = vunpack.c.h.b16 %v237
    %v1011 = vpack.c.b16 %v581, %v579
    %v1012 = vpack.c.b16 %v582, %v580
    %v1013 = vpack.c.b16 %v585, %v583
    %v1014 = vpack.c.b16 %v586, %v584
    %v1015 = vpack.c.b16 %v589, %v587
    %v1016 = vpack.c.b16 %v590, %v588
    %v1017 = vpack.c.b16 %v593, %v591
    %v1018 = vpack.c.b16 %v594, %v592
    %v1019 = vpack.c.b16 %v597, %v595
    %v1020 = vpack.c.b16 %v598, %v596
    %v1021 = vpack.c.b16 %v601, %v599
    %v1022 = vpack.c.b16 %v602, %v600
    %v1023 = vpack.c.b16 %v605, %v603
    %v1024 = vpack.c.b16 %v606, %v604
    %v1025 = vpack.c.b16 %v609, %v607
    %v1026 = vpack.c.b16 %v610, %v608
    %v1027 = vpack.c.b16 %v613, %v611
    %v1028 = vpack.c.b16 %v614, %v612
    %v1029 = vpack.c.b16 %v617, %v615
    %v1030 = vpack.c.b16 %v618, %v616
    %v1031 = vpack.c.b16 %v621, %v619
    %v1032 = vpack.c.b16 %v622, %v620
    %v1033 = vpack.c.b16 %v625, %v623
    %v1034 = vpack.c.b16 %v626, %v624
    %v1035 = vpack.c.b16 %v629, %v627
    %v1036 = vpack.c.b16 %v630, %v628
    %v1037 = vpack.c.b16 %v633, %v631
    %v1038 = vpack.c.b16 %v634, %v632
    %v1039 = vpack.c.b16 %v637, %v635
    %v1040 = vpack.c.b16 %v638, %v636
    %v1041 = vpack.c.b16 %v641, %v639
    %v1042 = vpack.c.b16 %v642, %v640
    %v1043 = vpack.c.b16 %v645, %v643
    %v1044 = vpack.c.b16 %v646, %v644
    %v1045 = vpack.c.b16 %v649, %v647
    %v1046 = vpack.c.b16 %v650, %v648
    %v1047 = vpack.c.b16 %v653, %v651
    %v1048 = vpack.c.b16 %v654, %v652
    %v1049 = vpack.c.b16 %v657, %v655
    %v1050 = vpack.c.b16 %v658, %v656
    %v1051 = vpack.c.b16 %v661, %v659
    %v1052 = vpack.c.b16 %v662, %v660
    %v1053 = vpack.c.b16 %v665, %v663
    %v1054 = vpack.c.b16 %v666, %v664
    %v1055 = vpack.c.b16 %v669, %v667
    %v1056 = vpack.c.b16 %v670, %v668
    %v1057 = vpack.c.b16 %v673, %v671
    %v1058 = vpack.c.b16 %v674, %v672
    %v1059 = vpack.c.b16 %v677, %v675
    %v1060 = vpack.c.b16 %v678, %v676
    %v1061 = vpack.c.b16 %v681, %v679
    %v1062 = vpack.c.b16 %v682, %v680
    %v1063 = vpack.c.b16 %v685, %v683
    %v1064 = vpack.c.b16 %v686, %v684
    %v1065 = vpack.c.b16 %v689, %v687
    %v1066 = vpack.c.b16 %v690, %v688
    %v1067 = vpack.c.b16 %v693, %v691
    %v1068 = vpack.c.b16 %v694, %v692
    %v1069 = vpack.c.b16 %v697, %v695
    %v1070 = vpack.c.b16 %v698, %v696
    %v1071 = vpack.c.b16 %v701, %v699
    %v1072 = vpack.c.b16 %v702, %v700
    %v1073 = vpack.c.b16 %v705, %v703
    %v1074 = vpack.c.b16 %v706, %v704
    %v1075 = vpack.c.b16 %v709, %v707
    %v1076 = vpack.c.b16 %v710, %v708
    %v1077 = vpack.c.b16 %v713, %v711
    %v1078 = vpack.c.b16 %v714, %v712
    %v1079 = vpack.c.b16 %v717, %v715
    %v1080 = vpack.c.b16 %v718, %v716
    %v1081 = vpack.c.b16 %v721, %v719
    %v1082 = vpack.c.b16 %v722, %v720
    %v1083 = vpack.c.b16 %v725, %v723
    %v1084 = vpack.c.b16 %v726, %v724
    %v1085 = vpack.c.b16 %v729, %v727
    %v1086 = vpack.c.b16 %v730, %v728
    %v1087 = vpack.c.b16 %v733, %v731
    %v1088 = vpack.c.b16 %v734, %v732
    %v1089 = vpack.c.b16 %v737, %v735
    %v1090 = vpack.c.b16 %v738, %v736
    %v1091 = vpack.c.b16 %v741, %v739
    %v1092 = vpack.c.b16 %v742, %v740
    %v1093 = vpack.c.b16 %v745, %v743
    %v1094 = vpack.c.b16 %v746, %v744
    %v1095 = vpack.c.b16 %v749, %v747
    %v1096 = vpack.c.b16 %v750, %v748
    %v1097 = vpack.c.b16 %v753, %v751
    %v1098 = vpack.c.b16 %v754, %v752
    %v1099 = vpack.c.b16 %v757, %v755
    %v1100 = vpack.c.b16 %v758, %v756
    %v1101 = vpack.c.b16 %v761, %v759
    %v1102 = vpack.c.b16 %v762, %v760
    %v1103 = vpack.c.b16 %v765, %v763
    %v1104 = vpack.c.b16 %v766, %v764
    %v1105 = vpack.c.b16 %v769, %v767
    %v1106 = vpack.c.b16 %v770, %v768
    %v1107 = vpack.c.b16 %v773, %v771
    %v1108 = vpack.c.b16 %v774, %v772
    %v1109 = vpack.c.b16 %v777, %v775
    %v1110 = vpack.c.b16 %v778, %v776
    %v1111 = vpack.c.b16 %v781, %v779
    %v1112 = vpack.c.b16 %v782, %v780
    %v1113 = vpack.c.b16 %v785, %v783
    %v1114 = vpack.c.b16 %v786, %v784
    %v1115 = vpack.c.b16 %v789, %v787
    %v1116 = vpack.c.b16 %v790, %v788
    %v1117 = vpack.c.b16 %v793, %v791
    %v1118 = vpack.c.b16 %v794, %v792
    %v1119 = vpack.c.b16 %v797, %v795
    %v1120 = vpack.c.b16 %v798, %v796
    %v1121 = vpack.c.b16 %v801, %v799
    %v1122 = vpack.c.b16 %v802, %v800
    %v1123 = vpack.c.b16 %v805, %v803
    %v1124 = vpack.c.b16 %v806, %v804
    %v1125 = vpack.c.b16 %v809, %v807
    %v1126 = vpack.c.b16 %v810, %v808
    %v1127 = vpack.c.b16 %v813, %v811
    %v1128 = vpack.c.b16 %v814, %v812
    %v1129 = vpack.c.b16 %v817, %v815
    %v1130 = vpack.c.b16 %v818, %v816
    %v1131 = vpack.c.b16 %v821, %v819
    %v1132 = vpack.c.b16 %v822, %v820
    %v1133 = vpack.c.b16 %v825, %v823
    %v1134 = vpack.c.b16 %v826, %v824
    %v1135 = vpack.c.b16 %v829, %v827
    %v1136 = vpack.c.b16 %v830, %v828
    %v1137 = vpack.c.b16 %v833, %v831
    %v1138 = vpack.c.b16 %v834, %v832
    %v1139 = vpack.c.b16 %v837, %v835
    %v1140 = vpack.c.b16 %v838, %v836
    %v1141 = vpack.c.b16 %v841, %v839
    %v1142 = vpack.c.b16 %v842, %v840
    %v1143 = vpack.c.b16 %v845, %v843
    %v1144 = vpack.c.b16 %v846, %v844
    %v1145 = vpack.c.b16 %v849, %v847
    %v1146 = vpack.c.b16 %v850, %v848
    %v1147 = vpack.c.b16 %v853, %v851
    %v1148 = vpack.c.b16 %v854, %v852
    %v1149 = vpack.c.b16 %v857, %v855
    %v1150 = vpack.c.b16 %v858, %v856
    %v1151 = vpack.c.b16 %v861, %v859
    %v1152 = vpack.c.b16 %v862, %v860
    %v1153 = vpack.c.b16 %v865, %v863
    %v1154 = vpack.c.b16 %v866, %v864
    %v1155 = vpack.c.b16 %v869, %v867
    %v1156 = vpack.c.b16 %v870, %v868
    %v1157 = vpack.c.b16 %v873, %v871
    %v1158 = vpack.c.b16 %v874, %v872
    %v1159 = vpack.c.b16 %v877, %v875
    %v1160 = vpack.c.b16 %v878, %v876
    %v1161 = vpack.c.b16 %v881, %v879
    %v1162 = vpack.c.b16 %v882, %v880
    %v1163 = vpack.c.b16 %v885, %v883
    %v1164 = vpack.c.b16 %v886, %v884
    %v1165 = vpack.c.b16 %v889, %v887
    %v1166 = vpack.c.b16 %v890, %v888
    %v1167 = vpack.c.b16 %v893, %v891
    %v1168 = vpack.c.b16 %v894, %v892
    %v1169 = vpack.c.b16 %v897, %v895
    %v1170 = vpack.c.b16 %v898, %v896
    %v1171 = vpack.c.b16 %v901, %v899
    %v1172 = vpack.c.b16 %v902, %v900
    %v1173 = vpack.c.b16 %v905, %v903
    %v1174 = vpack.c.b16 %v906, %v904
    %v1175 = vpack.c.b16 %v909, %v907
    %v1176 = vpack.c.b16 %v910, %v908
    %v1177 = vpack.c.b16 %v913, %v911
    %v1178 = vpack.c.b16 %v914, %v912
    %v1179 = vpack.c.b16 %v917, %v915
    %v1180 = vpack.c.b16 %v918, %v916
    %v1181 = vpack.c.b16 %v921, %v919
    %v1182 = vpack.c.b16 %v922, %v920
    %v1183 = vpack.c.b16 %v925, %v923
    %v1184 = vpack.c.b16 %v926, %v924
    %v1185 = vpack.c.b16 %v929, %v927
    %v1186 = vpack.c.b16 %v930, %v928
    %v1187 = vpack.c.b16 %v933, %v931
    %v1188 = vpack.c.b16 %v934, %v932
    %v1189 = vpack.c.b16 %v937, %v935
    %v1190 = vpack.c.b16 %v938, %v936
    %v1191 = vpack.c.b16 %v941, %v939
    %v1192 = vpack.c.b16 %v942, %v940
    %v1193 = vpack.c.b16 %v945, %v943
    %v1194 = vpack.c.b16 %v946, %v944
    %v1195 = vpack.c.b16 %v949, %v947
    %v1196 = vpack.c.b16 %v950, %v948
    %v1197 = vpack.c.b16 %v953, %v951
    %v1198 = vpack.c.b16 %v954, %v952
    %v1199 = vpack.c.b16 %v957, %v955
    %v1200 = vpack.c.b16 %v958, %v956
    %v1201 = vpack.c.b16 %v961, %v959
    %v1202 = vpack.c.b16 %v962, %v960
    %v1203 = vpack.c.b16 %v965, %v963
    %v1204 = vpack.c.b16 %v966, %v964
    %v1205 = vpack.c.b16 %v969, %v967
    %v1206 = vpack.c.b16 %v970, %v968
    %v1207 = vpack.c.b16 %v973, %v971
    %v1208 = vpack.c.b16 %v974, %v972
    %v1209 = vpack.c.b16 %v977, %v975
    %v1210 = vpack.c.b16 %v978, %v976
    %v1211 = vpack.c.b16 %v981, %v979
    %v1212 = vpack.c.b16 %v982, %v980
    %v1213 = vpack.c.b16 %v985, %v983
    %v1214 = vpack.c.b16 %v986, %v984
    %v1215 = vpack.c.b16 %v989, %v987
    %v1216 = vpack.c.b16 %v990, %v988
    %v1217 = vpack.c.b16 %v993, %v991
    %v1218 = vpack.c.b16 %v994, %v992
    %v1219 = vpack.c.b16 %v997, %v995
    %v1220 = vpack.c.b16 %v998, %v996
    %v1221 = vpack.c.b16 %v1001, %v999
    %v1222 = vpack.c.b16 %v1002, %v1000
    %v1223 = vpack.c.b16 %v1005, %v1003
    %v1224 = vpack.c.b16 %v1006, %v1004
    %v1225 = vpack.c.b16 %v1009, %v1007
    %v1226 = vpack.c.b16 %v1010, %v1008
    %vm1443 = vcmask 523264
    %v1445 = vsel %vm1443, %v347, 0
    %1447 = vmatprep.subr.bf16.mxu0 %v1012
    %1448 = vmatpush1.bf16.msra.mxu0 %v1011
    %1449 = vmatprep.subr.bf16.mxu0 %v1014
    %1450 = vmatpush1.bf16.msra.mxu0 %v1013
    %1451 = vmatprep.subr.bf16.mxu0 %v1016
    %1452 = vmatpush1.bf16.msra.mxu0 %v1015
    %1453 = vmatprep.subr.bf16.mxu0 %v1018
    %1454 = vmatpush1.bf16.msra.mxu0 %v1017
    %1455 = vmatprep.subr.bf16.mxu0 %v1020
    %1456 = vmatpush1.bf16.msra.mxu0 %v1019
    %1457 = vmatprep.subr.bf16.mxu0 %v1022
    %1458 = vmatpush1.bf16.msra.mxu0 %v1021
    %1459 = vmatprep.subr.bf16.mxu0 %v1024
    %1460 = vmatpush1.bf16.msra.mxu0 %v1023
    %1461 = vmatprep.subr.bf16.mxu0 %v1026
    %1462 = vmatpush1.bf16.msra.mxu0 %v1025
    %1463 = vmatprep.subr.bf16.mxu0 %v1028
    %1464 = vmatpush1.bf16.msra.mxu0 %v1027
    %1465 = vmatprep.subr.bf16.mxu0 %v1030
    %1466 = vmatpush1.bf16.msra.mxu0 %v1029
    %1467 = vmatprep.subr.bf16.mxu0 %v1032
    %1468 = vmatpush1.bf16.msra.mxu0 %v1031
    %1469 = vmatprep.subr.bf16.mxu0 %v1034
    %1470 = vmatpush1.bf16.msra.mxu0 %v1033
    %1471 = vmatprep.subr.bf16.mxu0 %v1036
    %1472 = vmatpush1.bf16.msra.mxu0 %v1035
    %1473 = vmatprep.subr.bf16.mxu0 %v1038
    %1474 = vmatpush1.bf16.msra.mxu0 %v1037
    %1475 = vmatprep.subr.bf16.mxu0 %v1040
    %1476 = vmatpush1.bf16.msra.mxu0 %v1039
    %1477 = vmatprep.subr.bf16.mxu0 %v1042
    %1478 = vmatpush1.bf16.msra.mxu0 %v1041
    %1479 = vmatprep.mubr.bf16.mxu0 %v291
    %1480 = vmatmul.mubr.bf16.gmra.mrb[0].mxu0 %v277
    %v1481 = vpop.f32.mrb[0].mxu0
    %v1482 = vadd.f32 %v245, %v1481
    %v1483 = vpop.f32.mrb[0].mxu0
    %v1484 = vadd.f32 %v249, %v1483
    %v1485 = vpop.f32.mrb[0].mxu0
    %v1486 = vpop.f32.mrb[0].mxu0
    %1487 = vdwg.mxu0
    %1488 = vmatprep.subr.bf16.mxu0 %v1044
    %1489 = vmatpush1.bf16.msra.mxu0 %v1043
    %1490 = vmatprep.subr.bf16.mxu0 %v1046
    %1491 = vmatpush1.bf16.msra.mxu0 %v1045
    %1492 = vmatprep.subr.bf16.mxu0 %v1048
    %1493 = vmatpush1.bf16.msra.mxu0 %v1047
    %1494 = vmatprep.subr.bf16.mxu0 %v1050
    %1495 = vmatpush1.bf16.msra.mxu0 %v1049
    %1496 = vmatprep.subr.bf16.mxu0 %v1052
    %1497 = vmatpush1.bf16.msra.mxu0 %v1051
    %1498 = vmatprep.subr.bf16.mxu0 %v1054
    %1499 = vmatpush1.bf16.msra.mxu0 %v1053
    %1500 = vmatprep.subr.bf16.mxu0 %v1056
    %1501 = vmatpush1.bf16.msra.mxu0 %v1055
    %1502 = vmatprep.subr.bf16.mxu0 %v1058
    %1503 = vmatpush1.bf16.msra.mxu0 %v1057
    %1504 = vmatprep.subr.bf16.mxu0 %v1060
    %1505 = vmatpush1.bf16.msra.mxu0 %v1059
    %1506 = vmatprep.subr.bf16.mxu0 %v1062
    %1507 = vmatpush1.bf16.msra.mxu0 %v1061
    %1508 = vmatprep.subr.bf16.mxu0 %v1064
    %1509 = vmatpush1.bf16.msra.mxu0 %v1063
    %1510 = vmatprep.subr.bf16.mxu0 %v1066
    %1511 = vmatpush1.bf16.msra.mxu0 %v1065
    %1512 = vmatprep.subr.bf16.mxu0 %v1068
    %1513 = vmatpush1.bf16.msra.mxu0 %v1067
    %1514 = vmatprep.subr.bf16.mxu0 %v1070
    %1515 = vmatpush1.bf16.msra.mxu0 %v1069
    %1516 = vmatprep.subr.bf16.mxu0 %v1072
    %1517 = vmatpush1.bf16.msra.mxu0 %v1071
    %1518 = vmatprep.subr.bf16.mxu0 %v1074
    %1519 = vmatpush1.bf16.msra.mxu0 %v1073
    %1520 = vmatprep.mubr.bf16.mxu0 %v301
    %1521 = vmatmul.mubr.bf16.gmra.mrb[0].mxu0 %v299
    %v1522 = vpop.f32.mrb[0].mxu0
    %v1523 = vadd.f32 %v1482, %v1522
    %v1524 = vpop.f32.mrb[0].mxu0
    %v1525 = vadd.f32 %v1484, %v1524
    %v1526 = vpop.f32.mrb[0].mxu0
    %v1527 = vpop.f32.mrb[0].mxu0
    %1528 = vdwg.mxu0
    %1529 = vmatprep.subr.bf16.mxu0 %v1076
    %1530 = vmatpush1.bf16.msra.mxu0 %v1075
    %1531 = vmatprep.subr.bf16.mxu0 %v1078
    %1532 = vmatpush1.bf16.msra.mxu0 %v1077
    %1533 = vmatprep.subr.bf16.mxu0 %v1080
    %1534 = vmatpush1.bf16.msra.mxu0 %v1079
    %1535 = vmatprep.subr.bf16.mxu0 %v1082
    %1536 = vmatpush1.bf16.msra.mxu0 %v1081
    %1537 = vmatprep.subr.bf16.mxu0 %v1084
    %1538 = vmatpush1.bf16.msra.mxu0 %v1083
    %1539 = vmatprep.subr.bf16.mxu0 %v1086
    %1540 = vmatpush1.bf16.msra.mxu0 %v1085
    %1541 = vmatprep.subr.bf16.mxu0 %v1088
    %1542 = vmatpush1.bf16.msra.mxu0 %v1087
    %1543 = vmatprep.subr.bf16.mxu0 %v1090
    %1544 = vmatpush1.bf16.msra.mxu0 %v1089
    %1545 = vmatprep.subr.bf16.mxu0 %v1092
    %1546 = vmatpush1.bf16.msra.mxu0 %v1091
    %1547 = vmatprep.subr.bf16.mxu0 %v1094
    %1548 = vmatpush1.bf16.msra.mxu0 %v1093
    %1549 = vmatprep.subr.bf16.mxu0 %v1096
    %1550 = vmatpush1.bf16.msra.mxu0 %v1095
    %1551 = vmatprep.subr.bf16.mxu0 %v1098
    %1552 = vmatpush1.bf16.msra.mxu0 %v1097
    %1553 = vmatprep.subr.bf16.mxu0 %v1100
    %1554 = vmatpush1.bf16.msra.mxu0 %v1099
    %1555 = vmatprep.subr.bf16.mxu0 %v1102
    %1556 = vmatpush1.bf16.msra.mxu0 %v1101
    %1557 = vmatprep.subr.bf16.mxu0 %v1104
    %1558 = vmatpush1.bf16.msra.mxu0 %v1103
    %1559 = vmatprep.subr.bf16.mxu0 %v1106
    %1560 = vmatpush1.bf16.msra.mxu0 %v1105
    %1561 = vmatprep.mubr.bf16.mxu0 %v298
    %1562 = vmatmul.mubr.bf16.gmra.mrb[0].mxu0 %v284
    %v1563 = vpop.f32.mrb[0].mxu0
    %v1564 = vadd.f32 %v1523, %v1563
    %v1565 = vpop.f32.mrb[0].mxu0
    %v1566 = vadd.f32 %v1525, %v1565
    %v1567 = vpop.f32.mrb[0].mxu0
    %v1568 = vpop.f32.mrb[0].mxu0
    %1569 = vdwg.mxu0
    %1570 = vmatprep.subr.bf16.mxu0 %v1108
    %1571 = vmatpush1.bf16.msra.mxu0 %v1107
    %1572 = vmatprep.subr.bf16.mxu0 %v1110
    %1573 = vmatpush1.bf16.msra.mxu0 %v1109
    %1574 = vmatprep.subr.bf16.mxu0 %v1112
    %1575 = vmatpush1.bf16.msra.mxu0 %v1111
    %1576 = vmatprep.subr.bf16.mxu0 %v1114
    %1577 = vmatpush1.bf16.msra.mxu0 %v1113
    %1578 = vmatprep.subr.bf16.mxu0 %v1116
    %1579 = vmatpush1.bf16.msra.mxu0 %v1115
    %1580 = vmatprep.subr.bf16.mxu0 %v1118
    %1581 = vmatpush1.bf16.msra.mxu0 %v1117
    %1582 = vmatprep.subr.bf16.mxu0 %v1120
    %1583 = vmatpush1.bf16.msra.mxu0 %v1119
    %1584 = vmatprep.subr.bf16.mxu0 %v1122
    %1585 = vmatpush1.bf16.msra.mxu0 %v1121
    %1586 = vmatprep.subr.bf16.mxu0 %v1124
    %1587 = vmatpush1.bf16.msra.mxu0 %v1123
    %1588 = vmatprep.subr.bf16.mxu0 %v1126
    %1589 = vmatpush1.bf16.msra.mxu0 %v1125
    %1590 = vmatprep.subr.bf16.mxu0 %v1128
    %1591 = vmatpush1.bf16.msra.mxu0 %v1127
    %1592 = vmatprep.subr.bf16.mxu0 %v1130
    %1593 = vmatpush1.bf16.msra.mxu0 %v1129
    %1594 = vmatprep.subr.bf16.mxu0 %v1132
    %1595 = vmatpush1.bf16.msra.mxu0 %v1131
    %1596 = vmatprep.subr.bf16.mxu0 %v1134
    %1597 = vmatpush1.bf16.msra.mxu0 %v1133
    %1598 = vmatprep.subr.bf16.mxu0 %v1136
    %1599 = vmatpush1.bf16.msra.mxu0 %v1135
    %1600 = vmatprep.subr.bf16.mxu0 %v1138
    %1601 = vmatpush1.bf16.msra.mxu0 %v1137
    %1602 = vmatprep.mubr.bf16.mxu0 %v302
    %1603 = vmatmul.mubr.bf16.gmra.mrb[0].mxu0 %v300
    %v1604 = vpop.f32.mrb[0].mxu0
    %v1605 = vadd.f32 %v1564, %v1604
    %v1606 = vpop.f32.mrb[0].mxu0
    %v1607 = vadd.f32 %v1566, %v1606
    %v1608 = vpop.f32.mrb[0].mxu0
    %v1609 = vpop.f32.mrb[0].mxu0
    %1610 = vdwg.mxu0
    %1611 = vmatprep.subr.bf16.mxu0 %v1140
    %1612 = vmatpush1.bf16.msra.mxu0 %v1139
    %1613 = vmatprep.subr.bf16.mxu0 %v1142
    %1614 = vmatpush1.bf16.msra.mxu0 %v1141
    %1615 = vmatprep.subr.bf16.mxu0 %v1144
    %1616 = vmatpush1.bf16.msra.mxu0 %v1143
    %1617 = vmatprep.subr.bf16.mxu0 %v1146
    %1618 = vmatpush1.bf16.msra.mxu0 %v1145
    %1619 = vmatprep.subr.bf16.mxu0 %v1148
    %1620 = vmatpush1.bf16.msra.mxu0 %v1147
    %1621 = vmatprep.subr.bf16.mxu0 %v1150
    %1622 = vmatpush1.bf16.msra.mxu0 %v1149
    %1623 = vmatprep.subr.bf16.mxu0 %v1152
    %1624 = vmatpush1.bf16.msra.mxu0 %v1151
    %1625 = vmatprep.subr.bf16.mxu0 %v1154
    %1626 = vmatpush1.bf16.msra.mxu0 %v1153
    %1627 = vmatprep.subr.bf16.mxu0 %v1156
    %1628 = vmatpush1.bf16.msra.mxu0 %v1155
    %1629 = vmatprep.subr.bf16.mxu0 %v1158
    %1630 = vmatpush1.bf16.msra.mxu0 %v1157
    %1631 = vmatprep.subr.bf16.mxu0 %v1160
    %1632 = vmatpush1.bf16.msra.mxu0 %v1159
    %1633 = vmatprep.subr.bf16.mxu0 %v1162
    %1634 = vmatpush1.bf16.msra.mxu0 %v1161
    %1635 = vmatprep.subr.bf16.mxu0 %v1164
    %1636 = vmatpush1.bf16.msra.mxu0 %v1163
    %1637 = vmatprep.subr.bf16.mxu0 %v1166
    %1638 = vmatpush1.bf16.msra.mxu0 %v1165
    %1639 = vmatprep.subr.bf16.mxu0 %v1168
    %1640 = vmatpush1.bf16.msra.mxu0 %v1167
    %1641 = vmatprep.subr.bf16.mxu0 %v1170
    %1642 = vmatpush1.bf16.msra.mxu0 %v1169
    %1643 = vmatprep.mubr.bf16.mxu0 %v340
    %1644 = vmatmul.mubr.bf16.gmra.mrb[0].mxu0 %v326
    %v1645 = vpop.f32.mrb[0].mxu0
    %v1646 = vadd.f32 %v1605, %v1645
    %v1647 = vpop.f32.mrb[0].mxu0
    %v1648 = vadd.f32 %v1607, %v1647
    %v1649 = vpop.f32.mrb[0].mxu0
    %v1650 = vpop.f32.mrb[0].mxu0
    %1651 = vdwg.mxu0
    %1652 = vmatprep.subr.bf16.mxu0 %v1172
    %1653 = vmatpush1.bf16.msra.mxu0 %v1171
    %1654 = vmatprep.subr.bf16.mxu0 %v1174
    %1655 = vmatpush1.bf16.msra.mxu0 %v1173
    %1656 = vmatprep.subr.bf16.mxu0 %v1176
    %1657 = vmatpush1.bf16.msra.mxu0 %v1175
    %1658 = vmatprep.subr.bf16.mxu0 %v1178
    %1659 = vmatpush1.bf16.msra.mxu0 %v1177
    %1660 = vmatprep.subr.bf16.mxu0 %v1180
    %1661 = vmatpush1.bf16.msra.mxu0 %v1179
    %1662 = vmatprep.subr.bf16.mxu0 %v1182
    %1663 = vmatpush1.bf16.msra.mxu0 %v1181
    %1664 = vmatprep.subr.bf16.mxu0 %v1184
    %1665 = vmatpush1.bf16.msra.mxu0 %v1183
    %1666 = vmatprep.subr.bf16.mxu0 %v1186
    %1667 = vmatpush1.bf16.msra.mxu0 %v1185
    %1668 = vmatprep.subr.bf16.mxu0 %v1188
    %1669 = vmatpush1.bf16.msra.mxu0 %v1187
    %1670 = vmatprep.subr.bf16.mxu0 %v1190
    %1671 = vmatpush1.bf16.msra.mxu0 %v1189
    %1672 = vmatprep.subr.bf16.mxu0 %v1192
    %1673 = vmatpush1.bf16.msra.mxu0 %v1191
    %1674 = vmatprep.subr.bf16.mxu0 %v1194
    %1675 = vmatpush1.bf16.msra.mxu0 %v1193
    %1676 = vmatprep.subr.bf16.mxu0 %v1196
    %1677 = vmatpush1.bf16.msra.mxu0 %v1195
    %1678 = vmatprep.subr.bf16.mxu0 %v1198
    %1679 = vmatpush1.bf16.msra.mxu0 %v1197
    %1680 = vmatprep.subr.bf16.mxu0 %v1200
    %1681 = vmatpush1.bf16.msra.mxu0 %v1199
    %1682 = vmatprep.subr.bf16.mxu0 %v1202
    %1683 = vmatpush1.bf16.msra.mxu0 %v1201
    %1684 = vmatprep.mubr.bf16.mxu0 %v349
    %1685 = vmatmul.mubr.bf16.gmra.mrb[0].mxu0 %v348
    %v1686 = vpop.f32.mrb[0].mxu0
    %v1687 = vadd.f32 %v1646, %v1686
    %v1688 = vpop.f32.mrb[0].mxu0
    %v1689 = vadd.f32 %v1648, %v1688
    %v1690 = vpop.f32.mrb[0].mxu0
    %v1691 = vpop.f32.mrb[0].mxu0
    %1692 = vdwg.mxu0
    %1693 = vmatprep.subr.bf16.mxu0 %v1204
    %1694 = vmatpush1.bf16.msra.mxu0 %v1203
    %1695 = vmatprep.subr.bf16.mxu0 %v1206
    %1696 = vmatpush1.bf16.msra.mxu0 %v1205
    %1697 = vmatprep.subr.bf16.mxu0 %v1208
    %1698 = vmatpush1.bf16.msra.mxu0 %v1207
    %1699 = vmatprep.subr.bf16.mxu0 %v1210
    %1700 = vmatpush1.bf16.msra.mxu0 %v1209
    %1701 = vmatprep.subr.bf16.mxu0 %v1212
    %1702 = vmatpush1.bf16.msra.mxu0 %v1211
    %1703 = vmatprep.subr.bf16.mxu0 %v1214
    %1704 = vmatpush1.bf16.msra.mxu0 %v1213
    %1705 = vmatprep.subr.bf16.mxu0 %v1216
    %1706 = vmatpush1.bf16.msra.mxu0 %v1215
    %1707 = vmatprep.subr.bf16.mxu0 %v1218
    %1708 = vmatpush1.bf16.msra.mxu0 %v1217
    %1709 = vmatprep.subr.bf16.mxu0 %v1220
    %1710 = vmatpush1.bf16.msra.mxu0 %v1219
    %1711 = vmatprep.subr.bf16.mxu0 %v1222
    %1712 = vmatpush1.bf16.msra.mxu0 %v1221
    %1713 = vmatprep.subr.bf16.mxu0 %v1224
    %1714 = vmatpush1.bf16.msra.mxu0 %v1223
    %1715 = vmatprep.subr.bf16.mxu0 %v1226
    %1716 = vmatpush1.bf16.msra.mxu0 %v1225
    %1717 = vmatprep.subr.bf16.mxu0 0
    %1718 = vmatpush1.bf16.msra.mxu0 0
    %1719 = vmatprep.subr.bf16.mxu0 0
    %1720 = vmatpush1.bf16.msra.mxu0 0
    %1721 = vmatprep.subr.bf16.mxu0 0
    %1722 = vmatpush1.bf16.msra.mxu0 0
    %1723 = vmatprep.subr.bf16.mxu0 0
    %1724 = vmatpush1.bf16.msra.mxu0 0
    %1725 = vmatprep.mubr.bf16.mxu0 %v1445
    %1726 = vmatmul.mubr.bf16.gmra.mrb[0].mxu0 %v333
    %v1727 = vpop.f32.mrb[0].mxu0
    %v1728 = vadd.f32 %v1687, %v1727
    %v1729 = vpop.f32.mrb[0].mxu0
    %v1730 = vadd.f32 %v1689, %v1729
    %v1731 = vpop.f32.mrb[0].mxu0
    %v1732 = vpop.f32.mrb[0].mxu0
    %1733 = vdwg.mxu0
    %v1734 = vmax.f32 %v1728, 0.0
    %v1735 = vmax.f32 %v1730, 0.0
    %s1736 = scalar_lea.vmem %s0, 14
    %v1737 = vld [vmem:[%s1736] sm:$0xff]
    %v1738 = vld [vmem:[%s1736 + $0x8] sm:$0x3f]
    %v1741 = vcombine.high %v1737, %v1737
    %v1743 = vunpack.c.l.s4 1966171168
    %v1744 = vunpack.c.0.s8 %v1743
    %v1745 = vlaneseq
    %v1746 = vshrl.u32 %v1745, 7
    %v1747 = vsub.s32 %v1744, %v1746
    %v1748 = vrot.slane %v1737, %v1747
    %v1750 = vunpack.c.l.s4 1966171168
    %v1751 = vunpack.c.0.s8 %v1750
    %v1752 = vlaneseq
    %v1753 = vshrl.u32 %v1752, 7
    %v1754 = vsub.s32 %v1751, %v1753
    %v1755 = vrot.slane %v1741, %v1754
    %v1756 = vcombine.high %v1748, %v1748
    %v1757 = vcombine.high %v1755, %v1755
    %v1759 = vunpack.c.l.s4 1966171168
    %v1760 = vunpack.c.0.s8 %v1759
    %v1761 = vlaneseq
    %v1762 = vshrl.u32 %v1761, 7
    %v1763 = vsub.s32 %v1760, %v1762
    %v1764 = vrot.slane %v1748, %v1763
    %v1766 = vunpack.c.l.s4 1966171168
    %v1767 = vunpack.c.0.s8 %v1766
    %v1768 = vlaneseq
    %v1769 = vshrl.u32 %v1768, 7
    %v1770 = vsub.s32 %v1767, %v1769
    %v1771 = vrot.slane %v1755, %v1770
    %v1773 = vunpack.c.l.s4 1966171168
    %v1774 = vunpack.c.0.s8 %v1773
    %v1775 = vlaneseq
    %v1776 = vshrl.u32 %v1775, 7
    %v1777 = vsub.s32 %v1774, %v1776
    %v1778 = vrot.slane %v1756, %v1777
    %v1780 = vunpack.c.l.s4 1966171168
    %v1781 = vunpack.c.0.s8 %v1780
    %v1782 = vlaneseq
    %v1783 = vshrl.u32 %v1782, 7
    %v1784 = vsub.s32 %v1781, %v1783
    %v1785 = vrot.slane %v1757, %v1784
    %v1786 = vcombine.high %v1764, %v1764
    %v1787 = vcombine.high %v1771, %v1771
    %v1788 = vcombine.high %v1778, %v1778
    %v1789 = vcombine.high %v1785, %v1785
    %v1790 = vcombine.high %v1738, %v1738
    %v1792 = vunpack.c.l.s4 1966171168
    %v1793 = vunpack.c.0.s8 %v1792
    %v1794 = vlaneseq
    %v1795 = vshrl.u32 %v1794, 7
    %v1796 = vsub.s32 %v1793, %v1795
    %v1797 = vrot.slane %v1738, %v1796
    %v1799 = vunpack.c.l.s4 1966171168
    %v1800 = vunpack.c.0.s8 %v1799
    %v1801 = vlaneseq
    %v1802 = vshrl.u32 %v1801, 7
    %v1803 = vsub.s32 %v1800, %v1802
    %v1804 = vrot.slane %v1790, %v1803
    %v1805 = vcombine.high %v1797, %v1797
    %v1806 = vcombine.high %v1804, %v1804
    %v1808 = vunpack.c.l.s4 1966171168
    %v1809 = vunpack.c.0.s8 %v1808
    %v1810 = vlaneseq
    %v1811 = vshrl.u32 %v1810, 7
    %v1812 = vsub.s32 %v1809, %v1811
    %v1813 = vrot.slane %v1797, %v1812
    %v1815 = vunpack.c.l.s4 1966171168
    %v1816 = vunpack.c.0.s8 %v1815
    %v1817 = vlaneseq
    %v1818 = vshrl.u32 %v1817, 7
    %v1819 = vsub.s32 %v1816, %v1818
    %v1820 = vrot.slane %v1804, %v1819
    %v1822 = vunpack.c.l.s4 1966171168
    %v1823 = vunpack.c.0.s8 %v1822
    %v1824 = vlaneseq
    %v1825 = vshrl.u32 %v1824, 7
    %v1826 = vsub.s32 %v1823, %v1825
    %v1827 = vrot.slane %v1805, %v1826
    %v1829 = vunpack.c.l.s4 1966171168
    %v1830 = vunpack.c.0.s8 %v1829
    %v1831 = vlaneseq
    %v1832 = vshrl.u32 %v1831, 7
    %v1833 = vsub.s32 %v1830, %v1832
    %v1834 = vrot.slane %v1806, %v1833
    %v1835 = vcombine.high %v1813, %v1813
    %v1836 = vcombine.high %v1827, %v1827
    %v1851 = vsel %vm1443, %v1834, 0
    %1853 = vmatprep.subr.bf16.mxu0 %v1012
    %1854 = vmatpush1.bf16.msra.mxu0 %v1011
    %1855 = vmatprep.subr.bf16.mxu0 %v1014
    %1856 = vmatpush1.bf16.msra.mxu0 %v1013
    %1857 = vmatprep.subr.bf16.mxu0 %v1016
    %1858 = vmatpush1.bf16.msra.mxu0 %v1015
    %1859 = vmatprep.subr.bf16.mxu0 %v1018
    %1860 = vmatpush1.bf16.msra.mxu0 %v1017
    %1861 = vmatprep.subr.bf16.mxu0 %v1020
    %1862 = vmatpush1.bf16.msra.mxu0 %v1019
    %1863 = vmatprep.subr.bf16.mxu0 %v1022
    %1864 = vmatpush1.bf16.msra.mxu0 %v1021
    %1865 = vmatprep.subr.bf16.mxu0 %v1024
    %1866 = vmatpush1.bf16.msra.mxu0 %v1023
    %1867 = vmatprep.subr.bf16.mxu0 %v1026
    %1868 = vmatpush1.bf16.msra.mxu0 %v1025
    %1869 = vmatprep.subr.bf16.mxu0 %v1028
    %1870 = vmatpush1.bf16.msra.mxu0 %v1027
    %1871 = vmatprep.subr.bf16.mxu0 %v1030
    %1872 = vmatpush1.bf16.msra.mxu0 %v1029
    %1873 = vmatprep.subr.bf16.mxu0 %v1032
    %1874 = vmatpush1.bf16.msra.mxu0 %v1031
    %1875 = vmatprep.subr.bf16.mxu0 %v1034
    %1876 = vmatpush1.bf16.msra.mxu0 %v1033
    %1877 = vmatprep.subr.bf16.mxu0 %v1036
    %1878 = vmatpush1.bf16.msra.mxu0 %v1035
    %1879 = vmatprep.subr.bf16.mxu0 %v1038
    %1880 = vmatpush1.bf16.msra.mxu0 %v1037
    %1881 = vmatprep.subr.bf16.mxu0 %v1040
    %1882 = vmatpush1.bf16.msra.mxu0 %v1039
    %1883 = vmatprep.subr.bf16.mxu0 %v1042
    %1884 = vmatpush1.bf16.msra.mxu0 %v1041
    %1885 = vmatprep.mubr.bf16.mxu0 %v1778
    %1886 = vmatmul.mubr.bf16.gmra.mrb[0].mxu0 %v1764
    %v1887 = vpop.f32.mrb[0].mxu0
    %v1888 = vadd.f32 %v245, %v1887
    %v1889 = vpop.f32.mrb[0].mxu0
    %v1890 = vadd.f32 %v249, %v1889
    %v1891 = vpop.f32.mrb[0].mxu0
    %v1892 = vpop.f32.mrb[0].mxu0
    %1893 = vdwg.mxu0
    %1894 = vmatprep.subr.bf16.mxu0 %v1044
    %1895 = vmatpush1.bf16.msra.mxu0 %v1043
    %1896 = vmatprep.subr.bf16.mxu0 %v1046
    %1897 = vmatpush1.bf16.msra.mxu0 %v1045
    %1898 = vmatprep.subr.bf16.mxu0 %v1048
    %1899 = vmatpush1.bf16.msra.mxu0 %v1047
    %1900 = vmatprep.subr.bf16.mxu0 %v1050
    %1901 = vmatpush1.bf16.msra.mxu0 %v1049
    %1902 = vmatprep.subr.bf16.mxu0 %v1052
    %1903 = vmatpush1.bf16.msra.mxu0 %v1051
    %1904 = vmatprep.subr.bf16.mxu0 %v1054
    %1905 = vmatpush1.bf16.msra.mxu0 %v1053
    %1906 = vmatprep.subr.bf16.mxu0 %v1056
    %1907 = vmatpush1.bf16.msra.mxu0 %v1055
    %1908 = vmatprep.subr.bf16.mxu0 %v1058
    %1909 = vmatpush1.bf16.msra.mxu0 %v1057
    %1910 = vmatprep.subr.bf16.mxu0 %v1060
    %1911 = vmatpush1.bf16.msra.mxu0 %v1059
    %1912 = vmatprep.subr.bf16.mxu0 %v1062
    %1913 = vmatpush1.bf16.msra.mxu0 %v1061
    %1914 = vmatprep.subr.bf16.mxu0 %v1064
    %1915 = vmatpush1.bf16.msra.mxu0 %v1063
    %1916 = vmatprep.subr.bf16.mxu0 %v1066
    %1917 = vmatpush1.bf16.msra.mxu0 %v1065
    %1918 = vmatprep.subr.bf16.mxu0 %v1068
    %1919 = vmatpush1.bf16.msra.mxu0 %v1067
    %1920 = vmatprep.subr.bf16.mxu0 %v1070
    %1921 = vmatpush1.bf16.msra.mxu0 %v1069
    %1922 = vmatprep.subr.bf16.mxu0 %v1072
    %1923 = vmatpush1.bf16.msra.mxu0 %v1071
    %1924 = vmatprep.subr.bf16.mxu0 %v1074
    %1925 = vmatpush1.bf16.msra.mxu0 %v1073
    %1926 = vmatprep.mubr.bf16.mxu0 %v1788
    %1927 = vmatmul.mubr.bf16.gmra.mrb[0].mxu0 %v1786
    %v1928 = vpop.f32.mrb[0].mxu0
    %v1929 = vadd.f32 %v1888, %v1928
    %v1930 = vpop.f32.mrb[0].mxu0
    %v1931 = vadd.f32 %v1890, %v1930
    %v1932 = vpop.f32.mrb[0].mxu0
    %v1933 = vpop.f32.mrb[0].mxu0
    %1934 = vdwg.mxu0
    %1935 = vmatprep.subr.bf16.mxu0 %v1076
    %1936 = vmatpush1.bf16.msra.mxu0 %v1075
    %1937 = vmatprep.subr.bf16.mxu0 %v1078
    %1938 = vmatpush1.bf16.msra.mxu0 %v1077
    %1939 = vmatprep.subr.bf16.mxu0 %v1080
    %1940 = vmatpush1.bf16.msra.mxu0 %v1079
    %1941 = vmatprep.subr.bf16.mxu0 %v1082
    %1942 = vmatpush1.bf16.msra.mxu0 %v1081
    %1943 = vmatprep.subr.bf16.mxu0 %v1084
    %1944 = vmatpush1.bf16.msra.mxu0 %v1083
    %1945 = vmatprep.subr.bf16.mxu0 %v1086
    %1946 = vmatpush1.bf16.msra.mxu0 %v1085
    %1947 = vmatprep.subr.bf16.mxu0 %v1088
    %1948 = vmatpush1.bf16.msra.mxu0 %v1087
    %1949 = vmatprep.subr.bf16.mxu0 %v1090
    %1950 = vmatpush1.bf16.msra.mxu0 %v1089
    %1951 = vmatprep.subr.bf16.mxu0 %v1092
    %1952 = vmatpush1.bf16.msra.mxu0 %v1091
    %1953 = vmatprep.subr.bf16.mxu0 %v1094
    %1954 = vmatpush1.bf16.msra.mxu0 %v1093
    %1955 = vmatprep.subr.bf16.mxu0 %v1096
    %1956 = vmatpush1.bf16.msra.mxu0 %v1095
    %1957 = vmatprep.subr.bf16.mxu0 %v1098
    %1958 = vmatpush1.bf16.msra.mxu0 %v1097
    %1959 = vmatprep.subr.bf16.mxu0 %v1100
    %1960 = vmatpush1.bf16.msra.mxu0 %v1099
    %1961 = vmatprep.subr.bf16.mxu0 %v1102
    %1962 = vmatpush1.bf16.msra.mxu0 %v1101
    %1963 = vmatprep.subr.bf16.mxu0 %v1104
    %1964 = vmatpush1.bf16.msra.mxu0 %v1103
    %1965 = vmatprep.subr.bf16.mxu0 %v1106
    %1966 = vmatpush1.bf16.msra.mxu0 %v1105
    %1967 = vmatprep.mubr.bf16.mxu0 %v1785
    %1968 = vmatmul.mubr.bf16.gmra.mrb[0].mxu0 %v1771
    %v1969 = vpop.f32.mrb[0].mxu0
    %v1970 = vadd.f32 %v1929, %v1969
    %v1971 = vpop.f32.mrb[0].mxu0
    %v1972 = vadd.f32 %v1931, %v1971
    %v1973 = vpop.f32.mrb[0].mxu0
    %v1974 = vpop.f32.mrb[0].mxu0
    %1975 = vdwg.mxu0
    %1976 = vmatprep.subr.bf16.mxu0 %v1108
    %1977 = vmatpush1.bf16.msra.mxu0 %v1107
    %1978 = vmatprep.subr.bf16.mxu0 %v1110
    %1979 = vmatpush1.bf16.msra.mxu0 %v1109
    %1980 = vmatprep.subr.bf16.mxu0 %v1112
    %1981 = vmatpush1.bf16.msra.mxu0 %v1111
    %1982 = vmatprep.subr.bf16.mxu0 %v1114
    %1983 = vmatpush1.bf16.msra.mxu0 %v1113
    %1984 = vmatprep.subr.bf16.mxu0 %v1116
    %1985 = vmatpush1.bf16.msra.mxu0 %v1115
    %1986 = vmatprep.subr.bf16.mxu0 %v1118
    %1987 = vmatpush1.bf16.msra.mxu0 %v1117
    %1988 = vmatprep.subr.bf16.mxu0 %v1120
    %1989 = vmatpush1.bf16.msra.mxu0 %v1119
    %1990 = vmatprep.subr.bf16.mxu0 %v1122
    %1991 = vmatpush1.bf16.msra.mxu0 %v1121
    %1992 = vmatprep.subr.bf16.mxu0 %v1124
    %1993 = vmatpush1.bf16.msra.mxu0 %v1123
    %1994 = vmatprep.subr.bf16.mxu0 %v1126
    %1995 = vmatpush1.bf16.msra.mxu0 %v1125
    %1996 = vmatprep.subr.bf16.mxu0 %v1128
    %1997 = vmatpush1.bf16.msra.mxu0 %v1127
    %1998 = vmatprep.subr.bf16.mxu0 %v1130
    %1999 = vmatpush1.bf16.msra.mxu0 %v1129
    %2000 = vmatprep.subr.bf16.mxu0 %v1132
    %2001 = vmatpush1.bf16.msra.mxu0 %v1131
    %2002 = vmatprep.subr.bf16.mxu0 %v1134
    %2003 = vmatpush1.bf16.msra.mxu0 %v1133
    %2004 = vmatprep.subr.bf16.mxu0 %v1136
    %2005 = vmatpush1.bf16.msra.mxu0 %v1135
    %2006 = vmatprep.subr.bf16.mxu0 %v1138
    %2007 = vmatpush1.bf16.msra.mxu0 %v1137
    %2008 = vmatprep.mubr.bf16.mxu0 %v1789
    %2009 = vmatmul.mubr.bf16.gmra.mrb[0].mxu0 %v1787
    %v2010 = vpop.f32.mrb[0].mxu0
    %v2011 = vadd.f32 %v1970, %v2010
    %v2012 = vpop.f32.mrb[0].mxu0
    %v2013 = vadd.f32 %v1972, %v2012
    %v2014 = vpop.f32.mrb[0].mxu0
    %v2015 = vpop.f32.mrb[0].mxu0
    %2016 = vdwg.mxu0
    %2017 = vmatprep.subr.bf16.mxu0 %v1140
    %2018 = vmatpush1.bf16.msra.mxu0 %v1139
    %2019 = vmatprep.subr.bf16.mxu0 %v1142
    %2020 = vmatpush1.bf16.msra.mxu0 %v1141
    %2021 = vmatprep.subr.bf16.mxu0 %v1144
    %2022 = vmatpush1.bf16.msra.mxu0 %v1143
    %2023 = vmatprep.subr.bf16.mxu0 %v1146
    %2024 = vmatpush1.bf16.msra.mxu0 %v1145
    %2025 = vmatprep.subr.bf16.mxu0 %v1148
    %2026 = vmatpush1.bf16.msra.mxu0 %v1147
    %2027 = vmatprep.subr.bf16.mxu0 %v1150
    %2028 = vmatpush1.bf16.msra.mxu0 %v1149
    %2029 = vmatprep.subr.bf16.mxu0 %v1152
    %2030 = vmatpush1.bf16.msra.mxu0 %v1151
    %2031 = vmatprep.subr.bf16.mxu0 %v1154
    %2032 = vmatpush1.bf16.msra.mxu0 %v1153
    %2033 = vmatprep.subr.bf16.mxu0 %v1156
    %2034 = vmatpush1.bf16.msra.mxu0 %v1155
    %2035 = vmatprep.subr.bf16.mxu0 %v1158
    %2036 = vmatpush1.bf16.msra.mxu0 %v1157
    %2037 = vmatprep.subr.bf16.mxu0 %v1160
    %2038 = vmatpush1.bf16.msra.mxu0 %v1159
    %2039 = vmatprep.subr.bf16.mxu0 %v1162
    %2040 = vmatpush1.bf16.msra.mxu0 %v1161
    %2041 = vmatprep.subr.bf16.mxu0 %v1164
    %2042 = vmatpush1.bf16.msra.mxu0 %v1163
    %2043 = vmatprep.subr.bf16.mxu0 %v1166
    %2044 = vmatpush1.bf16.msra.mxu0 %v1165
    %2045 = vmatprep.subr.bf16.mxu0 %v1168
    %2046 = vmatpush1.bf16.msra.mxu0 %v1167
    %2047 = vmatprep.subr.bf16.mxu0 %v1170
    %2048 = vmatpush1.bf16.msra.mxu0 %v1169
    %2049 = vmatprep.mubr.bf16.mxu0 %v1827
    %2050 = vmatmul.mubr.bf16.gmra.mrb[0].mxu0 %v1813
    %v2051 = vpop.f32.mrb[0].mxu0
    %v2052 = vadd.f32 %v2011, %v2051
    %v2053 = vpop.f32.mrb[0].mxu0
    %v2054 = vadd.f32 %v2013, %v2053
    %v2055 = vpop.f32.mrb[0].mxu0
    %v2056 = vpop.f32.mrb[0].mxu0
    %2057 = vdwg.mxu0
    %2058 = vmatprep.subr.bf16.mxu0 %v1172
    %2059 = vmatpush1.bf16.msra.mxu0 %v1171
    %2060 = vmatprep.subr.bf16.mxu0 %v1174
    %2061 = vmatpush1.bf16.msra.mxu0 %v1173
    %2062 = vmatprep.subr.bf16.mxu0 %v1176
    %2063 = vmatpush1.bf16.msra.mxu0 %v1175
    %2064 = vmatprep.subr.bf16.mxu0 %v1178
    %2065 = vmatpush1.bf16.msra.mxu0 %v1177
    %2066 = vmatprep.subr.bf16.mxu0 %v1180
    %2067 = vmatpush1.bf16.msra.mxu0 %v1179
    %2068 = vmatprep.subr.bf16.mxu0 %v1182
    %2069 = vmatpush1.bf16.msra.mxu0 %v1181
    %2070 = vmatprep.subr.bf16.mxu0 %v1184
    %2071 = vmatpush1.bf16.msra.mxu0 %v1183
    %2072 = vmatprep.subr.bf16.mxu0 %v1186
    %2073 = vmatpush1.bf16.msra.mxu0 %v1185
    %2074 = vmatprep.subr.bf16.mxu0 %v1188
    %2075 = vmatpush1.bf16.msra.mxu0 %v1187
    %2076 = vmatprep.subr.bf16.mxu0 %v1190
    %2077 = vmatpush1.bf16.msra.mxu0 %v1189
    %2078 = vmatprep.subr.bf16.mxu0 %v1192
    %2079 = vmatpush1.bf16.msra.mxu0 %v1191
    %2080 = vmatprep.subr.bf16.mxu0 %v1194
    %2081 = vmatpush1.bf16.msra.mxu0 %v1193
    %2082 = vmatprep.subr.bf16.mxu0 %v1196
    %2083 = vmatpush1.bf16.msra.mxu0 %v1195
    %2084 = vmatprep.subr.bf16.mxu0 %v1198
    %2085 = vmatpush1.bf16.msra.mxu0 %v1197
    %2086 = vmatprep.subr.bf16.mxu0 %v1200
    %2087 = vmatpush1.bf16.msra.mxu0 %v1199
    %2088 = vmatprep.subr.bf16.mxu0 %v1202
    %2089 = vmatpush1.bf16.msra.mxu0 %v1201
    %2090 = vmatprep.mubr.bf16.mxu0 %v1836
    %2091 = vmatmul.mubr.bf16.gmra.mrb[0].mxu0 %v1835
    %v2092 = vpop.f32.mrb[0].mxu0
    %v2093 = vadd.f32 %v2052, %v2092
    %v2094 = vpop.f32.mrb[0].mxu0
    %v2095 = vadd.f32 %v2054, %v2094
    %v2096 = vpop.f32.mrb[0].mxu0
    %v2097 = vpop.f32.mrb[0].mxu0
    %2098 = vdwg.mxu0
    %2099 = vmatprep.subr.bf16.mxu0 %v1204
    %2100 = vmatpush1.bf16.msra.mxu0 %v1203
    %2101 = vmatprep.subr.bf16.mxu0 %v1206
    %2102 = vmatpush1.bf16.msra.mxu0 %v1205
    %2103 = vmatprep.subr.bf16.mxu0 %v1208
    %2104 = vmatpush1.bf16.msra.mxu0 %v1207
    %2105 = vmatprep.subr.bf16.mxu0 %v1210
    %2106 = vmatpush1.bf16.msra.mxu0 %v1209
    %2107 = vmatprep.subr.bf16.mxu0 %v1212
    %2108 = vmatpush1.bf16.msra.mxu0 %v1211
    %2109 = vmatprep.subr.bf16.mxu0 %v1214
    %2110 = vmatpush1.bf16.msra.mxu0 %v1213
    %2111 = vmatprep.subr.bf16.mxu0 %v1216
    %2112 = vmatpush1.bf16.msra.mxu0 %v1215
    %2113 = vmatprep.subr.bf16.mxu0 %v1218
    %2114 = vmatpush1.bf16.msra.mxu0 %v1217
    %2115 = vmatprep.subr.bf16.mxu0 %v1220
    %2116 = vmatpush1.bf16.msra.mxu0 %v1219
    %2117 = vmatprep.subr.bf16.mxu0 %v1222
    %2118 = vmatpush1.bf16.msra.mxu0 %v1221
    %2119 = vmatprep.subr.bf16.mxu0 %v1224
    %2120 = vmatpush1.bf16.msra.mxu0 %v1223
    %2121 = vmatprep.subr.bf16.mxu0 %v1226
    %2122 = vmatpush1.bf16.msra.mxu0 %v1225
    %2123 = vmatprep.subr.bf16.mxu0 0
    %2124 = vmatpush1.bf16.msra.mxu0 0
    %2125 = vmatprep.subr.bf16.mxu0 0
    %2126 = vmatpush1.bf16.msra.mxu0 0
    %2127 = vmatprep.subr.bf16.mxu0 0
    %2128 = vmatpush1.bf16.msra.mxu0 0
    %2129 = vmatprep.subr.bf16.mxu0 0
    %2130 = vmatpush1.bf16.msra.mxu0 0
    %2131 = vmatprep.mubr.bf16.mxu0 %v1851
    %2132 = vmatmul.mubr.bf16.gmra.mrb[0].mxu0 %v1820
    %v2133 = vpop.f32.mrb[0].mxu0
    %v2134 = vadd.f32 %v2093, %v2133
    %v2135 = vpop.f32.mrb[0].mxu0
    %v2136 = vadd.f32 %v2095, %v2135
    %v2137 = vpop.f32.mrb[0].mxu0
    %v2138 = vpop.f32.mrb[0].mxu0
    %2139 = vdwg.mxu0
    %v2140 = vmax.f32 %v2134, 0.0
    %v2141 = vmax.f32 %v2136, 0.0
    %v2142 = vpack.c.bf16 %v1734, %v1734
    %v2143 = vpack.c.bf16 %v1735, %v1735
    %v2144 = vld [vmem:[%s3] sm:$0xff]
    %v2145 = vld [vmem:[%s3 + $0x8] sm:$0xff]
    %v2146 = vld [vmem:[%s3 + $0x10] sm:$0xff]
    %v2147 = vld [vmem:[%s3 + $0x18] sm:$0xff]
    %v2148 = vld [vmem:[%s3 + $0x20] sm:$0xff]
    %v2149 = vld [vmem:[%s3 + $0x28] sm:$0xff]
    %v2150 = vld [vmem:[%s3 + $0x30] sm:$0xff]
    %v2151 = vld [vmem:[%s3 + $0x38] sm:$0xff]
    %v2152 = vld [vmem:[%s3 + $0x40] sm:$0xff]
    %v2153 = vld [vmem:[%s3 + $0x48] sm:$0xff]
    %v2154 = vld [vmem:[%s3 + $0x50] sm:$0xff]
    %v2155 = vld [vmem:[%s3 + $0x58] sm:$0xff]
    %v2156 = vld [vmem:[%s3 + $0x60] sm:$0xff]
    %v2157 = vld [vmem:[%s3 + $0x68] sm:$0xff]
    %v2158 = vld [vmem:[%s3 + $0x70] sm:$0xff]
    %v2159 = vld [vmem:[%s3 + $0x78] sm:$0xff]
    %v2160 = vld [vmem:[%s3 + $0x80] sm:$0xff]
    %v2161 = vld [vmem:[%s3 + $0x88] sm:$0xff]
    %v2162 = vld [vmem:[%s3 + $0x90] sm:$0xff]
    %v2163 = vld [vmem:[%s3 + $0x98] sm:$0xff]
    %v2164 = vld [vmem:[%s3 + $0xa0] sm:$0xff]
    %v2165 = vld [vmem:[%s3 + $0xa8] sm:$0xff]
    %v2166 = vld [vmem:[%s3 + $0xb0] sm:$0xff]
    %v2167 = vld [vmem:[%s3 + $0xb8] sm:$0xff]
    %v2168 = vld [vmem:[%s3 + $0xc0] sm:$0xff]
    %v2169 = vld [vmem:[%s3 + $0xc8] sm:$0xff]
    %v2170 = vld [vmem:[%s3 + $0xd0] sm:$0xff]
    %v2171 = vld [vmem:[%s3 + $0xd8] sm:$0xff]
    %v2172 = vld [vmem:[%s3 + $0xe0] sm:$0xff]
    %v2173 = vld [vmem:[%s3 + $0xe8] sm:$0xff]
    %v2174 = vld [vmem:[%s3 + $0xf0] sm:$0xff]
    %v2175 = vld [vmem:[%s3 + $0xf8] sm:$0xff]
    %v2176 = vld [vmem:[%s3 + $0x100] sm:$0xff]
    %v2177 = vld [vmem:[%s3 + $0x108] sm:$0xff]
    %v2178 = vld [vmem:[%s3 + $0x110] sm:$0xff]
    %v2179 = vld [vmem:[%s3 + $0x118] sm:$0xff]
    %v2180 = vld [vmem:[%s3 + $0x120] sm:$0xff]
    %v2181 = vld [vmem:[%s3 + $0x128] sm:$0xff]
    %v2182 = vld [vmem:[%s3 + $0x130] sm:$0xff]
    %v2183 = vld [vmem:[%s3 + $0x138] sm:$0xff]
    %v2184 = vld [vmem:[%s3 + $0x140] sm:$0xff]
    %v2185 = vld [vmem:[%s3 + $0x148] sm:$0xff]
    %v2186 = vld [vmem:[%s3 + $0x150] sm:$0xff]
    %v2187 = vld [vmem:[%s3 + $0x158] sm:$0xff]
    %v2188 = vld [vmem:[%s3 + $0x160] sm:$0xff]
    %v2189 = vld [vmem:[%s3 + $0x168] sm:$0xff]
    %v2190 = vld [vmem:[%s3 + $0x170] sm:$0xff]
    %v2191 = vld [vmem:[%s3 + $0x178] sm:$0xff]
    %v2192 = vld [vmem:[%s3 + $0x180] sm:$0xff]
    %v2193 = vld [vmem:[%s3 + $0x188] sm:$0xff]
    %v2194 = vld [vmem:[%s3 + $0x190] sm:$0xff]
    %v2195 = vld [vmem:[%s3 + $0x198] sm:$0xff]
    %v2196 = vld [vmem:[%s3 + $0x1a0] sm:$0xff]
    %v2197 = vld [vmem:[%s3 + $0x1a8] sm:$0xff]
    %v2198 = vld [vmem:[%s3 + $0x1b0] sm:$0xff]
    %v2199 = vld [vmem:[%s3 + $0x1b8] sm:$0xff]
    %v2200 = vld [vmem:[%s3 + $0x1c0] sm:$0xff]
    %v2201 = vld [vmem:[%s3 + $0x1c8] sm:$0xff]
    %v2202 = vld [vmem:[%s3 + $0x1d0] sm:$0xff]
    %v2203 = vld [vmem:[%s3 + $0x1d8] sm:$0xff]
    %v2204 = vld [vmem:[%s3 + $0x1e0] sm:$0xff]
    %v2205 = vld [vmem:[%s3 + $0x1e8] sm:$0xff]
    %v2206 = vld [vmem:[%s3 + $0x1f0] sm:$0xff]
    %v2207 = vld [vmem:[%s3 + $0x1f8] sm:$0xff]
    %v2208 = vpack.c.bf16 %v2140, %v2140
    %v2209 = vpack.c.bf16 %v2141, %v2141
    %s2210 = scalar_lea.vmem %s3, 512
    %v2211 = vld [vmem:[%s2210] sm:$0xff]
    %v2212 = vld [vmem:[%s2210 + $0x8] sm:$0xff]
    %v2213 = vld [vmem:[%s2210 + $0x10] sm:$0xff]
    %v2214 = vld [vmem:[%s2210 + $0x18] sm:$0xff]
    %v2215 = vld [vmem:[%s2210 + $0x20] sm:$0xff]
    %v2216 = vld [vmem:[%s2210 + $0x28] sm:$0xff]
    %v2217 = vld [vmem:[%s2210 + $0x30] sm:$0xff]
    %v2218 = vld [vmem:[%s2210 + $0x38] sm:$0xff]
    %v2219 = vld [vmem:[%s2210 + $0x40] sm:$0xff]
    %v2220 = vld [vmem:[%s2210 + $0x48] sm:$0xff]
    %v2221 = vld [vmem:[%s2210 + $0x50] sm:$0xff]
    %v2222 = vld [vmem:[%s2210 + $0x58] sm:$0xff]
    %v2223 = vld [vmem:[%s2210 + $0x60] sm:$0xff]
    %v2224 = vld [vmem:[%s2210 + $0x68] sm:$0xff]
    %v2225 = vld [vmem:[%s2210 + $0x70] sm:$0xff]
    %v2226 = vld [vmem:[%s2210 + $0x78] sm:$0xff]
    %v2227 = vld [vmem:[%s2210 + $0x80] sm:$0xff]
    %v2228 = vld [vmem:[%s2210 + $0x88] sm:$0xff]
    %v2229 = vld [vmem:[%s2210 + $0x90] sm:$0xff]
    %v2230 = vld [vmem:[%s2210 + $0x98] sm:$0xff]
    %v2231 = vld [vmem:[%s2210 + $0xa0] sm:$0xff]
    %v2232 = vld [vmem:[%s2210 + $0xa8] sm:$0xff]
    %v2233 = vld [vmem:[%s2210 + $0xb0] sm:$0xff]
    %v2234 = vld [vmem:[%s2210 + $0xb8] sm:$0xff]
    %v2235 = vld [vmem:[%s2210 + $0xc0] sm:$0xff]
    %v2236 = vld [vmem:[%s2210 + $0xc8] sm:$0xff]
    %v2237 = vld [vmem:[%s2210 + $0xd0] sm:$0xff]
    %v2238 = vld [vmem:[%s2210 + $0xd8] sm:$0xff]
    %v2239 = vld [vmem:[%s2210 + $0xe0] sm:$0xff]
    %v2240 = vld [vmem:[%s2210 + $0xe8] sm:$0xff]
    %v2241 = vld [vmem:[%s2210 + $0xf0] sm:$0xff]
    %v2242 = vld [vmem:[%s2210 + $0xf8] sm:$0xff]
    %v2243 = vld [vmem:[%s2210 + $0x100] sm:$0xff]
    %v2244 = vld [vmem:[%s2210 + $0x108] sm:$0xff]
    %v2245 = vld [vmem:[%s2210 + $0x110] sm:$0xff]
    %v2246 = vld [vmem:[%s2210 + $0x118] sm:$0xff]
    %v2247 = vld [vmem:[%s2210 + $0x120] sm:$0xff]
    %v2248 = vld [vmem:[%s2210 + $0x128] sm:$0xff]
    %v2249 = vld [vmem:[%s2210 + $0x130] sm:$0xff]
    %v2250 = vld [vmem:[%s2210 + $0x138] sm:$0xff]
    %v2251 = vld [vmem:[%s2210 + $0x140] sm:$0xff]
    %v2252 = vld [vmem:[%s2210 + $0x148] sm:$0xff]
    %v2253 = vld [vmem:[%s2210 + $0x150] sm:$0xff]
    %v2254 = vld [vmem:[%s2210 + $0x158] sm:$0xff]
    %v2255 = vld [vmem:[%s2210 + $0x160] sm:$0xff]
    %v2256 = vld [vmem:[%s2210 + $0x168] sm:$0xff]
    %v2257 = vld [vmem:[%s2210 + $0x170] sm:$0xff]
    %v2258 = vld [vmem:[%s2210 + $0x178] sm:$0xff]
    %v2259 = vld [vmem:[%s2210 + $0x180] sm:$0xff]
    %v2260 = vld [vmem:[%s2210 + $0x188] sm:$0xff]
    %v2261 = vld [vmem:[%s2210 + $0x190] sm:$0xff]
    %v2262 = vld [vmem:[%s2210 + $0x198] sm:$0xff]
    %v2263 = vld [vmem:[%s2210 + $0x1a0] sm:$0xff]
    %v2264 = vld [vmem:[%s2210 + $0x1a8] sm:$0xff]
    %v2265 = vld [vmem:[%s2210 + $0x1b0] sm:$0xff]
    %v2266 = vld [vmem:[%s2210 + $0x1b8] sm:$0xff]
    %v2267 = vld [vmem:[%s2210 + $0x1c0] sm:$0xff]
    %v2268 = vld [vmem:[%s2210 + $0x1c8] sm:$0xff]
    %v2269 = vld [vmem:[%s2210 + $0x1d0] sm:$0xff]
    %v2270 = vld [vmem:[%s2210 + $0x1d8] sm:$0xff]
    %v2271 = vld [vmem:[%s2210 + $0x1e0] sm:$0xff]
    %v2272 = vld [vmem:[%s2210 + $0x1e8] sm:$0xff]
    %v2273 = vld [vmem:[%s2210 + $0x1f0] sm:$0xff]
    %v2274 = vld [vmem:[%s2210 + $0x1f8] sm:$0xff]
    %v2339 = vunpack.c.l.b16 %v2211
    %v2340 = vunpack.c.h.b16 %v2211
    %v2341 = vunpack.c.l.b16 %v2212
    %v2342 = vunpack.c.h.b16 %v2212
    %v2343 = vunpack.c.l.b16 %v2213
    %v2344 = vunpack.c.h.b16 %v2213
    %v2345 = vunpack.c.l.b16 %v2214
    %v2346 = vunpack.c.h.b16 %v2214
    %v2347 = vunpack.c.l.b16 %v2215
    %v2348 = vunpack.c.h.b16 %v2215
    %v2349 = vunpack.c.l.b16 %v2216
    %v2350 = vunpack.c.h.b16 %v2216
    %v2351 = vunpack.c.l.b16 %v2217
    %v2352 = vunpack.c.h.b16 %v2217
    %v2353 = vunpack.c.l.b16 %v2218
    %v2354 = vunpack.c.h.b16 %v2218
    %v2355 = vunpack.c.l.b16 %v2219
    %v2356 = vunpack.c.h.b16 %v2219
    %v2357 = vunpack.c.l.b16 %v2220
    %v2358 = vunpack.c.h.b16 %v2220
    %v2359 = vunpack.c.l.b16 %v2221
    %v2360 = vunpack.c.h.b16 %v2221
    %v2361 = vunpack.c.l.b16 %v2222
    %v2362 = vunpack.c.h.b16 %v2222
    %v2363 = vunpack.c.l.b16 %v2223
    %v2364 = vunpack.c.h.b16 %v2223
    %v2365 = vunpack.c.l.b16 %v2224
    %v2366 = vunpack.c.h.b16 %v2224
    %v2367 = vunpack.c.l.b16 %v2225
    %v2368 = vunpack.c.h.b16 %v2225
    %v2369 = vunpack.c.l.b16 %v2226
    %v2370 = vunpack.c.h.b16 %v2226
    %v2371 = vunpack.c.l.b16 %v2227
    %v2372 = vunpack.c.h.b16 %v2227
    %v2373 = vunpack.c.l.b16 %v2228
    %v2374 = vunpack.c.h.b16 %v2228
    %v2375 = vunpack.c.l.b16 %v2229
    %v2376 = vunpack.c.h.b16 %v2229
    %v2377 = vunpack.c.l.b16 %v2230
    %v2378 = vunpack.c.h.b16 %v2230
    %v2379 = vunpack.c.l.b16 %v2231
    %v2380 = vunpack.c.h.b16 %v2231
    %v2381 = vunpack.c.l.b16 %v2232
    %v2382 = vunpack.c.h.b16 %v2232
    %v2383 = vunpack.c.l.b16 %v2233
    %v2384 = vunpack.c.h.b16 %v2233
    %v2385 = vunpack.c.l.b16 %v2234
    %v2386 = vunpack.c.h.b16 %v2234
    %v2387 = vunpack.c.l.b16 %v2235
    %v2388 = vunpack.c.h.b16 %v2235
    %v2389 = vunpack.c.l.b16 %v2236
    %v2390 = vunpack.c.h.b16 %v2236
    %v2391 = vunpack.c.l.b16 %v2237
    %v2392 = vunpack.c.h.b16 %v2237
    %v2393 = vunpack.c.l.b16 %v2238
    %v2394 = vunpack.c.h.b16 %v2238
    %v2395 = vunpack.c.l.b16 %v2239
    %v2396 = vunpack.c.h.b16 %v2239
    %v2397 = vunpack.c.l.b16 %v2240
    %v2398 = vunpack.c.h.b16 %v2240
    %v2399 = vunpack.c.l.b16 %v2241
    %v2400 = vunpack.c.h.b16 %v2241
    %v2401 = vunpack.c.l.b16 %v2242
    %v2402 = vunpack.c.h.b16 %v2242
    %v2403 = vunpack.c.l.b16 %v2243
    %v2404 = vunpack.c.h.b16 %v2243
    %v2405 = vunpack.c.l.b16 %v2244
    %v2406 = vunpack.c.h.b16 %v2244
    %v2407 = vunpack.c.l.b16 %v2245
    %v2408 = vunpack.c.h.b16 %v2245
    %v2409 = vunpack.c.l.b16 %v2246
    %v2410 = vunpack.c.h.b16 %v2246
    %v2411 = vunpack.c.l.b16 %v2247
    %v2412 = vunpack.c.h.b16 %v2247
    %v2413 = vunpack.c.l.b16 %v2248
    %v2414 = vunpack.c.h.b16 %v2248
    %v2415 = vunpack.c.l.b16 %v2249
    %v2416 = vunpack.c.h.b16 %v2249
    %v2417 = vunpack.c.l.b16 %v2250
    %v2418 = vunpack.c.h.b16 %v2250
    %v2419 = vunpack.c.l.b16 %v2251
    %v2420 = vunpack.c.h.b16 %v2251
    %v2421 = vunpack.c.l.b16 %v2252
    %v2422 = vunpack.c.h.b16 %v2252
    %v2423 = vunpack.c.l.b16 %v2253
    %v2424 = vunpack.c.h.b16 %v2253
    %v2425 = vunpack.c.l.b16 %v2254
    %v2426 = vunpack.c.h.b16 %v2254
    %v2427 = vunpack.c.l.b16 %v2255
    %v2428 = vunpack.c.h.b16 %v2255
    %v2429 = vunpack.c.l.b16 %v2256
    %v2430 = vunpack.c.h.b16 %v2256
    %v2431 = vunpack.c.l.b16 %v2257
    %v2432 = vunpack.c.h.b16 %v2257
    %v2433 = vunpack.c.l.b16 %v2258
    %v2434 = vunpack.c.h.b16 %v2258
    %v2435 = vunpack.c.l.b16 %v2259
    %v2436 = vunpack.c.h.b16 %v2259
    %v2437 = vunpack.c.l.b16 %v2260
    %v2438 = vunpack.c.h.b16 %v2260
    %v2439 = vunpack.c.l.b16 %v2261
    %v2440 = vunpack.c.h.b16 %v2261
    %v2441 = vunpack.c.l.b16 %v2262
    %v2442 = vunpack.c.h.b16 %v2262
    %v2443 = vunpack.c.l.b16 %v2263
    %v2444 = vunpack.c.h.b16 %v2263
    %v2445 = vunpack.c.l.b16 %v2264
    %v2446 = vunpack.c.h.b16 %v2264
    %v2447 = vunpack.c.l.b16 %v2265
    %v2448 = vunpack.c.h.b16 %v2265
    %v2449 = vunpack.c.l.b16 %v2266
    %v2450 = vunpack.c.h.b16 %v2266
    %v2451 = vunpack.c.l.b16 %v2267
    %v2452 = vunpack.c.h.b16 %v2267
    %v2453 = vunpack.c.l.b16 %v2268
    %v2454 = vunpack.c.h.b16 %v2268
    %v2455 = vunpack.c.l.b16 %v2269
    %v2456 = vunpack.c.h.b16 %v2269
    %v2457 = vunpack.c.l.b16 %v2270
    %v2458 = vunpack.c.h.b16 %v2270
    %v2459 = vunpack.c.l.b16 %v2271
    %v2460 = vunpack.c.h.b16 %v2271
    %v2461 = vunpack.c.l.b16 %v2272
    %v2462 = vunpack.c.h.b16 %v2272
    %v2463 = vunpack.c.l.b16 %v2273
    %v2464 = vunpack.c.h.b16 %v2273
    %v2465 = vunpack.c.l.b16 %v2274
    %v2466 = vunpack.c.h.b16 %v2274
    %v2467 = vpack.c.b16 %v2343, %v2339
    %v2468 = vpack.c.b16 %v2344, %v2340
    %v2469 = vpack.c.b16 %v2345, %v2341
    %v2470 = vpack.c.b16 %v2346, %v2342
    %v2471 = vpack.c.b16 %v2351, %v2347
    %v2472 = vpack.c.b16 %v2352, %v2348
    %v2473 = vpack.c.b16 %v2353, %v2349
    %v2474 = vpack.c.b16 %v2354, %v2350
    %v2475 = vpack.c.b16 %v2359, %v2355
    %v2476 = vpack.c.b16 %v2360, %v2356
    %v2477 = vpack.c.b16 %v2361, %v2357
    %v2478 = vpack.c.b16 %v2362, %v2358
    %v2479 = vpack.c.b16 %v2367, %v2363
    %v2480 = vpack.c.b16 %v2368, %v2364
    %v2481 = vpack.c.b16 %v2369, %v2365
    %v2482 = vpack.c.b16 %v2370, %v2366
    %v2483 = vpack.c.b16 %v2375, %v2371
    %v2484 = vpack.c.b16 %v2376, %v2372
    %v2485 = vpack.c.b16 %v2377, %v2373
    %v2486 = vpack.c.b16 %v2378, %v2374
    %v2487 = vpack.c.b16 %v2383, %v2379
    %v2488 = vpack.c.b16 %v2384, %v2380
    %v2489 = vpack.c.b16 %v2385, %v2381
    %v2490 = vpack.c.b16 %v2386, %v2382
    %v2491 = vpack.c.b16 %v2391, %v2387
    %v2492 = vpack.c.b16 %v2392, %v2388
    %v2493 = vpack.c.b16 %v2393, %v2389
    %v2494 = vpack.c.b16 %v2394, %v2390
    %v2495 = vpack.c.b16 %v2399, %v2395
    %v2496 = vpack.c.b16 %v2400, %v2396
    %v2497 = vpack.c.b16 %v2401, %v2397
    %v2498 = vpack.c.b16 %v2402, %v2398
    %v2499 = vpack.c.b16 %v2407, %v2403
    %v2500 = vpack.c.b16 %v2408, %v2404
    %v2501 = vpack.c.b16 %v2409, %v2405
    %v2502 = vpack.c.b16 %v2410, %v2406
    %v2503 = vpack.c.b16 %v2415, %v2411
    %v2504 = vpack.c.b16 %v2416, %v2412
    %v2505 = vpack.c.b16 %v2417, %v2413
    %v2506 = vpack.c.b16 %v2418, %v2414
    %v2507 = vpack.c.b16 %v2423, %v2419
    %v2508 = vpack.c.b16 %v2424, %v2420
    %v2509 = vpack.c.b16 %v2425, %v2421
    %v2510 = vpack.c.b16 %v2426, %v2422
    %v2511 = vpack.c.b16 %v2431, %v2427
    %v2512 = vpack.c.b16 %v2432, %v2428
    %v2513 = vpack.c.b16 %v2433, %v2429
    %v2514 = vpack.c.b16 %v2434, %v2430
    %v2515 = vpack.c.b16 %v2439, %v2435
    %v2516 = vpack.c.b16 %v2440, %v2436
    %v2517 = vpack.c.b16 %v2441, %v2437
    %v2518 = vpack.c.b16 %v2442, %v2438
    %v2519 = vpack.c.b16 %v2447, %v2443
    %v2520 = vpack.c.b16 %v2448, %v2444
    %v2521 = vpack.c.b16 %v2449, %v2445
    %v2522 = vpack.c.b16 %v2450, %v2446
    %v2523 = vpack.c.b16 %v2455, %v2451
    %v2524 = vpack.c.b16 %v2456, %v2452
    %v2525 = vpack.c.b16 %v2457, %v2453
    %v2526 = vpack.c.b16 %v2458, %v2454
    %v2527 = vpack.c.b16 %v2463, %v2459
    %v2528 = vpack.c.b16 %v2464, %v2460
    %v2529 = vpack.c.b16 %v2465, %v2461
    %v2530 = vpack.c.b16 %v2466, %v2462
    %2595 = vmatprep.subr.bf16.mxu0 %v2468
    %2596 = vmatpush1.bf16.msra.mxu0 %v2467
    %2597 = vmatprep.subr.bf16.mxu0 %v2472
    %2598 = vmatpush1.bf16.msra.mxu0 %v2471
    %2599 = vmatprep.subr.bf16.mxu0 %v2476
    %2600 = vmatpush1.bf16.msra.mxu0 %v2475
    %2601 = vmatprep.subr.bf16.mxu0 %v2480
    %2602 = vmatpush1.bf16.msra.mxu0 %v2479
    %2603 = vmatprep.subr.bf16.mxu0 %v2484
    %2604 = vmatpush1.bf16.msra.mxu0 %v2483
    %2605 = vmatprep.subr.bf16.mxu0 %v2488
    %2606 = vmatpush1.bf16.msra.mxu0 %v2487
    %2607 = vmatprep.subr.bf16.mxu0 %v2492
    %2608 = vmatpush1.bf16.msra.mxu0 %v2491
    %2609 = vmatprep.subr.bf16.mxu0 %v2496
    %2610 = vmatpush1.bf16.msra.mxu0 %v2495
    %2611 = vmatprep.subr.bf16.mxu0 %v2500
    %2612 = vmatpush1.bf16.msra.mxu0 %v2499
    %2613 = vmatprep.subr.bf16.mxu0 %v2504
    %2614 = vmatpush1.bf16.msra.mxu0 %v2503
    %2615 = vmatprep.subr.bf16.mxu0 %v2508
    %2616 = vmatpush1.bf16.msra.mxu0 %v2507
    %2617 = vmatprep.subr.bf16.mxu0 %v2512
    %2618 = vmatpush1.bf16.msra.mxu0 %v2511
    %2619 = vmatprep.subr.bf16.mxu0 %v2516
    %2620 = vmatpush1.bf16.msra.mxu0 %v2515
    %2621 = vmatprep.subr.bf16.mxu0 %v2520
    %2622 = vmatpush1.bf16.msra.mxu0 %v2519
    %2623 = vmatprep.subr.bf16.mxu0 %v2524
    %2624 = vmatpush1.bf16.msra.mxu0 %v2523
    %2625 = vmatprep.subr.bf16.mxu0 %v2528
    %2626 = vmatpush1.bf16.msra.mxu0 %v2527
    %2627 = vmatprep.mubr.bf16.mxu0 %v2209
    %2628 = vmatmul.mubr.bf16.gmra.mrb[0].mxu0 %v2208
    %v2629 = vpop.f32.mrb[0].mxu0
    %v2630 = vadd.f32 0.0, %v2629
    %v2631 = vpop.f32.mrb[0].mxu0
    %v2632 = vadd.f32 0.0, %v2631
    %v2633 = vpop.f32.mrb[0].mxu0
    %v2634 = vpop.f32.mrb[0].mxu0
    %2635 = vdwg.mxu0
    %2636 = vmatprep.subr.bf16.mxu0 %v2470
    %2637 = vmatpush1.bf16.msra.mxu0 %v2469
    %2638 = vmatprep.subr.bf16.mxu0 %v2474
    %2639 = vmatpush1.bf16.msra.mxu0 %v2473
    %2640 = vmatprep.subr.bf16.mxu0 %v2478
    %2641 = vmatpush1.bf16.msra.mxu0 %v2477
    %2642 = vmatprep.subr.bf16.mxu0 %v2482
    %2643 = vmatpush1.bf16.msra.mxu0 %v2481
    %2644 = vmatprep.subr.bf16.mxu0 %v2486
    %2645 = vmatpush1.bf16.msra.mxu0 %v2485
    %2646 = vmatprep.subr.bf16.mxu0 %v2490
    %2647 = vmatpush1.bf16.msra.mxu0 %v2489
    %2648 = vmatprep.subr.bf16.mxu0 %v2494
    %2649 = vmatpush1.bf16.msra.mxu0 %v2493
    %2650 = vmatprep.subr.bf16.mxu0 %v2498
    %2651 = vmatpush1.bf16.msra.mxu0 %v2497
    %2652 = vmatprep.subr.bf16.mxu0 %v2502
    %2653 = vmatpush1.bf16.msra.mxu0 %v2501
    %2654 = vmatprep.subr.bf16.mxu0 %v2506
    %2655 = vmatpush1.bf16.msra.mxu0 %v2505
    %2656 = vmatprep.subr.bf16.mxu0 %v2510
    %2657 = vmatpush1.bf16.msra.mxu0 %v2509
    %2658 = vmatprep.subr.bf16.mxu0 %v2514
    %2659 = vmatpush1.bf16.msra.mxu0 %v2513
    %2660 = vmatprep.subr.bf16.mxu0 %v2518
    %2661 = vmatpush1.bf16.msra.mxu0 %v2517
    %2662 = vmatprep.subr.bf16.mxu0 %v2522
    %2663 = vmatpush1.bf16.msra.mxu0 %v2521
    %2664 = vmatprep.subr.bf16.mxu0 %v2526
    %2665 = vmatpush1.bf16.msra.mxu0 %v2525
    %2666 = vmatprep.subr.bf16.mxu0 %v2530
    %2667 = vmatpush1.bf16.msra.mxu0 %v2529
    %2668 = vmatprep.mubr.bf16.mxu0 %v2209
    %2669 = vmatmul.mubr.bf16.gmra.mrb[0].mxu0 %v2208
    %v2670 = vpop.f32.mrb[0].mxu0
    %v2671 = vadd.f32 0.0, %v2670
    %v2672 = vpop.f32.mrb[0].mxu0
    %v2673 = vadd.f32 0.0, %v2672
    %v2674 = vpop.f32.mrb[0].mxu0
    %v2675 = vpop.f32.mrb[0].mxu0
    %2676 = vdwg.mxu0
    %v2741 = vunpack.c.l.b16 %v2144
    %v2742 = vunpack.c.h.b16 %v2144
    %v2743 = vunpack.c.l.b16 %v2145
    %v2744 = vunpack.c.h.b16 %v2145
    %v2745 = vunpack.c.l.b16 %v2146
    %v2746 = vunpack.c.h.b16 %v2146
    %v2747 = vunpack.c.l.b16 %v2147
    %v2748 = vunpack.c.h.b16 %v2147
    %v2749 = vunpack.c.l.b16 %v2148
    %v2750 = vunpack.c.h.b16 %v2148
    %v2751 = vunpack.c.l.b16 %v2149
    %v2752 = vunpack.c.h.b16 %v2149
    %v2753 = vunpack.c.l.b16 %v2150
    %v2754 = vunpack.c.h.b16 %v2150
    %v2755 = vunpack.c.l.b16 %v2151
    %v2756 = vunpack.c.h.b16 %v2151
    %v2757 = vunpack.c.l.b16 %v2152
    %v2758 = vunpack.c.h.b16 %v2152
    %v2759 = vunpack.c.l.b16 %v2153
    %v2760 = vunpack.c.h.b16 %v2153
    %v2761 = vunpack.c.l.b16 %v2154
    %v2762 = vunpack.c.h.b16 %v2154
    %v2763 = vunpack.c.l.b16 %v2155
    %v2764 = vunpack.c.h.b16 %v2155
    %v2765 = vunpack.c.l.b16 %v2156
    %v2766 = vunpack.c.h.b16 %v2156
    %v2767 = vunpack.c.l.b16 %v2157
    %v2768 = vunpack.c.h.b16 %v2157
    %v2769 = vunpack.c.l.b16 %v2158
    %v2770 = vunpack.c.h.b16 %v2158
    %v2771 = vunpack.c.l.b16 %v2159
    %v2772 = vunpack.c.h.b16 %v2159
    %v2773 = vunpack.c.l.b16 %v2160
    %v2774 = vunpack.c.h.b16 %v2160
    %v2775 = vunpack.c.l.b16 %v2161
    %v2776 = vunpack.c.h.b16 %v2161
    %v2777 = vunpack.c.l.b16 %v2162
    %v2778 = vunpack.c.h.b16 %v2162
    %v2779 = vunpack.c.l.b16 %v2163
    %v2780 = vunpack.c.h.b16 %v2163
    %v2781 = vunpack.c.l.b16 %v2164
    %v2782 = vunpack.c.h.b16 %v2164
    %v2783 = vunpack.c.l.b16 %v2165
    %v2784 = vunpack.c.h.b16 %v2165
    %v2785 = vunpack.c.l.b16 %v2166
    %v2786 = vunpack.c.h.b16 %v2166
    %v2787 = vunpack.c.l.b16 %v2167
    %v2788 = vunpack.c.h.b16 %v2167
    %v2789 = vunpack.c.l.b16 %v2168
    %v2790 = vunpack.c.h.b16 %v2168
    %v2791 = vunpack.c.l.b16 %v2169
    %v2792 = vunpack.c.h.b16 %v2169
    %v2793 = vunpack.c.l.b16 %v2170
    %v2794 = vunpack.c.h.b16 %v2170
    %v2795 = vunpack.c.l.b16 %v2171
    %v2796 = vunpack.c.h.b16 %v2171
    %v2797 = vunpack.c.l.b16 %v2172
    %v2798 = vunpack.c.h.b16 %v2172
    %v2799 = vunpack.c.l.b16 %v2173
    %v2800 = vunpack.c.h.b16 %v2173
    %v2801 = vunpack.c.l.b16 %v2174
    %v2802 = vunpack.c.h.b16 %v2174
    %v2803 = vunpack.c.l.b16 %v2175
    %v2804 = vunpack.c.h.b16 %v2175
    %v2805 = vunpack.c.l.b16 %v2176
    %v2806 = vunpack.c.h.b16 %v2176
    %v2807 = vunpack.c.l.b16 %v2177
    %v2808 = vunpack.c.h.b16 %v2177
    %v2809 = vunpack.c.l.b16 %v2178
    %v2810 = vunpack.c.h.b16 %v2178
    %v2811 = vunpack.c.l.b16 %v2179
    %v2812 = vunpack.c.h.b16 %v2179
    %v2813 = vunpack.c.l.b16 %v2180
    %v2814 = vunpack.c.h.b16 %v2180
    %v2815 = vunpack.c.l.b16 %v2181
    %v2816 = vunpack.c.h.b16 %v2181
    %v2817 = vunpack.c.l.b16 %v2182
    %v2818 = vunpack.c.h.b16 %v2182
    %v2819 = vunpack.c.l.b16 %v2183
    %v2820 = vunpack.c.h.b16 %v2183
    %v2821 = vunpack.c.l.b16 %v2184
    %v2822 = vunpack.c.h.b16 %v2184
    %v2823 = vunpack.c.l.b16 %v2185
    %v2824 = vunpack.c.h.b16 %v2185
    %v2825 = vunpack.c.l.b16 %v2186
    %v2826 = vunpack.c.h.b16 %v2186
    %v2827 = vunpack.c.l.b16 %v2187
    %v2828 = vunpack.c.h.b16 %v2187
    %v2829 = vunpack.c.l.b16 %v2188
    %v2830 = vunpack.c.h.b16 %v2188
    %v2831 = vunpack.c.l.b16 %v2189
    %v2832 = vunpack.c.h.b16 %v2189
    %v2833 = vunpack.c.l.b16 %v2190
    %v2834 = vunpack.c.h.b16 %v2190
    %v2835 = vunpack.c.l.b16 %v2191
    %v2836 = vunpack.c.h.b16 %v2191
    %v2837 = vunpack.c.l.b16 %v2192
    %v2838 = vunpack.c.h.b16 %v2192
    %v2839 = vunpack.c.l.b16 %v2193
    %v2840 = vunpack.c.h.b16 %v2193
    %v2841 = vunpack.c.l.b16 %v2194
    %v2842 = vunpack.c.h.b16 %v2194
    %v2843 = vunpack.c.l.b16 %v2195
    %v2844 = vunpack.c.h.b16 %v2195
    %v2845 = vunpack.c.l.b16 %v2196
    %v2846 = vunpack.c.h.b16 %v2196
    %v2847 = vunpack.c.l.b16 %v2197
    %v2848 = vunpack.c.h.b16 %v2197
    %v2849 = vunpack.c.l.b16 %v2198
    %v2850 = vunpack.c.h.b16 %v2198
    %v2851 = vunpack.c.l.b16 %v2199
    %v2852 = vunpack.c.h.b16 %v2199
    %v2853 = vunpack.c.l.b16 %v2200
    %v2854 = vunpack.c.h.b16 %v2200
    %v2855 = vunpack.c.l.b16 %v2201
    %v2856 = vunpack.c.h.b16 %v2201
    %v2857 = vunpack.c.l.b16 %v2202
    %v2858 = vunpack.c.h.b16 %v2202
    %v2859 = vunpack.c.l.b16 %v2203
    %v2860 = vunpack.c.h.b16 %v2203
    %v2861 = vunpack.c.l.b16 %v2204
    %v2862 = vunpack.c.h.b16 %v2204
    %v2863 = vunpack.c.l.b16 %v2205
    %v2864 = vunpack.c.h.b16 %v2205
    %v2865 = vunpack.c.l.b16 %v2206
    %v2866 = vunpack.c.h.b16 %v2206
    %v2867 = vunpack.c.l.b16 %v2207
    %v2868 = vunpack.c.h.b16 %v2207
    %v2869 = vpack.c.b16 %v2745, %v2741
    %v2870 = vpack.c.b16 %v2746, %v2742
    %v2871 = vpack.c.b16 %v2747, %v2743
    %v2872 = vpack.c.b16 %v2748, %v2744
    %v2873 = vpack.c.b16 %v2753, %v2749
    %v2874 = vpack.c.b16 %v2754, %v2750
    %v2875 = vpack.c.b16 %v2755, %v2751
    %v2876 = vpack.c.b16 %v2756, %v2752
    %v2877 = vpack.c.b16 %v2761, %v2757
    %v2878 = vpack.c.b16 %v2762, %v2758
    %v2879 = vpack.c.b16 %v2763, %v2759
    %v2880 = vpack.c.b16 %v2764, %v2760
    %v2881 = vpack.c.b16 %v2769, %v2765
    %v2882 = vpack.c.b16 %v2770, %v2766
    %v2883 = vpack.c.b16 %v2771, %v2767
    %v2884 = vpack.c.b16 %v2772, %v2768
    %v2885 = vpack.c.b16 %v2777, %v2773
    %v2886 = vpack.c.b16 %v2778, %v2774
    %v2887 = vpack.c.b16 %v2779, %v2775
    %v2888 = vpack.c.b16 %v2780, %v2776
    %v2889 = vpack.c.b16 %v2785, %v2781
    %v2890 = vpack.c.b16 %v2786, %v2782
    %v2891 = vpack.c.b16 %v2787, %v2783
    %v2892 = vpack.c.b16 %v2788, %v2784
    %v2893 = vpack.c.b16 %v2793, %v2789
    %v2894 = vpack.c.b16 %v2794, %v2790
    %v2895 = vpack.c.b16 %v2795, %v2791
    %v2896 = vpack.c.b16 %v2796, %v2792
    %v2897 = vpack.c.b16 %v2801, %v2797
    %v2898 = vpack.c.b16 %v2802, %v2798
    %v2899 = vpack.c.b16 %v2803, %v2799
    %v2900 = vpack.c.b16 %v2804, %v2800
    %v2901 = vpack.c.b16 %v2809, %v2805
    %v2902 = vpack.c.b16 %v2810, %v2806
    %v2903 = vpack.c.b16 %v2811, %v2807
    %v2904 = vpack.c.b16 %v2812, %v2808
    %v2905 = vpack.c.b16 %v2817, %v2813
    %v2906 = vpack.c.b16 %v2818, %v2814
    %v2907 = vpack.c.b16 %v2819, %v2815
    %v2908 = vpack.c.b16 %v2820, %v2816
    %v2909 = vpack.c.b16 %v2825, %v2821
    %v2910 = vpack.c.b16 %v2826, %v2822
    %v2911 = vpack.c.b16 %v2827, %v2823
    %v2912 = vpack.c.b16 %v2828, %v2824
    %v2913 = vpack.c.b16 %v2833, %v2829
    %v2914 = vpack.c.b16 %v2834, %v2830
    %v2915 = vpack.c.b16 %v2835, %v2831
    %v2916 = vpack.c.b16 %v2836, %v2832
    %v2917 = vpack.c.b16 %v2841, %v2837
    %v2918 = vpack.c.b16 %v2842, %v2838
    %v2919 = vpack.c.b16 %v2843, %v2839
    %v2920 = vpack.c.b16 %v2844, %v2840
    %v2921 = vpack.c.b16 %v2849, %v2845
    %v2922 = vpack.c.b16 %v2850, %v2846
    %v2923 = vpack.c.b16 %v2851, %v2847
    %v2924 = vpack.c.b16 %v2852, %v2848
    %v2925 = vpack.c.b16 %v2857, %v2853
    %v2926 = vpack.c.b16 %v2858, %v2854
    %v2927 = vpack.c.b16 %v2859, %v2855
    %v2928 = vpack.c.b16 %v2860, %v2856
    %v2929 = vpack.c.b16 %v2865, %v2861
    %v2930 = vpack.c.b16 %v2866, %v2862
    %v2931 = vpack.c.b16 %v2867, %v2863
    %v2932 = vpack.c.b16 %v2868, %v2864
    %2997 = vmatprep.subr.bf16.mxu0 %v2870
    %2998 = vmatpush1.bf16.msra.mxu0 %v2869
    %2999 = vmatprep.subr.bf16.mxu0 %v2874
    %3000 = vmatpush1.bf16.msra.mxu0 %v2873
    %3001 = vmatprep.subr.bf16.mxu0 %v2878
    %3002 = vmatpush1.bf16.msra.mxu0 %v2877
    %3003 = vmatprep.subr.bf16.mxu0 %v2882
    %3004 = vmatpush1.bf16.msra.mxu0 %v2881
    %3005 = vmatprep.subr.bf16.mxu0 %v2886
    %3006 = vmatpush1.bf16.msra.mxu0 %v2885
    %3007 = vmatprep.subr.bf16.mxu0 %v2890
    %3008 = vmatpush1.bf16.msra.mxu0 %v2889
    %3009 = vmatprep.subr.bf16.mxu0 %v2894
    %3010 = vmatpush1.bf16.msra.mxu0 %v2893
    %3011 = vmatprep.subr.bf16.mxu0 %v2898
    %3012 = vmatpush1.bf16.msra.mxu0 %v2897
    %3013 = vmatprep.subr.bf16.mxu0 %v2902
    %3014 = vmatpush1.bf16.msra.mxu0 %v2901
    %3015 = vmatprep.subr.bf16.mxu0 %v2906
    %3016 = vmatpush1.bf16.msra.mxu0 %v2905
    %3017 = vmatprep.subr.bf16.mxu0 %v2910
    %3018 = vmatpush1.bf16.msra.mxu0 %v2909
    %3019 = vmatprep.subr.bf16.mxu0 %v2914
    %3020 = vmatpush1.bf16.msra.mxu0 %v2913
    %3021 = vmatprep.subr.bf16.mxu0 %v2918
    %3022 = vmatpush1.bf16.msra.mxu0 %v2917
    %3023 = vmatprep.subr.bf16.mxu0 %v2922
    %3024 = vmatpush1.bf16.msra.mxu0 %v2921
    %3025 = vmatprep.subr.bf16.mxu0 %v2926
    %3026 = vmatpush1.bf16.msra.mxu0 %v2925
    %3027 = vmatprep.subr.bf16.mxu0 %v2930
    %3028 = vmatpush1.bf16.msra.mxu0 %v2929
    %3029 = vmatprep.mubr.bf16.mxu0 %v2143
    %3030 = vmatmul.mubr.bf16.gmra.mrb[0].mxu0 %v2142
    %v3031 = vpop.f32.mrb[0].mxu0
    %v3032 = vadd.f32 %v2630, %v3031
    %v3033 = vpop.f32.mrb[0].mxu0
    %v3034 = vadd.f32 %v2632, %v3033
    %v3035 = vpop.f32.mrb[0].mxu0
    %v3036 = vpop.f32.mrb[0].mxu0
    %3037 = vdwg.mxu0
    %3038 = vmatprep.subr.bf16.mxu0 %v2872
    %3039 = vmatpush1.bf16.msra.mxu0 %v2871
    %3040 = vmatprep.subr.bf16.mxu0 %v2876
    %3041 = vmatpush1.bf16.msra.mxu0 %v2875
    %3042 = vmatprep.subr.bf16.mxu0 %v2880
    %3043 = vmatpush1.bf16.msra.mxu0 %v2879
    %3044 = vmatprep.subr.bf16.mxu0 %v2884
    %3045 = vmatpush1.bf16.msra.mxu0 %v2883
    %3046 = vmatprep.subr.bf16.mxu0 %v2888
    %3047 = vmatpush1.bf16.msra.mxu0 %v2887
    %3048 = vmatprep.subr.bf16.mxu0 %v2892
    %3049 = vmatpush1.bf16.msra.mxu0 %v2891
    %3050 = vmatprep.subr.bf16.mxu0 %v2896
    %3051 = vmatpush1.bf16.msra.mxu0 %v2895
    %3052 = vmatprep.subr.bf16.mxu0 %v2900
    %3053 = vmatpush1.bf16.msra.mxu0 %v2899
    %3054 = vmatprep.subr.bf16.mxu0 %v2904
    %3055 = vmatpush1.bf16.msra.mxu0 %v2903
    %3056 = vmatprep.subr.bf16.mxu0 %v2908
    %3057 = vmatpush1.bf16.msra.mxu0 %v2907
    %3058 = vmatprep.subr.bf16.mxu0 %v2912
    %3059 = vmatpush1.bf16.msra.mxu0 %v2911
    %3060 = vmatprep.subr.bf16.mxu0 %v2916
    %3061 = vmatpush1.bf16.msra.mxu0 %v2915
    %3062 = vmatprep.subr.bf16.mxu0 %v2920
    %3063 = vmatpush1.bf16.msra.mxu0 %v2919
    %3064 = vmatprep.subr.bf16.mxu0 %v2924
    %3065 = vmatpush1.bf16.msra.mxu0 %v2923
    %3066 = vmatprep.subr.bf16.mxu0 %v2928
    %3067 = vmatpush1.bf16.msra.mxu0 %v2927
    %3068 = vmatprep.subr.bf16.mxu0 %v2932
    %3069 = vmatpush1.bf16.msra.mxu0 %v2931
    %3070 = vmatprep.mubr.bf16.mxu0 %v2143
    %3071 = vmatmul.mubr.bf16.gmra.mrb[0].mxu0 %v2142
    %v3072 = vpop.f32.mrb[0].mxu0
    %v3073 = vadd.f32 %v2671, %v3072
    %v3074 = vpop.f32.mrb[0].mxu0
    %v3075 = vadd.f32 %v2673, %v3074
    %v3076 = vpop.f32.mrb[0].mxu0
    %v3077 = vpop.f32.mrb[0].mxu0
    %3078 = vdwg.mxu0
    %v3079 = vld [vmem:[%s4] sm:$0xf]
    %v3081 = vlaneseq
    %v3082 = vshrl.u32 %v3081, 7
    %v3083 = vsub.s32 0, %v3082
    %v3084 = vrot.slane %v3079, %v3083
    %v3085 = vlaneseq
    %v3086 = vshrl.u32 %v3085, 7
    %v3087 = vsub.s32 1, %v3086
    %v3088 = vrot.slane %v3079, %v3087
    %v3089 = vlaneseq
    %v3090 = vshrl.u32 %v3089, 7
    %v3091 = vsub.s32 2, %v3090
    %v3092 = vrot.slane %v3079, %v3091
    %v3093 = vlaneseq
    %v3094 = vshrl.u32 %v3093, 7
    %v3095 = vsub.s32 3, %v3094
    %v3096 = vrot.slane %v3079, %v3095
    %v3101 = vadd.f32 %v3032, %v3084
    %v3102 = vadd.f32 %v3034, %v3088
    %v3103 = vadd.f32 %v3073, %v3092
    %v3104 = vadd.f32 %v3075, %v3096
    %v3109 = vcombine.low %v3101, %v3102
    %v3110 = vcombine.low %v3103, %v3104
    %v3112 = vunpack.c.l.s4 1983009808
    %v3113 = vunpack.c.0.s8 %v3112
    %v3114 = vlaneseq
    %v3115 = vshrl.u32 %v3114, 7
    %v3116 = vsub.s32 %v3113, %v3115
    %v3117 = vrot.slane %v3109, %v3116
    %v3119 = vunpack.c.l.s4 1983009808
    %v3120 = vunpack.c.0.s8 %v3119
    %v3121 = vlaneseq
    %v3122 = vshrl.u32 %v3121, 7
    %v3123 = vsub.s32 %v3120, %v3122
    %v3124 = vrot.slane %v3110, %v3123
    %v3125 = vcombine.low %v3117, %v3124
    %3127 = vst [vmem:[#allocation2] sm:$0xff] %v3125
    // Predicated region
    $region22: #{siamese_forward.5} parent=1 // pred_check
      _
    $region23: #{siamese_forward.5} parent=1 // pred_check_branch
      %3129 = sbr.rel (0) target = $region25
    $region24: #{siamese_forward.5} parent=1 // pred_region
      %s3131 = ssub.s32 128, 128
      %3132 = vsyncadd [#allocation3], %s3131
      %s3134 = sshll.u32 [#allocation2], 4
      %s3135 = int_to_ptr.vmem [resolvable:$true] %s3134
      %3137 = dma.vmem_to_hbm [thread:$0]  %s3135, 128, %s5, [#allocation3]
    $region25: #{siamese_forward.5} parent=1 // pred_fallthru
      _
    // Predicated region
    $region26: #{siamese_forward.5} parent=1 // pred_check
      _
    $region27: #{siamese_forward.5} parent=1 // pred_check_branch
      %3139 = sbr.rel (0) target = $region29
    $region28: #{siamese_forward.5} parent=1 // pred_region
      %3140 = dma.done [#allocation3], 128
    $region29: #{siamese_forward.5} parent=1 // pred_fallthru
      _
    %3141 = vsyncpa [#allocation3], 1

// kernel: siamese_forward.4
$region0: #{siamese_forward.4}
  #allocation0 [shape = 'u32[]', space=smem, size = 0x4, offset = 0x4, fixed_abs, tag = 'smem constant byte address 0x4 - core index']
  #allocation1 [shape = 'u32[144,128]{1,0:T(1,128)}', space=vmem, size = 0x12000, scoped, tag = 'internal scratch']
  %s0 = inlined_call_operand.vmem [shape: bf16[4,36,3200], index: 0, kind: input, shape index: {}]
  %s1 = inlined_call_operand.vmem [shape: bf16[3200,192], index: 1, kind: input, shape index: {}]
  %s2 = inlined_call_operand.vmem [shape: f32[1,192], index: 2, kind: input, shape index: {}]
  %s3 = inlined_call_operand.vmem [shape: bf16[36,192], index: 3, kind: output, shape index: {}]
  %s4 = sld [smem:[#allocation0]]
  $region22: #{siamese_forward.4} parent=0
    _
  %s6 = ssub.s32 1, %s4
  %s7 = scalar_select 0, %s6, %s4
  // Predicated region
  $region2: #{siamese_forward.4} parent=0 // pred_check
    _
  $region3: #{siamese_forward.4} parent=0 // pred_check_branch
    %9 = sbr.rel (0) target = $region5
  $region4: #{siamese_forward.4} parent=0 // pred_region
    _
  $region5: #{siamese_forward.4} parent=0 // pred_fallthru
    _
  // Predicated region
  $region6: #{siamese_forward.4} parent=0 // pred_check
    _
  $region7: #{siamese_forward.4} parent=0 // pred_check_branch
    %11 = sbr.rel (0) target = $region9
  $region8: #{siamese_forward.4} parent=0 // pred_region
    _
  $region9: #{siamese_forward.4} parent=0 // pred_fallthru
    _
  // Predicated region
  $region10: #{siamese_forward.4} parent=0 // pred_check
    _
  $region11: #{siamese_forward.4} parent=0 // pred_check_branch
    %13 = sbr.rel (0) target = $region13
  $region12: #{siamese_forward.4} parent=0 // pred_region
    _
  $region13: #{siamese_forward.4} parent=0 // pred_fallthru
    _
  %v15 = vld [vmem:[%s1] sm:$0xff]
  %v16 = vld [vmem:[%s1 + $0x8] sm:$0xff]
  %v17 = vld [vmem:[%s1 + $0x10] sm:$0xff]
  %v18 = vld [vmem:[%s1 + $0x18] sm:$0xff]
  %v19 = vld [vmem:[%s1 + $0x20] sm:$0xff]
  %v20 = vld [vmem:[%s1 + $0x28] sm:$0xff]
  %v21 = vld [vmem:[%s1 + $0x30] sm:$0xff]
  %v22 = vld [vmem:[%s1 + $0x38] sm:$0xff]
  %v23 = vld [vmem:[%s1 + $0x40] sm:$0xff]
  %v24 = vld [vmem:[%s1 + $0x48] sm:$0xff]
  %v25 = vld [vmem:[%s1 + $0x50] sm:$0xff]
  %v26 = vld [vmem:[%s1 + $0x58] sm:$0xff]
  %v27 = vld [vmem:[%s1 + $0x60] sm:$0xff]
  %v28 = vld [vmem:[%s1 + $0x68] sm:$0xff]
  %v29 = vld [vmem:[%s1 + $0x70] sm:$0xff]
  %v30 = vld [vmem:[%s1 + $0x78] sm:$0xff]
  %v31 = vld [vmem:[%s1 + $0x80] sm:$0xff]
  %v32 = vld [vmem:[%s1 + $0x88] sm:$0xff]
  %v33 = vld [vmem:[%s1 + $0x90] sm:$0xff]
  %v34 = vld [vmem:[%s1 + $0x98] sm:$0xff]
  %v35 = vld [vmem:[%s1 + $0xa0] sm:$0xff]
  %v36 = vld [vmem:[%s1 + $0xa8] sm:$0xff]
  %v37 = vld [vmem:[%s1 + $0xb0] sm:$0xff]
  %v38 = vld [vmem:[%s1 + $0xb8] sm:$0xff]
  %v39 = vld [vmem:[%s1 + $0xc0] sm:$0xff]
  %v40 = vld [vmem:[%s1 + $0xc8] sm:$0xff]
  %v41 = vld [vmem:[%s1 + $0xd0] sm:$0xff]
  %v42 = vld [vmem:[%s1 + $0xd8] sm:$0xff]
  %v43 = vld [vmem:[%s1 + $0xe0] sm:$0xff]
  %v44 = vld [vmem:[%s1 + $0xe8] sm:$0xff]
  %v45 = vld [vmem:[%s1 + $0xf0] sm:$0xff]
  %v46 = vld [vmem:[%s1 + $0xf8] sm:$0xff]
  %v47 = vld [vmem:[%s1 + $0x100] sm:$0xff]
  %v48 = vld [vmem:[%s1 + $0x108] sm:$0xff]
  %v49 = vld [vmem:[%s1 + $0x110] sm:$0xff]
  %v50 = vld [vmem:[%s1 + $0x118] sm:$0xff]
  %v51 = vld [vmem:[%s1 + $0x120] sm:$0xff]
  %v52 = vld [vmem:[%s1 + $0x128] sm:$0xff]
  %v53 = vld [vmem:[%s1 + $0x130] sm:$0xff]
  %v54 = vld [vmem:[%s1 + $0x138] sm:$0xff]
  %v55 = vld [vmem:[%s1 + $0x140] sm:$0xff]
  %v56 = vld [vmem:[%s1 + $0x148] sm:$0xff]
  %v57 = vld [vmem:[%s1 + $0x150] sm:$0xff]
  %v58 = vld [vmem:[%s1 + $0x158] sm:$0xff]
  %v59 = vld [vmem:[%s1 + $0x160] sm:$0xff]
  %v60 = vld [vmem:[%s1 + $0x168] sm:$0xff]
  %v61 = vld [vmem:[%s1 + $0x170] sm:$0xff]
  %v62 = vld [vmem:[%s1 + $0x178] sm:$0xff]
  %v63 = vld [vmem:[%s1 + $0x180] sm:$0xff]
  %v64 = vld [vmem:[%s1 + $0x188] sm:$0xff]
  %v65 = vld [vmem:[%s1 + $0x190] sm:$0xff]
  %v66 = vld [vmem:[%s1 + $0x198] sm:$0xff]
  %v67 = vld [vmem:[%s1 + $0x1a0] sm:$0xff]
  %v68 = vld [vmem:[%s1 + $0x1a8] sm:$0xff]
  %v69 = vld [vmem:[%s1 + $0x1b0] sm:$0xff]
  %v70 = vld [vmem:[%s1 + $0x1b8] sm:$0xff]
  %v71 = vld [vmem:[%s1 + $0x1c0] sm:$0xff]
  %v72 = vld [vmem:[%s1 + $0x1c8] sm:$0xff]
  %v73 = vld [vmem:[%s1 + $0x1d0] sm:$0xff]
  %v74 = vld [vmem:[%s1 + $0x1d8] sm:$0xff]
  %v75 = vld [vmem:[%s1 + $0x1e0] sm:$0xff]
  %v76 = vld [vmem:[%s1 + $0x1e8] sm:$0xff]
  %v77 = vld [vmem:[%s1 + $0x1f0] sm:$0xff]
  %v78 = vld [vmem:[%s1 + $0x1f8] sm:$0xff]
  %v79 = vld [vmem:[%s1 + $0x200] sm:$0xff]
  %v80 = vld [vmem:[%s1 + $0x208] sm:$0xff]
  %v81 = vld [vmem:[%s1 + $0x210] sm:$0xff]
  %v82 = vld [vmem:[%s1 + $0x218] sm:$0xff]
  %v83 = vld [vmem:[%s1 + $0x220] sm:$0xff]
  %v84 = vld [vmem:[%s1 + $0x228] sm:$0xff]
  %v85 = vld [vmem:[%s1 + $0x230] sm:$0xff]
  %v86 = vld [vmem:[%s1 + $0x238] sm:$0xff]
  %v87 = vld [vmem:[%s1 + $0x240] sm:$0xff]
  %v88 = vld [vmem:[%s1 + $0x248] sm:$0xff]
  %v89 = vld [vmem:[%s1 + $0x250] sm:$0xff]
  %v90 = vld [vmem:[%s1 + $0x258] sm:$0xff]
  %v91 = vld [vmem:[%s1 + $0x260] sm:$0xff]
  %v92 = vld [vmem:[%s1 + $0x268] sm:$0xff]
  %v93 = vld [vmem:[%s1 + $0x270] sm:$0xff]
  %v94 = vld [vmem:[%s1 + $0x278] sm:$0xff]
  %v95 = vld [vmem:[%s1 + $0x280] sm:$0xff]
  %v96 = vld [vmem:[%s1 + $0x288] sm:$0xff]
  %v97 = vld [vmem:[%s1 + $0x290] sm:$0xff]
  %v98 = vld [vmem:[%s1 + $0x298] sm:$0xff]
  %v99 = vld [vmem:[%s1 + $0x2a0] sm:$0xff]
  %v100 = vld [vmem:[%s1 + $0x2a8] sm:$0xff]
  %v101 = vld [vmem:[%s1 + $0x2b0] sm:$0xff]
  %v102 = vld [vmem:[%s1 + $0x2b8] sm:$0xff]
  %v103 = vld [vmem:[%s1 + $0x2c0] sm:$0xff]
  %v104 = vld [vmem:[%s1 + $0x2c8] sm:$0xff]
  %v105 = vld [vmem:[%s1 + $0x2d0] sm:$0xff]
  %v106 = vld [vmem:[%s1 + $0x2d8] sm:$0xff]
  %v107 = vld [vmem:[%s1 + $0x2e0] sm:$0xff]
  %v108 = vld [vmem:[%s1 + $0x2e8] sm:$0xff]
  %v109 = vld [vmem:[%s1 + $0x2f0] sm:$0xff]
  %v110 = vld [vmem:[%s1 + $0x2f8] sm:$0xff]
  %v111 = vld [vmem:[%s1 + $0x300] sm:$0xff]
  %v112 = vld [vmem:[%s1 + $0x308] sm:$0xff]
  %v113 = vld [vmem:[%s1 + $0x310] sm:$0xff]
  %v114 = vld [vmem:[%s1 + $0x318] sm:$0xff]
  %v115 = vld [vmem:[%s1 + $0x320] sm:$0xff]
  %v116 = vld [vmem:[%s1 + $0x328] sm:$0xff]
  %v117 = vld [vmem:[%s1 + $0x330] sm:$0xff]
  %v118 = vld [vmem:[%s1 + $0x338] sm:$0xff]
  %v119 = vld [vmem:[%s1 + $0x340] sm:$0xff]
  %v120 = vld [vmem:[%s1 + $0x348] sm:$0xff]
  %v121 = vld [vmem:[%s1 + $0x350] sm:$0xff]
  %v122 = vld [vmem:[%s1 + $0x358] sm:$0xff]
  %v123 = vld [vmem:[%s1 + $0x360] sm:$0xff]
  %v124 = vld [vmem:[%s1 + $0x368] sm:$0xff]
  %v125 = vld [vmem:[%s1 + $0x370] sm:$0xff]
  %v126 = vld [vmem:[%s1 + $0x378] sm:$0xff]
  %v127 = vld [vmem:[%s1 + $0x380] sm:$0xff]
  %v128 = vld [vmem:[%s1 + $0x388] sm:$0xff]
  %v129 = vld [vmem:[%s1 + $0x390] sm:$0xff]
  %v130 = vld [vmem:[%s1 + $0x398] sm:$0xff]
  %v131 = vld [vmem:[%s1 + $0x3a0] sm:$0xff]
  %v132 = vld [vmem:[%s1 + $0x3a8] sm:$0xff]
  %v133 = vld [vmem:[%s1 + $0x3b0] sm:$0xff]
  %v134 = vld [vmem:[%s1 + $0x3b8] sm:$0xff]
  %v135 = vld [vmem:[%s1 + $0x3c0] sm:$0xff]
  %v136 = vld [vmem:[%s1 + $0x3c8] sm:$0xff]
  %v137 = vld [vmem:[%s1 + $0x3d0] sm:$0xff]
  %v138 = vld [vmem:[%s1 + $0x3d8] sm:$0xff]
  %v139 = vld [vmem:[%s1 + $0x3e0] sm:$0xff]
  %v140 = vld [vmem:[%s1 + $0x3e8] sm:$0xff]
  %v141 = vld [vmem:[%s1 + $0x3f0] sm:$0xff]
  %v142 = vld [vmem:[%s1 + $0x3f8] sm:$0xff]
  %v143 = vld [vmem:[%s1 + $0x400] sm:$0xff]
  %v144 = vld [vmem:[%s1 + $0x408] sm:$0xff]
  %v145 = vld [vmem:[%s1 + $0x410] sm:$0xff]
  %v146 = vld [vmem:[%s1 + $0x418] sm:$0xff]
  %v147 = vld [vmem:[%s1 + $0x420] sm:$0xff]
  %v148 = vld [vmem:[%s1 + $0x428] sm:$0xff]
  %v149 = vld [vmem:[%s1 + $0x430] sm:$0xff]
  %v150 = vld [vmem:[%s1 + $0x438] sm:$0xff]
  %v151 = vld [vmem:[%s1 + $0x440] sm:$0xff]
  %v152 = vld [vmem:[%s1 + $0x448] sm:$0xff]
  %v153 = vld [vmem:[%s1 + $0x450] sm:$0xff]
  %v154 = vld [vmem:[%s1 + $0x458] sm:$0xff]
  %v155 = vld [vmem:[%s1 + $0x460] sm:$0xff]
  %v156 = vld [vmem:[%s1 + $0x468] sm:$0xff]
  %v157 = vld [vmem:[%s1 + $0x470] sm:$0xff]
  %v158 = vld [vmem:[%s1 + $0x478] sm:$0xff]
  %v159 = vld [vmem:[%s1 + $0x480] sm:$0xff]
  %v160 = vld [vmem:[%s1 + $0x488] sm:$0xff]
  %v161 = vld [vmem:[%s1 + $0x490] sm:$0xff]
  %v162 = vld [vmem:[%s1 + $0x498] sm:$0xff]
  %v163 = vld [vmem:[%s1 + $0x4a0] sm:$0xff]
  %v164 = vld [vmem:[%s1 + $0x4a8] sm:$0xff]
  %v165 = vld [vmem:[%s1 + $0x4b0] sm:$0xff]
  %v166 = vld [vmem:[%s1 + $0x4b8] sm:$0xff]
  %v167 = vld [vmem:[%s1 + $0x4c0] sm:$0xff]
  %v168 = vld [vmem:[%s1 + $0x4c8] sm:$0xff]
  %v169 = vld [vmem:[%s1 + $0x4d0] sm:$0xff]
  %v170 = vld [vmem:[%s1 + $0x4d8] sm:$0xff]
  %v171 = vld [vmem:[%s1 + $0x4e0] sm:$0xff]
  %v172 = vld [vmem:[%s1 + $0x4e8] sm:$0xff]
  %v173 = vld [vmem:[%s1 + $0x4f0] sm:$0xff]
  %v174 = vld [vmem:[%s1 + $0x4f8] sm:$0xff]
  %v175 = vld [vmem:[%s1 + $0x500] sm:$0xff]
  %v176 = vld [vmem:[%s1 + $0x508] sm:$0xff]
  %v177 = vld [vmem:[%s1 + $0x510] sm:$0xff]
  %v178 = vld [vmem:[%s1 + $0x518] sm:$0xff]
  %v179 = vld [vmem:[%s1 + $0x520] sm:$0xff]
  %v180 = vld [vmem:[%s1 + $0x528] sm:$0xff]
  %v181 = vld [vmem:[%s1 + $0x530] sm:$0xff]
  %v182 = vld [vmem:[%s1 + $0x538] sm:$0xff]
  %v183 = vld [vmem:[%s1 + $0x540] sm:$0xff]
  %v184 = vld [vmem:[%s1 + $0x548] sm:$0xff]
  %v185 = vld [vmem:[%s1 + $0x550] sm:$0xff]
  %v186 = vld [vmem:[%s1 + $0x558] sm:$0xff]
  %v187 = vld [vmem:[%s1 + $0x560] sm:$0xff]
  %v188 = vld [vmem:[%s1 + $0x568] sm:$0xff]
  %v189 = vld [vmem:[%s1 + $0x570] sm:$0xff]
  %v190 = vld [vmem:[%s1 + $0x578] sm:$0xff]
  %v191 = vld [vmem:[%s1 + $0x580] sm:$0xff]
  %v192 = vld [vmem:[%s1 + $0x588] sm:$0xff]
  %v193 = vld [vmem:[%s1 + $0x590] sm:$0xff]
  %v194 = vld [vmem:[%s1 + $0x598] sm:$0xff]
  %v195 = vld [vmem:[%s1 + $0x5a0] sm:$0xff]
  %v196 = vld [vmem:[%s1 + $0x5a8] sm:$0xff]
  %v197 = vld [vmem:[%s1 + $0x5b0] sm:$0xff]
  %v198 = vld [vmem:[%s1 + $0x5b8] sm:$0xff]
  %v199 = vld [vmem:[%s1 + $0x5c0] sm:$0xff]
  %v200 = vld [vmem:[%s1 + $0x5c8] sm:$0xff]
  %v201 = vld [vmem:[%s1 + $0x5d0] sm:$0xff]
  %v202 = vld [vmem:[%s1 + $0x5d8] sm:$0xff]
  %v203 = vld [vmem:[%s1 + $0x5e0] sm:$0xff]
  %v204 = vld [vmem:[%s1 + $0x5e8] sm:$0xff]
  %v205 = vld [vmem:[%s1 + $0x5f0] sm:$0xff]
  %v206 = vld [vmem:[%s1 + $0x5f8] sm:$0xff]
  %v207 = vld [vmem:[%s1 + $0x600] sm:$0xff]
  %v208 = vld [vmem:[%s1 + $0x608] sm:$0xff]
  %v209 = vld [vmem:[%s1 + $0x610] sm:$0xff]
  %v210 = vld [vmem:[%s1 + $0x618] sm:$0xff]
  %v211 = vld [vmem:[%s1 + $0x620] sm:$0xff]
  %v212 = vld [vmem:[%s1 + $0x628] sm:$0xff]
  %v213 = vld [vmem:[%s1 + $0x630] sm:$0xff]
  %v214 = vld [vmem:[%s1 + $0x638] sm:$0xff]
  %v215 = vld [vmem:[%s1 + $0x640] sm:$0xff]
  %v216 = vld [vmem:[%s1 + $0x648] sm:$0xff]
  %v217 = vld [vmem:[%s1 + $0x650] sm:$0xff]
  %v218 = vld [vmem:[%s1 + $0x658] sm:$0xff]
  %v219 = vld [vmem:[%s1 + $0x660] sm:$0xff]
  %v220 = vld [vmem:[%s1 + $0x668] sm:$0xff]
  %v221 = vld [vmem:[%s1 + $0x670] sm:$0xff]
  %v222 = vld [vmem:[%s1 + $0x678] sm:$0xff]
  %v223 = vld [vmem:[%s1 + $0x680] sm:$0xff]
  %v224 = vld [vmem:[%s1 + $0x688] sm:$0xff]
  %v225 = vld [vmem:[%s1 + $0x690] sm:$0xff]
  %v226 = vld [vmem:[%s1 + $0x698] sm:$0xff]
  %v227 = vld [vmem:[%s1 + $0x6a0] sm:$0xff]
  %v228 = vld [vmem:[%s1 + $0x6a8] sm:$0xff]
  %v229 = vld [vmem:[%s1 + $0x6b0] sm:$0xff]
  %v230 = vld [vmem:[%s1 + $0x6b8] sm:$0xff]
  %v231 = vld [vmem:[%s1 + $0x6c0] sm:$0xff]
  %v232 = vld [vmem:[%s1 + $0x6c8] sm:$0xff]
  %v233 = vld [vmem:[%s1 + $0x6d0] sm:$0xff]
  %v234 = vld [vmem:[%s1 + $0x6d8] sm:$0xff]
  %v235 = vld [vmem:[%s1 + $0x6e0] sm:$0xff]
  %v236 = vld [vmem:[%s1 + $0x6e8] sm:$0xff]
  %v237 = vld [vmem:[%s1 + $0x6f0] sm:$0xff]
  %v238 = vld [vmem:[%s1 + $0x6f8] sm:$0xff]
  %v239 = vld [vmem:[%s1 + $0x700] sm:$0xff]
  %v240 = vld [vmem:[%s1 + $0x708] sm:$0xff]
  %v241 = vld [vmem:[%s1 + $0x710] sm:$0xff]
  %v242 = vld [vmem:[%s1 + $0x718] sm:$0xff]
  %v243 = vld [vmem:[%s1 + $0x720] sm:$0xff]
  %v244 = vld [vmem:[%s1 + $0x728] sm:$0xff]
  %v245 = vld [vmem:[%s1 + $0x730] sm:$0xff]
  %v246 = vld [vmem:[%s1 + $0x738] sm:$0xff]
  %v247 = vld [vmem:[%s1 + $0x740] sm:$0xff]
  %v248 = vld [vmem:[%s1 + $0x748] sm:$0xff]
  %v249 = vld [vmem:[%s1 + $0x750] sm:$0xff]
  %v250 = vld [vmem:[%s1 + $0x758] sm:$0xff]
  %v251 = vld [vmem:[%s1 + $0x760] sm:$0xff]
  %v252 = vld [vmem:[%s1 + $0x768] sm:$0xff]
  %v253 = vld [vmem:[%s1 + $0x770] sm:$0xff]
  %v254 = vld [vmem:[%s1 + $0x778] sm:$0xff]
  %v255 = vld [vmem:[%s1 + $0x780] sm:$0xff]
  %v256 = vld [vmem:[%s1 + $0x788] sm:$0xff]
  %v257 = vld [vmem:[%s1 + $0x790] sm:$0xff]
  %v258 = vld [vmem:[%s1 + $0x798] sm:$0xff]
  %v259 = vld [vmem:[%s1 + $0x7a0] sm:$0xff]
  %v260 = vld [vmem:[%s1 + $0x7a8] sm:$0xff]
  %v261 = vld [vmem:[%s1 + $0x7b0] sm:$0xff]
  %v262 = vld [vmem:[%s1 + $0x7b8] sm:$0xff]
  %v263 = vld [vmem:[%s1 + $0x7c0] sm:$0xff]
  %v264 = vld [vmem:[%s1 + $0x7c8] sm:$0xff]
  %v265 = vld [vmem:[%s1 + $0x7d0] sm:$0xff]
  %v266 = vld [vmem:[%s1 + $0x7d8] sm:$0xff]
  %v267 = vld [vmem:[%s1 + $0x7e0] sm:$0xff]
  %v268 = vld [vmem:[%s1 + $0x7e8] sm:$0xff]
  %v269 = vld [vmem:[%s1 + $0x7f0] sm:$0xff]
  %v270 = vld [vmem:[%s1 + $0x7f8] sm:$0xff]
  %v271 = vld [vmem:[%s1 + $0x800] sm:$0xff]
  %v272 = vld [vmem:[%s1 + $0x808] sm:$0xff]
  %v273 = vld [vmem:[%s1 + $0x810] sm:$0xff]
  %v274 = vld [vmem:[%s1 + $0x818] sm:$0xff]
  %v275 = vld [vmem:[%s1 + $0x820] sm:$0xff]
  %v276 = vld [vmem:[%s1 + $0x828] sm:$0xff]
  %v277 = vld [vmem:[%s1 + $0x830] sm:$0xff]
  %v278 = vld [vmem:[%s1 + $0x838] sm:$0xff]
  %v279 = vld [vmem:[%s1 + $0x840] sm:$0xff]
  %v280 = vld [vmem:[%s1 + $0x848] sm:$0xff]
  %v281 = vld [vmem:[%s1 + $0x850] sm:$0xff]
  %v282 = vld [vmem:[%s1 + $0x858] sm:$0xff]
  %v283 = vld [vmem:[%s1 + $0x860] sm:$0xff]
  %v284 = vld [vmem:[%s1 + $0x868] sm:$0xff]
  %v285 = vld [vmem:[%s1 + $0x870] sm:$0xff]
  %v286 = vld [vmem:[%s1 + $0x878] sm:$0xff]
  %v287 = vld [vmem:[%s1 + $0x880] sm:$0xff]
  %v288 = vld [vmem:[%s1 + $0x888] sm:$0xff]
  %v289 = vld [vmem:[%s1 + $0x890] sm:$0xff]
  %v290 = vld [vmem:[%s1 + $0x898] sm:$0xff]
  %v291 = vld [vmem:[%s1 + $0x8a0] sm:$0xff]
  %v292 = vld [vmem:[%s1 + $0x8a8] sm:$0xff]
  %v293 = vld [vmem:[%s1 + $0x8b0] sm:$0xff]
  %v294 = vld [vmem:[%s1 + $0x8b8] sm:$0xff]
  %v295 = vld [vmem:[%s1 + $0x8c0] sm:$0xff]
  %v296 = vld [vmem:[%s1 + $0x8c8] sm:$0xff]
  %v297 = vld [vmem:[%s1 + $0x8d0] sm:$0xff]
  %v298 = vld [vmem:[%s1 + $0x8d8] sm:$0xff]
  %v299 = vld [vmem:[%s1 + $0x8e0] sm:$0xff]
  %v300 = vld [vmem:[%s1 + $0x8e8] sm:$0xff]
  %v301 = vld [vmem:[%s1 + $0x8f0] sm:$0xff]
  %v302 = vld [vmem:[%s1 + $0x8f8] sm:$0xff]
  %v303 = vld [vmem:[%s1 + $0x900] sm:$0xff]
  %v304 = vld [vmem:[%s1 + $0x908] sm:$0xff]
  %v305 = vld [vmem:[%s1 + $0x910] sm:$0xff]
  %v306 = vld [vmem:[%s1 + $0x918] sm:$0xff]
  %v307 = vld [vmem:[%s1 + $0x920] sm:$0xff]
  %v308 = vld [vmem:[%s1 + $0x928] sm:$0xff]
  %v309 = vld [vmem:[%s1 + $0x930] sm:$0xff]
  %v310 = vld [vmem:[%s1 + $0x938] sm:$0xff]
  %v311 = vld [vmem:[%s1 + $0x940] sm:$0xff]
  %v312 = vld [vmem:[%s1 + $0x948] sm:$0xff]
  %v313 = vld [vmem:[%s1 + $0x950] sm:$0xff]
  %v314 = vld [vmem:[%s1 + $0x958] sm:$0xff]
  %v315 = vld [vmem:[%s1 + $0x960] sm:$0xff]
  %v316 = vld [vmem:[%s1 + $0x968] sm:$0xff]
  %v317 = vld [vmem:[%s1 + $0x970] sm:$0xff]
  %v318 = vld [vmem:[%s1 + $0x978] sm:$0xff]
  %v319 = vld [vmem:[%s1 + $0x980] sm:$0xff]
  %v320 = vld [vmem:[%s1 + $0x988] sm:$0xff]
  %v321 = vld [vmem:[%s1 + $0x990] sm:$0xff]
  %v322 = vld [vmem:[%s1 + $0x998] sm:$0xff]
  %v323 = vld [vmem:[%s1 + $0x9a0] sm:$0xff]
  %v324 = vld [vmem:[%s1 + $0x9a8] sm:$0xff]
  %v325 = vld [vmem:[%s1 + $0x9b0] sm:$0xff]
  %v326 = vld [vmem:[%s1 + $0x9b8] sm:$0xff]
  %v327 = vld [vmem:[%s1 + $0x9c0] sm:$0xff]
  %v328 = vld [vmem:[%s1 + $0x9c8] sm:$0xff]
  %v329 = vld [vmem:[%s1 + $0x9d0] sm:$0xff]
  %v330 = vld [vmem:[%s1 + $0x9d8] sm:$0xff]
  %v331 = vld [vmem:[%s1 + $0x9e0] sm:$0xff]
  %v332 = vld [vmem:[%s1 + $0x9e8] sm:$0xff]
  %v333 = vld [vmem:[%s1 + $0x9f0] sm:$0xff]
  %v334 = vld [vmem:[%s1 + $0x9f8] sm:$0xff]
  %v335 = vld [vmem:[%s1 + $0xa00] sm:$0xff]
  %v336 = vld [vmem:[%s1 + $0xa08] sm:$0xff]
  %v337 = vld [vmem:[%s1 + $0xa10] sm:$0xff]
  %v338 = vld [vmem:[%s1 + $0xa18] sm:$0xff]
  %v339 = vld [vmem:[%s1 + $0xa20] sm:$0xff]
  %v340 = vld [vmem:[%s1 + $0xa28] sm:$0xff]
  %v341 = vld [vmem:[%s1 + $0xa30] sm:$0xff]
  %v342 = vld [vmem:[%s1 + $0xa38] sm:$0xff]
  %v343 = vld [vmem:[%s1 + $0xa40] sm:$0xff]
  %v344 = vld [vmem:[%s1 + $0xa48] sm:$0xff]
  %v345 = vld [vmem:[%s1 + $0xa50] sm:$0xff]
  %v346 = vld [vmem:[%s1 + $0xa58] sm:$0xff]
  %v347 = vld [vmem:[%s1 + $0xa60] sm:$0xff]
  %v348 = vld [vmem:[%s1 + $0xa68] sm:$0xff]
  %v349 = vld [vmem:[%s1 + $0xa70] sm:$0xff]
  %v350 = vld [vmem:[%s1 + $0xa78] sm:$0xff]
  %v351 = vld [vmem:[%s1 + $0xa80] sm:$0xff]
  %v352 = vld [vmem:[%s1 + $0xa88] sm:$0xff]
  %v353 = vld [vmem:[%s1 + $0xa90] sm:$0xff]
  %v354 = vld [vmem:[%s1 + $0xa98] sm:$0xff]
  %v355 = vld [vmem:[%s1 + $0xaa0] sm:$0xff]
  %v356 = vld [vmem:[%s1 + $0xaa8] sm:$0xff]
  %v357 = vld [vmem:[%s1 + $0xab0] sm:$0xff]
  %v358 = vld [vmem:[%s1 + $0xab8] sm:$0xff]
  %v359 = vld [vmem:[%s1 + $0xac0] sm:$0xff]
  %v360 = vld [vmem:[%s1 + $0xac8] sm:$0xff]
  %v361 = vld [vmem:[%s1 + $0xad0] sm:$0xff]
  %v362 = vld [vmem:[%s1 + $0xad8] sm:$0xff]
  %v363 = vld [vmem:[%s1 + $0xae0] sm:$0xff]
  %v364 = vld [vmem:[%s1 + $0xae8] sm:$0xff]
  %v365 = vld [vmem:[%s1 + $0xaf0] sm:$0xff]
  %v366 = vld [vmem:[%s1 + $0xaf8] sm:$0xff]
  %v367 = vld [vmem:[%s1 + $0xb00] sm:$0xff]
  %v368 = vld [vmem:[%s1 + $0xb08] sm:$0xff]
  %v369 = vld [vmem:[%s1 + $0xb10] sm:$0xff]
  %v370 = vld [vmem:[%s1 + $0xb18] sm:$0xff]
  %v371 = vld [vmem:[%s1 + $0xb20] sm:$0xff]
  %v372 = vld [vmem:[%s1 + $0xb28] sm:$0xff]
  %v373 = vld [vmem:[%s1 + $0xb30] sm:$0xff]
  %v374 = vld [vmem:[%s1 + $0xb38] sm:$0xff]
  %v375 = vld [vmem:[%s1 + $0xb40] sm:$0xff]
  %v376 = vld [vmem:[%s1 + $0xb48] sm:$0xff]
  %v377 = vld [vmem:[%s1 + $0xb50] sm:$0xff]
  %v378 = vld [vmem:[%s1 + $0xb58] sm:$0xff]
  %v379 = vld [vmem:[%s1 + $0xb60] sm:$0xff]
  %v380 = vld [vmem:[%s1 + $0xb68] sm:$0xff]
  %v381 = vld [vmem:[%s1 + $0xb70] sm:$0xff]
  %v382 = vld [vmem:[%s1 + $0xb78] sm:$0xff]
  %v383 = vld [vmem:[%s1 + $0xb80] sm:$0xff]
  %v384 = vld [vmem:[%s1 + $0xb88] sm:$0xff]
  %v385 = vld [vmem:[%s1 + $0xb90] sm:$0xff]
  %v386 = vld [vmem:[%s1 + $0xb98] sm:$0xff]
  %v387 = vld [vmem:[%s1 + $0xba0] sm:$0xff]
  %v388 = vld [vmem:[%s1 + $0xba8] sm:$0xff]
  %v389 = vld [vmem:[%s1 + $0xbb0] sm:$0xff]
  %v390 = vld [vmem:[%s1 + $0xbb8] sm:$0xff]
  %v391 = vld [vmem:[%s1 + $0xbc0] sm:$0xff]
  %v392 = vld [vmem:[%s1 + $0xbc8] sm:$0xff]
  %v393 = vld [vmem:[%s1 + $0xbd0] sm:$0xff]
  %v394 = vld [vmem:[%s1 + $0xbd8] sm:$0xff]
  %v395 = vld [vmem:[%s1 + $0xbe0] sm:$0xff]
  %v396 = vld [vmem:[%s1 + $0xbe8] sm:$0xff]
  %v397 = vld [vmem:[%s1 + $0xbf0] sm:$0xff]
  %v398 = vld [vmem:[%s1 + $0xbf8] sm:$0xff]
  %v399 = vld [vmem:[%s1 + $0xc00] sm:$0xff]
  %v400 = vld [vmem:[%s1 + $0xc08] sm:$0xff]
  %v401 = vld [vmem:[%s1 + $0xc10] sm:$0xff]
  %v402 = vld [vmem:[%s1 + $0xc18] sm:$0xff]
  %v403 = vld [vmem:[%s1 + $0xc20] sm:$0xff]
  %v404 = vld [vmem:[%s1 + $0xc28] sm:$0xff]
  %v405 = vld [vmem:[%s1 + $0xc30] sm:$0xff]
  %v406 = vld [vmem:[%s1 + $0xc38] sm:$0xff]
  %v407 = vld [vmem:[%s1 + $0xc40] sm:$0xff]
  %v408 = vld [vmem:[%s1 + $0xc48] sm:$0xff]
  %v409 = vld [vmem:[%s1 + $0xc50] sm:$0xff]
  %v410 = vld [vmem:[%s1 + $0xc58] sm:$0xff]
  %v411 = vld [vmem:[%s1 + $0xc60] sm:$0xff]
  %v412 = vld [vmem:[%s1 + $0xc68] sm:$0xff]
  %v413 = vld [vmem:[%s1 + $0xc70] sm:$0xff]
  %v414 = vld [vmem:[%s1 + $0xc78] sm:$0xff]
  %v415 = vld [vmem:[%s2] sm:$0x3]
  %v416 = vld [vmem:[%s0] sm:$0xff]
  %v417 = vld [vmem:[%s0 + $0x8] sm:$0xff]
  %v418 = vld [vmem:[%s0 + $0x10] sm:$0xff]
  %v419 = vld [vmem:[%s0 + $0x18] sm:$0xff]
  %v420 = vld [vmem:[%s0 + $0x20] sm:$0xff]
  %v421 = vld [vmem:[%s0 + $0x28] sm:$0xff]
  %v422 = vld [vmem:[%s0 + $0x30] sm:$0xff]
  %v423 = vld [vmem:[%s0 + $0x38] sm:$0xff]
  %v424 = vld [vmem:[%s0 + $0x40] sm:$0xff]
  %v425 = vld [vmem:[%s0 + $0x48] sm:$0xff]
  %v426 = vld [vmem:[%s0 + $0x50] sm:$0xff]
  %v427 = vld [vmem:[%s0 + $0x58] sm:$0xff]
  %v428 = vld [vmem:[%s0 + $0x60] sm:$0xf]
  %v429 = vld [vmem:[%s0 + $0x64] sm:$0xff]
  %v430 = vld [vmem:[%s0 + $0x6c] sm:$0xff]
  %v431 = vld [vmem:[%s0 + $0x74] sm:$0xff]
  %v432 = vld [vmem:[%s0 + $0x7c] sm:$0xff]
  %v433 = vld [vmem:[%s0 + $0x84] sm:$0xff]
  %v434 = vld [vmem:[%s0 + $0x8c] sm:$0xff]
  %v435 = vld [vmem:[%s0 + $0x94] sm:$0xff]
  %v436 = vld [vmem:[%s0 + $0x9c] sm:$0xff]
  %v437 = vld [vmem:[%s0 + $0xa4] sm:$0xff]
  %v438 = vld [vmem:[%s0 + $0xac] sm:$0xff]
  %v439 = vld [vmem:[%s0 + $0xb4] sm:$0xff]
  %v440 = vld [vmem:[%s0 + $0xbc] sm:$0xff]
  %v441 = vld [vmem:[%s0 + $0xc4] sm:$0xf]
  %v442 = vld [vmem:[%s0 + $0xc8] sm:$0xff]
  %v443 = vld [vmem:[%s0 + $0xd0] sm:$0xff]
  %v444 = vld [vmem:[%s0 + $0xd8] sm:$0xff]
  %v445 = vld [vmem:[%s0 + $0xe0] sm:$0xff]
  %v446 = vld [vmem:[%s0 + $0xe8] sm:$0xff]
  %v447 = vld [vmem:[%s0 + $0xf0] sm:$0xff]
  %v448 = vld [vmem:[%s0 + $0xf8] sm:$0xff]
  %v449 = vld [vmem:[%s0 + $0x100] sm:$0xff]
  %v450 = vld [vmem:[%s0 + $0x108] sm:$0xff]
  %v451 = vld [vmem:[%s0 + $0x110] sm:$0xff]
  %v452 = vld [vmem:[%s0 + $0x118] sm:$0xff]
  %v453 = vld [vmem:[%s0 + $0x120] sm:$0xff]
  %v454 = vld [vmem:[%s0 + $0x128] sm:$0xf]
  %v455 = vld [vmem:[%s0 + $0x12c] sm:$0xff]
  %v456 = vld [vmem:[%s0 + $0x134] sm:$0xff]
  %v457 = vld [vmem:[%s0 + $0x13c] sm:$0xff]
  %v458 = vld [vmem:[%s0 + $0x144] sm:$0xff]
  %v459 = vld [vmem:[%s0 + $0x14c] sm:$0xff]
  %v460 = vld [vmem:[%s0 + $0x154] sm:$0xff]
  %v461 = vld [vmem:[%s0 + $0x15c] sm:$0xff]
  %v462 = vld [vmem:[%s0 + $0x164] sm:$0xff]
  %v463 = vld [vmem:[%s0 + $0x16c] sm:$0xff]
  %v464 = vld [vmem:[%s0 + $0x174] sm:$0xff]
  %v465 = vld [vmem:[%s0 + $0x17c] sm:$0xff]
  %v466 = vld [vmem:[%s0 + $0x184] sm:$0xff]
  %v467 = vld [vmem:[%s0 + $0x18c] sm:$0xf]
  %v468 = vld [vmem:[%s0 + $0x190] sm:$0x33]
  %v469 = vld [vmem:[%s0 + $0x198] sm:$0x33]
  %v470 = vld [vmem:[%s0 + $0x1a0] sm:$0x33]
  %v471 = vld [vmem:[%s0 + $0x1a8] sm:$0x33]
  %v472 = vld [vmem:[%s0 + $0x1b0] sm:$0x33]
  %v473 = vld [vmem:[%s0 + $0x1b8] sm:$0x33]
  %v474 = vld [vmem:[%s0 + $0x1c0] sm:$0x33]
  %v475 = vld [vmem:[%s0 + $0x1c8] sm:$0x33]
  %v476 = vld [vmem:[%s0 + $0x1d0] sm:$0x33]
  %v477 = vld [vmem:[%s0 + $0x1d8] sm:$0x33]
  %v478 = vld [vmem:[%s0 + $0x1e0] sm:$0x33]
  %v479 = vld [vmem:[%s0 + $0x1e8] sm:$0x33]
  %v480 = vld [vmem:[%s0 + $0x1f0] sm:$0x3]
  %v482 = vlaneseq
  %v483 = vshrl.u32 %v482, 7
  %v484 = vsub.s32 0, %v483
  %v485 = vrot.slane %v415, %v484
  %v486 = vlaneseq
  %v487 = vshrl.u32 %v486, 7
  %v488 = vsub.s32 1, %v487
  %v489 = vrot.slane %v415, %v488
  %v557 = vunpack.c.l.b16 %v416
  %v558 = vunpack.c.h.b16 %v416
  %v559 = vunpack.c.l.b16 %v417
  %v560 = vunpack.c.h.b16 %v417
  %v561 = vunpack.c.l.b16 %v418
  %v562 = vunpack.c.h.b16 %v418
  %v563 = vunpack.c.l.b16 %v419
  %v564 = vunpack.c.h.b16 %v419
  %v565 = vunpack.c.l.b16 %v420
  %v566 = vunpack.c.h.b16 %v420
  %v567 = vunpack.c.l.b16 %v421
  %v568 = vunpack.c.h.b16 %v421
  %v569 = vunpack.c.l.b16 %v422
  %v570 = vunpack.c.h.b16 %v422
  %v571 = vunpack.c.l.b16 %v423
  %v572 = vunpack.c.h.b16 %v423
  %v573 = vunpack.c.l.b16 %v424
  %v574 = vunpack.c.h.b16 %v424
  %v575 = vunpack.c.l.b16 %v425
  %v576 = vunpack.c.h.b16 %v425
  %v577 = vunpack.c.l.b16 %v426
  %v578 = vunpack.c.h.b16 %v426
  %v579 = vunpack.c.l.b16 %v427
  %v580 = vunpack.c.h.b16 %v427
  %v581 = vunpack.c.l.b16 %v428
  %v582 = vunpack.c.l.b16 %v429
  %v583 = vunpack.c.h.b16 %v429
  %v584 = vunpack.c.l.b16 %v430
  %v585 = vunpack.c.h.b16 %v430
  %v586 = vunpack.c.l.b16 %v431
  %v587 = vunpack.c.h.b16 %v431
  %v588 = vunpack.c.l.b16 %v432
  %v589 = vunpack.c.h.b16 %v432
  %v590 = vunpack.c.l.b16 %v433
  %v591 = vunpack.c.h.b16 %v433
  %v592 = vunpack.c.l.b16 %v434
  %v593 = vunpack.c.h.b16 %v434
  %v594 = vunpack.c.l.b16 %v435
  %v595 = vunpack.c.h.b16 %v435
  %v596 = vunpack.c.l.b16 %v436
  %v597 = vunpack.c.h.b16 %v436
  %v598 = vunpack.c.l.b16 %v437
  %v599 = vunpack.c.h.b16 %v437
  %v600 = vunpack.c.l.b16 %v438
  %v601 = vunpack.c.h.b16 %v438
  %v602 = vunpack.c.l.b16 %v439
  %v603 = vunpack.c.h.b16 %v439
  %v604 = vunpack.c.l.b16 %v440
  %v605 = vunpack.c.h.b16 %v440
  %v606 = vunpack.c.l.b16 %v441
  %v607 = vunpack.c.l.b16 %v442
  %v608 = vunpack.c.h.b16 %v442
  %v609 = vunpack.c.l.b16 %v443
  %v610 = vunpack.c.h.b16 %v443
  %v611 = vunpack.c.l.b16 %v444
  %v612 = vunpack.c.h.b16 %v444
  %v613 = vunpack.c.l.b16 %v445
  %v614 = vunpack.c.h.b16 %v445
  %v615 = vunpack.c.l.b16 %v446
  %v616 = vunpack.c.h.b16 %v446
  %v617 = vunpack.c.l.b16 %v447
  %v618 = vunpack.c.h.b16 %v447
  %v619 = vunpack.c.l.b16 %v448
  %v620 = vunpack.c.h.b16 %v448
  %v621 = vunpack.c.l.b16 %v449
  %v622 = vunpack.c.h.b16 %v449
  %v623 = vunpack.c.l.b16 %v450
  %v624 = vunpack.c.h.b16 %v450
  %v625 = vunpack.c.l.b16 %v451
  %v626 = vunpack.c.h.b16 %v451
  %v627 = vunpack.c.l.b16 %v452
  %v628 = vunpack.c.h.b16 %v452
  %v629 = vunpack.c.l.b16 %v453
  %v630 = vunpack.c.h.b16 %v453
  %v631 = vunpack.c.l.b16 %v454
  %v632 = vunpack.c.l.b16 %v455
  %v633 = vunpack.c.h.b16 %v455
  %v634 = vunpack.c.l.b16 %v456
  %v635 = vunpack.c.h.b16 %v456
  %v636 = vunpack.c.l.b16 %v457
  %v637 = vunpack.c.h.b16 %v457
  %v638 = vunpack.c.l.b16 %v458
  %v639 = vunpack.c.h.b16 %v458
  %v640 = vunpack.c.l.b16 %v459
  %v641 = vunpack.c.h.b16 %v459
  %v642 = vunpack.c.l.b16 %v460
  %v643 = vunpack.c.h.b16 %v460
  %v644 = vunpack.c.l.b16 %v461
  %v645 = vunpack.c.h.b16 %v461
  %v646 = vunpack.c.l.b16 %v462
  %v647 = vunpack.c.h.b16 %v462
  %v648 = vunpack.c.l.b16 %v463
  %v649 = vunpack.c.h.b16 %v463
  %v650 = vunpack.c.l.b16 %v464
  %v651 = vunpack.c.h.b16 %v464
  %v652 = vunpack.c.l.b16 %v465
  %v653 = vunpack.c.h.b16 %v465
  %v654 = vunpack.c.l.b16 %v466
  %v655 = vunpack.c.h.b16 %v466
  %v656 = vunpack.c.l.b16 %v467
  %v657 = vunpack.c.l.b16 %v468
  %v658 = vunpack.c.h.b16 %v468
  %v659 = vunpack.c.l.b16 %v469
  %v660 = vunpack.c.h.b16 %v469
  %v661 = vunpack.c.l.b16 %v470
  %v662 = vunpack.c.h.b16 %v470
  %v663 = vunpack.c.l.b16 %v471
  %v664 = vunpack.c.h.b16 %v471
  %v665 = vunpack.c.l.b16 %v472
  %v666 = vunpack.c.h.b16 %v472
  %v667 = vunpack.c.l.b16 %v473
  %v668 = vunpack.c.h.b16 %v473
  %v669 = vunpack.c.l.b16 %v474
  %v670 = vunpack.c.h.b16 %v474
  %v671 = vunpack.c.l.b16 %v475
  %v672 = vunpack.c.h.b16 %v475
  %v673 = vunpack.c.l.b16 %v476
  %v674 = vunpack.c.h.b16 %v476
  %v675 = vunpack.c.l.b16 %v477
  %v676 = vunpack.c.h.b16 %v477
  %v677 = vunpack.c.l.b16 %v478
  %v678 = vunpack.c.h.b16 %v478
  %v679 = vunpack.c.l.b16 %v479
  %v680 = vunpack.c.h.b16 %v479
  %v681 = vunpack.c.l.b16 %v480
  %v682 = vpack.c.b16 %v582, %v557
  %v683 = vpack.c.b16 %v583, %v558
  %v684 = vpack.c.b16 %v584, %v559
  %v685 = vpack.c.b16 %v585, %v560
  %v686 = vpack.c.b16 %v586, %v561
  %v687 = vpack.c.b16 %v587, %v562
  %v688 = vpack.c.b16 %v588, %v563
  %v689 = vpack.c.b16 %v589, %v564
  %v690 = vpack.c.b16 %v590, %v565
  %v691 = vpack.c.b16 %v591, %v566
  %v692 = vpack.c.b16 %v592, %v567
  %v693 = vpack.c.b16 %v593, %v568
  %v694 = vpack.c.b16 %v594, %v569
  %v695 = vpack.c.b16 %v595, %v570
  %v696 = vpack.c.b16 %v596, %v571
  %v697 = vpack.c.b16 %v597, %v572
  %v698 = vpack.c.b16 %v598, %v573
  %v699 = vpack.c.b16 %v599, %v574
  %v700 = vpack.c.b16 %v600, %v575
  %v701 = vpack.c.b16 %v601, %v576
  %v702 = vpack.c.b16 %v602, %v577
  %v703 = vpack.c.b16 %v603, %v578
  %v704 = vpack.c.b16 %v604, %v579
  %v705 = vpack.c.b16 %v605, %v580
  %v706 = vpack.c.b16 %v606, %v581
  %v707 = vpack.c.b16 %v632, %v607
  %v708 = vpack.c.b16 %v633, %v608
  %v709 = vpack.c.b16 %v634, %v609
  %v710 = vpack.c.b16 %v635, %v610
  %v711 = vpack.c.b16 %v636, %v611
  %v712 = vpack.c.b16 %v637, %v612
  %v713 = vpack.c.b16 %v638, %v613
  %v714 = vpack.c.b16 %v639, %v614
  %v715 = vpack.c.b16 %v640, %v615
  %v716 = vpack.c.b16 %v641, %v616
  %v717 = vpack.c.b16 %v642, %v617
  %v718 = vpack.c.b16 %v643, %v618
  %v719 = vpack.c.b16 %v644, %v619
  %v720 = vpack.c.b16 %v645, %v620
  %v721 = vpack.c.b16 %v646, %v621
  %v722 = vpack.c.b16 %v647, %v622
  %v723 = vpack.c.b16 %v648, %v623
  %v724 = vpack.c.b16 %v649, %v624
  %v725 = vpack.c.b16 %v650, %v625
  %v726 = vpack.c.b16 %v651, %v626
  %v727 = vpack.c.b16 %v652, %v627
  %v728 = vpack.c.b16 %v653, %v628
  %v729 = vpack.c.b16 %v654, %v629
  %v730 = vpack.c.b16 %v655, %v630
  %v731 = vpack.c.b16 %v656, %v631
  %v732 = vpack.c.b16 %v657, %v657
  %v733 = vpack.c.b16 %v658, %v658
  %v734 = vpack.c.b16 %v659, %v659
  %v735 = vpack.c.b16 %v660, %v660
  %v736 = vpack.c.b16 %v661, %v661
  %v737 = vpack.c.b16 %v662, %v662
  %v738 = vpack.c.b16 %v663, %v663
  %v739 = vpack.c.b16 %v664, %v664
  %v740 = vpack.c.b16 %v665, %v665
  %v741 = vpack.c.b16 %v666, %v666
  %v742 = vpack.c.b16 %v667, %v667
  %v743 = vpack.c.b16 %v668, %v668
  %v744 = vpack.c.b16 %v669, %v669
  %v745 = vpack.c.b16 %v670, %v670
  %v746 = vpack.c.b16 %v671, %v671
  %v747 = vpack.c.b16 %v672, %v672
  %v748 = vpack.c.b16 %v673, %v673
  %v749 = vpack.c.b16 %v674, %v674
  %v750 = vpack.c.b16 %v675, %v675
  %v751 = vpack.c.b16 %v676, %v676
  %v752 = vpack.c.b16 %v677, %v677
  %v753 = vpack.c.b16 %v678, %v678
  %v754 = vpack.c.b16 %v679, %v679
  %v755 = vpack.c.b16 %v680, %v680
  %v756 = vpack.c.b16 %v681, %v681
  %v1232 = vunpack.c.l.b16 %v15
  %v1233 = vunpack.c.h.b16 %v15
  %v1234 = vunpack.c.l.b16 %v16
  %v1235 = vunpack.c.h.b16 %v16
  %v1236 = vunpack.c.l.b16 %v17
  %v1237 = vunpack.c.h.b16 %v17
  %v1238 = vunpack.c.l.b16 %v18
  %v1239 = vunpack.c.h.b16 %v18
  %v1240 = vunpack.c.l.b16 %v19
  %v1241 = vunpack.c.h.b16 %v19
  %v1242 = vunpack.c.l.b16 %v20
  %v1243 = vunpack.c.h.b16 %v20
  %v1244 = vunpack.c.l.b16 %v21
  %v1245 = vunpack.c.h.b16 %v21
  %v1246 = vunpack.c.l.b16 %v22
  %v1247 = vunpack.c.h.b16 %v22
  %v1248 = vunpack.c.l.b16 %v23
  %v1249 = vunpack.c.h.b16 %v23
  %v1250 = vunpack.c.l.b16 %v24
  %v1251 = vunpack.c.h.b16 %v24
  %v1252 = vunpack.c.l.b16 %v25
  %v1253 = vunpack.c.h.b16 %v25
  %v1254 = vunpack.c.l.b16 %v26
  %v1255 = vunpack.c.h.b16 %v26
  %v1256 = vunpack.c.l.b16 %v27
  %v1257 = vunpack.c.h.b16 %v27
  %v1258 = vunpack.c.l.b16 %v28
  %v1259 = vunpack.c.h.b16 %v28
  %v1260 = vunpack.c.l.b16 %v29
  %v1261 = vunpack.c.h.b16 %v29
  %v1262 = vunpack.c.l.b16 %v30
  %v1263 = vunpack.c.h.b16 %v30
  %v1264 = vunpack.c.l.b16 %v31
  %v1265 = vunpack.c.h.b16 %v31
  %v1266 = vunpack.c.l.b16 %v32
  %v1267 = vunpack.c.h.b16 %v32
  %v1268 = vunpack.c.l.b16 %v33
  %v1269 = vunpack.c.h.b16 %v33
  %v1270 = vunpack.c.l.b16 %v34
  %v1271 = vunpack.c.h.b16 %v34
  %v1272 = vunpack.c.l.b16 %v35
  %v1273 = vunpack.c.h.b16 %v35
  %v1274 = vunpack.c.l.b16 %v36
  %v1275 = vunpack.c.h.b16 %v36
  %v1276 = vunpack.c.l.b16 %v37
  %v1277 = vunpack.c.h.b16 %v37
  %v1278 = vunpack.c.l.b16 %v38
  %v1279 = vunpack.c.h.b16 %v38
  %v1280 = vunpack.c.l.b16 %v39
  %v1281 = vunpack.c.h.b16 %v39
  %v1282 = vunpack.c.l.b16 %v40
  %v1283 = vunpack.c.h.b16 %v40
  %v1284 = vunpack.c.l.b16 %v41
  %v1285 = vunpack.c.h.b16 %v41
  %v1286 = vunpack.c.l.b16 %v42
  %v1287 = vunpack.c.h.b16 %v42
  %v1288 = vunpack.c.l.b16 %v43
  %v1289 = vunpack.c.h.b16 %v43
  %v1290 = vunpack.c.l.b16 %v44
  %v1291 = vunpack.c.h.b16 %v44
  %v1292 = vunpack.c.l.b16 %v45
  %v1293 = vunpack.c.h.b16 %v45
  %v1294 = vunpack.c.l.b16 %v46
  %v1295 = vunpack.c.h.b16 %v46
  %v1296 = vunpack.c.l.b16 %v47
  %v1297 = vunpack.c.h.b16 %v47
  %v1298 = vunpack.c.l.b16 %v48
  %v1299 = vunpack.c.h.b16 %v48
  %v1300 = vunpack.c.l.b16 %v49
  %v1301 = vunpack.c.h.b16 %v49
  %v1302 = vunpack.c.l.b16 %v50
  %v1303 = vunpack.c.h.b16 %v50
  %v1304 = vunpack.c.l.b16 %v51
  %v1305 = vunpack.c.h.b16 %v51
  %v1306 = vunpack.c.l.b16 %v52
  %v1307 = vunpack.c.h.b16 %v52
  %v1308 = vunpack.c.l.b16 %v53
  %v1309 = vunpack.c.h.b16 %v53
  %v1310 = vunpack.c.l.b16 %v54
  %v1311 = vunpack.c.h.b16 %v54
  %v1312 = vunpack.c.l.b16 %v55
  %v1313 = vunpack.c.h.b16 %v55
  %v1314 = vunpack.c.l.b16 %v56
  %v1315 = vunpack.c.h.b16 %v56
  %v1316 = vunpack.c.l.b16 %v57
  %v1317 = vunpack.c.h.b16 %v57
  %v1318 = vunpack.c.l.b16 %v58
  %v1319 = vunpack.c.h.b16 %v58
  %v1320 = vunpack.c.l.b16 %v59
  %v1321 = vunpack.c.h.b16 %v59
  %v1322 = vunpack.c.l.b16 %v60
  %v1323 = vunpack.c.h.b16 %v60
  %v1324 = vunpack.c.l.b16 %v61
  %v1325 = vunpack.c.h.b16 %v61
  %v1326 = vunpack.c.l.b16 %v62
  %v1327 = vunpack.c.h.b16 %v62
  %v1328 = vunpack.c.l.b16 %v63
  %v1329 = vunpack.c.h.b16 %v63
  %v1330 = vunpack.c.l.b16 %v64
  %v1331 = vunpack.c.h.b16 %v64
  %v1332 = vunpack.c.l.b16 %v65
  %v1333 = vunpack.c.h.b16 %v65
  %v1334 = vunpack.c.l.b16 %v66
  %v1335 = vunpack.c.h.b16 %v66
  %v1336 = vunpack.c.l.b16 %v67
  %v1337 = vunpack.c.h.b16 %v67
  %v1338 = vunpack.c.l.b16 %v68
  %v1339 = vunpack.c.h.b16 %v68
  %v1340 = vunpack.c.l.b16 %v69
  %v1341 = vunpack.c.h.b16 %v69
  %v1342 = vunpack.c.l.b16 %v70
  %v1343 = vunpack.c.h.b16 %v70
  %v1344 = vunpack.c.l.b16 %v71
  %v1345 = vunpack.c.h.b16 %v71
  %v1346 = vunpack.c.l.b16 %v72
  %v1347 = vunpack.c.h.b16 %v72
  %v1348 = vunpack.c.l.b16 %v73
  %v1349 = vunpack.c.h.b16 %v73
  %v1350 = vunpack.c.l.b16 %v74
  %v1351 = vunpack.c.h.b16 %v74
  %v1352 = vunpack.c.l.b16 %v75
  %v1353 = vunpack.c.h.b16 %v75
  %v1354 = vunpack.c.l.b16 %v76
  %v1355 = vunpack.c.h.b16 %v76
  %v1356 = vunpack.c.l.b16 %v77
  %v1357 = vunpack.c.h.b16 %v77
  %v1358 = vunpack.c.l.b16 %v78
  %v1359 = vunpack.c.h.b16 %v78
  %v1360 = vunpack.c.l.b16 %v79
  %v1361 = vunpack.c.h.b16 %v79
  %v1362 = vunpack.c.l.b16 %v80
  %v1363 = vunpack.c.h.b16 %v80
  %v1364 = vunpack.c.l.b16 %v81
  %v1365 = vunpack.c.h.b16 %v81
  %v1366 = vunpack.c.l.b16 %v82
  %v1367 = vunpack.c.h.b16 %v82
  %v1368 = vunpack.c.l.b16 %v83
  %v1369 = vunpack.c.h.b16 %v83
  %v1370 = vunpack.c.l.b16 %v84
  %v1371 = vunpack.c.h.b16 %v84
  %v1372 = vunpack.c.l.b16 %v85
  %v1373 = vunpack.c.h.b16 %v85
  %v1374 = vunpack.c.l.b16 %v86
  %v1375 = vunpack.c.h.b16 %v86
  %v1376 = vunpack.c.l.b16 %v87
  %v1377 = vunpack.c.h.b16 %v87
  %v1378 = vunpack.c.l.b16 %v88
  %v1379 = vunpack.c.h.b16 %v88
  %v1380 = vunpack.c.l.b16 %v89
  %v1381 = vunpack.c.h.b16 %v89
  %v1382 = vunpack.c.l.b16 %v90
  %v1383 = vunpack.c.h.b16 %v90
  %v1384 = vunpack.c.l.b16 %v91
  %v1385 = vunpack.c.h.b16 %v91
  %v1386 = vunpack.c.l.b16 %v92
  %v1387 = vunpack.c.h.b16 %v92
  %v1388 = vunpack.c.l.b16 %v93
  %v1389 = vunpack.c.h.b16 %v93
  %v1390 = vunpack.c.l.b16 %v94
  %v1391 = vunpack.c.h.b16 %v94
  %v1392 = vunpack.c.l.b16 %v95
  %v1393 = vunpack.c.h.b16 %v95
  %v1394 = vunpack.c.l.b16 %v96
  %v1395 = vunpack.c.h.b16 %v96
  %v1396 = vunpack.c.l.b16 %v97
  %v1397 = vunpack.c.h.b16 %v97
  %v1398 = vunpack.c.l.b16 %v98
  %v1399 = vunpack.c.h.b16 %v98
  %v1400 = vunpack.c.l.b16 %v99
  %v1401 = vunpack.c.h.b16 %v99
  %v1402 = vunpack.c.l.b16 %v100
  %v1403 = vunpack.c.h.b16 %v100
  %v1404 = vunpack.c.l.b16 %v101
  %v1405 = vunpack.c.h.b16 %v101
  %v1406 = vunpack.c.l.b16 %v102
  %v1407 = vunpack.c.h.b16 %v102
  %v1408 = vunpack.c.l.b16 %v103
  %v1409 = vunpack.c.h.b16 %v103
  %v1410 = vunpack.c.l.b16 %v104
  %v1411 = vunpack.c.h.b16 %v104
  %v1412 = vunpack.c.l.b16 %v105
  %v1413 = vunpack.c.h.b16 %v105
  %v1414 = vunpack.c.l.b16 %v106
  %v1415 = vunpack.c.h.b16 %v106
  %v1416 = vunpack.c.l.b16 %v107
  %v1417 = vunpack.c.h.b16 %v107
  %v1418 = vunpack.c.l.b16 %v108
  %v1419 = vunpack.c.h.b16 %v108
  %v1420 = vunpack.c.l.b16 %v109
  %v1421 = vunpack.c.h.b16 %v109
  %v1422 = vunpack.c.l.b16 %v110
  %v1423 = vunpack.c.h.b16 %v110
  %v1424 = vunpack.c.l.b16 %v111
  %v1425 = vunpack.c.h.b16 %v111
  %v1426 = vunpack.c.l.b16 %v112
  %v1427 = vunpack.c.h.b16 %v112
  %v1428 = vunpack.c.l.b16 %v113
  %v1429 = vunpack.c.h.b16 %v113
  %v1430 = vunpack.c.l.b16 %v114
  %v1431 = vunpack.c.h.b16 %v114
  %v1432 = vunpack.c.l.b16 %v115
  %v1433 = vunpack.c.h.b16 %v115
  %v1434 = vunpack.c.l.b16 %v116
  %v1435 = vunpack.c.h.b16 %v116
  %v1436 = vunpack.c.l.b16 %v117
  %v1437 = vunpack.c.h.b16 %v117
  %v1438 = vunpack.c.l.b16 %v118
  %v1439 = vunpack.c.h.b16 %v118
  %v1440 = vunpack.c.l.b16 %v119
  %v1441 = vunpack.c.h.b16 %v119
  %v1442 = vunpack.c.l.b16 %v120
  %v1443 = vunpack.c.h.b16 %v120
  %v1444 = vunpack.c.l.b16 %v121
  %v1445 = vunpack.c.h.b16 %v121
  %v1446 = vunpack.c.l.b16 %v122
  %v1447 = vunpack.c.h.b16 %v122
  %v1448 = vunpack.c.l.b16 %v123
  %v1449 = vunpack.c.h.b16 %v123
  %v1450 = vunpack.c.l.b16 %v124
  %v1451 = vunpack.c.h.b16 %v124
  %v1452 = vunpack.c.l.b16 %v125
  %v1453 = vunpack.c.h.b16 %v125
  %v1454 = vunpack.c.l.b16 %v126
  %v1455 = vunpack.c.h.b16 %v126
  %v1456 = vunpack.c.l.b16 %v127
  %v1457 = vunpack.c.h.b16 %v127
  %v1458 = vunpack.c.l.b16 %v128
  %v1459 = vunpack.c.h.b16 %v128
  %v1460 = vunpack.c.l.b16 %v129
  %v1461 = vunpack.c.h.b16 %v129
  %v1462 = vunpack.c.l.b16 %v130
  %v1463 = vunpack.c.h.b16 %v130
  %v1464 = vunpack.c.l.b16 %v131
  %v1465 = vunpack.c.h.b16 %v131
  %v1466 = vunpack.c.l.b16 %v132
  %v1467 = vunpack.c.h.b16 %v132
  %v1468 = vunpack.c.l.b16 %v133
  %v1469 = vunpack.c.h.b16 %v133
  %v1470 = vunpack.c.l.b16 %v134
  %v1471 = vunpack.c.h.b16 %v134
  %v1472 = vunpack.c.l.b16 %v135
  %v1473 = vunpack.c.h.b16 %v135
  %v1474 = vunpack.c.l.b16 %v136
  %v1475 = vunpack.c.h.b16 %v136
  %v1476 = vunpack.c.l.b16 %v137
  %v1477 = vunpack.c.h.b16 %v137
  %v1478 = vunpack.c.l.b16 %v138
  %v1479 = vunpack.c.h.b16 %v138
  %v1480 = vunpack.c.l.b16 %v139
  %v1481 = vunpack.c.h.b16 %v139
  %v1482 = vunpack.c.l.b16 %v140
  %v1483 = vunpack.c.h.b16 %v140
  %v1484 = vunpack.c.l.b16 %v141
  %v1485 = vunpack.c.h.b16 %v141
  %v1486 = vunpack.c.l.b16 %v142
  %v1487 = vunpack.c.h.b16 %v142
  %v1488 = vunpack.c.l.b16 %v143
  %v1489 = vunpack.c.h.b16 %v143
  %v1490 = vunpack.c.l.b16 %v144
  %v1491 = vunpack.c.h.b16 %v144
  %v1492 = vunpack.c.l.b16 %v145
  %v1493 = vunpack.c.h.b16 %v145
  %v1494 = vunpack.c.l.b16 %v146
  %v1495 = vunpack.c.h.b16 %v146
  %v1496 = vunpack.c.l.b16 %v147
  %v1497 = vunpack.c.h.b16 %v147
  %v1498 = vunpack.c.l.b16 %v148
  %v1499 = vunpack.c.h.b16 %v148
  %v1500 = vunpack.c.l.b16 %v149
  %v1501 = vunpack.c.h.b16 %v149
  %v1502 = vunpack.c.l.b16 %v150
  %v1503 = vunpack.c.h.b16 %v150
  %v1504 = vunpack.c.l.b16 %v151
  %v1505 = vunpack.c.h.b16 %v151
  %v1506 = vunpack.c.l.b16 %v152
  %v1507 = vunpack.c.h.b16 %v152
  %v1508 = vunpack.c.l.b16 %v153
  %v1509 = vunpack.c.h.b16 %v153
  %v1510 = vunpack.c.l.b16 %v154
  %v1511 = vunpack.c.h.b16 %v154
  %v1512 = vunpack.c.l.b16 %v155
  %v1513 = vunpack.c.h.b16 %v155
  %v1514 = vunpack.c.l.b16 %v156
  %v1515 = vunpack.c.h.b16 %v156
  %v1516 = vunpack.c.l.b16 %v157
  %v1517 = vunpack.c.h.b16 %v157
  %v1518 = vunpack.c.l.b16 %v158
  %v1519 = vunpack.c.h.b16 %v158
  %v1520 = vunpack.c.l.b16 %v159
  %v1521 = vunpack.c.h.b16 %v159
  %v1522 = vunpack.c.l.b16 %v160
  %v1523 = vunpack.c.h.b16 %v160
  %v1524 = vunpack.c.l.b16 %v161
  %v1525 = vunpack.c.h.b16 %v161
  %v1526 = vunpack.c.l.b16 %v162
  %v1527 = vunpack.c.h.b16 %v162
  %v1528 = vunpack.c.l.b16 %v163
  %v1529 = vunpack.c.h.b16 %v163
  %v1530 = vunpack.c.l.b16 %v164
  %v1531 = vunpack.c.h.b16 %v164
  %v1532 = vunpack.c.l.b16 %v165
  %v1533 = vunpack.c.h.b16 %v165
  %v1534 = vunpack.c.l.b16 %v166
  %v1535 = vunpack.c.h.b16 %v166
  %v1536 = vunpack.c.l.b16 %v167
  %v1537 = vunpack.c.h.b16 %v167
  %v1538 = vunpack.c.l.b16 %v168
  %v1539 = vunpack.c.h.b16 %v168
  %v1540 = vunpack.c.l.b16 %v169
  %v1541 = vunpack.c.h.b16 %v169
  %v1542 = vunpack.c.l.b16 %v170
  %v1543 = vunpack.c.h.b16 %v170
  %v1544 = vunpack.c.l.b16 %v171
  %v1545 = vunpack.c.h.b16 %v171
  %v1546 = vunpack.c.l.b16 %v172
  %v1547 = vunpack.c.h.b16 %v172
  %v1548 = vunpack.c.l.b16 %v173
  %v1549 = vunpack.c.h.b16 %v173
  %v1550 = vunpack.c.l.b16 %v174
  %v1551 = vunpack.c.h.b16 %v174
  %v1552 = vunpack.c.l.b16 %v175
  %v1553 = vunpack.c.h.b16 %v175
  %v1554 = vunpack.c.l.b16 %v176
  %v1555 = vunpack.c.h.b16 %v176
  %v1556 = vunpack.c.l.b16 %v177
  %v1557 = vunpack.c.h.b16 %v177
  %v1558 = vunpack.c.l.b16 %v178
  %v1559 = vunpack.c.h.b16 %v178
  %v1560 = vunpack.c.l.b16 %v179
  %v1561 = vunpack.c.h.b16 %v179
  %v1562 = vunpack.c.l.b16 %v180
  %v1563 = vunpack.c.h.b16 %v180
  %v1564 = vunpack.c.l.b16 %v181
  %v1565 = vunpack.c.h.b16 %v181
  %v1566 = vunpack.c.l.b16 %v182
  %v1567 = vunpack.c.h.b16 %v182
  %v1568 = vunpack.c.l.b16 %v183
  %v1569 = vunpack.c.h.b16 %v183
  %v1570 = vunpack.c.l.b16 %v184
  %v1571 = vunpack.c.h.b16 %v184
  %v1572 = vunpack.c.l.b16 %v185
  %v1573 = vunpack.c.h.b16 %v185
  %v1574 = vunpack.c.l.b16 %v186
  %v1575 = vunpack.c.h.b16 %v186
  %v1576 = vunpack.c.l.b16 %v187
  %v1577 = vunpack.c.h.b16 %v187
  %v1578 = vunpack.c.l.b16 %v188
  %v1579 = vunpack.c.h.b16 %v188
  %v1580 = vunpack.c.l.b16 %v189
  %v1581 = vunpack.c.h.b16 %v189
  %v1582 = vunpack.c.l.b16 %v190
  %v1583 = vunpack.c.h.b16 %v190
  %v1584 = vunpack.c.l.b16 %v191
  %v1585 = vunpack.c.h.b16 %v191
  %v1586 = vunpack.c.l.b16 %v192
  %v1587 = vunpack.c.h.b16 %v192
  %v1588 = vunpack.c.l.b16 %v193
  %v1589 = vunpack.c.h.b16 %v193
  %v1590 = vunpack.c.l.b16 %v194
  %v1591 = vunpack.c.h.b16 %v194
  %v1592 = vunpack.c.l.b16 %v195
  %v1593 = vunpack.c.h.b16 %v195
  %v1594 = vunpack.c.l.b16 %v196
  %v1595 = vunpack.c.h.b16 %v196
  %v1596 = vunpack.c.l.b16 %v197
  %v1597 = vunpack.c.h.b16 %v197
  %v1598 = vunpack.c.l.b16 %v198
  %v1599 = vunpack.c.h.b16 %v198
  %v1600 = vunpack.c.l.b16 %v199
  %v1601 = vunpack.c.h.b16 %v199
  %v1602 = vunpack.c.l.b16 %v200
  %v1603 = vunpack.c.h.b16 %v200
  %v1604 = vunpack.c.l.b16 %v201
  %v1605 = vunpack.c.h.b16 %v201
  %v1606 = vunpack.c.l.b16 %v202
  %v1607 = vunpack.c.h.b16 %v202
  %v1608 = vunpack.c.l.b16 %v203
  %v1609 = vunpack.c.h.b16 %v203
  %v1610 = vunpack.c.l.b16 %v204
  %v1611 = vunpack.c.h.b16 %v204
  %v1612 = vunpack.c.l.b16 %v205
  %v1613 = vunpack.c.h.b16 %v205
  %v1614 = vunpack.c.l.b16 %v206
  %v1615 = vunpack.c.h.b16 %v206
  %v1616 = vunpack.c.l.b16 %v207
  %v1617 = vunpack.c.h.b16 %v207
  %v1618 = vunpack.c.l.b16 %v208
  %v1619 = vunpack.c.h.b16 %v208
  %v1620 = vunpack.c.l.b16 %v209
  %v1621 = vunpack.c.h.b16 %v209
  %v1622 = vunpack.c.l.b16 %v210
  %v1623 = vunpack.c.h.b16 %v210
  %v1624 = vunpack.c.l.b16 %v211
  %v1625 = vunpack.c.h.b16 %v211
  %v1626 = vunpack.c.l.b16 %v212
  %v1627 = vunpack.c.h.b16 %v212
  %v1628 = vunpack.c.l.b16 %v213
  %v1629 = vunpack.c.h.b16 %v213
  %v1630 = vunpack.c.l.b16 %v214
  %v1631 = vunpack.c.h.b16 %v214
  %v1632 = vunpack.c.l.b16 %v215
  %v1633 = vunpack.c.h.b16 %v215
  %v1634 = vunpack.c.l.b16 %v216
  %v1635 = vunpack.c.h.b16 %v216
  %v1636 = vunpack.c.l.b16 %v217
  %v1637 = vunpack.c.h.b16 %v217
  %v1638 = vunpack.c.l.b16 %v218
  %v1639 = vunpack.c.h.b16 %v218
  %v1640 = vunpack.c.l.b16 %v219
  %v1641 = vunpack.c.h.b16 %v219
  %v1642 = vunpack.c.l.b16 %v220
  %v1643 = vunpack.c.h.b16 %v220
  %v1644 = vunpack.c.l.b16 %v221
  %v1645 = vunpack.c.h.b16 %v221
  %v1646 = vunpack.c.l.b16 %v222
  %v1647 = vunpack.c.h.b16 %v222
  %v1648 = vunpack.c.l.b16 %v223
  %v1649 = vunpack.c.h.b16 %v223
  %v1650 = vunpack.c.l.b16 %v224
  %v1651 = vunpack.c.h.b16 %v224
  %v1652 = vunpack.c.l.b16 %v225
  %v1653 = vunpack.c.h.b16 %v225
  %v1654 = vunpack.c.l.b16 %v226
  %v1655 = vunpack.c.h.b16 %v226
  %v1656 = vunpack.c.l.b16 %v227
  %v1657 = vunpack.c.h.b16 %v227
  %v1658 = vunpack.c.l.b16 %v228
  %v1659 = vunpack.c.h.b16 %v228
  %v1660 = vunpack.c.l.b16 %v229
  %v1661 = vunpack.c.h.b16 %v229
  %v1662 = vunpack.c.l.b16 %v230
  %v1663 = vunpack.c.h.b16 %v230
  %v1664 = vunpack.c.l.b16 %v231
  %v1665 = vunpack.c.h.b16 %v231
  %v1666 = vunpack.c.l.b16 %v232
  %v1667 = vunpack.c.h.b16 %v232
  %v1668 = vunpack.c.l.b16 %v233
  %v1669 = vunpack.c.h.b16 %v233
  %v1670 = vunpack.c.l.b16 %v234
  %v1671 = vunpack.c.h.b16 %v234
  %v1672 = vunpack.c.l.b16 %v235
  %v1673 = vunpack.c.h.b16 %v235
  %v1674 = vunpack.c.l.b16 %v236
  %v1675 = vunpack.c.h.b16 %v236
  %v1676 = vunpack.c.l.b16 %v237
  %v1677 = vunpack.c.h.b16 %v237
  %v1678 = vunpack.c.l.b16 %v238
  %v1679 = vunpack.c.h.b16 %v238
  %v1680 = vunpack.c.l.b16 %v239
  %v1681 = vunpack.c.h.b16 %v239
  %v1682 = vunpack.c.l.b16 %v240
  %v1683 = vunpack.c.h.b16 %v240
  %v1684 = vunpack.c.l.b16 %v241
  %v1685 = vunpack.c.h.b16 %v241
  %v1686 = vunpack.c.l.b16 %v242
  %v1687 = vunpack.c.h.b16 %v242
  %v1688 = vunpack.c.l.b16 %v243
  %v1689 = vunpack.c.h.b16 %v243
  %v1690 = vunpack.c.l.b16 %v244
  %v1691 = vunpack.c.h.b16 %v244
  %v1692 = vunpack.c.l.b16 %v245
  %v1693 = vunpack.c.h.b16 %v245
  %v1694 = vunpack.c.l.b16 %v246
  %v1695 = vunpack.c.h.b16 %v246
  %v1696 = vunpack.c.l.b16 %v247
  %v1697 = vunpack.c.h.b16 %v247
  %v1698 = vunpack.c.l.b16 %v248
  %v1699 = vunpack.c.h.b16 %v248
  %v1700 = vunpack.c.l.b16 %v249
  %v1701 = vunpack.c.h.b16 %v249
  %v1702 = vunpack.c.l.b16 %v250
  %v1703 = vunpack.c.h.b16 %v250
  %v1704 = vunpack.c.l.b16 %v251
  %v1705 = vunpack.c.h.b16 %v251
  %v1706 = vunpack.c.l.b16 %v252
  %v1707 = vunpack.c.h.b16 %v252
  %v1708 = vunpack.c.l.b16 %v253
  %v1709 = vunpack.c.h.b16 %v253
  %v1710 = vunpack.c.l.b16 %v254
  %v1711 = vunpack.c.h.b16 %v254
  %v1712 = vunpack.c.l.b16 %v255
  %v1713 = vunpack.c.h.b16 %v255
  %v1714 = vunpack.c.l.b16 %v256
  %v1715 = vunpack.c.h.b16 %v256
  %v1716 = vunpack.c.l.b16 %v257
  %v1717 = vunpack.c.h.b16 %v257
  %v1718 = vunpack.c.l.b16 %v258
  %v1719 = vunpack.c.h.b16 %v258
  %v1720 = vunpack.c.l.b16 %v259
  %v1721 = vunpack.c.h.b16 %v259
  %v1722 = vunpack.c.l.b16 %v260
  %v1723 = vunpack.c.h.b16 %v260
  %v1724 = vunpack.c.l.b16 %v261
  %v1725 = vunpack.c.h.b16 %v261
  %v1726 = vunpack.c.l.b16 %v262
  %v1727 = vunpack.c.h.b16 %v262
  %v1728 = vunpack.c.l.b16 %v263
  %v1729 = vunpack.c.h.b16 %v263
  %v1730 = vunpack.c.l.b16 %v264
  %v1731 = vunpack.c.h.b16 %v264
  %v1732 = vunpack.c.l.b16 %v265
  %v1733 = vunpack.c.h.b16 %v265
  %v1734 = vunpack.c.l.b16 %v266
  %v1735 = vunpack.c.h.b16 %v266
  %v1736 = vunpack.c.l.b16 %v267
  %v1737 = vunpack.c.h.b16 %v267
  %v1738 = vunpack.c.l.b16 %v268
  %v1739 = vunpack.c.h.b16 %v268
  %v1740 = vunpack.c.l.b16 %v269
  %v1741 = vunpack.c.h.b16 %v269
  %v1742 = vunpack.c.l.b16 %v270
  %v1743 = vunpack.c.h.b16 %v270
  %v1744 = vunpack.c.l.b16 %v271
  %v1745 = vunpack.c.h.b16 %v271
  %v1746 = vunpack.c.l.b16 %v272
  %v1747 = vunpack.c.h.b16 %v272
  %v1748 = vunpack.c.l.b16 %v273
  %v1749 = vunpack.c.h.b16 %v273
  %v1750 = vunpack.c.l.b16 %v274
  %v1751 = vunpack.c.h.b16 %v274
  %v1752 = vunpack.c.l.b16 %v275
  %v1753 = vunpack.c.h.b16 %v275
  %v1754 = vunpack.c.l.b16 %v276
  %v1755 = vunpack.c.h.b16 %v276
  %v1756 = vunpack.c.l.b16 %v277
  %v1757 = vunpack.c.h.b16 %v277
  %v1758 = vunpack.c.l.b16 %v278
  %v1759 = vunpack.c.h.b16 %v278
  %v1760 = vunpack.c.l.b16 %v279
  %v1761 = vunpack.c.h.b16 %v279
  %v1762 = vunpack.c.l.b16 %v280
  %v1763 = vunpack.c.h.b16 %v280
  %v1764 = vunpack.c.l.b16 %v281
  %v1765 = vunpack.c.h.b16 %v281
  %v1766 = vunpack.c.l.b16 %v282
  %v1767 = vunpack.c.h.b16 %v282
  %v1768 = vunpack.c.l.b16 %v283
  %v1769 = vunpack.c.h.b16 %v283
  %v1770 = vunpack.c.l.b16 %v284
  %v1771 = vunpack.c.h.b16 %v284
  %v1772 = vunpack.c.l.b16 %v285
  %v1773 = vunpack.c.h.b16 %v285
  %v1774 = vunpack.c.l.b16 %v286
  %v1775 = vunpack.c.h.b16 %v286
  %v1776 = vunpack.c.l.b16 %v287
  %v1777 = vunpack.c.h.b16 %v287
  %v1778 = vunpack.c.l.b16 %v288
  %v1779 = vunpack.c.h.b16 %v288
  %v1780 = vunpack.c.l.b16 %v289
  %v1781 = vunpack.c.h.b16 %v289
  %v1782 = vunpack.c.l.b16 %v290
  %v1783 = vunpack.c.h.b16 %v290
  %v1784 = vunpack.c.l.b16 %v291
  %v1785 = vunpack.c.h.b16 %v291
  %v1786 = vunpack.c.l.b16 %v292
  %v1787 = vunpack.c.h.b16 %v292
  %v1788 = vunpack.c.l.b16 %v293
  %v1789 = vunpack.c.h.b16 %v293
  %v1790 = vunpack.c.l.b16 %v294
  %v1791 = vunpack.c.h.b16 %v294
  %v1792 = vunpack.c.l.b16 %v295
  %v1793 = vunpack.c.h.b16 %v295
  %v1794 = vunpack.c.l.b16 %v296
  %v1795 = vunpack.c.h.b16 %v296
  %v1796 = vunpack.c.l.b16 %v297
  %v1797 = vunpack.c.h.b16 %v297
  %v1798 = vunpack.c.l.b16 %v298
  %v1799 = vunpack.c.h.b16 %v298
  %v1800 = vunpack.c.l.b16 %v299
  %v1801 = vunpack.c.h.b16 %v299
  %v1802 = vunpack.c.l.b16 %v300
  %v1803 = vunpack.c.h.b16 %v300
  %v1804 = vunpack.c.l.b16 %v301
  %v1805 = vunpack.c.h.b16 %v301
  %v1806 = vunpack.c.l.b16 %v302
  %v1807 = vunpack.c.h.b16 %v302
  %v1808 = vunpack.c.l.b16 %v303
  %v1809 = vunpack.c.h.b16 %v303
  %v1810 = vunpack.c.l.b16 %v304
  %v1811 = vunpack.c.h.b16 %v304
  %v1812 = vunpack.c.l.b16 %v305
  %v1813 = vunpack.c.h.b16 %v305
  %v1814 = vunpack.c.l.b16 %v306
  %v1815 = vunpack.c.h.b16 %v306
  %v1816 = vunpack.c.l.b16 %v307
  %v1817 = vunpack.c.h.b16 %v307
  %v1818 = vunpack.c.l.b16 %v308
  %v1819 = vunpack.c.h.b16 %v308
  %v1820 = vunpack.c.l.b16 %v309
  %v1821 = vunpack.c.h.b16 %v309
  %v1822 = vunpack.c.l.b16 %v310
  %v1823 = vunpack.c.h.b16 %v310
  %v1824 = vunpack.c.l.b16 %v311
  %v1825 = vunpack.c.h.b16 %v311
  %v1826 = vunpack.c.l.b16 %v312
  %v1827 = vunpack.c.h.b16 %v312
  %v1828 = vunpack.c.l.b16 %v313
  %v1829 = vunpack.c.h.b16 %v313
  %v1830 = vunpack.c.l.b16 %v314
  %v1831 = vunpack.c.h.b16 %v314
  %v1832 = vunpack.c.l.b16 %v315
  %v1833 = vunpack.c.h.b16 %v315
  %v1834 = vunpack.c.l.b16 %v316
  %v1835 = vunpack.c.h.b16 %v316
  %v1836 = vunpack.c.l.b16 %v317
  %v1837 = vunpack.c.h.b16 %v317
  %v1838 = vunpack.c.l.b16 %v318
  %v1839 = vunpack.c.h.b16 %v318
  %v1840 = vunpack.c.l.b16 %v319
  %v1841 = vunpack.c.h.b16 %v319
  %v1842 = vunpack.c.l.b16 %v320
  %v1843 = vunpack.c.h.b16 %v320
  %v1844 = vunpack.c.l.b16 %v321
  %v1845 = vunpack.c.h.b16 %v321
  %v1846 = vunpack.c.l.b16 %v322
  %v1847 = vunpack.c.h.b16 %v322
  %v1848 = vunpack.c.l.b16 %v323
  %v1849 = vunpack.c.h.b16 %v323
  %v1850 = vunpack.c.l.b16 %v324
  %v1851 = vunpack.c.h.b16 %v324
  %v1852 = vunpack.c.l.b16 %v325
  %v1853 = vunpack.c.h.b16 %v325
  %v1854 = vunpack.c.l.b16 %v326
  %v1855 = vunpack.c.h.b16 %v326
  %v1856 = vunpack.c.l.b16 %v327
  %v1857 = vunpack.c.h.b16 %v327
  %v1858 = vunpack.c.l.b16 %v328
  %v1859 = vunpack.c.h.b16 %v328
  %v1860 = vunpack.c.l.b16 %v329
  %v1861 = vunpack.c.h.b16 %v329
  %v1862 = vunpack.c.l.b16 %v330
  %v1863 = vunpack.c.h.b16 %v330
  %v1864 = vunpack.c.l.b16 %v331
  %v1865 = vunpack.c.h.b16 %v331
  %v1866 = vunpack.c.l.b16 %v332
  %v1867 = vunpack.c.h.b16 %v332
  %v1868 = vunpack.c.l.b16 %v333
  %v1869 = vunpack.c.h.b16 %v333
  %v1870 = vunpack.c.l.b16 %v334
  %v1871 = vunpack.c.h.b16 %v334
  %v1872 = vunpack.c.l.b16 %v335
  %v1873 = vunpack.c.h.b16 %v335
  %v1874 = vunpack.c.l.b16 %v336
  %v1875 = vunpack.c.h.b16 %v336
  %v1876 = vunpack.c.l.b16 %v337
  %v1877 = vunpack.c.h.b16 %v337
  %v1878 = vunpack.c.l.b16 %v338
  %v1879 = vunpack.c.h.b16 %v338
  %v1880 = vunpack.c.l.b16 %v339
  %v1881 = vunpack.c.h.b16 %v339
  %v1882 = vunpack.c.l.b16 %v340
  %v1883 = vunpack.c.h.b16 %v340
  %v1884 = vunpack.c.l.b16 %v341
  %v1885 = vunpack.c.h.b16 %v341
  %v1886 = vunpack.c.l.b16 %v342
  %v1887 = vunpack.c.h.b16 %v342
  %v1888 = vunpack.c.l.b16 %v343
  %v1889 = vunpack.c.h.b16 %v343
  %v1890 = vunpack.c.l.b16 %v344
  %v1891 = vunpack.c.h.b16 %v344
  %v1892 = vunpack.c.l.b16 %v345
  %v1893 = vunpack.c.h.b16 %v345
  %v1894 = vunpack.c.l.b16 %v346
  %v1895 = vunpack.c.h.b16 %v346
  %v1896 = vunpack.c.l.b16 %v347
  %v1897 = vunpack.c.h.b16 %v347
  %v1898 = vunpack.c.l.b16 %v348
  %v1899 = vunpack.c.h.b16 %v348
  %v1900 = vunpack.c.l.b16 %v349
  %v1901 = vunpack.c.h.b16 %v349
  %v1902 = vunpack.c.l.b16 %v350
  %v1903 = vunpack.c.h.b16 %v350
  %v1904 = vunpack.c.l.b16 %v351
  %v1905 = vunpack.c.h.b16 %v351
  %v1906 = vunpack.c.l.b16 %v352
  %v1907 = vunpack.c.h.b16 %v352
  %v1908 = vunpack.c.l.b16 %v353
  %v1909 = vunpack.c.h.b16 %v353
  %v1910 = vunpack.c.l.b16 %v354
  %v1911 = vunpack.c.h.b16 %v354
  %v1912 = vunpack.c.l.b16 %v355
  %v1913 = vunpack.c.h.b16 %v355
  %v1914 = vunpack.c.l.b16 %v356
  %v1915 = vunpack.c.h.b16 %v356
  %v1916 = vunpack.c.l.b16 %v357
  %v1917 = vunpack.c.h.b16 %v357
  %v1918 = vunpack.c.l.b16 %v358
  %v1919 = vunpack.c.h.b16 %v358
  %v1920 = vunpack.c.l.b16 %v359
  %v1921 = vunpack.c.h.b16 %v359
  %v1922 = vunpack.c.l.b16 %v360
  %v1923 = vunpack.c.h.b16 %v360
  %v1924 = vunpack.c.l.b16 %v361
  %v1925 = vunpack.c.h.b16 %v361
  %v1926 = vunpack.c.l.b16 %v362
  %v1927 = vunpack.c.h.b16 %v362
  %v1928 = vunpack.c.l.b16 %v363
  %v1929 = vunpack.c.h.b16 %v363
  %v1930 = vunpack.c.l.b16 %v364
  %v1931 = vunpack.c.h.b16 %v364
  %v1932 = vunpack.c.l.b16 %v365
  %v1933 = vunpack.c.h.b16 %v365
  %v1934 = vunpack.c.l.b16 %v366
  %v1935 = vunpack.c.h.b16 %v366
  %v1936 = vunpack.c.l.b16 %v367
  %v1937 = vunpack.c.h.b16 %v367
  %v1938 = vunpack.c.l.b16 %v368
  %v1939 = vunpack.c.h.b16 %v368
  %v1940 = vunpack.c.l.b16 %v369
  %v1941 = vunpack.c.h.b16 %v369
  %v1942 = vunpack.c.l.b16 %v370
  %v1943 = vunpack.c.h.b16 %v370
  %v1944 = vunpack.c.l.b16 %v371
  %v1945 = vunpack.c.h.b16 %v371
  %v1946 = vunpack.c.l.b16 %v372
  %v1947 = vunpack.c.h.b16 %v372
  %v1948 = vunpack.c.l.b16 %v373
  %v1949 = vunpack.c.h.b16 %v373
  %v1950 = vunpack.c.l.b16 %v374
  %v1951 = vunpack.c.h.b16 %v374
  %v1952 = vunpack.c.l.b16 %v375
  %v1953 = vunpack.c.h.b16 %v375
  %v1954 = vunpack.c.l.b16 %v376
  %v1955 = vunpack.c.h.b16 %v376
  %v1956 = vunpack.c.l.b16 %v377
  %v1957 = vunpack.c.h.b16 %v377
  %v1958 = vunpack.c.l.b16 %v378
  %v1959 = vunpack.c.h.b16 %v378
  %v1960 = vunpack.c.l.b16 %v379
  %v1961 = vunpack.c.h.b16 %v379
  %v1962 = vunpack.c.l.b16 %v380
  %v1963 = vunpack.c.h.b16 %v380
  %v1964 = vunpack.c.l.b16 %v381
  %v1965 = vunpack.c.h.b16 %v381
  %v1966 = vunpack.c.l.b16 %v382
  %v1967 = vunpack.c.h.b16 %v382
  %v1968 = vunpack.c.l.b16 %v383
  %v1969 = vunpack.c.h.b16 %v383
  %v1970 = vunpack.c.l.b16 %v384
  %v1971 = vunpack.c.h.b16 %v384
  %v1972 = vunpack.c.l.b16 %v385
  %v1973 = vunpack.c.h.b16 %v385
  %v1974 = vunpack.c.l.b16 %v386
  %v1975 = vunpack.c.h.b16 %v386
  %v1976 = vunpack.c.l.b16 %v387
  %v1977 = vunpack.c.h.b16 %v387
  %v1978 = vunpack.c.l.b16 %v388
  %v1979 = vunpack.c.h.b16 %v388
  %v1980 = vunpack.c.l.b16 %v389
  %v1981 = vunpack.c.h.b16 %v389
  %v1982 = vunpack.c.l.b16 %v390
  %v1983 = vunpack.c.h.b16 %v390
  %v1984 = vunpack.c.l.b16 %v391
  %v1985 = vunpack.c.h.b16 %v391
  %v1986 = vunpack.c.l.b16 %v392
  %v1987 = vunpack.c.h.b16 %v392
  %v1988 = vunpack.c.l.b16 %v393
  %v1989 = vunpack.c.h.b16 %v393
  %v1990 = vunpack.c.l.b16 %v394
  %v1991 = vunpack.c.h.b16 %v394
  %v1992 = vunpack.c.l.b16 %v395
  %v1993 = vunpack.c.h.b16 %v395
  %v1994 = vunpack.c.l.b16 %v396
  %v1995 = vunpack.c.h.b16 %v396
  %v1996 = vunpack.c.l.b16 %v397
  %v1997 = vunpack.c.h.b16 %v397
  %v1998 = vunpack.c.l.b16 %v398
  %v1999 = vunpack.c.h.b16 %v398
  %v2000 = vunpack.c.l.b16 %v399
  %v2001 = vunpack.c.h.b16 %v399
  %v2002 = vunpack.c.l.b16 %v400
  %v2003 = vunpack.c.h.b16 %v400
  %v2004 = vunpack.c.l.b16 %v401
  %v2005 = vunpack.c.h.b16 %v401
  %v2006 = vunpack.c.l.b16 %v402
  %v2007 = vunpack.c.h.b16 %v402
  %v2008 = vunpack.c.l.b16 %v403
  %v2009 = vunpack.c.h.b16 %v403
  %v2010 = vunpack.c.l.b16 %v404
  %v2011 = vunpack.c.h.b16 %v404
  %v2012 = vunpack.c.l.b16 %v405
  %v2013 = vunpack.c.h.b16 %v405
  %v2014 = vunpack.c.l.b16 %v406
  %v2015 = vunpack.c.h.b16 %v406
  %v2016 = vunpack.c.l.b16 %v407
  %v2017 = vunpack.c.h.b16 %v407
  %v2018 = vunpack.c.l.b16 %v408
  %v2019 = vunpack.c.h.b16 %v408
  %v2020 = vunpack.c.l.b16 %v409
  %v2021 = vunpack.c.h.b16 %v409
  %v2022 = vunpack.c.l.b16 %v410
  %v2023 = vunpack.c.h.b16 %v410
  %v2024 = vunpack.c.l.b16 %v411
  %v2025 = vunpack.c.h.b16 %v411
  %v2026 = vunpack.c.l.b16 %v412
  %v2027 = vunpack.c.h.b16 %v412
  %v2028 = vunpack.c.l.b16 %v413
  %v2029 = vunpack.c.h.b16 %v413
  %v2030 = vunpack.c.l.b16 %v414
  %v2031 = vunpack.c.h.b16 %v414
  %v2032 = vpack.c.b16 %v1234, %v1232
  %v2033 = vpack.c.b16 %v1235, %v1233
  %v2034 = vpack.c.b16 %v1238, %v1236
  %v2035 = vpack.c.b16 %v1239, %v1237
  %v2036 = vpack.c.b16 %v1242, %v1240
  %v2037 = vpack.c.b16 %v1243, %v1241
  %v2038 = vpack.c.b16 %v1246, %v1244
  %v2039 = vpack.c.b16 %v1247, %v1245
  %v2040 = vpack.c.b16 %v1250, %v1248
  %v2041 = vpack.c.b16 %v1251, %v1249
  %v2042 = vpack.c.b16 %v1254, %v1252
  %v2043 = vpack.c.b16 %v1255, %v1253
  %v2044 = vpack.c.b16 %v1258, %v1256
  %v2045 = vpack.c.b16 %v1259, %v1257
  %v2046 = vpack.c.b16 %v1262, %v1260
  %v2047 = vpack.c.b16 %v1263, %v1261
  %v2048 = vpack.c.b16 %v1266, %v1264
  %v2049 = vpack.c.b16 %v1267, %v1265
  %v2050 = vpack.c.b16 %v1270, %v1268
  %v2051 = vpack.c.b16 %v1271, %v1269
  %v2052 = vpack.c.b16 %v1274, %v1272
  %v2053 = vpack.c.b16 %v1275, %v1273
  %v2054 = vpack.c.b16 %v1278, %v1276
  %v2055 = vpack.c.b16 %v1279, %v1277
  %v2056 = vpack.c.b16 %v1282, %v1280
  %v2057 = vpack.c.b16 %v1283, %v1281
  %v2058 = vpack.c.b16 %v1286, %v1284
  %v2059 = vpack.c.b16 %v1287, %v1285
  %v2060 = vpack.c.b16 %v1290, %v1288
  %v2061 = vpack.c.b16 %v1291, %v1289
  %v2062 = vpack.c.b16 %v1294, %v1292
  %v2063 = vpack.c.b16 %v1295, %v1293
  %v2064 = vpack.c.b16 %v1298, %v1296
  %v2065 = vpack.c.b16 %v1299, %v1297
  %v2066 = vpack.c.b16 %v1302, %v1300
  %v2067 = vpack.c.b16 %v1303, %v1301
  %v2068 = vpack.c.b16 %v1306, %v1304
  %v2069 = vpack.c.b16 %v1307, %v1305
  %v2070 = vpack.c.b16 %v1310, %v1308
  %v2071 = vpack.c.b16 %v1311, %v1309
  %v2072 = vpack.c.b16 %v1314, %v1312
  %v2073 = vpack.c.b16 %v1315, %v1313
  %v2074 = vpack.c.b16 %v1318, %v1316
  %v2075 = vpack.c.b16 %v1319, %v1317
  %v2076 = vpack.c.b16 %v1322, %v1320
  %v2077 = vpack.c.b16 %v1323, %v1321
  %v2078 = vpack.c.b16 %v1326, %v1324
  %v2079 = vpack.c.b16 %v1327, %v1325
  %v2080 = vpack.c.b16 %v1330, %v1328
  %v2081 = vpack.c.b16 %v1331, %v1329
  %v2082 = vpack.c.b16 %v1334, %v1332
  %v2083 = vpack.c.b16 %v1335, %v1333
  %v2084 = vpack.c.b16 %v1338, %v1336
  %v2085 = vpack.c.b16 %v1339, %v1337
  %v2086 = vpack.c.b16 %v1342, %v1340
  %v2087 = vpack.c.b16 %v1343, %v1341
  %v2088 = vpack.c.b16 %v1346, %v1344
  %v2089 = vpack.c.b16 %v1347, %v1345
  %v2090 = vpack.c.b16 %v1350, %v1348
  %v2091 = vpack.c.b16 %v1351, %v1349
  %v2092 = vpack.c.b16 %v1354, %v1352
  %v2093 = vpack.c.b16 %v1355, %v1353
  %v2094 = vpack.c.b16 %v1358, %v1356
  %v2095 = vpack.c.b16 %v1359, %v1357
  %v2096 = vpack.c.b16 %v1362, %v1360
  %v2097 = vpack.c.b16 %v1363, %v1361
  %v2098 = vpack.c.b16 %v1366, %v1364
  %v2099 = vpack.c.b16 %v1367, %v1365
  %v2100 = vpack.c.b16 %v1370, %v1368
  %v2101 = vpack.c.b16 %v1371, %v1369
  %v2102 = vpack.c.b16 %v1374, %v1372
  %v2103 = vpack.c.b16 %v1375, %v1373
  %v2104 = vpack.c.b16 %v1378, %v1376
  %v2105 = vpack.c.b16 %v1379, %v1377
  %v2106 = vpack.c.b16 %v1382, %v1380
  %v2107 = vpack.c.b16 %v1383, %v1381
  %v2108 = vpack.c.b16 %v1386, %v1384
  %v2109 = vpack.c.b16 %v1387, %v1385
  %v2110 = vpack.c.b16 %v1390, %v1388
  %v2111 = vpack.c.b16 %v1391, %v1389
  %v2112 = vpack.c.b16 %v1394, %v1392
  %v2113 = vpack.c.b16 %v1395, %v1393
  %v2114 = vpack.c.b16 %v1398, %v1396
  %v2115 = vpack.c.b16 %v1399, %v1397
  %v2116 = vpack.c.b16 %v1402, %v1400
  %v2117 = vpack.c.b16 %v1403, %v1401
  %v2118 = vpack.c.b16 %v1406, %v1404
  %v2119 = vpack.c.b16 %v1407, %v1405
  %v2120 = vpack.c.b16 %v1410, %v1408
  %v2121 = vpack.c.b16 %v1411, %v1409
  %v2122 = vpack.c.b16 %v1414, %v1412
  %v2123 = vpack.c.b16 %v1415, %v1413
  %v2124 = vpack.c.b16 %v1418, %v1416
  %v2125 = vpack.c.b16 %v1419, %v1417
  %v2126 = vpack.c.b16 %v1422, %v1420
  %v2127 = vpack.c.b16 %v1423, %v1421
  %v2128 = vpack.c.b16 %v1426, %v1424
  %v2129 = vpack.c.b16 %v1427, %v1425
  %v2130 = vpack.c.b16 %v1430, %v1428
  %v2131 = vpack.c.b16 %v1431, %v1429
  %v2132 = vpack.c.b16 %v1434, %v1432
  %v2133 = vpack.c.b16 %v1435, %v1433
  %v2134 = vpack.c.b16 %v1438, %v1436
  %v2135 = vpack.c.b16 %v1439, %v1437
  %v2136 = vpack.c.b16 %v1442, %v1440
  %v2137 = vpack.c.b16 %v1443, %v1441
  %v2138 = vpack.c.b16 %v1446, %v1444
  %v2139 = vpack.c.b16 %v1447, %v1445
  %v2140 = vpack.c.b16 %v1450, %v1448
  %v2141 = vpack.c.b16 %v1451, %v1449
  %v2142 = vpack.c.b16 %v1454, %v1452
  %v2143 = vpack.c.b16 %v1455, %v1453
  %v2144 = vpack.c.b16 %v1458, %v1456
  %v2145 = vpack.c.b16 %v1459, %v1457
  %v2146 = vpack.c.b16 %v1462, %v1460
  %v2147 = vpack.c.b16 %v1463, %v1461
  %v2148 = vpack.c.b16 %v1466, %v1464
  %v2149 = vpack.c.b16 %v1467, %v1465
  %v2150 = vpack.c.b16 %v1470, %v1468
  %v2151 = vpack.c.b16 %v1471, %v1469
  %v2152 = vpack.c.b16 %v1474, %v1472
  %v2153 = vpack.c.b16 %v1475, %v1473
  %v2154 = vpack.c.b16 %v1478, %v1476
  %v2155 = vpack.c.b16 %v1479, %v1477
  %v2156 = vpack.c.b16 %v1482, %v1480
  %v2157 = vpack.c.b16 %v1483, %v1481
  %v2158 = vpack.c.b16 %v1486, %v1484
  %v2159 = vpack.c.b16 %v1487, %v1485
  %v2160 = vpack.c.b16 %v1490, %v1488
  %v2161 = vpack.c.b16 %v1491, %v1489
  %v2162 = vpack.c.b16 %v1494, %v1492
  %v2163 = vpack.c.b16 %v1495, %v1493
  %v2164 = vpack.c.b16 %v1498, %v1496
  %v2165 = vpack.c.b16 %v1499, %v1497
  %v2166 = vpack.c.b16 %v1502, %v1500
  %v2167 = vpack.c.b16 %v1503, %v1501
  %v2168 = vpack.c.b16 %v1506, %v1504
  %v2169 = vpack.c.b16 %v1507, %v1505
  %v2170 = vpack.c.b16 %v1510, %v1508
  %v2171 = vpack.c.b16 %v1511, %v1509
  %v2172 = vpack.c.b16 %v1514, %v1512
  %v2173 = vpack.c.b16 %v1515, %v1513
  %v2174 = vpack.c.b16 %v1518, %v1516
  %v2175 = vpack.c.b16 %v1519, %v1517
  %v2176 = vpack.c.b16 %v1522, %v1520
  %v2177 = vpack.c.b16 %v1523, %v1521
  %v2178 = vpack.c.b16 %v1526, %v1524
  %v2179 = vpack.c.b16 %v1527, %v1525
  %v2180 = vpack.c.b16 %v1530, %v1528
  %v2181 = vpack.c.b16 %v1531, %v1529
  %v2182 = vpack.c.b16 %v1534, %v1532
  %v2183 = vpack.c.b16 %v1535, %v1533
  %v2184 = vpack.c.b16 %v1538, %v1536
  %v2185 = vpack.c.b16 %v1539, %v1537
  %v2186 = vpack.c.b16 %v1542, %v1540
  %v2187 = vpack.c.b16 %v1543, %v1541
  %v2188 = vpack.c.b16 %v1546, %v1544
  %v2189 = vpack.c.b16 %v1547, %v1545
  %v2190 = vpack.c.b16 %v1550, %v1548
  %v2191 = vpack.c.b16 %v1551, %v1549
  %v2192 = vpack.c.b16 %v1554, %v1552
  %v2193 = vpack.c.b16 %v1555, %v1553
  %v2194 = vpack.c.b16 %v1558, %v1556
  %v2195 = vpack.c.b16 %v1559, %v1557
  %v2196 = vpack.c.b16 %v1562, %v1560
  %v2197 = vpack.c.b16 %v1563, %v1561
  %v2198 = vpack.c.b16 %v1566, %v1564
  %v2199 = vpack.c.b16 %v1567, %v1565
  %v2200 = vpack.c.b16 %v1570, %v1568
  %v2201 = vpack.c.b16 %v1571, %v1569
  %v2202 = vpack.c.b16 %v1574, %v1572
  %v2203 = vpack.c.b16 %v1575, %v1573
  %v2204 = vpack.c.b16 %v1578, %v1576
  %v2205 = vpack.c.b16 %v1579, %v1577
  %v2206 = vpack.c.b16 %v1582, %v1580
  %v2207 = vpack.c.b16 %v1583, %v1581
  %v2208 = vpack.c.b16 %v1586, %v1584
  %v2209 = vpack.c.b16 %v1587, %v1585
  %v2210 = vpack.c.b16 %v1590, %v1588
  %v2211 = vpack.c.b16 %v1591, %v1589
  %v2212 = vpack.c.b16 %v1594, %v1592
  %v2213 = vpack.c.b16 %v1595, %v1593
  %v2214 = vpack.c.b16 %v1598, %v1596
  %v2215 = vpack.c.b16 %v1599, %v1597
  %v2216 = vpack.c.b16 %v1602, %v1600
  %v2217 = vpack.c.b16 %v1603, %v1601
  %v2218 = vpack.c.b16 %v1606, %v1604
  %v2219 = vpack.c.b16 %v1607, %v1605
  %v2220 = vpack.c.b16 %v1610, %v1608
  %v2221 = vpack.c.b16 %v1611, %v1609
  %v2222 = vpack.c.b16 %v1614, %v1612
  %v2223 = vpack.c.b16 %v1615, %v1613
  %v2224 = vpack.c.b16 %v1618, %v1616
  %v2225 = vpack.c.b16 %v1619, %v1617
  %v2226 = vpack.c.b16 %v1622, %v1620
  %v2227 = vpack.c.b16 %v1623, %v1621
  %v2228 = vpack.c.b16 %v1626, %v1624
  %v2229 = vpack.c.b16 %v1627, %v1625
  %v2230 = vpack.c.b16 %v1630, %v1628
  %v2231 = vpack.c.b16 %v1631, %v1629
  %v2232 = vpack.c.b16 %v1634, %v1632
  %v2233 = vpack.c.b16 %v1635, %v1633
  %v2234 = vpack.c.b16 %v1638, %v1636
  %v2235 = vpack.c.b16 %v1639, %v1637
  %v2236 = vpack.c.b16 %v1642, %v1640
  %v2237 = vpack.c.b16 %v1643, %v1641
  %v2238 = vpack.c.b16 %v1646, %v1644
  %v2239 = vpack.c.b16 %v1647, %v1645
  %v2240 = vpack.c.b16 %v1650, %v1648
  %v2241 = vpack.c.b16 %v1651, %v1649
  %v2242 = vpack.c.b16 %v1654, %v1652
  %v2243 = vpack.c.b16 %v1655, %v1653
  %v2244 = vpack.c.b16 %v1658, %v1656
  %v2245 = vpack.c.b16 %v1659, %v1657
  %v2246 = vpack.c.b16 %v1662, %v1660
  %v2247 = vpack.c.b16 %v1663, %v1661
  %v2248 = vpack.c.b16 %v1666, %v1664
  %v2249 = vpack.c.b16 %v1667, %v1665
  %v2250 = vpack.c.b16 %v1670, %v1668
  %v2251 = vpack.c.b16 %v1671, %v1669
  %v2252 = vpack.c.b16 %v1674, %v1672
  %v2253 = vpack.c.b16 %v1675, %v1673
  %v2254 = vpack.c.b16 %v1678, %v1676
  %v2255 = vpack.c.b16 %v1679, %v1677
  %v2256 = vpack.c.b16 %v1682, %v1680
  %v2257 = vpack.c.b16 %v1683, %v1681
  %v2258 = vpack.c.b16 %v1686, %v1684
  %v2259 = vpack.c.b16 %v1687, %v1685
  %v2260 = vpack.c.b16 %v1690, %v1688
  %v2261 = vpack.c.b16 %v1691, %v1689
  %v2262 = vpack.c.b16 %v1694, %v1692
  %v2263 = vpack.c.b16 %v1695, %v1693
  %v2264 = vpack.c.b16 %v1698, %v1696
  %v2265 = vpack.c.b16 %v1699, %v1697
  %v2266 = vpack.c.b16 %v1702, %v1700
  %v2267 = vpack.c.b16 %v1703, %v1701
  %v2268 = vpack.c.b16 %v1706, %v1704
  %v2269 = vpack.c.b16 %v1707, %v1705
  %v2270 = vpack.c.b16 %v1710, %v1708
  %v2271 = vpack.c.b16 %v1711, %v1709
  %v2272 = vpack.c.b16 %v1714, %v1712
  %v2273 = vpack.c.b16 %v1715, %v1713
  %v2274 = vpack.c.b16 %v1718, %v1716
  %v2275 = vpack.c.b16 %v1719, %v1717
  %v2276 = vpack.c.b16 %v1722, %v1720
  %v2277 = vpack.c.b16 %v1723, %v1721
  %v2278 = vpack.c.b16 %v1726, %v1724
  %v2279 = vpack.c.b16 %v1727, %v1725
  %v2280 = vpack.c.b16 %v1730, %v1728
  %v2281 = vpack.c.b16 %v1731, %v1729
  %v2282 = vpack.c.b16 %v1734, %v1732
  %v2283 = vpack.c.b16 %v1735, %v1733
  %v2284 = vpack.c.b16 %v1738, %v1736
  %v2285 = vpack.c.b16 %v1739, %v1737
  %v2286 = vpack.c.b16 %v1742, %v1740
  %v2287 = vpack.c.b16 %v1743, %v1741
  %v2288 = vpack.c.b16 %v1746, %v1744
  %v2289 = vpack.c.b16 %v1747, %v1745
  %v2290 = vpack.c.b16 %v1750, %v1748
  %v2291 = vpack.c.b16 %v1751, %v1749
  %v2292 = vpack.c.b16 %v1754, %v1752
  %v2293 = vpack.c.b16 %v1755, %v1753
  %v2294 = vpack.c.b16 %v1758, %v1756
  %v2295 = vpack.c.b16 %v1759, %v1757
  %v2296 = vpack.c.b16 %v1762, %v1760
  %v2297 = vpack.c.b16 %v1763, %v1761
  %v2298 = vpack.c.b16 %v1766, %v1764
  %v2299 = vpack.c.b16 %v1767, %v1765
  %v2300 = vpack.c.b16 %v1770, %v1768
  %v2301 = vpack.c.b16 %v1771, %v1769
  %v2302 = vpack.c.b16 %v1774, %v1772
  %v2303 = vpack.c.b16 %v1775, %v1773
  %v2304 = vpack.c.b16 %v1778, %v1776
  %v2305 = vpack.c.b16 %v1779, %v1777
  %v2306 = vpack.c.b16 %v1782, %v1780
  %v2307 = vpack.c.b16 %v1783, %v1781
  %v2308 = vpack.c.b16 %v1786, %v1784
  %v2309 = vpack.c.b16 %v1787, %v1785
  %v2310 = vpack.c.b16 %v1790, %v1788
  %v2311 = vpack.c.b16 %v1791, %v1789
  %v2312 = vpack.c.b16 %v1794, %v1792
  %v2313 = vpack.c.b16 %v1795, %v1793
  %v2314 = vpack.c.b16 %v1798, %v1796
  %v2315 = vpack.c.b16 %v1799, %v1797
  %v2316 = vpack.c.b16 %v1802, %v1800
  %v2317 = vpack.c.b16 %v1803, %v1801
  %v2318 = vpack.c.b16 %v1806, %v1804
  %v2319 = vpack.c.b16 %v1807, %v1805
  %v2320 = vpack.c.b16 %v1810, %v1808
  %v2321 = vpack.c.b16 %v1811, %v1809
  %v2322 = vpack.c.b16 %v1814, %v1812
  %v2323 = vpack.c.b16 %v1815, %v1813
  %v2324 = vpack.c.b16 %v1818, %v1816
  %v2325 = vpack.c.b16 %v1819, %v1817
  %v2326 = vpack.c.b16 %v1822, %v1820
  %v2327 = vpack.c.b16 %v1823, %v1821
  %v2328 = vpack.c.b16 %v1826, %v1824
  %v2329 = vpack.c.b16 %v1827, %v1825
  %v2330 = vpack.c.b16 %v1830, %v1828
  %v2331 = vpack.c.b16 %v1831, %v1829
  %v2332 = vpack.c.b16 %v1834, %v1832
  %v2333 = vpack.c.b16 %v1835, %v1833
  %v2334 = vpack.c.b16 %v1838, %v1836
  %v2335 = vpack.c.b16 %v1839, %v1837
  %v2336 = vpack.c.b16 %v1842, %v1840
  %v2337 = vpack.c.b16 %v1843, %v1841
  %v2338 = vpack.c.b16 %v1846, %v1844
  %v2339 = vpack.c.b16 %v1847, %v1845
  %v2340 = vpack.c.b16 %v1850, %v1848
  %v2341 = vpack.c.b16 %v1851, %v1849
  %v2342 = vpack.c.b16 %v1854, %v1852
  %v2343 = vpack.c.b16 %v1855, %v1853
  %v2344 = vpack.c.b16 %v1858, %v1856
  %v2345 = vpack.c.b16 %v1859, %v1857
  %v2346 = vpack.c.b16 %v1862, %v1860
  %v2347 = vpack.c.b16 %v1863, %v1861
  %v2348 = vpack.c.b16 %v1866, %v1864
  %v2349 = vpack.c.b16 %v1867, %v1865
  %v2350 = vpack.c.b16 %v1870, %v1868
  %v2351 = vpack.c.b16 %v1871, %v1869
  %v2352 = vpack.c.b16 %v1874, %v1872
  %v2353 = vpack.c.b16 %v1875, %v1873
  %v2354 = vpack.c.b16 %v1878, %v1876
  %v2355 = vpack.c.b16 %v1879, %v1877
  %v2356 = vpack.c.b16 %v1882, %v1880
  %v2357 = vpack.c.b16 %v1883, %v1881
  %v2358 = vpack.c.b16 %v1886, %v1884
  %v2359 = vpack.c.b16 %v1887, %v1885
  %v2360 = vpack.c.b16 %v1890, %v1888
  %v2361 = vpack.c.b16 %v1891, %v1889
  %v2362 = vpack.c.b16 %v1894, %v1892
  %v2363 = vpack.c.b16 %v1895, %v1893
  %v2364 = vpack.c.b16 %v1898, %v1896
  %v2365 = vpack.c.b16 %v1899, %v1897
  %v2366 = vpack.c.b16 %v1902, %v1900
  %v2367 = vpack.c.b16 %v1903, %v1901
  %v2368 = vpack.c.b16 %v1906, %v1904
  %v2369 = vpack.c.b16 %v1907, %v1905
  %v2370 = vpack.c.b16 %v1910, %v1908
  %v2371 = vpack.c.b16 %v1911, %v1909
  %v2372 = vpack.c.b16 %v1914, %v1912
  %v2373 = vpack.c.b16 %v1915, %v1913
  %v2374 = vpack.c.b16 %v1918, %v1916
  %v2375 = vpack.c.b16 %v1919, %v1917
  %v2376 = vpack.c.b16 %v1922, %v1920
  %v2377 = vpack.c.b16 %v1923, %v1921
  %v2378 = vpack.c.b16 %v1926, %v1924
  %v2379 = vpack.c.b16 %v1927, %v1925
  %v2380 = vpack.c.b16 %v1930, %v1928
  %v2381 = vpack.c.b16 %v1931, %v1929
  %v2382 = vpack.c.b16 %v1934, %v1932
  %v2383 = vpack.c.b16 %v1935, %v1933
  %v2384 = vpack.c.b16 %v1938, %v1936
  %v2385 = vpack.c.b16 %v1939, %v1937
  %v2386 = vpack.c.b16 %v1942, %v1940
  %v2387 = vpack.c.b16 %v1943, %v1941
  %v2388 = vpack.c.b16 %v1946, %v1944
  %v2389 = vpack.c.b16 %v1947, %v1945
  %v2390 = vpack.c.b16 %v1950, %v1948
  %v2391 = vpack.c.b16 %v1951, %v1949
  %v2392 = vpack.c.b16 %v1954, %v1952
  %v2393 = vpack.c.b16 %v1955, %v1953
  %v2394 = vpack.c.b16 %v1958, %v1956
  %v2395 = vpack.c.b16 %v1959, %v1957
  %v2396 = vpack.c.b16 %v1962, %v1960
  %v2397 = vpack.c.b16 %v1963, %v1961
  %v2398 = vpack.c.b16 %v1966, %v1964
  %v2399 = vpack.c.b16 %v1967, %v1965
  %v2400 = vpack.c.b16 %v1970, %v1968
  %v2401 = vpack.c.b16 %v1971, %v1969
  %v2402 = vpack.c.b16 %v1974, %v1972
  %v2403 = vpack.c.b16 %v1975, %v1973
  %v2404 = vpack.c.b16 %v1978, %v1976
  %v2405 = vpack.c.b16 %v1979, %v1977
  %v2406 = vpack.c.b16 %v1982, %v1980
  %v2407 = vpack.c.b16 %v1983, %v1981
  %v2408 = vpack.c.b16 %v1986, %v1984
  %v2409 = vpack.c.b16 %v1987, %v1985
  %v2410 = vpack.c.b16 %v1990, %v1988
  %v2411 = vpack.c.b16 %v1991, %v1989
  %v2412 = vpack.c.b16 %v1994, %v1992
  %v2413 = vpack.c.b16 %v1995, %v1993
  %v2414 = vpack.c.b16 %v1998, %v1996
  %v2415 = vpack.c.b16 %v1999, %v1997
  %v2416 = vpack.c.b16 %v2002, %v2000
  %v2417 = vpack.c.b16 %v2003, %v2001
  %v2418 = vpack.c.b16 %v2006, %v2004
  %v2419 = vpack.c.b16 %v2007, %v2005
  %v2420 = vpack.c.b16 %v2010, %v2008
  %v2421 = vpack.c.b16 %v2011, %v2009
  %v2422 = vpack.c.b16 %v2014, %v2012
  %v2423 = vpack.c.b16 %v2015, %v2013
  %v2424 = vpack.c.b16 %v2018, %v2016
  %v2425 = vpack.c.b16 %v2019, %v2017
  %v2426 = vpack.c.b16 %v2022, %v2020
  %v2427 = vpack.c.b16 %v2023, %v2021
  %v2428 = vpack.c.b16 %v2026, %v2024
  %v2429 = vpack.c.b16 %v2027, %v2025
  %v2430 = vpack.c.b16 %v2030, %v2028
  %v2431 = vpack.c.b16 %v2031, %v2029
  %2832 = vmatprep.subr.bf16.mxu0 %v2033
  %2833 = vmatpush1.bf16.msra.mxu0 %v2032
  %2834 = vmatprep.subr.bf16.mxu0 %v2035
  %2835 = vmatpush1.bf16.msra.mxu0 %v2034
  %2836 = vmatprep.subr.bf16.mxu0 %v2037
  %2837 = vmatpush1.bf16.msra.mxu0 %v2036
  %2838 = vmatprep.subr.bf16.mxu0 %v2039
  %2839 = vmatpush1.bf16.msra.mxu0 %v2038
  %2840 = vmatprep.subr.bf16.mxu0 %v2041
  %2841 = vmatpush1.bf16.msra.mxu0 %v2040
  %2842 = vmatprep.subr.bf16.mxu0 %v2043
  %2843 = vmatpush1.bf16.msra.mxu0 %v2042
  %2844 = vmatprep.subr.bf16.mxu0 %v2045
  %2845 = vmatpush1.bf16.msra.mxu0 %v2044
  %2846 = vmatprep.subr.bf16.mxu0 %v2047
  %2847 = vmatpush1.bf16.msra.mxu0 %v2046
  %2848 = vmatprep.subr.bf16.mxu0 %v2049
  %2849 = vmatpush1.bf16.msra.mxu0 %v2048
  %2850 = vmatprep.subr.bf16.mxu0 %v2051
  %2851 = vmatpush1.bf16.msra.mxu0 %v2050
  %2852 = vmatprep.subr.bf16.mxu0 %v2053
  %2853 = vmatpush1.bf16.msra.mxu0 %v2052
  %2854 = vmatprep.subr.bf16.mxu0 %v2055
  %2855 = vmatpush1.bf16.msra.mxu0 %v2054
  %2856 = vmatprep.subr.bf16.mxu0 %v2057
  %2857 = vmatpush1.bf16.msra.mxu0 %v2056
  %2858 = vmatprep.subr.bf16.mxu0 %v2059
  %2859 = vmatpush1.bf16.msra.mxu0 %v2058
  %2860 = vmatprep.subr.bf16.mxu0 %v2061
  %2861 = vmatpush1.bf16.msra.mxu0 %v2060
  %2862 = vmatprep.subr.bf16.mxu0 %v2063
  %2863 = vmatpush1.bf16.msra.mxu0 %v2062
  %2864 = vmatprep.mubr.bf16.mxu0 %v683
  %2865 = vmatmul.mubr.bf16.gmra.mrb[0].mxu0 %v682
  %v2866 = vpop.f32.mrb[0].mxu0
  %v2867 = vadd.f32 %v485, %v2866
  %v2868 = vpop.f32.mrb[0].mxu0
  %v2869 = vadd.f32 %v489, %v2868
  %v2870 = vpop.f32.mrb[0].mxu0
  %v2871 = vadd.f32 %v485, %v2870
  %v2872 = vpop.f32.mrb[0].mxu0
  %v2873 = vadd.f32 %v489, %v2872
  %2874 = vmatprep.mubr.bf16.mxu0 %v708
  %2875 = vmatmul.mubr.bf16.gmra.mrb[0].mxu0 %v707
  %v2876 = vpop.f32.mrb[0].mxu0
  %v2877 = vadd.f32 %v485, %v2876
  %v2878 = vpop.f32.mrb[0].mxu0
  %v2879 = vadd.f32 %v489, %v2878
  %v2880 = vpop.f32.mrb[0].mxu0
  %v2881 = vadd.f32 %v485, %v2880
  %v2882 = vpop.f32.mrb[0].mxu0
  %v2883 = vadd.f32 %v489, %v2882
  %2884 = vmatprep.mubr.bf16.mxu0 %v733
  %2885 = vmatmul.mubr.bf16.gmra.mrb[0].mxu0 %v732
  %v2886 = vpop.f32.mrb[0].mxu0
  %v2887 = vadd.f32 %v485, %v2886
  %v2888 = vpop.f32.mrb[0].mxu0
  %v2889 = vadd.f32 %v489, %v2888
  %v2890 = vpop.f32.mrb[0].mxu0
  %v2891 = vpop.f32.mrb[0].mxu0
  %2892 = vdwg.mxu0
  %2893 = vmatprep.subr.bf16.mxu0 %v2065
  %2894 = vmatpush1.bf16.msra.mxu0 %v2064
  %2895 = vmatprep.subr.bf16.mxu0 %v2067
  %2896 = vmatpush1.bf16.msra.mxu0 %v2066
  %2897 = vmatprep.subr.bf16.mxu0 %v2069
  %2898 = vmatpush1.bf16.msra.mxu0 %v2068
  %2899 = vmatprep.subr.bf16.mxu0 %v2071
  %2900 = vmatpush1.bf16.msra.mxu0 %v2070
  %2901 = vmatprep.subr.bf16.mxu0 %v2073
  %2902 = vmatpush1.bf16.msra.mxu0 %v2072
  %2903 = vmatprep.subr.bf16.mxu0 %v2075
  %2904 = vmatpush1.bf16.msra.mxu0 %v2074
  %2905 = vmatprep.subr.bf16.mxu0 %v2077
  %2906 = vmatpush1.bf16.msra.mxu0 %v2076
  %2907 = vmatprep.subr.bf16.mxu0 %v2079
  %2908 = vmatpush1.bf16.msra.mxu0 %v2078
  %2909 = vmatprep.subr.bf16.mxu0 %v2081
  %2910 = vmatpush1.bf16.msra.mxu0 %v2080
  %2911 = vmatprep.subr.bf16.mxu0 %v2083
  %2912 = vmatpush1.bf16.msra.mxu0 %v2082
  %2913 = vmatprep.subr.bf16.mxu0 %v2085
  %2914 = vmatpush1.bf16.msra.mxu0 %v2084
  %2915 = vmatprep.subr.bf16.mxu0 %v2087
  %2916 = vmatpush1.bf16.msra.mxu0 %v2086
  %2917 = vmatprep.subr.bf16.mxu0 %v2089
  %2918 = vmatpush1.bf16.msra.mxu0 %v2088
  %2919 = vmatprep.subr.bf16.mxu0 %v2091
  %2920 = vmatpush1.bf16.msra.mxu0 %v2090
  %2921 = vmatprep.subr.bf16.mxu0 %v2093
  %2922 = vmatpush1.bf16.msra.mxu0 %v2092
  %2923 = vmatprep.subr.bf16.mxu0 %v2095
  %2924 = vmatpush1.bf16.msra.mxu0 %v2094
  %2925 = vmatprep.mubr.bf16.mxu0 %v685
  %2926 = vmatmul.mubr.bf16.gmra.mrb[0].mxu0 %v684
  %v2927 = vpop.f32.mrb[0].mxu0
  %v2928 = vadd.f32 %v2867, %v2927
  %v2929 = vpop.f32.mrb[0].mxu0
  %v2930 = vadd.f32 %v2869, %v2929
  %v2931 = vpop.f32.mrb[0].mxu0
  %v2932 = vadd.f32 %v2871, %v2931
  %v2933 = vpop.f32.mrb[0].mxu0
  %v2934 = vadd.f32 %v2873, %v2933
  %2935 = vmatprep.mubr.bf16.mxu0 %v710
  %2936 = vmatmul.mubr.bf16.gmra.mrb[0].mxu0 %v709
  %v2937 = vpop.f32.mrb[0].mxu0
  %v2938 = vadd.f32 %v2877, %v2937
  %v2939 = vpop.f32.mrb[0].mxu0
  %v2940 = vadd.f32 %v2879, %v2939
  %v2941 = vpop.f32.mrb[0].mxu0
  %v2942 = vadd.f32 %v2881, %v2941
  %v2943 = vpop.f32.mrb[0].mxu0
  %v2944 = vadd.f32 %v2883, %v2943
  %2945 = vmatprep.mubr.bf16.mxu0 %v735
  %2946 = vmatmul.mubr.bf16.gmra.mrb[0].mxu0 %v734
  %v2947 = vpop.f32.mrb[0].mxu0
  %v2948 = vadd.f32 %v2887, %v2947
  %v2949 = vpop.f32.mrb[0].mxu0
  %v2950 = vadd.f32 %v2889, %v2949
  %v2951 = vpop.f32.mrb[0].mxu0
  %v2952 = vpop.f32.mrb[0].mxu0
  %2953 = vdwg.mxu0
  %2954 = vmatprep.subr.bf16.mxu0 %v2097
  %2955 = vmatpush1.bf16.msra.mxu0 %v2096
  %2956 = vmatprep.subr.bf16.mxu0 %v2099
  %2957 = vmatpush1.bf16.msra.mxu0 %v2098
  %2958 = vmatprep.subr.bf16.mxu0 %v2101
  %2959 = vmatpush1.bf16.msra.mxu0 %v2100
  %2960 = vmatprep.subr.bf16.mxu0 %v2103
  %2961 = vmatpush1.bf16.msra.mxu0 %v2102
  %2962 = vmatprep.subr.bf16.mxu0 %v2105
  %2963 = vmatpush1.bf16.msra.mxu0 %v2104
  %2964 = vmatprep.subr.bf16.mxu0 %v2107
  %2965 = vmatpush1.bf16.msra.mxu0 %v2106
  %2966 = vmatprep.subr.bf16.mxu0 %v2109
  %2967 = vmatpush1.bf16.msra.mxu0 %v2108
  %2968 = vmatprep.subr.bf16.mxu0 %v2111
  %2969 = vmatpush1.bf16.msra.mxu0 %v2110
  %2970 = vmatprep.subr.bf16.mxu0 %v2113
  %2971 = vmatpush1.bf16.msra.mxu0 %v2112
  %2972 = vmatprep.subr.bf16.mxu0 %v2115
  %2973 = vmatpush1.bf16.msra.mxu0 %v2114
  %2974 = vmatprep.subr.bf16.mxu0 %v2117
  %2975 = vmatpush1.bf16.msra.mxu0 %v2116
  %2976 = vmatprep.subr.bf16.mxu0 %v2119
  %2977 = vmatpush1.bf16.msra.mxu0 %v2118
  %2978 = vmatprep.subr.bf16.mxu0 %v2121
  %2979 = vmatpush1.bf16.msra.mxu0 %v2120
  %2980 = vmatprep.subr.bf16.mxu0 %v2123
  %2981 = vmatpush1.bf16.msra.mxu0 %v2122
  %2982 = vmatprep.subr.bf16.mxu0 %v2125
  %2983 = vmatpush1.bf16.msra.mxu0 %v2124
  %2984 = vmatprep.subr.bf16.mxu0 %v2127
  %2985 = vmatpush1.bf16.msra.mxu0 %v2126
  %2986 = vmatprep.mubr.bf16.mxu0 %v687
  %2987 = vmatmul.mubr.bf16.gmra.mrb[0].mxu0 %v686
  %v2988 = vpop.f32.mrb[0].mxu0
  %v2989 = vadd.f32 %v2928, %v2988
  %v2990 = vpop.f32.mrb[0].mxu0
  %v2991 = vadd.f32 %v2930, %v2990
  %v2992 = vpop.f32.mrb[0].mxu0
  %v2993 = vadd.f32 %v2932, %v2992
  %v2994 = vpop.f32.mrb[0].mxu0
  %v2995 = vadd.f32 %v2934, %v2994
  %2996 = vmatprep.mubr.bf16.mxu0 %v712
  %2997 = vmatmul.mubr.bf16.gmra.mrb[0].mxu0 %v711
  %v2998 = vpop.f32.mrb[0].mxu0
  %v2999 = vadd.f32 %v2938, %v2998
  %v3000 = vpop.f32.mrb[0].mxu0
  %v3001 = vadd.f32 %v2940, %v3000
  %v3002 = vpop.f32.mrb[0].mxu0
  %v3003 = vadd.f32 %v2942, %v3002
  %v3004 = vpop.f32.mrb[0].mxu0
  %v3005 = vadd.f32 %v2944, %v3004
  %3006 = vmatprep.mubr.bf16.mxu0 %v737
  %3007 = vmatmul.mubr.bf16.gmra.mrb[0].mxu0 %v736
  %v3008 = vpop.f32.mrb[0].mxu0
  %v3009 = vadd.f32 %v2948, %v3008
  %v3010 = vpop.f32.mrb[0].mxu0
  %v3011 = vadd.f32 %v2950, %v3010
  %v3012 = vpop.f32.mrb[0].mxu0
  %v3013 = vpop.f32.mrb[0].mxu0
  %3014 = vdwg.mxu0
  %3015 = vmatprep.subr.bf16.mxu0 %v2129
  %3016 = vmatpush1.bf16.msra.mxu0 %v2128
  %3017 = vmatprep.subr.bf16.mxu0 %v2131
  %3018 = vmatpush1.bf16.msra.mxu0 %v2130
  %3019 = vmatprep.subr.bf16.mxu0 %v2133
  %3020 = vmatpush1.bf16.msra.mxu0 %v2132
  %3021 = vmatprep.subr.bf16.mxu0 %v2135
  %3022 = vmatpush1.bf16.msra.mxu0 %v2134
  %3023 = vmatprep.subr.bf16.mxu0 %v2137
  %3024 = vmatpush1.bf16.msra.mxu0 %v2136
  %3025 = vmatprep.subr.bf16.mxu0 %v2139
  %3026 = vmatpush1.bf16.msra.mxu0 %v2138
  %3027 = vmatprep.subr.bf16.mxu0 %v2141
  %3028 = vmatpush1.bf16.msra.mxu0 %v2140
  %3029 = vmatprep.subr.bf16.mxu0 %v2143
  %3030 = vmatpush1.bf16.msra.mxu0 %v2142
  %3031 = vmatprep.subr.bf16.mxu0 %v2145
  %3032 = vmatpush1.bf16.msra.mxu0 %v2144
  %3033 = vmatprep.subr.bf16.mxu0 %v2147
  %3034 = vmatpush1.bf16.msra.mxu0 %v2146
  %3035 = vmatprep.subr.bf16.mxu0 %v2149
  %3036 = vmatpush1.bf16.msra.mxu0 %v2148
  %3037 = vmatprep.subr.bf16.mxu0 %v2151
  %3038 = vmatpush1.bf16.msra.mxu0 %v2150
  %3039 = vmatprep.subr.bf16.mxu0 %v2153
  %3040 = vmatpush1.bf16.msra.mxu0 %v2152
  %3041 = vmatprep.subr.bf16.mxu0 %v2155
  %3042 = vmatpush1.bf16.msra.mxu0 %v2154
  %3043 = vmatprep.subr.bf16.mxu0 %v2157
  %3044 = vmatpush1.bf16.msra.mxu0 %v2156
  %3045 = vmatprep.subr.bf16.mxu0 %v2159
  %3046 = vmatpush1.bf16.msra.mxu0 %v2158
  %3047 = vmatprep.mubr.bf16.mxu0 %v689
  %3048 = vmatmul.mubr.bf16.gmra.mrb[0].mxu0 %v688
  %v3049 = vpop.f32.mrb[0].mxu0
  %v3050 = vadd.f32 %v2989, %v3049
  %v3051 = vpop.f32.mrb[0].mxu0
  %v3052 = vadd.f32 %v2991, %v3051
  %v3053 = vpop.f32.mrb[0].mxu0
  %v3054 = vadd.f32 %v2993, %v3053
  %v3055 = vpop.f32.mrb[0].mxu0
  %v3056 = vadd.f32 %v2995, %v3055
  %3057 = vmatprep.mubr.bf16.mxu0 %v714
  %3058 = vmatmul.mubr.bf16.gmra.mrb[0].mxu0 %v713
  %v3059 = vpop.f32.mrb[0].mxu0
  %v3060 = vadd.f32 %v2999, %v3059
  %v3061 = vpop.f32.mrb[0].mxu0
  %v3062 = vadd.f32 %v3001, %v3061
  %v3063 = vpop.f32.mrb[0].mxu0
  %v3064 = vadd.f32 %v3003, %v3063
  %v3065 = vpop.f32.mrb[0].mxu0
  %v3066 = vadd.f32 %v3005, %v3065
  %3067 = vmatprep.mubr.bf16.mxu0 %v739
  %3068 = vmatmul.mubr.bf16.gmra.mrb[0].mxu0 %v738
  %v3069 = vpop.f32.mrb[0].mxu0
  %v3070 = vadd.f32 %v3009, %v3069
  %v3071 = vpop.f32.mrb[0].mxu0
  %v3072 = vadd.f32 %v3011, %v3071
  %v3073 = vpop.f32.mrb[0].mxu0
  %v3074 = vpop.f32.mrb[0].mxu0
  %3075 = vdwg.mxu0
  %3076 = vmatprep.subr.bf16.mxu0 %v2161
  %3077 = vmatpush1.bf16.msra.mxu0 %v2160
  %3078 = vmatprep.subr.bf16.mxu0 %v2163
  %3079 = vmatpush1.bf16.msra.mxu0 %v2162
  %3080 = vmatprep.subr.bf16.mxu0 %v2165
  %3081 = vmatpush1.bf16.msra.mxu0 %v2164
  %3082 = vmatprep.subr.bf16.mxu0 %v2167
  %3083 = vmatpush1.bf16.msra.mxu0 %v2166
  %3084 = vmatprep.subr.bf16.mxu0 %v2169
  %3085 = vmatpush1.bf16.msra.mxu0 %v2168
  %3086 = vmatprep.subr.bf16.mxu0 %v2171
  %3087 = vmatpush1.bf16.msra.mxu0 %v2170
  %3088 = vmatprep.subr.bf16.mxu0 %v2173
  %3089 = vmatpush1.bf16.msra.mxu0 %v2172
  %3090 = vmatprep.subr.bf16.mxu0 %v2175
  %3091 = vmatpush1.bf16.msra.mxu0 %v2174
  %3092 = vmatprep.subr.bf16.mxu0 %v2177
  %3093 = vmatpush1.bf16.msra.mxu0 %v2176
  %3094 = vmatprep.subr.bf16.mxu0 %v2179
  %3095 = vmatpush1.bf16.msra.mxu0 %v2178
  %3096 = vmatprep.subr.bf16.mxu0 %v2181
  %3097 = vmatpush1.bf16.msra.mxu0 %v2180
  %3098 = vmatprep.subr.bf16.mxu0 %v2183
  %3099 = vmatpush1.bf16.msra.mxu0 %v2182
  %3100 = vmatprep.subr.bf16.mxu0 %v2185
  %3101 = vmatpush1.bf16.msra.mxu0 %v2184
  %3102 = vmatprep.subr.bf16.mxu0 %v2187
  %3103 = vmatpush1.bf16.msra.mxu0 %v2186
  %3104 = vmatprep.subr.bf16.mxu0 %v2189
  %3105 = vmatpush1.bf16.msra.mxu0 %v2188
  %3106 = vmatprep.subr.bf16.mxu0 %v2191
  %3107 = vmatpush1.bf16.msra.mxu0 %v2190
  %3108 = vmatprep.mubr.bf16.mxu0 %v691
  %3109 = vmatmul.mubr.bf16.gmra.mrb[0].mxu0 %v690
  %v3110 = vpop.f32.mrb[0].mxu0
  %v3111 = vadd.f32 %v3050, %v3110
  %v3112 = vpop.f32.mrb[0].mxu0
  %v3113 = vadd.f32 %v3052, %v3112
  %v3114 = vpop.f32.mrb[0].mxu0
  %v3115 = vadd.f32 %v3054, %v3114
  %v3116 = vpop.f32.mrb[0].mxu0
  %v3117 = vadd.f32 %v3056, %v3116
  %3118 = vmatprep.mubr.bf16.mxu0 %v716
  %3119 = vmatmul.mubr.bf16.gmra.mrb[0].mxu0 %v715
  %v3120 = vpop.f32.mrb[0].mxu0
  %v3121 = vadd.f32 %v3060, %v3120
  %v3122 = vpop.f32.mrb[0].mxu0
  %v3123 = vadd.f32 %v3062, %v3122
  %v3124 = vpop.f32.mrb[0].mxu0
  %v3125 = vadd.f32 %v3064, %v3124
  %v3126 = vpop.f32.mrb[0].mxu0
  %v3127 = vadd.f32 %v3066, %v3126
  %3128 = vmatprep.mubr.bf16.mxu0 %v741
  %3129 = vmatmul.mubr.bf16.gmra.mrb[0].mxu0 %v740
  %v3130 = vpop.f32.mrb[0].mxu0
  %v3131 = vadd.f32 %v3070, %v3130
  %v3132 = vpop.f32.mrb[0].mxu0
  %v3133 = vadd.f32 %v3072, %v3132
  %v3134 = vpop.f32.mrb[0].mxu0
  %v3135 = vpop.f32.mrb[0].mxu0
  %3136 = vdwg.mxu0
  %3137 = vmatprep.subr.bf16.mxu0 %v2193
  %3138 = vmatpush1.bf16.msra.mxu0 %v2192
  %3139 = vmatprep.subr.bf16.mxu0 %v2195
  %3140 = vmatpush1.bf16.msra.mxu0 %v2194
  %3141 = vmatprep.subr.bf16.mxu0 %v2197
  %3142 = vmatpush1.bf16.msra.mxu0 %v2196
  %3143 = vmatprep.subr.bf16.mxu0 %v2199
  %3144 = vmatpush1.bf16.msra.mxu0 %v2198
  %3145 = vmatprep.subr.bf16.mxu0 %v2201
  %3146 = vmatpush1.bf16.msra.mxu0 %v2200
  %3147 = vmatprep.subr.bf16.mxu0 %v2203
  %3148 = vmatpush1.bf16.msra.mxu0 %v2202
  %3149 = vmatprep.subr.bf16.mxu0 %v2205
  %3150 = vmatpush1.bf16.msra.mxu0 %v2204
  %3151 = vmatprep.subr.bf16.mxu0 %v2207
  %3152 = vmatpush1.bf16.msra.mxu0 %v2206
  %3153 = vmatprep.subr.bf16.mxu0 %v2209
  %3154 = vmatpush1.bf16.msra.mxu0 %v2208
  %3155 = vmatprep.subr.bf16.mxu0 %v2211
  %3156 = vmatpush1.bf16.msra.mxu0 %v2210
  %3157 = vmatprep.subr.bf16.mxu0 %v2213
  %3158 = vmatpush1.bf16.msra.mxu0 %v2212
  %3159 = vmatprep.subr.bf16.mxu0 %v2215
  %3160 = vmatpush1.bf16.msra.mxu0 %v2214
  %3161 = vmatprep.subr.bf16.mxu0 %v2217
  %3162 = vmatpush1.bf16.msra.mxu0 %v2216
  %3163 = vmatprep.subr.bf16.mxu0 %v2219
  %3164 = vmatpush1.bf16.msra.mxu0 %v2218
  %3165 = vmatprep.subr.bf16.mxu0 %v2221
  %3166 = vmatpush1.bf16.msra.mxu0 %v2220
  %3167 = vmatprep.subr.bf16.mxu0 %v2223
  %3168 = vmatpush1.bf16.msra.mxu0 %v2222
  %3169 = vmatprep.mubr.bf16.mxu0 %v693
  %3170 = vmatmul.mubr.bf16.gmra.mrb[0].mxu0 %v692
  %v3171 = vpop.f32.mrb[0].mxu0
  %v3172 = vadd.f32 %v3111, %v3171
  %v3173 = vpop.f32.mrb[0].mxu0
  %v3174 = vadd.f32 %v3113, %v3173
  %v3175 = vpop.f32.mrb[0].mxu0
  %v3176 = vadd.f32 %v3115, %v3175
  %v3177 = vpop.f32.mrb[0].mxu0
  %v3178 = vadd.f32 %v3117, %v3177
  %3179 = vmatprep.mubr.bf16.mxu0 %v718
  %3180 = vmatmul.mubr.bf16.gmra.mrb[0].mxu0 %v717
  %v3181 = vpop.f32.mrb[0].mxu0
  %v3182 = vadd.f32 %v3121, %v3181
  %v3183 = vpop.f32.mrb[0].mxu0
  %v3184 = vadd.f32 %v3123, %v3183
  %v3185 = vpop.f32.mrb[0].mxu0
  %v3186 = vadd.f32 %v3125, %v3185
  %v3187 = vpop.f32.mrb[0].mxu0
  %v3188 = vadd.f32 %v3127, %v3187
  %3189 = vmatprep.mubr.bf16.mxu0 %v743
  %3190 = vmatmul.mubr.bf16.gmra.mrb[0].mxu0 %v742
  %v3191 = vpop.f32.mrb[0].mxu0
  %v3192 = vadd.f32 %v3131, %v3191
  %v3193 = vpop.f32.mrb[0].mxu0
  %v3194 = vadd.f32 %v3133, %v3193
  %v3195 = vpop.f32.mrb[0].mxu0
  %v3196 = vpop.f32.mrb[0].mxu0
  %3197 = vdwg.mxu0
  %3198 = vmatprep.subr.bf16.mxu0 %v2225
  %3199 = vmatpush1.bf16.msra.mxu0 %v2224
  %3200 = vmatprep.subr.bf16.mxu0 %v2227
  %3201 = vmatpush1.bf16.msra.mxu0 %v2226
  %3202 = vmatprep.subr.bf16.mxu0 %v2229
  %3203 = vmatpush1.bf16.msra.mxu0 %v2228
  %3204 = vmatprep.subr.bf16.mxu0 %v2231
  %3205 = vmatpush1.bf16.msra.mxu0 %v2230
  %3206 = vmatprep.subr.bf16.mxu0 %v2233
  %3207 = vmatpush1.bf16.msra.mxu0 %v2232
  %3208 = vmatprep.subr.bf16.mxu0 %v2235
  %3209 = vmatpush1.bf16.msra.mxu0 %v2234
  %3210 = vmatprep.subr.bf16.mxu0 %v2237
  %3211 = vmatpush1.bf16.msra.mxu0 %v2236
  %3212 = vmatprep.subr.bf16.mxu0 %v2239
  %3213 = vmatpush1.bf16.msra.mxu0 %v2238
  %3214 = vmatprep.subr.bf16.mxu0 %v2241
  %3215 = vmatpush1.bf16.msra.mxu0 %v2240
  %3216 = vmatprep.subr.bf16.mxu0 %v2243
  %3217 = vmatpush1.bf16.msra.mxu0 %v2242
  %3218 = vmatprep.subr.bf16.mxu0 %v2245
  %3219 = vmatpush1.bf16.msra.mxu0 %v2244
  %3220 = vmatprep.subr.bf16.mxu0 %v2247
  %3221 = vmatpush1.bf16.msra.mxu0 %v2246
  %3222 = vmatprep.subr.bf16.mxu0 %v2249
  %3223 = vmatpush1.bf16.msra.mxu0 %v2248
  %3224 = vmatprep.subr.bf16.mxu0 %v2251
  %3225 = vmatpush1.bf16.msra.mxu0 %v2250
  %3226 = vmatprep.subr.bf16.mxu0 %v2253
  %3227 = vmatpush1.bf16.msra.mxu0 %v2252
  %3228 = vmatprep.subr.bf16.mxu0 %v2255
  %3229 = vmatpush1.bf16.msra.mxu0 %v2254
  %3230 = vmatprep.mubr.bf16.mxu0 %v695
  %3231 = vmatmul.mubr.bf16.gmra.mrb[0].mxu0 %v694
  %v3232 = vpop.f32.mrb[0].mxu0
  %v3233 = vadd.f32 %v3172, %v3232
  %v3234 = vpop.f32.mrb[0].mxu0
  %v3235 = vadd.f32 %v3174, %v3234
  %v3236 = vpop.f32.mrb[0].mxu0
  %v3237 = vadd.f32 %v3176, %v3236
  %v3238 = vpop.f32.mrb[0].mxu0
  %v3239 = vadd.f32 %v3178, %v3238
  %3240 = vmatprep.mubr.bf16.mxu0 %v720
  %3241 = vmatmul.mubr.bf16.gmra.mrb[0].mxu0 %v719
  %v3242 = vpop.f32.mrb[0].mxu0
  %v3243 = vadd.f32 %v3182, %v3242
  %v3244 = vpop.f32.mrb[0].mxu0
  %v3245 = vadd.f32 %v3184, %v3244
  %v3246 = vpop.f32.mrb[0].mxu0
  %v3247 = vadd.f32 %v3186, %v3246
  %v3248 = vpop.f32.mrb[0].mxu0
  %v3249 = vadd.f32 %v3188, %v3248
  %3250 = vmatprep.mubr.bf16.mxu0 %v745
  %3251 = vmatmul.mubr.bf16.gmra.mrb[0].mxu0 %v744
  %v3252 = vpop.f32.mrb[0].mxu0
  %v3253 = vadd.f32 %v3192, %v3252
  %v3254 = vpop.f32.mrb[0].mxu0
  %v3255 = vadd.f32 %v3194, %v3254
  %v3256 = vpop.f32.mrb[0].mxu0
  %v3257 = vpop.f32.mrb[0].mxu0
  %3258 = vdwg.mxu0
  %3259 = vmatprep.subr.bf16.mxu0 %v2257
  %3260 = vmatpush1.bf16.msra.mxu0 %v2256
  %3261 = vmatprep.subr.bf16.mxu0 %v2259
  %3262 = vmatpush1.bf16.msra.mxu0 %v2258
  %3263 = vmatprep.subr.bf16.mxu0 %v2261
  %3264 = vmatpush1.bf16.msra.mxu0 %v2260
  %3265 = vmatprep.subr.bf16.mxu0 %v2263
  %3266 = vmatpush1.bf16.msra.mxu0 %v2262
  %3267 = vmatprep.subr.bf16.mxu0 %v2265
  %3268 = vmatpush1.bf16.msra.mxu0 %v2264
  %3269 = vmatprep.subr.bf16.mxu0 %v2267
  %3270 = vmatpush1.bf16.msra.mxu0 %v2266
  %3271 = vmatprep.subr.bf16.mxu0 %v2269
  %3272 = vmatpush1.bf16.msra.mxu0 %v2268
  %3273 = vmatprep.subr.bf16.mxu0 %v2271
  %3274 = vmatpush1.bf16.msra.mxu0 %v2270
  %3275 = vmatprep.subr.bf16.mxu0 %v2273
  %3276 = vmatpush1.bf16.msra.mxu0 %v2272
  %3277 = vmatprep.subr.bf16.mxu0 %v2275
  %3278 = vmatpush1.bf16.msra.mxu0 %v2274
  %3279 = vmatprep.subr.bf16.mxu0 %v2277
  %3280 = vmatpush1.bf16.msra.mxu0 %v2276
  %3281 = vmatprep.subr.bf16.mxu0 %v2279
  %3282 = vmatpush1.bf16.msra.mxu0 %v2278
  %3283 = vmatprep.subr.bf16.mxu0 %v2281
  %3284 = vmatpush1.bf16.msra.mxu0 %v2280
  %3285 = vmatprep.subr.bf16.mxu0 %v2283
  %3286 = vmatpush1.bf16.msra.mxu0 %v2282
  %3287 = vmatprep.subr.bf16.mxu0 %v2285
  %3288 = vmatpush1.bf16.msra.mxu0 %v2284
  %3289 = vmatprep.subr.bf16.mxu0 %v2287
  %3290 = vmatpush1.bf16.msra.mxu0 %v2286
  %3291 = vmatprep.mubr.bf16.mxu0 %v697
  %3292 = vmatmul.mubr.bf16.gmra.mrb[0].mxu0 %v696
  %v3293 = vpop.f32.mrb[0].mxu0
  %v3294 = vadd.f32 %v3233, %v3293
  %v3295 = vpop.f32.mrb[0].mxu0
  %v3296 = vadd.f32 %v3235, %v3295
  %v3297 = vpop.f32.mrb[0].mxu0
  %v3298 = vadd.f32 %v3237, %v3297
  %v3299 = vpop.f32.mrb[0].mxu0
  %v3300 = vadd.f32 %v3239, %v3299
  %3301 = vmatprep.mubr.bf16.mxu0 %v722
  %3302 = vmatmul.mubr.bf16.gmra.mrb[0].mxu0 %v721
  %v3303 = vpop.f32.mrb[0].mxu0
  %v3304 = vadd.f32 %v3243, %v3303
  %v3305 = vpop.f32.mrb[0].mxu0
  %v3306 = vadd.f32 %v3245, %v3305
  %v3307 = vpop.f32.mrb[0].mxu0
  %v3308 = vadd.f32 %v3247, %v3307
  %v3309 = vpop.f32.mrb[0].mxu0
  %v3310 = vadd.f32 %v3249, %v3309
  %3311 = vmatprep.mubr.bf16.mxu0 %v747
  %3312 = vmatmul.mubr.bf16.gmra.mrb[0].mxu0 %v746
  %v3313 = vpop.f32.mrb[0].mxu0
  %v3314 = vadd.f32 %v3253, %v3313
  %v3315 = vpop.f32.mrb[0].mxu0
  %v3316 = vadd.f32 %v3255, %v3315
  %v3317 = vpop.f32.mrb[0].mxu0
  %v3318 = vpop.f32.mrb[0].mxu0
  %3319 = vdwg.mxu0
  %3320 = vmatprep.subr.bf16.mxu0 %v2289
  %3321 = vmatpush1.bf16.msra.mxu0 %v2288
  %3322 = vmatprep.subr.bf16.mxu0 %v2291
  %3323 = vmatpush1.bf16.msra.mxu0 %v2290
  %3324 = vmatprep.subr.bf16.mxu0 %v2293
  %3325 = vmatpush1.bf16.msra.mxu0 %v2292
  %3326 = vmatprep.subr.bf16.mxu0 %v2295
  %3327 = vmatpush1.bf16.msra.mxu0 %v2294
  %3328 = vmatprep.subr.bf16.mxu0 %v2297
  %3329 = vmatpush1.bf16.msra.mxu0 %v2296
  %3330 = vmatprep.subr.bf16.mxu0 %v2299
  %3331 = vmatpush1.bf16.msra.mxu0 %v2298
  %3332 = vmatprep.subr.bf16.mxu0 %v2301
  %3333 = vmatpush1.bf16.msra.mxu0 %v2300
  %3334 = vmatprep.subr.bf16.mxu0 %v2303
  %3335 = vmatpush1.bf16.msra.mxu0 %v2302
  %3336 = vmatprep.subr.bf16.mxu0 %v2305
  %3337 = vmatpush1.bf16.msra.mxu0 %v2304
  %3338 = vmatprep.subr.bf16.mxu0 %v2307
  %3339 = vmatpush1.bf16.msra.mxu0 %v2306
  %3340 = vmatprep.subr.bf16.mxu0 %v2309
  %3341 = vmatpush1.bf16.msra.mxu0 %v2308
  %3342 = vmatprep.subr.bf16.mxu0 %v2311
  %3343 = vmatpush1.bf16.msra.mxu0 %v2310
  %3344 = vmatprep.subr.bf16.mxu0 %v2313
  %3345 = vmatpush1.bf16.msra.mxu0 %v2312
  %3346 = vmatprep.subr.bf16.mxu0 %v2315
  %3347 = vmatpush1.bf16.msra.mxu0 %v2314
  %3348 = vmatprep.subr.bf16.mxu0 %v2317
  %3349 = vmatpush1.bf16.msra.mxu0 %v2316
  %3350 = vmatprep.subr.bf16.mxu0 %v2319
  %3351 = vmatpush1.bf16.msra.mxu0 %v2318
  %3352 = vmatprep.mubr.bf16.mxu0 %v699
  %3353 = vmatmul.mubr.bf16.gmra.mrb[0].mxu0 %v698
  %v3354 = vpop.f32.mrb[0].mxu0
  %v3355 = vadd.f32 %v3294, %v3354
  %v3356 = vpop.f32.mrb[0].mxu0
  %v3357 = vadd.f32 %v3296, %v3356
  %v3358 = vpop.f32.mrb[0].mxu0
  %v3359 = vadd.f32 %v3298, %v3358
  %v3360 = vpop.f32.mrb[0].mxu0
  %v3361 = vadd.f32 %v3300, %v3360
  %3362 = vmatprep.mubr.bf16.mxu0 %v724
  %3363 = vmatmul.mubr.bf16.gmra.mrb[0].mxu0 %v723
  %v3364 = vpop.f32.mrb[0].mxu0
  %v3365 = vadd.f32 %v3304, %v3364
  %v3366 = vpop.f32.mrb[0].mxu0
  %v3367 = vadd.f32 %v3306, %v3366
  %v3368 = vpop.f32.mrb[0].mxu0
  %v3369 = vadd.f32 %v3308, %v3368
  %v3370 = vpop.f32.mrb[0].mxu0
  %v3371 = vadd.f32 %v3310, %v3370
  %3372 = vmatprep.mubr.bf16.mxu0 %v749
  %3373 = vmatmul.mubr.bf16.gmra.mrb[0].mxu0 %v748
  %v3374 = vpop.f32.mrb[0].mxu0
  %v3375 = vadd.f32 %v3314, %v3374
  %v3376 = vpop.f32.mrb[0].mxu0
  %v3377 = vadd.f32 %v3316, %v3376
  %v3378 = vpop.f32.mrb[0].mxu0
  %v3379 = vpop.f32.mrb[0].mxu0
  %3380 = vdwg.mxu0
  %3381 = vmatprep.subr.bf16.mxu0 %v2321
  %3382 = vmatpush1.bf16.msra.mxu0 %v2320
  %3383 = vmatprep.subr.bf16.mxu0 %v2323
  %3384 = vmatpush1.bf16.msra.mxu0 %v2322
  %3385 = vmatprep.subr.bf16.mxu0 %v2325
  %3386 = vmatpush1.bf16.msra.mxu0 %v2324
  %3387 = vmatprep.subr.bf16.mxu0 %v2327
  %3388 = vmatpush1.bf16.msra.mxu0 %v2326
  %3389 = vmatprep.subr.bf16.mxu0 %v2329
  %3390 = vmatpush1.bf16.msra.mxu0 %v2328
  %3391 = vmatprep.subr.bf16.mxu0 %v2331
  %3392 = vmatpush1.bf16.msra.mxu0 %v2330
  %3393 = vmatprep.subr.bf16.mxu0 %v2333
  %3394 = vmatpush1.bf16.msra.mxu0 %v2332
  %3395 = vmatprep.subr.bf16.mxu0 %v2335
  %3396 = vmatpush1.bf16.msra.mxu0 %v2334
  %3397 = vmatprep.subr.bf16.mxu0 %v2337
  %3398 = vmatpush1.bf16.msra.mxu0 %v2336
  %3399 = vmatprep.subr.bf16.mxu0 %v2339
  %3400 = vmatpush1.bf16.msra.mxu0 %v2338
  %3401 = vmatprep.subr.bf16.mxu0 %v2341
  %3402 = vmatpush1.bf16.msra.mxu0 %v2340
  %3403 = vmatprep.subr.bf16.mxu0 %v2343
  %3404 = vmatpush1.bf16.msra.mxu0 %v2342
  %3405 = vmatprep.subr.bf16.mxu0 %v2345
  %3406 = vmatpush1.bf16.msra.mxu0 %v2344
  %3407 = vmatprep.subr.bf16.mxu0 %v2347
  %3408 = vmatpush1.bf16.msra.mxu0 %v2346
  %3409 = vmatprep.subr.bf16.mxu0 %v2349
  %3410 = vmatpush1.bf16.msra.mxu0 %v2348
  %3411 = vmatprep.subr.bf16.mxu0 %v2351
  %3412 = vmatpush1.bf16.msra.mxu0 %v2350
  %3413 = vmatprep.mubr.bf16.mxu0 %v701
  %3414 = vmatmul.mubr.bf16.gmra.mrb[0].mxu0 %v700
  %v3415 = vpop.f32.mrb[0].mxu0
  %v3416 = vadd.f32 %v3355, %v3415
  %v3417 = vpop.f32.mrb[0].mxu0
  %v3418 = vadd.f32 %v3357, %v3417
  %v3419 = vpop.f32.mrb[0].mxu0
  %v3420 = vadd.f32 %v3359, %v3419
  %v3421 = vpop.f32.mrb[0].mxu0
  %v3422 = vadd.f32 %v3361, %v3421
  %3423 = vmatprep.mubr.bf16.mxu0 %v726
  %3424 = vmatmul.mubr.bf16.gmra.mrb[0].mxu0 %v725
  %v3425 = vpop.f32.mrb[0].mxu0
  %v3426 = vadd.f32 %v3365, %v3425
  %v3427 = vpop.f32.mrb[0].mxu0
  %v3428 = vadd.f32 %v3367, %v3427
  %v3429 = vpop.f32.mrb[0].mxu0
  %v3430 = vadd.f32 %v3369, %v3429
  %v3431 = vpop.f32.mrb[0].mxu0
  %v3432 = vadd.f32 %v3371, %v3431
  %3433 = vmatprep.mubr.bf16.mxu0 %v751
  %3434 = vmatmul.mubr.bf16.gmra.mrb[0].mxu0 %v750
  %v3435 = vpop.f32.mrb[0].mxu0
  %v3436 = vadd.f32 %v3375, %v3435
  %v3437 = vpop.f32.mrb[0].mxu0
  %v3438 = vadd.f32 %v3377, %v3437
  %v3439 = vpop.f32.mrb[0].mxu0
  %v3440 = vpop.f32.mrb[0].mxu0
  %3441 = vdwg.mxu0
  %3442 = vmatprep.subr.bf16.mxu0 %v2353
  %3443 = vmatpush1.bf16.msra.mxu0 %v2352
  %3444 = vmatprep.subr.bf16.mxu0 %v2355
  %3445 = vmatpush1.bf16.msra.mxu0 %v2354
  %3446 = vmatprep.subr.bf16.mxu0 %v2357
  %3447 = vmatpush1.bf16.msra.mxu0 %v2356
  %3448 = vmatprep.subr.bf16.mxu0 %v2359
  %3449 = vmatpush1.bf16.msra.mxu0 %v2358
  %3450 = vmatprep.subr.bf16.mxu0 %v2361
  %3451 = vmatpush1.bf16.msra.mxu0 %v2360
  %3452 = vmatprep.subr.bf16.mxu0 %v2363
  %3453 = vmatpush1.bf16.msra.mxu0 %v2362
  %3454 = vmatprep.subr.bf16.mxu0 %v2365
  %3455 = vmatpush1.bf16.msra.mxu0 %v2364
  %3456 = vmatprep.subr.bf16.mxu0 %v2367
  %3457 = vmatpush1.bf16.msra.mxu0 %v2366
  %3458 = vmatprep.subr.bf16.mxu0 %v2369
  %3459 = vmatpush1.bf16.msra.mxu0 %v2368
  %3460 = vmatprep.subr.bf16.mxu0 %v2371
  %3461 = vmatpush1.bf16.msra.mxu0 %v2370
  %3462 = vmatprep.subr.bf16.mxu0 %v2373
  %3463 = vmatpush1.bf16.msra.mxu0 %v2372
  %3464 = vmatprep.subr.bf16.mxu0 %v2375
  %3465 = vmatpush1.bf16.msra.mxu0 %v2374
  %3466 = vmatprep.subr.bf16.mxu0 %v2377
  %3467 = vmatpush1.bf16.msra.mxu0 %v2376
  %3468 = vmatprep.subr.bf16.mxu0 %v2379
  %3469 = vmatpush1.bf16.msra.mxu0 %v2378
  %3470 = vmatprep.subr.bf16.mxu0 %v2381
  %3471 = vmatpush1.bf16.msra.mxu0 %v2380
  %3472 = vmatprep.subr.bf16.mxu0 %v2383
  %3473 = vmatpush1.bf16.msra.mxu0 %v2382
  %3474 = vmatprep.mubr.bf16.mxu0 %v703
  %3475 = vmatmul.mubr.bf16.gmra.mrb[0].mxu0 %v702
  %v3476 = vpop.f32.mrb[0].mxu0
  %v3477 = vadd.f32 %v3416, %v3476
  %v3478 = vpop.f32.mrb[0].mxu0
  %v3479 = vadd.f32 %v3418, %v3478
  %v3480 = vpop.f32.mrb[0].mxu0
  %v3481 = vadd.f32 %v3420, %v3480
  %v3482 = vpop.f32.mrb[0].mxu0
  %v3483 = vadd.f32 %v3422, %v3482
  %3484 = vmatprep.mubr.bf16.mxu0 %v728
  %3485 = vmatmul.mubr.bf16.gmra.mrb[0].mxu0 %v727
  %v3486 = vpop.f32.mrb[0].mxu0
  %v3487 = vadd.f32 %v3426, %v3486
  %v3488 = vpop.f32.mrb[0].mxu0
  %v3489 = vadd.f32 %v3428, %v3488
  %v3490 = vpop.f32.mrb[0].mxu0
  %v3491 = vadd.f32 %v3430, %v3490
  %v3492 = vpop.f32.mrb[0].mxu0
  %v3493 = vadd.f32 %v3432, %v3492
  %3494 = vmatprep.mubr.bf16.mxu0 %v753
  %3495 = vmatmul.mubr.bf16.gmra.mrb[0].mxu0 %v752
  %v3496 = vpop.f32.mrb[0].mxu0
  %v3497 = vadd.f32 %v3436, %v3496
  %v3498 = vpop.f32.mrb[0].mxu0
  %v3499 = vadd.f32 %v3438, %v3498
  %v3500 = vpop.f32.mrb[0].mxu0
  %v3501 = vpop.f32.mrb[0].mxu0
  %3502 = vdwg.mxu0
  %3503 = vmatprep.subr.bf16.mxu0 %v2385
  %3504 = vmatpush1.bf16.msra.mxu0 %v2384
  %3505 = vmatprep.subr.bf16.mxu0 %v2387
  %3506 = vmatpush1.bf16.msra.mxu0 %v2386
  %3507 = vmatprep.subr.bf16.mxu0 %v2389
  %3508 = vmatpush1.bf16.msra.mxu0 %v2388
  %3509 = vmatprep.subr.bf16.mxu0 %v2391
  %3510 = vmatpush1.bf16.msra.mxu0 %v2390
  %3511 = vmatprep.subr.bf16.mxu0 %v2393
  %3512 = vmatpush1.bf16.msra.mxu0 %v2392
  %3513 = vmatprep.subr.bf16.mxu0 %v2395
  %3514 = vmatpush1.bf16.msra.mxu0 %v2394
  %3515 = vmatprep.subr.bf16.mxu0 %v2397
  %3516 = vmatpush1.bf16.msra.mxu0 %v2396
  %3517 = vmatprep.subr.bf16.mxu0 %v2399
  %3518 = vmatpush1.bf16.msra.mxu0 %v2398
  %3519 = vmatprep.subr.bf16.mxu0 %v2401
  %3520 = vmatpush1.bf16.msra.mxu0 %v2400
  %3521 = vmatprep.subr.bf16.mxu0 %v2403
  %3522 = vmatpush1.bf16.msra.mxu0 %v2402
  %3523 = vmatprep.subr.bf16.mxu0 %v2405
  %3524 = vmatpush1.bf16.msra.mxu0 %v2404
  %3525 = vmatprep.subr.bf16.mxu0 %v2407
  %3526 = vmatpush1.bf16.msra.mxu0 %v2406
  %3527 = vmatprep.subr.bf16.mxu0 %v2409
  %3528 = vmatpush1.bf16.msra.mxu0 %v2408
  %3529 = vmatprep.subr.bf16.mxu0 %v2411
  %3530 = vmatpush1.bf16.msra.mxu0 %v2410
  %3531 = vmatprep.subr.bf16.mxu0 %v2413
  %3532 = vmatpush1.bf16.msra.mxu0 %v2412
  %3533 = vmatprep.subr.bf16.mxu0 %v2415
  %3534 = vmatpush1.bf16.msra.mxu0 %v2414
  %3535 = vmatprep.mubr.bf16.mxu0 %v705
  %3536 = vmatmul.mubr.bf16.gmra.mrb[0].mxu0 %v704
  %v3537 = vpop.f32.mrb[0].mxu0
  %v3538 = vadd.f32 %v3477, %v3537
  %v3539 = vpop.f32.mrb[0].mxu0
  %v3540 = vadd.f32 %v3479, %v3539
  %v3541 = vpop.f32.mrb[0].mxu0
  %v3542 = vadd.f32 %v3481, %v3541
  %v3543 = vpop.f32.mrb[0].mxu0
  %v3544 = vadd.f32 %v3483, %v3543
  %3545 = vmatprep.mubr.bf16.mxu0 %v730
  %3546 = vmatmul.mubr.bf16.gmra.mrb[0].mxu0 %v729
  %v3547 = vpop.f32.mrb[0].mxu0
  %v3548 = vadd.f32 %v3487, %v3547
  %v3549 = vpop.f32.mrb[0].mxu0
  %v3550 = vadd.f32 %v3489, %v3549
  %v3551 = vpop.f32.mrb[0].mxu0
  %v3552 = vadd.f32 %v3491, %v3551
  %v3553 = vpop.f32.mrb[0].mxu0
  %v3554 = vadd.f32 %v3493, %v3553
  %3555 = vmatprep.mubr.bf16.mxu0 %v755
  %3556 = vmatmul.mubr.bf16.gmra.mrb[0].mxu0 %v754
  %v3557 = vpop.f32.mrb[0].mxu0
  %v3558 = vadd.f32 %v3497, %v3557
  %v3559 = vpop.f32.mrb[0].mxu0
  %v3560 = vadd.f32 %v3499, %v3559
  %v3561 = vpop.f32.mrb[0].mxu0
  %v3562 = vpop.f32.mrb[0].mxu0
  %3563 = vdwg.mxu0
  %3564 = vmatprep.subr.bf16.mxu0 %v2417
  %3565 = vmatpush1.bf16.msra.mxu0 %v2416
  %3566 = vmatprep.subr.bf16.mxu0 %v2419
  %3567 = vmatpush1.bf16.msra.mxu0 %v2418
  %3568 = vmatprep.subr.bf16.mxu0 %v2421
  %3569 = vmatpush1.bf16.msra.mxu0 %v2420
  %3570 = vmatprep.subr.bf16.mxu0 %v2423
  %3571 = vmatpush1.bf16.msra.mxu0 %v2422
  %3572 = vmatprep.subr.bf16.mxu0 %v2425
  %3573 = vmatpush1.bf16.msra.mxu0 %v2424
  %3574 = vmatprep.subr.bf16.mxu0 %v2427
  %3575 = vmatpush1.bf16.msra.mxu0 %v2426
  %3576 = vmatprep.subr.bf16.mxu0 %v2429
  %3577 = vmatpush1.bf16.msra.mxu0 %v2428
  %3578 = vmatprep.subr.bf16.mxu0 %v2431
  %3579 = vmatpush1.bf16.msra.mxu0 %v2430
  %3580 = vmatprep.subr.bf16.mxu0 0
  %3581 = vmatpush1.bf16.msra.mxu0 0
  %3582 = vmatprep.subr.bf16.mxu0 0
  %3583 = vmatpush1.bf16.msra.mxu0 0
  %3584 = vmatprep.subr.bf16.mxu0 0
  %3585 = vmatpush1.bf16.msra.mxu0 0
  %3586 = vmatprep.subr.bf16.mxu0 0
  %3587 = vmatpush1.bf16.msra.mxu0 0
  %3588 = vmatprep.subr.bf16.mxu0 0
  %3589 = vmatpush1.bf16.msra.mxu0 0
  %3590 = vmatprep.subr.bf16.mxu0 0
  %3591 = vmatpush1.bf16.msra.mxu0 0
  %3592 = vmatprep.subr.bf16.mxu0 0
  %3593 = vmatpush1.bf16.msra.mxu0 0
  %3594 = vmatprep.subr.bf16.mxu0 0
  %3595 = vmatpush1.bf16.msra.mxu0 0
  %3596 = vmatprep.mubr.bf16.mxu0 0
  %3597 = vmatmul.mubr.bf16.gmra.mrb[0].mxu0 %v706
  %v3598 = vpop.f32.mrb[0].mxu0
  %v3599 = vadd.f32 %v3538, %v3598
  %v3600 = vpop.f32.mrb[0].mxu0
  %v3601 = vadd.f32 %v3540, %v3600
  %v3602 = vpop.f32.mrb[0].mxu0
  %v3603 = vadd.f32 %v3542, %v3602
  %v3604 = vpop.f32.mrb[0].mxu0
  %v3605 = vadd.f32 %v3544, %v3604
  %3606 = vmatprep.mubr.bf16.mxu0 0
  %3607 = vmatmul.mubr.bf16.gmra.mrb[0].mxu0 %v731
  %v3608 = vpop.f32.mrb[0].mxu0
  %v3609 = vadd.f32 %v3548, %v3608
  %v3610 = vpop.f32.mrb[0].mxu0
  %v3611 = vadd.f32 %v3550, %v3610
  %v3612 = vpop.f32.mrb[0].mxu0
  %v3613 = vadd.f32 %v3552, %v3612
  %v3614 = vpop.f32.mrb[0].mxu0
  %v3615 = vadd.f32 %v3554, %v3614
  %3616 = vmatprep.mubr.bf16.mxu0 0
  %3617 = vmatmul.mubr.bf16.gmra.mrb[0].mxu0 %v756
  %v3618 = vpop.f32.mrb[0].mxu0
  %v3619 = vadd.f32 %v3558, %v3618
  %v3620 = vpop.f32.mrb[0].mxu0
  %v3621 = vadd.f32 %v3560, %v3620
  %v3622 = vpop.f32.mrb[0].mxu0
  %v3623 = vpop.f32.mrb[0].mxu0
  %3624 = vdwg.mxu0
  %v3625 = vmax.f32 %v3599, 0.0
  %v3626 = vmax.f32 %v3601, 0.0
  %v3627 = vmax.f32 %v3603, 0.0
  %v3628 = vmax.f32 %v3605, 0.0
  %v3629 = vmax.f32 %v3609, 0.0
  %v3630 = vmax.f32 %v3611, 0.0
  %v3631 = vmax.f32 %v3613, 0.0
  %v3632 = vmax.f32 %v3615, 0.0
  %v3633 = vmax.f32 %v3619, 0.0
  %v3634 = vmax.f32 %v3621, 0.0
  %s3635 = scalar_lea.vmem %s0, 500
  %v3636 = vld [vmem:[%s3635] sm:$0xff]
  %v3637 = vld [vmem:[%s3635 + $0x8] sm:$0xff]
  %v3638 = vld [vmem:[%s3635 + $0x10] sm:$0xff]
  %v3639 = vld [vmem:[%s3635 + $0x18] sm:$0xff]
  %v3640 = vld [vmem:[%s3635 + $0x20] sm:$0xff]
  %v3641 = vld [vmem:[%s3635 + $0x28] sm:$0xff]
  %v3642 = vld [vmem:[%s3635 + $0x30] sm:$0xff]
  %v3643 = vld [vmem:[%s3635 + $0x38] sm:$0xff]
  %v3644 = vld [vmem:[%s3635 + $0x40] sm:$0xff]
  %v3645 = vld [vmem:[%s3635 + $0x48] sm:$0xff]
  %v3646 = vld [vmem:[%s3635 + $0x50] sm:$0xff]
  %v3647 = vld [vmem:[%s3635 + $0x58] sm:$0xff]
  %v3648 = vld [vmem:[%s3635 + $0x60] sm:$0xf]
  %v3649 = vld [vmem:[%s3635 + $0x64] sm:$0xff]
  %v3650 = vld [vmem:[%s3635 + $0x6c] sm:$0xff]
  %v3651 = vld [vmem:[%s3635 + $0x74] sm:$0xff]
  %v3652 = vld [vmem:[%s3635 + $0x7c] sm:$0xff]
  %v3653 = vld [vmem:[%s3635 + $0x84] sm:$0xff]
  %v3654 = vld [vmem:[%s3635 + $0x8c] sm:$0xff]
  %v3655 = vld [vmem:[%s3635 + $0x94] sm:$0xff]
  %v3656 = vld [vmem:[%s3635 + $0x9c] sm:$0xff]
  %v3657 = vld [vmem:[%s3635 + $0xa4] sm:$0xff]
  %v3658 = vld [vmem:[%s3635 + $0xac] sm:$0xff]
  %v3659 = vld [vmem:[%s3635 + $0xb4] sm:$0xff]
  %v3660 = vld [vmem:[%s3635 + $0xbc] sm:$0xff]
  %v3661 = vld [vmem:[%s3635 + $0xc4] sm:$0xf]
  %v3662 = vld [vmem:[%s3635 + $0xc8] sm:$0xff]
  %v3663 = vld [vmem:[%s3635 + $0xd0] sm:$0xff]
  %v3664 = vld [vmem:[%s3635 + $0xd8] sm:$0xff]
  %v3665 = vld [vmem:[%s3635 + $0xe0] sm:$0xff]
  %v3666 = vld [vmem:[%s3635 + $0xe8] sm:$0xff]
  %v3667 = vld [vmem:[%s3635 + $0xf0] sm:$0xff]
  %v3668 = vld [vmem:[%s3635 + $0xf8] sm:$0xff]
  %v3669 = vld [vmem:[%s3635 + $0x100] sm:$0xff]
  %v3670 = vld [vmem:[%s3635 + $0x108] sm:$0xff]
  %v3671 = vld [vmem:[%s3635 + $0x110] sm:$0xff]
  %v3672 = vld [vmem:[%s3635 + $0x118] sm:$0xff]
  %v3673 = vld [vmem:[%s3635 + $0x120] sm:$0xff]
  %v3674 = vld [vmem:[%s3635 + $0x128] sm:$0xf]
  %v3675 = vld [vmem:[%s3635 + $0x12c] sm:$0xff]
  %v3676 = vld [vmem:[%s3635 + $0x134] sm:$0xff]
  %v3677 = vld [vmem:[%s3635 + $0x13c] sm:$0xff]
  %v3678 = vld [vmem:[%s3635 + $0x144] sm:$0xff]
  %v3679 = vld [vmem:[%s3635 + $0x14c] sm:$0xff]
  %v3680 = vld [vmem:[%s3635 + $0x154] sm:$0xff]
  %v3681 = vld [vmem:[%s3635 + $0x15c] sm:$0xff]
  %v3682 = vld [vmem:[%s3635 + $0x164] sm:$0xff]
  %v3683 = vld [vmem:[%s3635 + $0x16c] sm:$0xff]
  %v3684 = vld [vmem:[%s3635 + $0x174] sm:$0xff]
  %v3685 = vld [vmem:[%s3635 + $0x17c] sm:$0xff]
  %v3686 = vld [vmem:[%s3635 + $0x184] sm:$0xff]
  %v3687 = vld [vmem:[%s3635 + $0x18c] sm:$0xf]
  %v3688 = vld [vmem:[%s3635 + $0x190] sm:$0x33]
  %v3689 = vld [vmem:[%s3635 + $0x198] sm:$0x33]
  %v3690 = vld [vmem:[%s3635 + $0x1a0] sm:$0x33]
  %v3691 = vld [vmem:[%s3635 + $0x1a8] sm:$0x33]
  %v3692 = vld [vmem:[%s3635 + $0x1b0] sm:$0x33]
  %v3693 = vld [vmem:[%s3635 + $0x1b8] sm:$0x33]
  %v3694 = vld [vmem:[%s3635 + $0x1c0] sm:$0x33]
  %v3695 = vld [vmem:[%s3635 + $0x1c8] sm:$0x33]
  %v3696 = vld [vmem:[%s3635 + $0x1d0] sm:$0x33]
  %v3697 = vld [vmem:[%s3635 + $0x1d8] sm:$0x33]
  %v3698 = vld [vmem:[%s3635 + $0x1e0] sm:$0x33]
  %v3699 = vld [vmem:[%s3635 + $0x1e8] sm:$0x33]
  %v3700 = vld [vmem:[%s3635 + $0x1f0] sm:$0x3]
  %v3766 = vunpack.c.l.b16 %v3636
  %v3767 = vunpack.c.h.b16 %v3636
  %v3768 = vunpack.c.l.b16 %v3637
  %v3769 = vunpack.c.h.b16 %v3637
  %v3770 = vunpack.c.l.b16 %v3638
  %v3771 = vunpack.c.h.b16 %v3638
  %v3772 = vunpack.c.l.b16 %v3639
  %v3773 = vunpack.c.h.b16 %v3639
  %v3774 = vunpack.c.l.b16 %v3640
  %v3775 = vunpack.c.h.b16 %v3640
  %v3776 = vunpack.c.l.b16 %v3641
  %v3777 = vunpack.c.h.b16 %v3641
  %v3778 = vunpack.c.l.b16 %v3642
  %v3779 = vunpack.c.h.b16 %v3642
  %v3780 = vunpack.c.l.b16 %v3643
  %v3781 = vunpack.c.h.b16 %v3643
  %v3782 = vunpack.c.l.b16 %v3644
  %v3783 = vunpack.c.h.b16 %v3644
  %v3784 = vunpack.c.l.b16 %v3645
  %v3785 = vunpack.c.h.b16 %v3645
  %v3786 = vunpack.c.l.b16 %v3646
  %v3787 = vunpack.c.h.b16 %v3646
  %v3788 = vunpack.c.l.b16 %v3647
  %v3789 = vunpack.c.h.b16 %v3647
  %v3790 = vunpack.c.l.b16 %v3648
  %v3791 = vunpack.c.l.b16 %v3649
  %v3792 = vunpack.c.h.b16 %v3649
  %v3793 = vunpack.c.l.b16 %v3650
  %v3794 = vunpack.c.h.b16 %v3650
  %v3795 = vunpack.c.l.b16 %v3651
  %v3796 = vunpack.c.h.b16 %v3651
  %v3797 = vunpack.c.l.b16 %v3652
  %v3798 = vunpack.c.h.b16 %v3652
  %v3799 = vunpack.c.l.b16 %v3653
  %v3800 = vunpack.c.h.b16 %v3653
  %v3801 = vunpack.c.l.b16 %v3654
  %v3802 = vunpack.c.h.b16 %v3654
  %v3803 = vunpack.c.l.b16 %v3655
  %v3804 = vunpack.c.h.b16 %v3655
  %v3805 = vunpack.c.l.b16 %v3656
  %v3806 = vunpack.c.h.b16 %v3656
  %v3807 = vunpack.c.l.b16 %v3657
  %v3808 = vunpack.c.h.b16 %v3657
  %v3809 = vunpack.c.l.b16 %v3658
  %v3810 = vunpack.c.h.b16 %v3658
  %v3811 = vunpack.c.l.b16 %v3659
  %v3812 = vunpack.c.h.b16 %v3659
  %v3813 = vunpack.c.l.b16 %v3660
  %v3814 = vunpack.c.h.b16 %v3660
  %v3815 = vunpack.c.l.b16 %v3661
  %v3816 = vunpack.c.l.b16 %v3662
  %v3817 = vunpack.c.h.b16 %v3662
  %v3818 = vunpack.c.l.b16 %v3663
  %v3819 = vunpack.c.h.b16 %v3663
  %v3820 = vunpack.c.l.b16 %v3664
  %v3821 = vunpack.c.h.b16 %v3664
  %v3822 = vunpack.c.l.b16 %v3665
  %v3823 = vunpack.c.h.b16 %v3665
  %v3824 = vunpack.c.l.b16 %v3666
  %v3825 = vunpack.c.h.b16 %v3666
  %v3826 = vunpack.c.l.b16 %v3667
  %v3827 = vunpack.c.h.b16 %v3667
  %v3828 = vunpack.c.l.b16 %v3668
  %v3829 = vunpack.c.h.b16 %v3668
  %v3830 = vunpack.c.l.b16 %v3669
  %v3831 = vunpack.c.h.b16 %v3669
  %v3832 = vunpack.c.l.b16 %v3670
  %v3833 = vunpack.c.h.b16 %v3670
  %v3834 = vunpack.c.l.b16 %v3671
  %v3835 = vunpack.c.h.b16 %v3671
  %v3836 = vunpack.c.l.b16 %v3672
  %v3837 = vunpack.c.h.b16 %v3672
  %v3838 = vunpack.c.l.b16 %v3673
  %v3839 = vunpack.c.h.b16 %v3673
  %v3840 = vunpack.c.l.b16 %v3674
  %v3841 = vunpack.c.l.b16 %v3675
  %v3842 = vunpack.c.h.b16 %v3675
  %v3843 = vunpack.c.l.b16 %v3676
  %v3844 = vunpack.c.h.b16 %v3676
  %v3845 = vunpack.c.l.b16 %v3677
  %v3846 = vunpack.c.h.b16 %v3677
  %v3847 = vunpack.c.l.b16 %v3678
  %v3848 = vunpack.c.h.b16 %v3678
  %v3849 = vunpack.c.l.b16 %v3679
  %v3850 = vunpack.c.h.b16 %v3679
  %v3851 = vunpack.c.l.b16 %v3680
  %v3852 = vunpack.c.h.b16 %v3680
  %v3853 = vunpack.c.l.b16 %v3681
  %v3854 = vunpack.c.h.b16 %v3681
  %v3855 = vunpack.c.l.b16 %v3682
  %v3856 = vunpack.c.h.b16 %v3682
  %v3857 = vunpack.c.l.b16 %v3683
  %v3858 = vunpack.c.h.b16 %v3683
  %v3859 = vunpack.c.l.b16 %v3684
  %v3860 = vunpack.c.h.b16 %v3684
  %v3861 = vunpack.c.l.b16 %v3685
  %v3862 = vunpack.c.h.b16 %v3685
  %v3863 = vunpack.c.l.b16 %v3686
  %v3864 = vunpack.c.h.b16 %v3686
  %v3865 = vunpack.c.l.b16 %v3687
  %v3866 = vunpack.c.l.b16 %v3688
  %v3867 = vunpack.c.h.b16 %v3688
  %v3868 = vunpack.c.l.b16 %v3689
  %v3869 = vunpack.c.h.b16 %v3689
  %v3870 = vunpack.c.l.b16 %v3690
  %v3871 = vunpack.c.h.b16 %v3690
  %v3872 = vunpack.c.l.b16 %v3691
  %v3873 = vunpack.c.h.b16 %v3691
  %v3874 = vunpack.c.l.b16 %v3692
  %v3875 = vunpack.c.h.b16 %v3692
  %v3876 = vunpack.c.l.b16 %v3693
  %v3877 = vunpack.c.h.b16 %v3693
  %v3878 = vunpack.c.l.b16 %v3694
  %v3879 = vunpack.c.h.b16 %v3694
  %v3880 = vunpack.c.l.b16 %v3695
  %v3881 = vunpack.c.h.b16 %v3695
  %v3882 = vunpack.c.l.b16 %v3696
  %v3883 = vunpack.c.h.b16 %v3696
  %v3884 = vunpack.c.l.b16 %v3697
  %v3885 = vunpack.c.h.b16 %v3697
  %v3886 = vunpack.c.l.b16 %v3698
  %v3887 = vunpack.c.h.b16 %v3698
  %v3888 = vunpack.c.l.b16 %v3699
  %v3889 = vunpack.c.h.b16 %v3699
  %v3890 = vunpack.c.l.b16 %v3700
  %v3891 = vpack.c.b16 %v3791, %v3766
  %v3892 = vpack.c.b16 %v3792, %v3767
  %v3893 = vpack.c.b16 %v3793, %v3768
  %v3894 = vpack.c.b16 %v3794, %v3769
  %v3895 = vpack.c.b16 %v3795, %v3770
  %v3896 = vpack.c.b16 %v3796, %v3771
  %v3897 = vpack.c.b16 %v3797, %v3772
  %v3898 = vpack.c.b16 %v3798, %v3773
  %v3899 = vpack.c.b16 %v3799, %v3774
  %v3900 = vpack.c.b16 %v3800, %v3775
  %v3901 = vpack.c.b16 %v3801, %v3776
  %v3902 = vpack.c.b16 %v3802, %v3777
  %v3903 = vpack.c.b16 %v3803, %v3778
  %v3904 = vpack.c.b16 %v3804, %v3779
  %v3905 = vpack.c.b16 %v3805, %v3780
  %v3906 = vpack.c.b16 %v3806, %v3781
  %v3907 = vpack.c.b16 %v3807, %v3782
  %v3908 = vpack.c.b16 %v3808, %v3783
  %v3909 = vpack.c.b16 %v3809, %v3784
  %v3910 = vpack.c.b16 %v3810, %v3785
  %v3911 = vpack.c.b16 %v3811, %v3786
  %v3912 = vpack.c.b16 %v3812, %v3787
  %v3913 = vpack.c.b16 %v3813, %v3788
  %v3914 = vpack.c.b16 %v3814, %v3789
  %v3915 = vpack.c.b16 %v3815, %v3790
  %v3916 = vpack.c.b16 %v3841, %v3816
  %v3917 = vpack.c.b16 %v3842, %v3817
  %v3918 = vpack.c.b16 %v3843, %v3818
  %v3919 = vpack.c.b16 %v3844, %v3819
  %v3920 = vpack.c.b16 %v3845, %v3820
  %v3921 = vpack.c.b16 %v3846, %v3821
  %v3922 = vpack.c.b16 %v3847, %v3822
  %v3923 = vpack.c.b16 %v3848, %v3823
  %v3924 = vpack.c.b16 %v3849, %v3824
  %v3925 = vpack.c.b16 %v3850, %v3825
  %v3926 = vpack.c.b16 %v3851, %v3826
  %v3927 = vpack.c.b16 %v3852, %v3827
  %v3928 = vpack.c.b16 %v3853, %v3828
  %v3929 = vpack.c.b16 %v3854, %v3829
  %v3930 = vpack.c.b16 %v3855, %v3830
  %v3931 = vpack.c.b16 %v3856, %v3831
  %v3932 = vpack.c.b16 %v3857, %v3832
  %v3933 = vpack.c.b16 %v3858, %v3833
  %v3934 = vpack.c.b16 %v3859, %v3834
  %v3935 = vpack.c.b16 %v3860, %v3835
  %v3936 = vpack.c.b16 %v3861, %v3836
  %v3937 = vpack.c.b16 %v3862, %v3837
  %v3938 = vpack.c.b16 %v3863, %v3838
  %v3939 = vpack.c.b16 %v3864, %v3839
  %v3940 = vpack.c.b16 %v3865, %v3840
  %v3941 = vpack.c.b16 %v3866, %v3866
  %v3942 = vpack.c.b16 %v3867, %v3867
  %v3943 = vpack.c.b16 %v3868, %v3868
  %v3944 = vpack.c.b16 %v3869, %v3869
  %v3945 = vpack.c.b16 %v3870, %v3870
  %v3946 = vpack.c.b16 %v3871, %v3871
  %v3947 = vpack.c.b16 %v3872, %v3872
  %v3948 = vpack.c.b16 %v3873, %v3873
  %v3949 = vpack.c.b16 %v3874, %v3874
  %v3950 = vpack.c.b16 %v3875, %v3875
  %v3951 = vpack.c.b16 %v3876, %v3876
  %v3952 = vpack.c.b16 %v3877, %v3877
  %v3953 = vpack.c.b16 %v3878, %v3878
  %v3954 = vpack.c.b16 %v3879, %v3879
  %v3955 = vpack.c.b16 %v3880, %v3880
  %v3956 = vpack.c.b16 %v3881, %v3881
  %v3957 = vpack.c.b16 %v3882, %v3882
  %v3958 = vpack.c.b16 %v3883, %v3883
  %v3959 = vpack.c.b16 %v3884, %v3884
  %v3960 = vpack.c.b16 %v3885, %v3885
  %v3961 = vpack.c.b16 %v3886, %v3886
  %v3962 = vpack.c.b16 %v3887, %v3887
  %v3963 = vpack.c.b16 %v3888, %v3888
  %v3964 = vpack.c.b16 %v3889, %v3889
  %v3965 = vpack.c.b16 %v3890, %v3890
  %4041 = vmatprep.subr.bf16.mxu0 %v2033
  %4042 = vmatpush1.bf16.msra.mxu0 %v2032
  %4043 = vmatprep.subr.bf16.mxu0 %v2035
  %4044 = vmatpush1.bf16.msra.mxu0 %v2034
  %4045 = vmatprep.subr.bf16.mxu0 %v2037
  %4046 = vmatpush1.bf16.msra.mxu0 %v2036
  %4047 = vmatprep.subr.bf16.mxu0 %v2039
  %4048 = vmatpush1.bf16.msra.mxu0 %v2038
  %4049 = vmatprep.subr.bf16.mxu0 %v2041
  %4050 = vmatpush1.bf16.msra.mxu0 %v2040
  %4051 = vmatprep.subr.bf16.mxu0 %v2043
  %4052 = vmatpush1.bf16.msra.mxu0 %v2042
  %4053 = vmatprep.subr.bf16.mxu0 %v2045
  %4054 = vmatpush1.bf16.msra.mxu0 %v2044
  %4055 = vmatprep.subr.bf16.mxu0 %v2047
  %4056 = vmatpush1.bf16.msra.mxu0 %v2046
  %4057 = vmatprep.subr.bf16.mxu0 %v2049
  %4058 = vmatpush1.bf16.msra.mxu0 %v2048
  %4059 = vmatprep.subr.bf16.mxu0 %v2051
  %4060 = vmatpush1.bf16.msra.mxu0 %v2050
  %4061 = vmatprep.subr.bf16.mxu0 %v2053
  %4062 = vmatpush1.bf16.msra.mxu0 %v2052
  %4063 = vmatprep.subr.bf16.mxu0 %v2055
  %4064 = vmatpush1.bf16.msra.mxu0 %v2054
  %4065 = vmatprep.subr.bf16.mxu0 %v2057
  %4066 = vmatpush1.bf16.msra.mxu0 %v2056
  %4067 = vmatprep.subr.bf16.mxu0 %v2059
  %4068 = vmatpush1.bf16.msra.mxu0 %v2058
  %4069 = vmatprep.subr.bf16.mxu0 %v2061
  %4070 = vmatpush1.bf16.msra.mxu0 %v2060
  %4071 = vmatprep.subr.bf16.mxu0 %v2063
  %4072 = vmatpush1.bf16.msra.mxu0 %v2062
  %4073 = vmatprep.mubr.bf16.mxu0 %v3892
  %4074 = vmatmul.mubr.bf16.gmra.mrb[0].mxu0 %v3891
  %v4075 = vpop.f32.mrb[0].mxu0
  %v4076 = vadd.f32 %v485, %v4075
  %v4077 = vpop.f32.mrb[0].mxu0
  %v4078 = vadd.f32 %v489, %v4077
  %v4079 = vpop.f32.mrb[0].mxu0
  %v4080 = vadd.f32 %v485, %v4079
  %v4081 = vpop.f32.mrb[0].mxu0
  %v4082 = vadd.f32 %v489, %v4081
  %4083 = vmatprep.mubr.bf16.mxu0 %v3917
  %4084 = vmatmul.mubr.bf16.gmra.mrb[0].mxu0 %v3916
  %v4085 = vpop.f32.mrb[0].mxu0
  %v4086 = vadd.f32 %v485, %v4085
  %v4087 = vpop.f32.mrb[0].mxu0
  %v4088 = vadd.f32 %v489, %v4087
  %v4089 = vpop.f32.mrb[0].mxu0
  %v4090 = vadd.f32 %v485, %v4089
  %v4091 = vpop.f32.mrb[0].mxu0
  %v4092 = vadd.f32 %v489, %v4091
  %4093 = vmatprep.mubr.bf16.mxu0 %v3942
  %4094 = vmatmul.mubr.bf16.gmra.mrb[0].mxu0 %v3941
  %v4095 = vpop.f32.mrb[0].mxu0
  %v4096 = vadd.f32 %v485, %v4095
  %v4097 = vpop.f32.mrb[0].mxu0
  %v4098 = vadd.f32 %v489, %v4097
  %v4099 = vpop.f32.mrb[0].mxu0
  %v4100 = vpop.f32.mrb[0].mxu0
  %4101 = vdwg.mxu0
  %4102 = vmatprep.subr.bf16.mxu0 %v2065
  %4103 = vmatpush1.bf16.msra.mxu0 %v2064
  %4104 = vmatprep.subr.bf16.mxu0 %v2067
  %4105 = vmatpush1.bf16.msra.mxu0 %v2066
  %4106 = vmatprep.subr.bf16.mxu0 %v2069
  %4107 = vmatpush1.bf16.msra.mxu0 %v2068
  %4108 = vmatprep.subr.bf16.mxu0 %v2071
  %4109 = vmatpush1.bf16.msra.mxu0 %v2070
  %4110 = vmatprep.subr.bf16.mxu0 %v2073
  %4111 = vmatpush1.bf16.msra.mxu0 %v2072
  %4112 = vmatprep.subr.bf16.mxu0 %v2075
  %4113 = vmatpush1.bf16.msra.mxu0 %v2074
  %4114 = vmatprep.subr.bf16.mxu0 %v2077
  %4115 = vmatpush1.bf16.msra.mxu0 %v2076
  %4116 = vmatprep.subr.bf16.mxu0 %v2079
  %4117 = vmatpush1.bf16.msra.mxu0 %v2078
  %4118 = vmatprep.subr.bf16.mxu0 %v2081
  %4119 = vmatpush1.bf16.msra.mxu0 %v2080
  %4120 = vmatprep.subr.bf16.mxu0 %v2083
  %4121 = vmatpush1.bf16.msra.mxu0 %v2082
  %4122 = vmatprep.subr.bf16.mxu0 %v2085
  %4123 = vmatpush1.bf16.msra.mxu0 %v2084
  %4124 = vmatprep.subr.bf16.mxu0 %v2087
  %4125 = vmatpush1.bf16.msra.mxu0 %v2086
  %4126 = vmatprep.subr.bf16.mxu0 %v2089
  %4127 = vmatpush1.bf16.msra.mxu0 %v2088
  %4128 = vmatprep.subr.bf16.mxu0 %v2091
  %4129 = vmatpush1.bf16.msra.mxu0 %v2090
  %4130 = vmatprep.subr.bf16.mxu0 %v2093
  %4131 = vmatpush1.bf16.msra.mxu0 %v2092
  %4132 = vmatprep.subr.bf16.mxu0 %v2095
  %4133 = vmatpush1.bf16.msra.mxu0 %v2094
  %4134 = vmatprep.mubr.bf16.mxu0 %v3894
  %4135 = vmatmul.mubr.bf16.gmra.mrb[0].mxu0 %v3893
  %v4136 = vpop.f32.mrb[0].mxu0
  %v4137 = vadd.f32 %v4076, %v4136
  %v4138 = vpop.f32.mrb[0].mxu0
  %v4139 = vadd.f32 %v4078, %v4138
  %v4140 = vpop.f32.mrb[0].mxu0
  %v4141 = vadd.f32 %v4080, %v4140
  %v4142 = vpop.f32.mrb[0].mxu0
  %v4143 = vadd.f32 %v4082, %v4142
  %4144 = vmatprep.mubr.bf16.mxu0 %v3919
  %4145 = vmatmul.mubr.bf16.gmra.mrb[0].mxu0 %v3918
  %v4146 = vpop.f32.mrb[0].mxu0
  %v4147 = vadd.f32 %v4086, %v4146
  %v4148 = vpop.f32.mrb[0].mxu0
  %v4149 = vadd.f32 %v4088, %v4148
  %v4150 = vpop.f32.mrb[0].mxu0
  %v4151 = vadd.f32 %v4090, %v4150
  %v4152 = vpop.f32.mrb[0].mxu0
  %v4153 = vadd.f32 %v4092, %v4152
  %4154 = vmatprep.mubr.bf16.mxu0 %v3944
  %4155 = vmatmul.mubr.bf16.gmra.mrb[0].mxu0 %v3943
  %v4156 = vpop.f32.mrb[0].mxu0
  %v4157 = vadd.f32 %v4096, %v4156
  %v4158 = vpop.f32.mrb[0].mxu0
  %v4159 = vadd.f32 %v4098, %v4158
  %v4160 = vpop.f32.mrb[0].mxu0
  %v4161 = vpop.f32.mrb[0].mxu0
  %4162 = vdwg.mxu0
  %4163 = vmatprep.subr.bf16.mxu0 %v2097
  %4164 = vmatpush1.bf16.msra.mxu0 %v2096
  %4165 = vmatprep.subr.bf16.mxu0 %v2099
  %4166 = vmatpush1.bf16.msra.mxu0 %v2098
  %4167 = vmatprep.subr.bf16.mxu0 %v2101
  %4168 = vmatpush1.bf16.msra.mxu0 %v2100
  %4169 = vmatprep.subr.bf16.mxu0 %v2103
  %4170 = vmatpush1.bf16.msra.mxu0 %v2102
  %4171 = vmatprep.subr.bf16.mxu0 %v2105
  %4172 = vmatpush1.bf16.msra.mxu0 %v2104
  %4173 = vmatprep.subr.bf16.mxu0 %v2107
  %4174 = vmatpush1.bf16.msra.mxu0 %v2106
  %4175 = vmatprep.subr.bf16.mxu0 %v2109
  %4176 = vmatpush1.bf16.msra.mxu0 %v2108
  %4177 = vmatprep.subr.bf16.mxu0 %v2111
  %4178 = vmatpush1.bf16.msra.mxu0 %v2110
  %4179 = vmatprep.subr.bf16.mxu0 %v2113
  %4180 = vmatpush1.bf16.msra.mxu0 %v2112
  %4181 = vmatprep.subr.bf16.mxu0 %v2115
  %4182 = vmatpush1.bf16.msra.mxu0 %v2114
  %4183 = vmatprep.subr.bf16.mxu0 %v2117
  %4184 = vmatpush1.bf16.msra.mxu0 %v2116
  %4185 = vmatprep.subr.bf16.mxu0 %v2119
  %4186 = vmatpush1.bf16.msra.mxu0 %v2118
  %4187 = vmatprep.subr.bf16.mxu0 %v2121
  %4188 = vmatpush1.bf16.msra.mxu0 %v2120
  %4189 = vmatprep.subr.bf16.mxu0 %v2123
  %4190 = vmatpush1.bf16.msra.mxu0 %v2122
  %4191 = vmatprep.subr.bf16.mxu0 %v2125
  %4192 = vmatpush1.bf16.msra.mxu0 %v2124
  %4193 = vmatprep.subr.bf16.mxu0 %v2127
  %4194 = vmatpush1.bf16.msra.mxu0 %v2126
  %4195 = vmatprep.mubr.bf16.mxu0 %v3896
  %4196 = vmatmul.mubr.bf16.gmra.mrb[0].mxu0 %v3895
  %v4197 = vpop.f32.mrb[0].mxu0
  %v4198 = vadd.f32 %v4137, %v4197
  %v4199 = vpop.f32.mrb[0].mxu0
  %v4200 = vadd.f32 %v4139, %v4199
  %v4201 = vpop.f32.mrb[0].mxu0
  %v4202 = vadd.f32 %v4141, %v4201
  %v4203 = vpop.f32.mrb[0].mxu0
  %v4204 = vadd.f32 %v4143, %v4203
  %4205 = vmatprep.mubr.bf16.mxu0 %v3921
  %4206 = vmatmul.mubr.bf16.gmra.mrb[0].mxu0 %v3920
  %v4207 = vpop.f32.mrb[0].mxu0
  %v4208 = vadd.f32 %v4147, %v4207
  %v4209 = vpop.f32.mrb[0].mxu0
  %v4210 = vadd.f32 %v4149, %v4209
  %v4211 = vpop.f32.mrb[0].mxu0
  %v4212 = vadd.f32 %v4151, %v4211
  %v4213 = vpop.f32.mrb[0].mxu0
  %v4214 = vadd.f32 %v4153, %v4213
  %4215 = vmatprep.mubr.bf16.mxu0 %v3946
  %4216 = vmatmul.mubr.bf16.gmra.mrb[0].mxu0 %v3945
  %v4217 = vpop.f32.mrb[0].mxu0
  %v4218 = vadd.f32 %v4157, %v4217
  %v4219 = vpop.f32.mrb[0].mxu0
  %v4220 = vadd.f32 %v4159, %v4219
  %v4221 = vpop.f32.mrb[0].mxu0
  %v4222 = vpop.f32.mrb[0].mxu0
  %4223 = vdwg.mxu0
  %4224 = vmatprep.subr.bf16.mxu0 %v2129
  %4225 = vmatpush1.bf16.msra.mxu0 %v2128
  %4226 = vmatprep.subr.bf16.mxu0 %v2131
  %4227 = vmatpush1.bf16.msra.mxu0 %v2130
  %4228 = vmatprep.subr.bf16.mxu0 %v2133
  %4229 = vmatpush1.bf16.msra.mxu0 %v2132
  %4230 = vmatprep.subr.bf16.mxu0 %v2135
  %4231 = vmatpush1.bf16.msra.mxu0 %v2134
  %4232 = vmatprep.subr.bf16.mxu0 %v2137
  %4233 = vmatpush1.bf16.msra.mxu0 %v2136
  %4234 = vmatprep.subr.bf16.mxu0 %v2139
  %4235 = vmatpush1.bf16.msra.mxu0 %v2138
  %4236 = vmatprep.subr.bf16.mxu0 %v2141
  %4237 = vmatpush1.bf16.msra.mxu0 %v2140
  %4238 = vmatprep.subr.bf16.mxu0 %v2143
  %4239 = vmatpush1.bf16.msra.mxu0 %v2142
  %4240 = vmatprep.subr.bf16.mxu0 %v2145
  %4241 = vmatpush1.bf16.msra.mxu0 %v2144
  %4242 = vmatprep.subr.bf16.mxu0 %v2147
  %4243 = vmatpush1.bf16.msra.mxu0 %v2146
  %4244 = vmatprep.subr.bf16.mxu0 %v2149
  %4245 = vmatpush1.bf16.msra.mxu0 %v2148
  %4246 = vmatprep.subr.bf16.mxu0 %v2151
  %4247 = vmatpush1.bf16.msra.mxu0 %v2150
  %4248 = vmatprep.subr.bf16.mxu0 %v2153
  %4249 = vmatpush1.bf16.msra.mxu0 %v2152
  %4250 = vmatprep.subr.bf16.mxu0 %v2155
  %4251 = vmatpush1.bf16.msra.mxu0 %v2154
  %4252 = vmatprep.subr.bf16.mxu0 %v2157
  %4253 = vmatpush1.bf16.msra.mxu0 %v2156
  %4254 = vmatprep.subr.bf16.mxu0 %v2159
  %4255 = vmatpush1.bf16.msra.mxu0 %v2158
  %4256 = vmatprep.mubr.bf16.mxu0 %v3898
  %4257 = vmatmul.mubr.bf16.gmra.mrb[0].mxu0 %v3897
  %v4258 = vpop.f32.mrb[0].mxu0
  %v4259 = vadd.f32 %v4198, %v4258
  %v4260 = vpop.f32.mrb[0].mxu0
  %v4261 = vadd.f32 %v4200, %v4260
  %v4262 = vpop.f32.mrb[0].mxu0
  %v4263 = vadd.f32 %v4202, %v4262
  %v4264 = vpop.f32.mrb[0].mxu0
  %v4265 = vadd.f32 %v4204, %v4264
  %4266 = vmatprep.mubr.bf16.mxu0 %v3923
  %4267 = vmatmul.mubr.bf16.gmra.mrb[0].mxu0 %v3922
  %v4268 = vpop.f32.mrb[0].mxu0
  %v4269 = vadd.f32 %v4208, %v4268
  %v4270 = vpop.f32.mrb[0].mxu0
  %v4271 = vadd.f32 %v4210, %v4270
  %v4272 = vpop.f32.mrb[0].mxu0
  %v4273 = vadd.f32 %v4212, %v4272
  %v4274 = vpop.f32.mrb[0].mxu0
  %v4275 = vadd.f32 %v4214, %v4274
  %4276 = vmatprep.mubr.bf16.mxu0 %v3948
  %4277 = vmatmul.mubr.bf16.gmra.mrb[0].mxu0 %v3947
  %v4278 = vpop.f32.mrb[0].mxu0
  %v4279 = vadd.f32 %v4218, %v4278
  %v4280 = vpop.f32.mrb[0].mxu0
  %v4281 = vadd.f32 %v4220, %v4280
  %v4282 = vpop.f32.mrb[0].mxu0
  %v4283 = vpop.f32.mrb[0].mxu0
  %4284 = vdwg.mxu0
  %4285 = vmatprep.subr.bf16.mxu0 %v2161
  %4286 = vmatpush1.bf16.msra.mxu0 %v2160
  %4287 = vmatprep.subr.bf16.mxu0 %v2163
  %4288 = vmatpush1.bf16.msra.mxu0 %v2162
  %4289 = vmatprep.subr.bf16.mxu0 %v2165
  %4290 = vmatpush1.bf16.msra.mxu0 %v2164
  %4291 = vmatprep.subr.bf16.mxu0 %v2167
  %4292 = vmatpush1.bf16.msra.mxu0 %v2166
  %4293 = vmatprep.subr.bf16.mxu0 %v2169
  %4294 = vmatpush1.bf16.msra.mxu0 %v2168
  %4295 = vmatprep.subr.bf16.mxu0 %v2171
  %4296 = vmatpush1.bf16.msra.mxu0 %v2170
  %4297 = vmatprep.subr.bf16.mxu0 %v2173
  %4298 = vmatpush1.bf16.msra.mxu0 %v2172
  %4299 = vmatprep.subr.bf16.mxu0 %v2175
  %4300 = vmatpush1.bf16.msra.mxu0 %v2174
  %4301 = vmatprep.subr.bf16.mxu0 %v2177
  %4302 = vmatpush1.bf16.msra.mxu0 %v2176
  %4303 = vmatprep.subr.bf16.mxu0 %v2179
  %4304 = vmatpush1.bf16.msra.mxu0 %v2178
  %4305 = vmatprep.subr.bf16.mxu0 %v2181
  %4306 = vmatpush1.bf16.msra.mxu0 %v2180
  %4307 = vmatprep.subr.bf16.mxu0 %v2183
  %4308 = vmatpush1.bf16.msra.mxu0 %v2182
  %4309 = vmatprep.subr.bf16.mxu0 %v2185
  %4310 = vmatpush1.bf16.msra.mxu0 %v2184
  %4311 = vmatprep.subr.bf16.mxu0 %v2187
  %4312 = vmatpush1.bf16.msra.mxu0 %v2186
  %4313 = vmatprep.subr.bf16.mxu0 %v2189
  %4314 = vmatpush1.bf16.msra.mxu0 %v2188
  %4315 = vmatprep.subr.bf16.mxu0 %v2191
  %4316 = vmatpush1.bf16.msra.mxu0 %v2190
  %4317 = vmatprep.mubr.bf16.mxu0 %v3900
  %4318 = vmatmul.mubr.bf16.gmra.mrb[0].mxu0 %v3899
  %v4319 = vpop.f32.mrb[0].mxu0
  %v4320 = vadd.f32 %v4259, %v4319
  %v4321 = vpop.f32.mrb[0].mxu0
  %v4322 = vadd.f32 %v4261, %v4321
  %v4323 = vpop.f32.mrb[0].mxu0
  %v4324 = vadd.f32 %v4263, %v4323
  %v4325 = vpop.f32.mrb[0].mxu0
  %v4326 = vadd.f32 %v4265, %v4325
  %4327 = vmatprep.mubr.bf16.mxu0 %v3925
  %4328 = vmatmul.mubr.bf16.gmra.mrb[0].mxu0 %v3924
  %v4329 = vpop.f32.mrb[0].mxu0
  %v4330 = vadd.f32 %v4269, %v4329
  %v4331 = vpop.f32.mrb[0].mxu0
  %v4332 = vadd.f32 %v4271, %v4331
  %v4333 = vpop.f32.mrb[0].mxu0
  %v4334 = vadd.f32 %v4273, %v4333
  %v4335 = vpop.f32.mrb[0].mxu0
  %v4336 = vadd.f32 %v4275, %v4335
  %4337 = vmatprep.mubr.bf16.mxu0 %v3950
  %4338 = vmatmul.mubr.bf16.gmra.mrb[0].mxu0 %v3949
  %v4339 = vpop.f32.mrb[0].mxu0
  %v4340 = vadd.f32 %v4279, %v4339
  %v4341 = vpop.f32.mrb[0].mxu0
  %v4342 = vadd.f32 %v4281, %v4341
  %v4343 = vpop.f32.mrb[0].mxu0
  %v4344 = vpop.f32.mrb[0].mxu0
  %4345 = vdwg.mxu0
  %4346 = vmatprep.subr.bf16.mxu0 %v2193
  %4347 = vmatpush1.bf16.msra.mxu0 %v2192
  %4348 = vmatprep.subr.bf16.mxu0 %v2195
  %4349 = vmatpush1.bf16.msra.mxu0 %v2194
  %4350 = vmatprep.subr.bf16.mxu0 %v2197
  %4351 = vmatpush1.bf16.msra.mxu0 %v2196
  %4352 = vmatprep.subr.bf16.mxu0 %v2199
  %4353 = vmatpush1.bf16.msra.mxu0 %v2198
  %4354 = vmatprep.subr.bf16.mxu0 %v2201
  %4355 = vmatpush1.bf16.msra.mxu0 %v2200
  %4356 = vmatprep.subr.bf16.mxu0 %v2203
  %4357 = vmatpush1.bf16.msra.mxu0 %v2202
  %4358 = vmatprep.subr.bf16.mxu0 %v2205
  %4359 = vmatpush1.bf16.msra.mxu0 %v2204
  %4360 = vmatprep.subr.bf16.mxu0 %v2207
  %4361 = vmatpush1.bf16.msra.mxu0 %v2206
  %4362 = vmatprep.subr.bf16.mxu0 %v2209
  %4363 = vmatpush1.bf16.msra.mxu0 %v2208
  %4364 = vmatprep.subr.bf16.mxu0 %v2211
  %4365 = vmatpush1.bf16.msra.mxu0 %v2210
  %4366 = vmatprep.subr.bf16.mxu0 %v2213
  %4367 = vmatpush1.bf16.msra.mxu0 %v2212
  %4368 = vmatprep.subr.bf16.mxu0 %v2215
  %4369 = vmatpush1.bf16.msra.mxu0 %v2214
  %4370 = vmatprep.subr.bf16.mxu0 %v2217
  %4371 = vmatpush1.bf16.msra.mxu0 %v2216
  %4372 = vmatprep.subr.bf16.mxu0 %v2219
  %4373 = vmatpush1.bf16.msra.mxu0 %v2218
  %4374 = vmatprep.subr.bf16.mxu0 %v2221
  %4375 = vmatpush1.bf16.msra.mxu0 %v2220
  %4376 = vmatprep.subr.bf16.mxu0 %v2223
  %4377 = vmatpush1.bf16.msra.mxu0 %v2222
  %4378 = vmatprep.mubr.bf16.mxu0 %v3902
  %4379 = vmatmul.mubr.bf16.gmra.mrb[0].mxu0 %v3901
  %v4380 = vpop.f32.mrb[0].mxu0
  %v4381 = vadd.f32 %v4320, %v4380
  %v4382 = vpop.f32.mrb[0].mxu0
  %v4383 = vadd.f32 %v4322, %v4382
  %v4384 = vpop.f32.mrb[0].mxu0
  %v4385 = vadd.f32 %v4324, %v4384
  %v4386 = vpop.f32.mrb[0].mxu0
  %v4387 = vadd.f32 %v4326, %v4386
  %4388 = vmatprep.mubr.bf16.mxu0 %v3927
  %4389 = vmatmul.mubr.bf16.gmra.mrb[0].mxu0 %v3926
  %v4390 = vpop.f32.mrb[0].mxu0
  %v4391 = vadd.f32 %v4330, %v4390
  %v4392 = vpop.f32.mrb[0].mxu0
  %v4393 = vadd.f32 %v4332, %v4392
  %v4394 = vpop.f32.mrb[0].mxu0
  %v4395 = vadd.f32 %v4334, %v4394
  %v4396 = vpop.f32.mrb[0].mxu0
  %v4397 = vadd.f32 %v4336, %v4396
  %4398 = vmatprep.mubr.bf16.mxu0 %v3952
  %4399 = vmatmul.mubr.bf16.gmra.mrb[0].mxu0 %v3951
  %v4400 = vpop.f32.mrb[0].mxu0
  %v4401 = vadd.f32 %v4340, %v4400
  %v4402 = vpop.f32.mrb[0].mxu0
  %v4403 = vadd.f32 %v4342, %v4402
  %v4404 = vpop.f32.mrb[0].mxu0
  %v4405 = vpop.f32.mrb[0].mxu0
  %4406 = vdwg.mxu0
  %4407 = vmatprep.subr.bf16.mxu0 %v2225
  %4408 = vmatpush1.bf16.msra.mxu0 %v2224
  %4409 = vmatprep.subr.bf16.mxu0 %v2227
  %4410 = vmatpush1.bf16.msra.mxu0 %v2226
  %4411 = vmatprep.subr.bf16.mxu0 %v2229
  %4412 = vmatpush1.bf16.msra.mxu0 %v2228
  %4413 = vmatprep.subr.bf16.mxu0 %v2231
  %4414 = vmatpush1.bf16.msra.mxu0 %v2230
  %4415 = vmatprep.subr.bf16.mxu0 %v2233
  %4416 = vmatpush1.bf16.msra.mxu0 %v2232
  %4417 = vmatprep.subr.bf16.mxu0 %v2235
  %4418 = vmatpush1.bf16.msra.mxu0 %v2234
  %4419 = vmatprep.subr.bf16.mxu0 %v2237
  %4420 = vmatpush1.bf16.msra.mxu0 %v2236
  %4421 = vmatprep.subr.bf16.mxu0 %v2239
  %4422 = vmatpush1.bf16.msra.mxu0 %v2238
  %4423 = vmatprep.subr.bf16.mxu0 %v2241
  %4424 = vmatpush1.bf16.msra.mxu0 %v2240
  %4425 = vmatprep.subr.bf16.mxu0 %v2243
  %4426 = vmatpush1.bf16.msra.mxu0 %v2242
  %4427 = vmatprep.subr.bf16.mxu0 %v2245
  %4428 = vmatpush1.bf16.msra.mxu0 %v2244
  %4429 = vmatprep.subr.bf16.mxu0 %v2247
  %4430 = vmatpush1.bf16.msra.mxu0 %v2246
  %4431 = vmatprep.subr.bf16.mxu0 %v2249
  %4432 = vmatpush1.bf16.msra.mxu0 %v2248
  %4433 = vmatprep.subr.bf16.mxu0 %v2251
  %4434 = vmatpush1.bf16.msra.mxu0 %v2250
  %4435 = vmatprep.subr.bf16.mxu0 %v2253
  %4436 = vmatpush1.bf16.msra.mxu0 %v2252
  %4437 = vmatprep.subr.bf16.mxu0 %v2255
  %4438 = vmatpush1.bf16.msra.mxu0 %v2254
  %4439 = vmatprep.mubr.bf16.mxu0 %v3904
  %4440 = vmatmul.mubr.bf16.gmra.mrb[0].mxu0 %v3903
  %v4441 = vpop.f32.mrb[0].mxu0
  %v4442 = vadd.f32 %v4381, %v4441
  %v4443 = vpop.f32.mrb[0].mxu0
  %v4444 = vadd.f32 %v4383, %v4443
  %v4445 = vpop.f32.mrb[0].mxu0
  %v4446 = vadd.f32 %v4385, %v4445
  %v4447 = vpop.f32.mrb[0].mxu0
  %v4448 = vadd.f32 %v4387, %v4447
  %4449 = vmatprep.mubr.bf16.mxu0 %v3929
  %4450 = vmatmul.mubr.bf16.gmra.mrb[0].mxu0 %v3928
  %v4451 = vpop.f32.mrb[0].mxu0
  %v4452 = vadd.f32 %v4391, %v4451
  %v4453 = vpop.f32.mrb[0].mxu0
  %v4454 = vadd.f32 %v4393, %v4453
  %v4455 = vpop.f32.mrb[0].mxu0
  %v4456 = vadd.f32 %v4395, %v4455
  %v4457 = vpop.f32.mrb[0].mxu0
  %v4458 = vadd.f32 %v4397, %v4457
  %4459 = vmatprep.mubr.bf16.mxu0 %v3954
  %4460 = vmatmul.mubr.bf16.gmra.mrb[0].mxu0 %v3953
  %v4461 = vpop.f32.mrb[0].mxu0
  %v4462 = vadd.f32 %v4401, %v4461
  %v4463 = vpop.f32.mrb[0].mxu0
  %v4464 = vadd.f32 %v4403, %v4463
  %v4465 = vpop.f32.mrb[0].mxu0
  %v4466 = vpop.f32.mrb[0].mxu0
  %4467 = vdwg.mxu0
  %4468 = vmatprep.subr.bf16.mxu0 %v2257
  %4469 = vmatpush1.bf16.msra.mxu0 %v2256
  %4470 = vmatprep.subr.bf16.mxu0 %v2259
  %4471 = vmatpush1.bf16.msra.mxu0 %v2258
  %4472 = vmatprep.subr.bf16.mxu0 %v2261
  %4473 = vmatpush1.bf16.msra.mxu0 %v2260
  %4474 = vmatprep.subr.bf16.mxu0 %v2263
  %4475 = vmatpush1.bf16.msra.mxu0 %v2262
  %4476 = vmatprep.subr.bf16.mxu0 %v2265
  %4477 = vmatpush1.bf16.msra.mxu0 %v2264
  %4478 = vmatprep.subr.bf16.mxu0 %v2267
  %4479 = vmatpush1.bf16.msra.mxu0 %v2266
  %4480 = vmatprep.subr.bf16.mxu0 %v2269
  %4481 = vmatpush1.bf16.msra.mxu0 %v2268
  %4482 = vmatprep.subr.bf16.mxu0 %v2271
  %4483 = vmatpush1.bf16.msra.mxu0 %v2270
  %4484 = vmatprep.subr.bf16.mxu0 %v2273
  %4485 = vmatpush1.bf16.msra.mxu0 %v2272
  %4486 = vmatprep.subr.bf16.mxu0 %v2275
  %4487 = vmatpush1.bf16.msra.mxu0 %v2274
  %4488 = vmatprep.subr.bf16.mxu0 %v2277
  %4489 = vmatpush1.bf16.msra.mxu0 %v2276
  %4490 = vmatprep.subr.bf16.mxu0 %v2279
  %4491 = vmatpush1.bf16.msra.mxu0 %v2278
  %4492 = vmatprep.subr.bf16.mxu0 %v2281
  %4493 = vmatpush1.bf16.msra.mxu0 %v2280
  %4494 = vmatprep.subr.bf16.mxu0 %v2283
  %4495 = vmatpush1.bf16.msra.mxu0 %v2282
  %4496 = vmatprep.subr.bf16.mxu0 %v2285
  %4497 = vmatpush1.bf16.msra.mxu0 %v2284
  %4498 = vmatprep.subr.bf16.mxu0 %v2287
  %4499 = vmatpush1.bf16.msra.mxu0 %v2286
  %4500 = vmatprep.mubr.bf16.mxu0 %v3906
  %4501 = vmatmul.mubr.bf16.gmra.mrb[0].mxu0 %v3905
  %v4502 = vpop.f32.mrb[0].mxu0
  %v4503 = vadd.f32 %v4442, %v4502
  %v4504 = vpop.f32.mrb[0].mxu0
  %v4505 = vadd.f32 %v4444, %v4504
  %v4506 = vpop.f32.mrb[0].mxu0
  %v4507 = vadd.f32 %v4446, %v4506
  %v4508 = vpop.f32.mrb[0].mxu0
  %v4509 = vadd.f32 %v4448, %v4508
  %4510 = vmatprep.mubr.bf16.mxu0 %v3931
  %4511 = vmatmul.mubr.bf16.gmra.mrb[0].mxu0 %v3930
  %v4512 = vpop.f32.mrb[0].mxu0
  %v4513 = vadd.f32 %v4452, %v4512
  %v4514 = vpop.f32.mrb[0].mxu0
  %v4515 = vadd.f32 %v4454, %v4514
  %v4516 = vpop.f32.mrb[0].mxu0
  %v4517 = vadd.f32 %v4456, %v4516
  %v4518 = vpop.f32.mrb[0].mxu0
  %v4519 = vadd.f32 %v4458, %v4518
  %4520 = vmatprep.mubr.bf16.mxu0 %v3956
  %4521 = vmatmul.mubr.bf16.gmra.mrb[0].mxu0 %v3955
  %v4522 = vpop.f32.mrb[0].mxu0
  %v4523 = vadd.f32 %v4462, %v4522
  %v4524 = vpop.f32.mrb[0].mxu0
  %v4525 = vadd.f32 %v4464, %v4524
  %v4526 = vpop.f32.mrb[0].mxu0
  %v4527 = vpop.f32.mrb[0].mxu0
  %4528 = vdwg.mxu0
  %4529 = vmatprep.subr.bf16.mxu0 %v2289
  %4530 = vmatpush1.bf16.msra.mxu0 %v2288
  %4531 = vmatprep.subr.bf16.mxu0 %v2291
  %4532 = vmatpush1.bf16.msra.mxu0 %v2290
  %4533 = vmatprep.subr.bf16.mxu0 %v2293
  %4534 = vmatpush1.bf16.msra.mxu0 %v2292
  %4535 = vmatprep.subr.bf16.mxu0 %v2295
  %4536 = vmatpush1.bf16.msra.mxu0 %v2294
  %4537 = vmatprep.subr.bf16.mxu0 %v2297
  %4538 = vmatpush1.bf16.msra.mxu0 %v2296
  %4539 = vmatprep.subr.bf16.mxu0 %v2299
  %4540 = vmatpush1.bf16.msra.mxu0 %v2298
  %4541 = vmatprep.subr.bf16.mxu0 %v2301
  %4542 = vmatpush1.bf16.msra.mxu0 %v2300
  %4543 = vmatprep.subr.bf16.mxu0 %v2303
  %4544 = vmatpush1.bf16.msra.mxu0 %v2302
  %4545 = vmatprep.subr.bf16.mxu0 %v2305
  %4546 = vmatpush1.bf16.msra.mxu0 %v2304
  %4547 = vmatprep.subr.bf16.mxu0 %v2307
  %4548 = vmatpush1.bf16.msra.mxu0 %v2306
  %4549 = vmatprep.subr.bf16.mxu0 %v2309
  %4550 = vmatpush1.bf16.msra.mxu0 %v2308
  %4551 = vmatprep.subr.bf16.mxu0 %v2311
  %4552 = vmatpush1.bf16.msra.mxu0 %v2310
  %4553 = vmatprep.subr.bf16.mxu0 %v2313
  %4554 = vmatpush1.bf16.msra.mxu0 %v2312
  %4555 = vmatprep.subr.bf16.mxu0 %v2315
  %4556 = vmatpush1.bf16.msra.mxu0 %v2314
  %4557 = vmatprep.subr.bf16.mxu0 %v2317
  %4558 = vmatpush1.bf16.msra.mxu0 %v2316
  %4559 = vmatprep.subr.bf16.mxu0 %v2319
  %4560 = vmatpush1.bf16.msra.mxu0 %v2318
  %4561 = vmatprep.mubr.bf16.mxu0 %v3908
  %4562 = vmatmul.mubr.bf16.gmra.mrb[0].mxu0 %v3907
  %v4563 = vpop.f32.mrb[0].mxu0
  %v4564 = vadd.f32 %v4503, %v4563
  %v4565 = vpop.f32.mrb[0].mxu0
  %v4566 = vadd.f32 %v4505, %v4565
  %v4567 = vpop.f32.mrb[0].mxu0
  %v4568 = vadd.f32 %v4507, %v4567
  %v4569 = vpop.f32.mrb[0].mxu0
  %v4570 = vadd.f32 %v4509, %v4569
  %4571 = vmatprep.mubr.bf16.mxu0 %v3933
  %4572 = vmatmul.mubr.bf16.gmra.mrb[0].mxu0 %v3932
  %v4573 = vpop.f32.mrb[0].mxu0
  %v4574 = vadd.f32 %v4513, %v4573
  %v4575 = vpop.f32.mrb[0].mxu0
  %v4576 = vadd.f32 %v4515, %v4575
  %v4577 = vpop.f32.mrb[0].mxu0
  %v4578 = vadd.f32 %v4517, %v4577
  %v4579 = vpop.f32.mrb[0].mxu0
  %v4580 = vadd.f32 %v4519, %v4579
  %4581 = vmatprep.mubr.bf16.mxu0 %v3958
  %4582 = vmatmul.mubr.bf16.gmra.mrb[0].mxu0 %v3957
  %v4583 = vpop.f32.mrb[0].mxu0
  %v4584 = vadd.f32 %v4523, %v4583
  %v4585 = vpop.f32.mrb[0].mxu0
  %v4586 = vadd.f32 %v4525, %v4585
  %v4587 = vpop.f32.mrb[0].mxu0
  %v4588 = vpop.f32.mrb[0].mxu0
  %4589 = vdwg.mxu0
  %4590 = vmatprep.subr.bf16.mxu0 %v2321
  %4591 = vmatpush1.bf16.msra.mxu0 %v2320
  %4592 = vmatprep.subr.bf16.mxu0 %v2323
  %4593 = vmatpush1.bf16.msra.mxu0 %v2322
  %4594 = vmatprep.subr.bf16.mxu0 %v2325
  %4595 = vmatpush1.bf16.msra.mxu0 %v2324
  %4596 = vmatprep.subr.bf16.mxu0 %v2327
  %4597 = vmatpush1.bf16.msra.mxu0 %v2326
  %4598 = vmatprep.subr.bf16.mxu0 %v2329
  %4599 = vmatpush1.bf16.msra.mxu0 %v2328
  %4600 = vmatprep.subr.bf16.mxu0 %v2331
  %4601 = vmatpush1.bf16.msra.mxu0 %v2330
  %4602 = vmatprep.subr.bf16.mxu0 %v2333
  %4603 = vmatpush1.bf16.msra.mxu0 %v2332
  %4604 = vmatprep.subr.bf16.mxu0 %v2335
  %4605 = vmatpush1.bf16.msra.mxu0 %v2334
  %4606 = vmatprep.subr.bf16.mxu0 %v2337
  %4607 = vmatpush1.bf16.msra.mxu0 %v2336
  %4608 = vmatprep.subr.bf16.mxu0 %v2339
  %4609 = vmatpush1.bf16.msra.mxu0 %v2338
  %4610 = vmatprep.subr.bf16.mxu0 %v2341
  %4611 = vmatpush1.bf16.msra.mxu0 %v2340
  %4612 = vmatprep.subr.bf16.mxu0 %v2343
  %4613 = vmatpush1.bf16.msra.mxu0 %v2342
  %4614 = vmatprep.subr.bf16.mxu0 %v2345
  %4615 = vmatpush1.bf16.msra.mxu0 %v2344
  %4616 = vmatprep.subr.bf16.mxu0 %v2347
  %4617 = vmatpush1.bf16.msra.mxu0 %v2346
  %4618 = vmatprep.subr.bf16.mxu0 %v2349
  %4619 = vmatpush1.bf16.msra.mxu0 %v2348
  %4620 = vmatprep.subr.bf16.mxu0 %v2351
  %4621 = vmatpush1.bf16.msra.mxu0 %v2350
  %4622 = vmatprep.mubr.bf16.mxu0 %v3910
  %4623 = vmatmul.mubr.bf16.gmra.mrb[0].mxu0 %v3909
  %v4624 = vpop.f32.mrb[0].mxu0
  %v4625 = vadd.f32 %v4564, %v4624
  %v4626 = vpop.f32.mrb[0].mxu0
  %v4627 = vadd.f32 %v4566, %v4626
  %v4628 = vpop.f32.mrb[0].mxu0
  %v4629 = vadd.f32 %v4568, %v4628
  %v4630 = vpop.f32.mrb[0].mxu0
  %v4631 = vadd.f32 %v4570, %v4630
  %4632 = vmatprep.mubr.bf16.mxu0 %v3935
  %4633 = vmatmul.mubr.bf16.gmra.mrb[0].mxu0 %v3934
  %v4634 = vpop.f32.mrb[0].mxu0
  %v4635 = vadd.f32 %v4574, %v4634
  %v4636 = vpop.f32.mrb[0].mxu0
  %v4637 = vadd.f32 %v4576, %v4636
  %v4638 = vpop.f32.mrb[0].mxu0
  %v4639 = vadd.f32 %v4578, %v4638
  %v4640 = vpop.f32.mrb[0].mxu0
  %v4641 = vadd.f32 %v4580, %v4640
  %4642 = vmatprep.mubr.bf16.mxu0 %v3960
  %4643 = vmatmul.mubr.bf16.gmra.mrb[0].mxu0 %v3959
  %v4644 = vpop.f32.mrb[0].mxu0
  %v4645 = vadd.f32 %v4584, %v4644
  %v4646 = vpop.f32.mrb[0].mxu0
  %v4647 = vadd.f32 %v4586, %v4646
  %v4648 = vpop.f32.mrb[0].mxu0
  %v4649 = vpop.f32.mrb[0].mxu0
  %4650 = vdwg.mxu0
  %4651 = vmatprep.subr.bf16.mxu0 %v2353
  %4652 = vmatpush1.bf16.msra.mxu0 %v2352
  %4653 = vmatprep.subr.bf16.mxu0 %v2355
  %4654 = vmatpush1.bf16.msra.mxu0 %v2354
  %4655 = vmatprep.subr.bf16.mxu0 %v2357
  %4656 = vmatpush1.bf16.msra.mxu0 %v2356
  %4657 = vmatprep.subr.bf16.mxu0 %v2359
  %4658 = vmatpush1.bf16.msra.mxu0 %v2358
  %4659 = vmatprep.subr.bf16.mxu0 %v2361
  %4660 = vmatpush1.bf16.msra.mxu0 %v2360
  %4661 = vmatprep.subr.bf16.mxu0 %v2363
  %4662 = vmatpush1.bf16.msra.mxu0 %v2362
  %4663 = vmatprep.subr.bf16.mxu0 %v2365
  %4664 = vmatpush1.bf16.msra.mxu0 %v2364
  %4665 = vmatprep.subr.bf16.mxu0 %v2367
  %4666 = vmatpush1.bf16.msra.mxu0 %v2366
  %4667 = vmatprep.subr.bf16.mxu0 %v2369
  %4668 = vmatpush1.bf16.msra.mxu0 %v2368
  %4669 = vmatprep.subr.bf16.mxu0 %v2371
  %4670 = vmatpush1.bf16.msra.mxu0 %v2370
  %4671 = vmatprep.subr.bf16.mxu0 %v2373
  %4672 = vmatpush1.bf16.msra.mxu0 %v2372
  %4673 = vmatprep.subr.bf16.mxu0 %v2375
  %4674 = vmatpush1.bf16.msra.mxu0 %v2374
  %4675 = vmatprep.subr.bf16.mxu0 %v2377
  %4676 = vmatpush1.bf16.msra.mxu0 %v2376
  %4677 = vmatprep.subr.bf16.mxu0 %v2379
  %4678 = vmatpush1.bf16.msra.mxu0 %v2378
  %4679 = vmatprep.subr.bf16.mxu0 %v2381
  %4680 = vmatpush1.bf16.msra.mxu0 %v2380
  %4681 = vmatprep.subr.bf16.mxu0 %v2383
  %4682 = vmatpush1.bf16.msra.mxu0 %v2382
  %4683 = vmatprep.mubr.bf16.mxu0 %v3912
  %4684 = vmatmul.mubr.bf16.gmra.mrb[0].mxu0 %v3911
  %v4685 = vpop.f32.mrb[0].mxu0
  %v4686 = vadd.f32 %v4625, %v4685
  %v4687 = vpop.f32.mrb[0].mxu0
  %v4688 = vadd.f32 %v4627, %v4687
  %v4689 = vpop.f32.mrb[0].mxu0
  %v4690 = vadd.f32 %v4629, %v4689
  %v4691 = vpop.f32.mrb[0].mxu0
  %v4692 = vadd.f32 %v4631, %v4691
  %4693 = vmatprep.mubr.bf16.mxu0 %v3937
  %4694 = vmatmul.mubr.bf16.gmra.mrb[0].mxu0 %v3936
  %v4695 = vpop.f32.mrb[0].mxu0
  %v4696 = vadd.f32 %v4635, %v4695
  %v4697 = vpop.f32.mrb[0].mxu0
  %v4698 = vadd.f32 %v4637, %v4697
  %v4699 = vpop.f32.mrb[0].mxu0
  %v4700 = vadd.f32 %v4639, %v4699
  %v4701 = vpop.f32.mrb[0].mxu0
  %v4702 = vadd.f32 %v4641, %v4701
  %4703 = vmatprep.mubr.bf16.mxu0 %v3962
  %4704 = vmatmul.mubr.bf16.gmra.mrb[0].mxu0 %v3961
  %v4705 = vpop.f32.mrb[0].mxu0
  %v4706 = vadd.f32 %v4645, %v4705
  %v4707 = vpop.f32.mrb[0].mxu0
  %v4708 = vadd.f32 %v4647, %v4707
  %v4709 = vpop.f32.mrb[0].mxu0
  %v4710 = vpop.f32.mrb[0].mxu0
  %4711 = vdwg.mxu0
  %4712 = vmatprep.subr.bf16.mxu0 %v2385
  %4713 = vmatpush1.bf16.msra.mxu0 %v2384
  %4714 = vmatprep.subr.bf16.mxu0 %v2387
  %4715 = vmatpush1.bf16.msra.mxu0 %v2386
  %4716 = vmatprep.subr.bf16.mxu0 %v2389
  %4717 = vmatpush1.bf16.msra.mxu0 %v2388
  %4718 = vmatprep.subr.bf16.mxu0 %v2391
  %4719 = vmatpush1.bf16.msra.mxu0 %v2390
  %4720 = vmatprep.subr.bf16.mxu0 %v2393
  %4721 = vmatpush1.bf16.msra.mxu0 %v2392
  %4722 = vmatprep.subr.bf16.mxu0 %v2395
  %4723 = vmatpush1.bf16.msra.mxu0 %v2394
  %4724 = vmatprep.subr.bf16.mxu0 %v2397
  %4725 = vmatpush1.bf16.msra.mxu0 %v2396
  %4726 = vmatprep.subr.bf16.mxu0 %v2399
  %4727 = vmatpush1.bf16.msra.mxu0 %v2398
  %4728 = vmatprep.subr.bf16.mxu0 %v2401
  %4729 = vmatpush1.bf16.msra.mxu0 %v2400
  %4730 = vmatprep.subr.bf16.mxu0 %v2403
  %4731 = vmatpush1.bf16.msra.mxu0 %v2402
  %4732 = vmatprep.subr.bf16.mxu0 %v2405
  %4733 = vmatpush1.bf16.msra.mxu0 %v2404
  %4734 = vmatprep.subr.bf16.mxu0 %v2407
  %4735 = vmatpush1.bf16.msra.mxu0 %v2406
  %4736 = vmatprep.subr.bf16.mxu0 %v2409
  %4737 = vmatpush1.bf16.msra.mxu0 %v2408
  %4738 = vmatprep.subr.bf16.mxu0 %v2411
  %4739 = vmatpush1.bf16.msra.mxu0 %v2410
  %4740 = vmatprep.subr.bf16.mxu0 %v2413
  %4741 = vmatpush1.bf16.msra.mxu0 %v2412
  %4742 = vmatprep.subr.bf16.mxu0 %v2415
  %4743 = vmatpush1.bf16.msra.mxu0 %v2414
  %4744 = vmatprep.mubr.bf16.mxu0 %v3914
  %4745 = vmatmul.mubr.bf16.gmra.mrb[0].mxu0 %v3913
  %v4746 = vpop.f32.mrb[0].mxu0
  %v4747 = vadd.f32 %v4686, %v4746
  %v4748 = vpop.f32.mrb[0].mxu0
  %v4749 = vadd.f32 %v4688, %v4748
  %v4750 = vpop.f32.mrb[0].mxu0
  %v4751 = vadd.f32 %v4690, %v4750
  %v4752 = vpop.f32.mrb[0].mxu0
  %v4753 = vadd.f32 %v4692, %v4752
  %4754 = vmatprep.mubr.bf16.mxu0 %v3939
  %4755 = vmatmul.mubr.bf16.gmra.mrb[0].mxu0 %v3938
  %v4756 = vpop.f32.mrb[0].mxu0
  %v4757 = vadd.f32 %v4696, %v4756
  %v4758 = vpop.f32.mrb[0].mxu0
  %v4759 = vadd.f32 %v4698, %v4758
  %v4760 = vpop.f32.mrb[0].mxu0
  %v4761 = vadd.f32 %v4700, %v4760
  %v4762 = vpop.f32.mrb[0].mxu0
  %v4763 = vadd.f32 %v4702, %v4762
  %4764 = vmatprep.mubr.bf16.mxu0 %v3964
  %4765 = vmatmul.mubr.bf16.gmra.mrb[0].mxu0 %v3963
  %v4766 = vpop.f32.mrb[0].mxu0
  %v4767 = vadd.f32 %v4706, %v4766
  %v4768 = vpop.f32.mrb[0].mxu0
  %v4769 = vadd.f32 %v4708, %v4768
  %v4770 = vpop.f32.mrb[0].mxu0
  %v4771 = vpop.f32.mrb[0].mxu0
  %4772 = vdwg.mxu0
  %4773 = vmatprep.subr.bf16.mxu0 %v2417
  %4774 = vmatpush1.bf16.msra.mxu0 %v2416
  %4775 = vmatprep.subr.bf16.mxu0 %v2419
  %4776 = vmatpush1.bf16.msra.mxu0 %v2418
  %4777 = vmatprep.subr.bf16.mxu0 %v2421
  %4778 = vmatpush1.bf16.msra.mxu0 %v2420
  %4779 = vmatprep.subr.bf16.mxu0 %v2423
  %4780 = vmatpush1.bf16.msra.mxu0 %v2422
  %4781 = vmatprep.subr.bf16.mxu0 %v2425
  %4782 = vmatpush1.bf16.msra.mxu0 %v2424
  %4783 = vmatprep.subr.bf16.mxu0 %v2427
  %4784 = vmatpush1.bf16.msra.mxu0 %v2426
  %4785 = vmatprep.subr.bf16.mxu0 %v2429
  %4786 = vmatpush1.bf16.msra.mxu0 %v2428
  %4787 = vmatprep.subr.bf16.mxu0 %v2431
  %4788 = vmatpush1.bf16.msra.mxu0 %v2430
  %4789 = vmatprep.subr.bf16.mxu0 0
  %4790 = vmatpush1.bf16.msra.mxu0 0
  %4791 = vmatprep.subr.bf16.mxu0 0
  %4792 = vmatpush1.bf16.msra.mxu0 0
  %4793 = vmatprep.subr.bf16.mxu0 0
  %4794 = vmatpush1.bf16.msra.mxu0 0
  %4795 = vmatprep.subr.bf16.mxu0 0
  %4796 = vmatpush1.bf16.msra.mxu0 0
  %4797 = vmatprep.subr.bf16.mxu0 0
  %4798 = vmatpush1.bf16.msra.mxu0 0
  %4799 = vmatprep.subr.bf16.mxu0 0
  %4800 = vmatpush1.bf16.msra.mxu0 0
  %4801 = vmatprep.subr.bf16.mxu0 0
  %4802 = vmatpush1.bf16.msra.mxu0 0
  %4803 = vmatprep.subr.bf16.mxu0 0
  %4804 = vmatpush1.bf16.msra.mxu0 0
  %4805 = vmatprep.mubr.bf16.mxu0 0
  %4806 = vmatmul.mubr.bf16.gmra.mrb[0].mxu0 %v3915
  %v4807 = vpop.f32.mrb[0].mxu0
  %v4808 = vadd.f32 %v4747, %v4807
  %v4809 = vpop.f32.mrb[0].mxu0
  %v4810 = vadd.f32 %v4749, %v4809
  %v4811 = vpop.f32.mrb[0].mxu0
  %v4812 = vadd.f32 %v4751, %v4811
  %v4813 = vpop.f32.mrb[0].mxu0
  %v4814 = vadd.f32 %v4753, %v4813
  %4815 = vmatprep.mubr.bf16.mxu0 0
  %4816 = vmatmul.mubr.bf16.gmra.mrb[0].mxu0 %v3940
  %v4817 = vpop.f32.mrb[0].mxu0
  %v4818 = vadd.f32 %v4757, %v4817
  %v4819 = vpop.f32.mrb[0].mxu0
  %v4820 = vadd.f32 %v4759, %v4819
  %v4821 = vpop.f32.mrb[0].mxu0
  %v4822 = vadd.f32 %v4761, %v4821
  %v4823 = vpop.f32.mrb[0].mxu0
  %v4824 = vadd.f32 %v4763, %v4823
  %4825 = vmatprep.mubr.bf16.mxu0 0
  %4826 = vmatmul.mubr.bf16.gmra.mrb[0].mxu0 %v3965
  %v4827 = vpop.f32.mrb[0].mxu0
  %v4828 = vadd.f32 %v4767, %v4827
  %v4829 = vpop.f32.mrb[0].mxu0
  %v4830 = vadd.f32 %v4769, %v4829
  %v4831 = vpop.f32.mrb[0].mxu0
  %v4832 = vpop.f32.mrb[0].mxu0
  %4833 = vdwg.mxu0
  %v4834 = vmax.f32 %v4808, 0.0
  %v4835 = vmax.f32 %v4810, 0.0
  %v4836 = vmax.f32 %v4812, 0.0
  %v4837 = vmax.f32 %v4814, 0.0
  %v4838 = vmax.f32 %v4818, 0.0
  %v4839 = vmax.f32 %v4820, 0.0
  %v4840 = vmax.f32 %v4822, 0.0
  %v4841 = vmax.f32 %v4824, 0.0
  %v4842 = vmax.f32 %v4828, 0.0
  %v4843 = vmax.f32 %v4830, 0.0
  %v4844 = vmax.f32 %v3625, %v4834
  %v4845 = vmax.f32 %v3626, %v4835
  %v4846 = vmax.f32 %v3627, %v4836
  %v4847 = vmax.f32 %v3628, %v4837
  %v4848 = vmax.f32 %v3629, %v4838
  %v4849 = vmax.f32 %v3630, %v4839
  %v4850 = vmax.f32 %v3631, %v4840
  %v4851 = vmax.f32 %v3632, %v4841
  %v4852 = vmax.f32 %v3633, %v4842
  %v4853 = vmax.f32 %v3634, %v4843
  %s4854 = scalar_lea.vmem %s0, 1000
  %v4855 = vld [vmem:[%s4854] sm:$0xff]
  %v4856 = vld [vmem:[%s4854 + $0x8] sm:$0xff]
  %v4857 = vld [vmem:[%s4854 + $0x10] sm:$0xff]
  %v4858 = vld [vmem:[%s4854 + $0x18] sm:$0xff]
  %v4859 = vld [vmem:[%s4854 + $0x20] sm:$0xff]
  %v4860 = vld [vmem:[%s4854 + $0x28] sm:$0xff]
  %v4861 = vld [vmem:[%s4854 + $0x30] sm:$0xff]
  %v4862 = vld [vmem:[%s4854 + $0x38] sm:$0xff]
  %v4863 = vld [vmem:[%s4854 + $0x40] sm:$0xff]
  %v4864 = vld [vmem:[%s4854 + $0x48] sm:$0xff]
  %v4865 = vld [vmem:[%s4854 + $0x50] sm:$0xff]
  %v4866 = vld [vmem:[%s4854 + $0x58] sm:$0xff]
  %v4867 = vld [vmem:[%s4854 + $0x60] sm:$0xf]
  %v4868 = vld [vmem:[%s4854 + $0x64] sm:$0xff]
  %v4869 = vld [vmem:[%s4854 + $0x6c] sm:$0xff]
  %v4870 = vld [vmem:[%s4854 + $0x74] sm:$0xff]
  %v4871 = vld [vmem:[%s4854 + $0x7c] sm:$0xff]
  %v4872 = vld [vmem:[%s4854 + $0x84] sm:$0xff]
  %v4873 = vld [vmem:[%s4854 + $0x8c] sm:$0xff]
  %v4874 = vld [vmem:[%s4854 + $0x94] sm:$0xff]
  %v4875 = vld [vmem:[%s4854 + $0x9c] sm:$0xff]
  %v4876 = vld [vmem:[%s4854 + $0xa4] sm:$0xff]
  %v4877 = vld [vmem:[%s4854 + $0xac] sm:$0xff]
  %v4878 = vld [vmem:[%s4854 + $0xb4] sm:$0xff]
  %v4879 = vld [vmem:[%s4854 + $0xbc] sm:$0xff]
  %v4880 = vld [vmem:[%s4854 + $0xc4] sm:$0xf]
  %v4881 = vld [vmem:[%s4854 + $0xc8] sm:$0xff]
  %v4882 = vld [vmem:[%s4854 + $0xd0] sm:$0xff]
  %v4883 = vld [vmem:[%s4854 + $0xd8] sm:$0xff]
  %v4884 = vld [vmem:[%s4854 + $0xe0] sm:$0xff]
  %v4885 = vld [vmem:[%s4854 + $0xe8] sm:$0xff]
  %v4886 = vld [vmem:[%s4854 + $0xf0] sm:$0xff]
  %v4887 = vld [vmem:[%s4854 + $0xf8] sm:$0xff]
  %v4888 = vld [vmem:[%s4854 + $0x100] sm:$0xff]
  %v4889 = vld [vmem:[%s4854 + $0x108] sm:$0xff]
  %v4890 = vld [vmem:[%s4854 + $0x110] sm:$0xff]
  %v4891 = vld [vmem:[%s4854 + $0x118] sm:$0xff]
  %v4892 = vld [vmem:[%s4854 + $0x120] sm:$0xff]
  %v4893 = vld [vmem:[%s4854 + $0x128] sm:$0xf]
  %v4894 = vld [vmem:[%s4854 + $0x12c] sm:$0xff]
  %v4895 = vld [vmem:[%s4854 + $0x134] sm:$0xff]
  %v4896 = vld [vmem:[%s4854 + $0x13c] sm:$0xff]
  %v4897 = vld [vmem:[%s4854 + $0x144] sm:$0xff]
  %v4898 = vld [vmem:[%s4854 + $0x14c] sm:$0xff]
  %v4899 = vld [vmem:[%s4854 + $0x154] sm:$0xff]
  %v4900 = vld [vmem:[%s4854 + $0x15c] sm:$0xff]
  %v4901 = vld [vmem:[%s4854 + $0x164] sm:$0xff]
  %v4902 = vld [vmem:[%s4854 + $0x16c] sm:$0xff]
  %v4903 = vld [vmem:[%s4854 + $0x174] sm:$0xff]
  %v4904 = vld [vmem:[%s4854 + $0x17c] sm:$0xff]
  %v4905 = vld [vmem:[%s4854 + $0x184] sm:$0xff]
  %v4906 = vld [vmem:[%s4854 + $0x18c] sm:$0xf]
  %v4907 = vld [vmem:[%s4854 + $0x190] sm:$0x33]
  %v4908 = vld [vmem:[%s4854 + $0x198] sm:$0x33]
  %v4909 = vld [vmem:[%s4854 + $0x1a0] sm:$0x33]
  %v4910 = vld [vmem:[%s4854 + $0x1a8] sm:$0x33]
  %v4911 = vld [vmem:[%s4854 + $0x1b0] sm:$0x33]
  %v4912 = vld [vmem:[%s4854 + $0x1b8] sm:$0x33]
  %v4913 = vld [vmem:[%s4854 + $0x1c0] sm:$0x33]
  %v4914 = vld [vmem:[%s4854 + $0x1c8] sm:$0x33]
  %v4915 = vld [vmem:[%s4854 + $0x1d0] sm:$0x33]
  %v4916 = vld [vmem:[%s4854 + $0x1d8] sm:$0x33]
  %v4917 = vld [vmem:[%s4854 + $0x1e0] sm:$0x33]
  %v4918 = vld [vmem:[%s4854 + $0x1e8] sm:$0x33]
  %v4919 = vld [vmem:[%s4854 + $0x1f0] sm:$0x3]
  %v4985 = vunpack.c.l.b16 %v4855
  %v4986 = vunpack.c.h.b16 %v4855
  %v4987 = vunpack.c.l.b16 %v4856
  %v4988 = vunpack.c.h.b16 %v4856
  %v4989 = vunpack.c.l.b16 %v4857
  %v4990 = vunpack.c.h.b16 %v4857
  %v4991 = vunpack.c.l.b16 %v4858
  %v4992 = vunpack.c.h.b16 %v4858
  %v4993 = vunpack.c.l.b16 %v4859
  %v4994 = vunpack.c.h.b16 %v4859
  %v4995 = vunpack.c.l.b16 %v4860
  %v4996 = vunpack.c.h.b16 %v4860
  %v4997 = vunpack.c.l.b16 %v4861
  %v4998 = vunpack.c.h.b16 %v4861
  %v4999 = vunpack.c.l.b16 %v4862
  %v5000 = vunpack.c.h.b16 %v4862
  %v5001 = vunpack.c.l.b16 %v4863
  %v5002 = vunpack.c.h.b16 %v4863
  %v5003 = vunpack.c.l.b16 %v4864
  %v5004 = vunpack.c.h.b16 %v4864
  %v5005 = vunpack.c.l.b16 %v4865
  %v5006 = vunpack.c.h.b16 %v4865
  %v5007 = vunpack.c.l.b16 %v4866
  %v5008 = vunpack.c.h.b16 %v4866
  %v5009 = vunpack.c.l.b16 %v4867
  %v5010 = vunpack.c.l.b16 %v4868
  %v5011 = vunpack.c.h.b16 %v4868
  %v5012 = vunpack.c.l.b16 %v4869
  %v5013 = vunpack.c.h.b16 %v4869
  %v5014 = vunpack.c.l.b16 %v4870
  %v5015 = vunpack.c.h.b16 %v4870
  %v5016 = vunpack.c.l.b16 %v4871
  %v5017 = vunpack.c.h.b16 %v4871
  %v5018 = vunpack.c.l.b16 %v4872
  %v5019 = vunpack.c.h.b16 %v4872
  %v5020 = vunpack.c.l.b16 %v4873
  %v5021 = vunpack.c.h.b16 %v4873
  %v5022 = vunpack.c.l.b16 %v4874
  %v5023 = vunpack.c.h.b16 %v4874
  %v5024 = vunpack.c.l.b16 %v4875
  %v5025 = vunpack.c.h.b16 %v4875
  %v5026 = vunpack.c.l.b16 %v4876
  %v5027 = vunpack.c.h.b16 %v4876
  %v5028 = vunpack.c.l.b16 %v4877
  %v5029 = vunpack.c.h.b16 %v4877
  %v5030 = vunpack.c.l.b16 %v4878
  %v5031 = vunpack.c.h.b16 %v4878
  %v5032 = vunpack.c.l.b16 %v4879
  %v5033 = vunpack.c.h.b16 %v4879
  %v5034 = vunpack.c.l.b16 %v4880
  %v5035 = vunpack.c.l.b16 %v4881
  %v5036 = vunpack.c.h.b16 %v4881
  %v5037 = vunpack.c.l.b16 %v4882
  %v5038 = vunpack.c.h.b16 %v4882
  %v5039 = vunpack.c.l.b16 %v4883
  %v5040 = vunpack.c.h.b16 %v4883
  %v5041 = vunpack.c.l.b16 %v4884
  %v5042 = vunpack.c.h.b16 %v4884
  %v5043 = vunpack.c.l.b16 %v4885
  %v5044 = vunpack.c.h.b16 %v4885
  %v5045 = vunpack.c.l.b16 %v4886
  %v5046 = vunpack.c.h.b16 %v4886
  %v5047 = vunpack.c.l.b16 %v4887
  %v5048 = vunpack.c.h.b16 %v4887
  %v5049 = vunpack.c.l.b16 %v4888
  %v5050 = vunpack.c.h.b16 %v4888
  %v5051 = vunpack.c.l.b16 %v4889
  %v5052 = vunpack.c.h.b16 %v4889
  %v5053 = vunpack.c.l.b16 %v4890
  %v5054 = vunpack.c.h.b16 %v4890
  %v5055 = vunpack.c.l.b16 %v4891
  %v5056 = vunpack.c.h.b16 %v4891
  %v5057 = vunpack.c.l.b16 %v4892
  %v5058 = vunpack.c.h.b16 %v4892
  %v5059 = vunpack.c.l.b16 %v4893
  %v5060 = vunpack.c.l.b16 %v4894
  %v5061 = vunpack.c.h.b16 %v4894
  %v5062 = vunpack.c.l.b16 %v4895
  %v5063 = vunpack.c.h.b16 %v4895
  %v5064 = vunpack.c.l.b16 %v4896
  %v5065 = vunpack.c.h.b16 %v4896
  %v5066 = vunpack.c.l.b16 %v4897
  %v5067 = vunpack.c.h.b16 %v4897
  %v5068 = vunpack.c.l.b16 %v4898
  %v5069 = vunpack.c.h.b16 %v4898
  %v5070 = vunpack.c.l.b16 %v4899
  %v5071 = vunpack.c.h.b16 %v4899
  %v5072 = vunpack.c.l.b16 %v4900
  %v5073 = vunpack.c.h.b16 %v4900
  %v5074 = vunpack.c.l.b16 %v4901
  %v5075 = vunpack.c.h.b16 %v4901
  %v5076 = vunpack.c.l.b16 %v4902
  %v5077 = vunpack.c.h.b16 %v4902
  %v5078 = vunpack.c.l.b16 %v4903
  %v5079 = vunpack.c.h.b16 %v4903
  %v5080 = vunpack.c.l.b16 %v4904
  %v5081 = vunpack.c.h.b16 %v4904
  %v5082 = vunpack.c.l.b16 %v4905
  %v5083 = vunpack.c.h.b16 %v4905
  %v5084 = vunpack.c.l.b16 %v4906
  %v5085 = vunpack.c.l.b16 %v4907
  %v5086 = vunpack.c.h.b16 %v4907
  %v5087 = vunpack.c.l.b16 %v4908
  %v5088 = vunpack.c.h.b16 %v4908
  %v5089 = vunpack.c.l.b16 %v4909
  %v5090 = vunpack.c.h.b16 %v4909
  %v5091 = vunpack.c.l.b16 %v4910
  %v5092 = vunpack.c.h.b16 %v4910
  %v5093 = vunpack.c.l.b16 %v4911
  %v5094 = vunpack.c.h.b16 %v4911
  %v5095 = vunpack.c.l.b16 %v4912
  %v5096 = vunpack.c.h.b16 %v4912
  %v5097 = vunpack.c.l.b16 %v4913
  %v5098 = vunpack.c.h.b16 %v4913
  %v5099 = vunpack.c.l.b16 %v4914
  %v5100 = vunpack.c.h.b16 %v4914
  %v5101 = vunpack.c.l.b16 %v4915
  %v5102 = vunpack.c.h.b16 %v4915
  %v5103 = vunpack.c.l.b16 %v4916
  %v5104 = vunpack.c.h.b16 %v4916
  %v5105 = vunpack.c.l.b16 %v4917
  %v5106 = vunpack.c.h.b16 %v4917
  %v5107 = vunpack.c.l.b16 %v4918
  %v5108 = vunpack.c.h.b16 %v4918
  %v5109 = vunpack.c.l.b16 %v4919
  %v5110 = vpack.c.b16 %v5010, %v4985
  %v5111 = vpack.c.b16 %v5011, %v4986
  %v5112 = vpack.c.b16 %v5012, %v4987
  %v5113 = vpack.c.b16 %v5013, %v4988
  %v5114 = vpack.c.b16 %v5014, %v4989
  %v5115 = vpack.c.b16 %v5015, %v4990
  %v5116 = vpack.c.b16 %v5016, %v4991
  %v5117 = vpack.c.b16 %v5017, %v4992
  %v5118 = vpack.c.b16 %v5018, %v4993
  %v5119 = vpack.c.b16 %v5019, %v4994
  %v5120 = vpack.c.b16 %v5020, %v4995
  %v5121 = vpack.c.b16 %v5021, %v4996
  %v5122 = vpack.c.b16 %v5022, %v4997
  %v5123 = vpack.c.b16 %v5023, %v4998
  %v5124 = vpack.c.b16 %v5024, %v4999
  %v5125 = vpack.c.b16 %v5025, %v5000
  %v5126 = vpack.c.b16 %v5026, %v5001
  %v5127 = vpack.c.b16 %v5027, %v5002
  %v5128 = vpack.c.b16 %v5028, %v5003
  %v5129 = vpack.c.b16 %v5029, %v5004
  %v5130 = vpack.c.b16 %v5030, %v5005
  %v5131 = vpack.c.b16 %v5031, %v5006
  %v5132 = vpack.c.b16 %v5032, %v5007
  %v5133 = vpack.c.b16 %v5033, %v5008
  %v5134 = vpack.c.b16 %v5034, %v5009
  %v5135 = vpack.c.b16 %v5060, %v5035
  %v5136 = vpack.c.b16 %v5061, %v5036
  %v5137 = vpack.c.b16 %v5062, %v5037
  %v5138 = vpack.c.b16 %v5063, %v5038
  %v5139 = vpack.c.b16 %v5064, %v5039
  %v5140 = vpack.c.b16 %v5065, %v5040
  %v5141 = vpack.c.b16 %v5066, %v5041
  %v5142 = vpack.c.b16 %v5067, %v5042
  %v5143 = vpack.c.b16 %v5068, %v5043
  %v5144 = vpack.c.b16 %v5069, %v5044
  %v5145 = vpack.c.b16 %v5070, %v5045
  %v5146 = vpack.c.b16 %v5071, %v5046
  %v5147 = vpack.c.b16 %v5072, %v5047
  %v5148 = vpack.c.b16 %v5073, %v5048
  %v5149 = vpack.c.b16 %v5074, %v5049
  %v5150 = vpack.c.b16 %v5075, %v5050
  %v5151 = vpack.c.b16 %v5076, %v5051
  %v5152 = vpack.c.b16 %v5077, %v5052
  %v5153 = vpack.c.b16 %v5078, %v5053
  %v5154 = vpack.c.b16 %v5079, %v5054
  %v5155 = vpack.c.b16 %v5080, %v5055
  %v5156 = vpack.c.b16 %v5081, %v5056
  %v5157 = vpack.c.b16 %v5082, %v5057
  %v5158 = vpack.c.b16 %v5083, %v5058
  %v5159 = vpack.c.b16 %v5084, %v5059
  %v5160 = vpack.c.b16 %v5085, %v5085
  %v5161 = vpack.c.b16 %v5086, %v5086
  %v5162 = vpack.c.b16 %v5087, %v5087
  %v5163 = vpack.c.b16 %v5088, %v5088
  %v5164 = vpack.c.b16 %v5089, %v5089
  %v5165 = vpack.c.b16 %v5090, %v5090
  %v5166 = vpack.c.b16 %v5091, %v5091
  %v5167 = vpack.c.b16 %v5092, %v5092
  %v5168 = vpack.c.b16 %v5093, %v5093
  %v5169 = vpack.c.b16 %v5094, %v5094
  %v5170 = vpack.c.b16 %v5095, %v5095
  %v5171 = vpack.c.b16 %v5096, %v5096
  %v5172 = vpack.c.b16 %v5097, %v5097
  %v5173 = vpack.c.b16 %v5098, %v5098
  %v5174 = vpack.c.b16 %v5099, %v5099
  %v5175 = vpack.c.b16 %v5100, %v5100
  %v5176 = vpack.c.b16 %v5101, %v5101
  %v5177 = vpack.c.b16 %v5102, %v5102
  %v5178 = vpack.c.b16 %v5103, %v5103
  %v5179 = vpack.c.b16 %v5104, %v5104
  %v5180 = vpack.c.b16 %v5105, %v5105
  %v5181 = vpack.c.b16 %v5106, %v5106
  %v5182 = vpack.c.b16 %v5107, %v5107
  %v5183 = vpack.c.b16 %v5108, %v5108
  %v5184 = vpack.c.b16 %v5109, %v5109
  %5260 = vmatprep.subr.bf16.mxu0 %v2033
  %5261 = vmatpush1.bf16.msra.mxu0 %v2032
  %5262 = vmatprep.subr.bf16.mxu0 %v2035
  %5263 = vmatpush1.bf16.msra.mxu0 %v2034
  %5264 = vmatprep.subr.bf16.mxu0 %v2037
  %5265 = vmatpush1.bf16.msra.mxu0 %v2036
  %5266 = vmatprep.subr.bf16.mxu0 %v2039
  %5267 = vmatpush1.bf16.msra.mxu0 %v2038
  %5268 = vmatprep.subr.bf16.mxu0 %v2041
  %5269 = vmatpush1.bf16.msra.mxu0 %v2040
  %5270 = vmatprep.subr.bf16.mxu0 %v2043
  %5271 = vmatpush1.bf16.msra.mxu0 %v2042
  %5272 = vmatprep.subr.bf16.mxu0 %v2045
  %5273 = vmatpush1.bf16.msra.mxu0 %v2044
  %5274 = vmatprep.subr.bf16.mxu0 %v2047
  %5275 = vmatpush1.bf16.msra.mxu0 %v2046
  %5276 = vmatprep.subr.bf16.mxu0 %v2049
  %5277 = vmatpush1.bf16.msra.mxu0 %v2048
  %5278 = vmatprep.subr.bf16.mxu0 %v2051
  %5279 = vmatpush1.bf16.msra.mxu0 %v2050
  %5280 = vmatprep.subr.bf16.mxu0 %v2053
  %5281 = vmatpush1.bf16.msra.mxu0 %v2052
  %5282 = vmatprep.subr.bf16.mxu0 %v2055
  %5283 = vmatpush1.bf16.msra.mxu0 %v2054
  %5284 = vmatprep.subr.bf16.mxu0 %v2057
  %5285 = vmatpush1.bf16.msra.mxu0 %v2056
  %5286 = vmatprep.subr.bf16.mxu0 %v2059
  %5287 = vmatpush1.bf16.msra.mxu0 %v2058
  %5288 = vmatprep.subr.bf16.mxu0 %v2061
  %5289 = vmatpush1.bf16.msra.mxu0 %v2060
  %5290 = vmatprep.subr.bf16.mxu0 %v2063
  %5291 = vmatpush1.bf16.msra.mxu0 %v2062
  %5292 = vmatprep.mubr.bf16.mxu0 %v5111
  %5293 = vmatmul.mubr.bf16.gmra.mrb[0].mxu0 %v5110
  %v5294 = vpop.f32.mrb[0].mxu0
  %v5295 = vadd.f32 %v485, %v5294
  %v5296 = vpop.f32.mrb[0].mxu0
  %v5297 = vadd.f32 %v489, %v5296
  %v5298 = vpop.f32.mrb[0].mxu0
  %v5299 = vadd.f32 %v485, %v5298
  %v5300 = vpop.f32.mrb[0].mxu0
  %v5301 = vadd.f32 %v489, %v5300
  %5302 = vmatprep.mubr.bf16.mxu0 %v5136
  %5303 = vmatmul.mubr.bf16.gmra.mrb[0].mxu0 %v5135
  %v5304 = vpop.f32.mrb[0].mxu0
  %v5305 = vadd.f32 %v485, %v5304
  %v5306 = vpop.f32.mrb[0].mxu0
  %v5307 = vadd.f32 %v489, %v5306
  %v5308 = vpop.f32.mrb[0].mxu0
  %v5309 = vadd.f32 %v485, %v5308
  %v5310 = vpop.f32.mrb[0].mxu0
  %v5311 = vadd.f32 %v489, %v5310
  %5312 = vmatprep.mubr.bf16.mxu0 %v5161
  %5313 = vmatmul.mubr.bf16.gmra.mrb[0].mxu0 %v5160
  %v5314 = vpop.f32.mrb[0].mxu0
  %v5315 = vadd.f32 %v485, %v5314
  %v5316 = vpop.f32.mrb[0].mxu0
  %v5317 = vadd.f32 %v489, %v5316
  %v5318 = vpop.f32.mrb[0].mxu0
  %v5319 = vpop.f32.mrb[0].mxu0
  %5320 = vdwg.mxu0
  %5321 = vmatprep.subr.bf16.mxu0 %v2065
  %5322 = vmatpush1.bf16.msra.mxu0 %v2064
  %5323 = vmatprep.subr.bf16.mxu0 %v2067
  %5324 = vmatpush1.bf16.msra.mxu0 %v2066
  %5325 = vmatprep.subr.bf16.mxu0 %v2069
  %5326 = vmatpush1.bf16.msra.mxu0 %v2068
  %5327 = vmatprep.subr.bf16.mxu0 %v2071
  %5328 = vmatpush1.bf16.msra.mxu0 %v2070
  %5329 = vmatprep.subr.bf16.mxu0 %v2073
  %5330 = vmatpush1.bf16.msra.mxu0 %v2072
  %5331 = vmatprep.subr.bf16.mxu0 %v2075
  %5332 = vmatpush1.bf16.msra.mxu0 %v2074
  %5333 = vmatprep.subr.bf16.mxu0 %v2077
  %5334 = vmatpush1.bf16.msra.mxu0 %v2076
  %5335 = vmatprep.subr.bf16.mxu0 %v2079
  %5336 = vmatpush1.bf16.msra.mxu0 %v2078
  %5337 = vmatprep.subr.bf16.mxu0 %v2081
  %5338 = vmatpush1.bf16.msra.mxu0 %v2080
  %5339 = vmatprep.subr.bf16.mxu0 %v2083
  %5340 = vmatpush1.bf16.msra.mxu0 %v2082
  %5341 = vmatprep.subr.bf16.mxu0 %v2085
  %5342 = vmatpush1.bf16.msra.mxu0 %v2084
  %5343 = vmatprep.subr.bf16.mxu0 %v2087
  %5344 = vmatpush1.bf16.msra.mxu0 %v2086
  %5345 = vmatprep.subr.bf16.mxu0 %v2089
  %5346 = vmatpush1.bf16.msra.mxu0 %v2088
  %5347 = vmatprep.subr.bf16.mxu0 %v2091
  %5348 = vmatpush1.bf16.msra.mxu0 %v2090
  %5349 = vmatprep.subr.bf16.mxu0 %v2093
  %5350 = vmatpush1.bf16.msra.mxu0 %v2092
  %5351 = vmatprep.subr.bf16.mxu0 %v2095
  %5352 = vmatpush1.bf16.msra.mxu0 %v2094
  %5353 = vmatprep.mubr.bf16.mxu0 %v5113
  %5354 = vmatmul.mubr.bf16.gmra.mrb[0].mxu0 %v5112
  %v5355 = vpop.f32.mrb[0].mxu0
  %v5356 = vadd.f32 %v5295, %v5355
  %v5357 = vpop.f32.mrb[0].mxu0
  %v5358 = vadd.f32 %v5297, %v5357
  %v5359 = vpop.f32.mrb[0].mxu0
  %v5360 = vadd.f32 %v5299, %v5359
  %v5361 = vpop.f32.mrb[0].mxu0
  %v5362 = vadd.f32 %v5301, %v5361
  %5363 = vmatprep.mubr.bf16.mxu0 %v5138
  %5364 = vmatmul.mubr.bf16.gmra.mrb[0].mxu0 %v5137
  %v5365 = vpop.f32.mrb[0].mxu0
  %v5366 = vadd.f32 %v5305, %v5365
  %v5367 = vpop.f32.mrb[0].mxu0
  %v5368 = vadd.f32 %v5307, %v5367
  %v5369 = vpop.f32.mrb[0].mxu0
  %v5370 = vadd.f32 %v5309, %v5369
  %v5371 = vpop.f32.mrb[0].mxu0
  %v5372 = vadd.f32 %v5311, %v5371
  %5373 = vmatprep.mubr.bf16.mxu0 %v5163
  %5374 = vmatmul.mubr.bf16.gmra.mrb[0].mxu0 %v5162
  %v5375 = vpop.f32.mrb[0].mxu0
  %v5376 = vadd.f32 %v5315, %v5375
  %v5377 = vpop.f32.mrb[0].mxu0
  %v5378 = vadd.f32 %v5317, %v5377
  %v5379 = vpop.f32.mrb[0].mxu0
  %v5380 = vpop.f32.mrb[0].mxu0
  %5381 = vdwg.mxu0
  %5382 = vmatprep.subr.bf16.mxu0 %v2097
  %5383 = vmatpush1.bf16.msra.mxu0 %v2096
  %5384 = vmatprep.subr.bf16.mxu0 %v2099
  %5385 = vmatpush1.bf16.msra.mxu0 %v2098
  %5386 = vmatprep.subr.bf16.mxu0 %v2101
  %5387 = vmatpush1.bf16.msra.mxu0 %v2100
  %5388 = vmatprep.subr.bf16.mxu0 %v2103
  %5389 = vmatpush1.bf16.msra.mxu0 %v2102
  %5390 = vmatprep.subr.bf16.mxu0 %v2105
  %5391 = vmatpush1.bf16.msra.mxu0 %v2104
  %5392 = vmatprep.subr.bf16.mxu0 %v2107
  %5393 = vmatpush1.bf16.msra.mxu0 %v2106
  %5394 = vmatprep.subr.bf16.mxu0 %v2109
  %5395 = vmatpush1.bf16.msra.mxu0 %v2108
  %5396 = vmatprep.subr.bf16.mxu0 %v2111
  %5397 = vmatpush1.bf16.msra.mxu0 %v2110
  %5398 = vmatprep.subr.bf16.mxu0 %v2113
  %5399 = vmatpush1.bf16.msra.mxu0 %v2112
  %5400 = vmatprep.subr.bf16.mxu0 %v2115
  %5401 = vmatpush1.bf16.msra.mxu0 %v2114
  %5402 = vmatprep.subr.bf16.mxu0 %v2117
  %5403 = vmatpush1.bf16.msra.mxu0 %v2116
  %5404 = vmatprep.subr.bf16.mxu0 %v2119
  %5405 = vmatpush1.bf16.msra.mxu0 %v2118
  %5406 = vmatprep.subr.bf16.mxu0 %v2121
  %5407 = vmatpush1.bf16.msra.mxu0 %v2120
  %5408 = vmatprep.subr.bf16.mxu0 %v2123
  %5409 = vmatpush1.bf16.msra.mxu0 %v2122
  %5410 = vmatprep.subr.bf16.mxu0 %v2125
  %5411 = vmatpush1.bf16.msra.mxu0 %v2124
  %5412 = vmatprep.subr.bf16.mxu0 %v2127
  %5413 = vmatpush1.bf16.msra.mxu0 %v2126
  %5414 = vmatprep.mubr.bf16.mxu0 %v5115
  %5415 = vmatmul.mubr.bf16.gmra.mrb[0].mxu0 %v5114
  %v5416 = vpop.f32.mrb[0].mxu0
  %v5417 = vadd.f32 %v5356, %v5416
  %v5418 = vpop.f32.mrb[0].mxu0
  %v5419 = vadd.f32 %v5358, %v5418
  %v5420 = vpop.f32.mrb[0].mxu0
  %v5421 = vadd.f32 %v5360, %v5420
  %v5422 = vpop.f32.mrb[0].mxu0
  %v5423 = vadd.f32 %v5362, %v5422
  %5424 = vmatprep.mubr.bf16.mxu0 %v5140
  %5425 = vmatmul.mubr.bf16.gmra.mrb[0].mxu0 %v5139
  %v5426 = vpop.f32.mrb[0].mxu0
  %v5427 = vadd.f32 %v5366, %v5426
  %v5428 = vpop.f32.mrb[0].mxu0
  %v5429 = vadd.f32 %v5368, %v5428
  %v5430 = vpop.f32.mrb[0].mxu0
  %v5431 = vadd.f32 %v5370, %v5430
  %v5432 = vpop.f32.mrb[0].mxu0
  %v5433 = vadd.f32 %v5372, %v5432
  %5434 = vmatprep.mubr.bf16.mxu0 %v5165
  %5435 = vmatmul.mubr.bf16.gmra.mrb[0].mxu0 %v5164
  %v5436 = vpop.f32.mrb[0].mxu0
  %v5437 = vadd.f32 %v5376, %v5436
  %v5438 = vpop.f32.mrb[0].mxu0
  %v5439 = vadd.f32 %v5378, %v5438
  %v5440 = vpop.f32.mrb[0].mxu0
  %v5441 = vpop.f32.mrb[0].mxu0
  %5442 = vdwg.mxu0
  %5443 = vmatprep.subr.bf16.mxu0 %v2129
  %5444 = vmatpush1.bf16.msra.mxu0 %v2128
  %5445 = vmatprep.subr.bf16.mxu0 %v2131
  %5446 = vmatpush1.bf16.msra.mxu0 %v2130
  %5447 = vmatprep.subr.bf16.mxu0 %v2133
  %5448 = vmatpush1.bf16.msra.mxu0 %v2132
  %5449 = vmatprep.subr.bf16.mxu0 %v2135
  %5450 = vmatpush1.bf16.msra.mxu0 %v2134
  %5451 = vmatprep.subr.bf16.mxu0 %v2137
  %5452 = vmatpush1.bf16.msra.mxu0 %v2136
  %5453 = vmatprep.subr.bf16.mxu0 %v2139
  %5454 = vmatpush1.bf16.msra.mxu0 %v2138
  %5455 = vmatprep.subr.bf16.mxu0 %v2141
  %5456 = vmatpush1.bf16.msra.mxu0 %v2140
  %5457 = vmatprep.subr.bf16.mxu0 %v2143
  %5458 = vmatpush1.bf16.msra.mxu0 %v2142
  %5459 = vmatprep.subr.bf16.mxu0 %v2145
  %5460 = vmatpush1.bf16.msra.mxu0 %v2144
  %5461 = vmatprep.subr.bf16.mxu0 %v2147
  %5462 = vmatpush1.bf16.msra.mxu0 %v2146
  %5463 = vmatprep.subr.bf16.mxu0 %v2149
  %5464 = vmatpush1.bf16.msra.mxu0 %v2148
  %5465 = vmatprep.subr.bf16.mxu0 %v2151
  %5466 = vmatpush1.bf16.msra.mxu0 %v2150
  %5467 = vmatprep.subr.bf16.mxu0 %v2153
  %5468 = vmatpush1.bf16.msra.mxu0 %v2152
  %5469 = vmatprep.subr.bf16.mxu0 %v2155
  %5470 = vmatpush1.bf16.msra.mxu0 %v2154
  %5471 = vmatprep.subr.bf16.mxu0 %v2157
  %5472 = vmatpush1.bf16.msra.mxu0 %v2156
  %5473 = vmatprep.subr.bf16.mxu0 %v2159
  %5474 = vmatpush1.bf16.msra.mxu0 %v2158
  %5475 = vmatprep.mubr.bf16.mxu0 %v5117
  %5476 = vmatmul.mubr.bf16.gmra.mrb[0].mxu0 %v5116
  %v5477 = vpop.f32.mrb[0].mxu0
  %v5478 = vadd.f32 %v5417, %v5477
  %v5479 = vpop.f32.mrb[0].mxu0
  %v5480 = vadd.f32 %v5419, %v5479
  %v5481 = vpop.f32.mrb[0].mxu0
  %v5482 = vadd.f32 %v5421, %v5481
  %v5483 = vpop.f32.mrb[0].mxu0
  %v5484 = vadd.f32 %v5423, %v5483
  %5485 = vmatprep.mubr.bf16.mxu0 %v5142
  %5486 = vmatmul.mubr.bf16.gmra.mrb[0].mxu0 %v5141
  %v5487 = vpop.f32.mrb[0].mxu0
  %v5488 = vadd.f32 %v5427, %v5487
  %v5489 = vpop.f32.mrb[0].mxu0
  %v5490 = vadd.f32 %v5429, %v5489
  %v5491 = vpop.f32.mrb[0].mxu0
  %v5492 = vadd.f32 %v5431, %v5491
  %v5493 = vpop.f32.mrb[0].mxu0
  %v5494 = vadd.f32 %v5433, %v5493
  %5495 = vmatprep.mubr.bf16.mxu0 %v5167
  %5496 = vmatmul.mubr.bf16.gmra.mrb[0].mxu0 %v5166
  %v5497 = vpop.f32.mrb[0].mxu0
  %v5498 = vadd.f32 %v5437, %v5497
  %v5499 = vpop.f32.mrb[0].mxu0
  %v5500 = vadd.f32 %v5439, %v5499
  %v5501 = vpop.f32.mrb[0].mxu0
  %v5502 = vpop.f32.mrb[0].mxu0
  %5503 = vdwg.mxu0
  %5504 = vmatprep.subr.bf16.mxu0 %v2161
  %5505 = vmatpush1.bf16.msra.mxu0 %v2160
  %5506 = vmatprep.subr.bf16.mxu0 %v2163
  %5507 = vmatpush1.bf16.msra.mxu0 %v2162
  %5508 = vmatprep.subr.bf16.mxu0 %v2165
  %5509 = vmatpush1.bf16.msra.mxu0 %v2164
  %5510 = vmatprep.subr.bf16.mxu0 %v2167
  %5511 = vmatpush1.bf16.msra.mxu0 %v2166
  %5512 = vmatprep.subr.bf16.mxu0 %v2169
  %5513 = vmatpush1.bf16.msra.mxu0 %v2168
  %5514 = vmatprep.subr.bf16.mxu0 %v2171
  %5515 = vmatpush1.bf16.msra.mxu0 %v2170
  %5516 = vmatprep.subr.bf16.mxu0 %v2173
  %5517 = vmatpush1.bf16.msra.mxu0 %v2172
  %5518 = vmatprep.subr.bf16.mxu0 %v2175
  %5519 = vmatpush1.bf16.msra.mxu0 %v2174
  %5520 = vmatprep.subr.bf16.mxu0 %v2177
  %5521 = vmatpush1.bf16.msra.mxu0 %v2176
  %5522 = vmatprep.subr.bf16.mxu0 %v2179
  %5523 = vmatpush1.bf16.msra.mxu0 %v2178
  %5524 = vmatprep.subr.bf16.mxu0 %v2181
  %5525 = vmatpush1.bf16.msra.mxu0 %v2180
  %5526 = vmatprep.subr.bf16.mxu0 %v2183
  %5527 = vmatpush1.bf16.msra.mxu0 %v2182
  %5528 = vmatprep.subr.bf16.mxu0 %v2185
  %5529 = vmatpush1.bf16.msra.mxu0 %v2184
  %5530 = vmatprep.subr.bf16.mxu0 %v2187
  %5531 = vmatpush1.bf16.msra.mxu0 %v2186
  %5532 = vmatprep.subr.bf16.mxu0 %v2189
  %5533 = vmatpush1.bf16.msra.mxu0 %v2188
  %5534 = vmatprep.subr.bf16.mxu0 %v2191
  %5535 = vmatpush1.bf16.msra.mxu0 %v2190
  %5536 = vmatprep.mubr.bf16.mxu0 %v5119
  %5537 = vmatmul.mubr.bf16.gmra.mrb[0].mxu0 %v5118
  %v5538 = vpop.f32.mrb[0].mxu0
  %v5539 = vadd.f32 %v5478, %v5538
  %v5540 = vpop.f32.mrb[0].mxu0
  %v5541 = vadd.f32 %v5480, %v5540
  %v5542 = vpop.f32.mrb[0].mxu0
  %v5543 = vadd.f32 %v5482, %v5542
  %v5544 = vpop.f32.mrb[0].mxu0
  %v5545 = vadd.f32 %v5484, %v5544
  %5546 = vmatprep.mubr.bf16.mxu0 %v5144
  %5547 = vmatmul.mubr.bf16.gmra.mrb[0].mxu0 %v5143
  %v5548 = vpop.f32.mrb[0].mxu0
  %v5549 = vadd.f32 %v5488, %v5548
  %v5550 = vpop.f32.mrb[0].mxu0
  %v5551 = vadd.f32 %v5490, %v5550
  %v5552 = vpop.f32.mrb[0].mxu0
  %v5553 = vadd.f32 %v5492, %v5552
  %v5554 = vpop.f32.mrb[0].mxu0
  %v5555 = vadd.f32 %v5494, %v5554
  %5556 = vmatprep.mubr.bf16.mxu0 %v5169
  %5557 = vmatmul.mubr.bf16.gmra.mrb[0].mxu0 %v5168
  %v5558 = vpop.f32.mrb[0].mxu0
  %v5559 = vadd.f32 %v5498, %v5558
  %v5560 = vpop.f32.mrb[0].mxu0
  %v5561 = vadd.f32 %v5500, %v5560
  %v5562 = vpop.f32.mrb[0].mxu0
  %v5563 = vpop.f32.mrb[0].mxu0
  %5564 = vdwg.mxu0
  %5565 = vmatprep.subr.bf16.mxu0 %v2193
  %5566 = vmatpush1.bf16.msra.mxu0 %v2192
  %5567 = vmatprep.subr.bf16.mxu0 %v2195
  %5568 = vmatpush1.bf16.msra.mxu0 %v2194
  %5569 = vmatprep.subr.bf16.mxu0 %v2197
  %5570 = vmatpush1.bf16.msra.mxu0 %v2196
  %5571 = vmatprep.subr.bf16.mxu0 %v2199
  %5572 = vmatpush1.bf16.msra.mxu0 %v2198
  %5573 = vmatprep.subr.bf16.mxu0 %v2201
  %5574 = vmatpush1.bf16.msra.mxu0 %v2200
  %5575 = vmatprep.subr.bf16.mxu0 %v2203
  %5576 = vmatpush1.bf16.msra.mxu0 %v2202
  %5577 = vmatprep.subr.bf16.mxu0 %v2205
  %5578 = vmatpush1.bf16.msra.mxu0 %v2204
  %5579 = vmatprep.subr.bf16.mxu0 %v2207
  %5580 = vmatpush1.bf16.msra.mxu0 %v2206
  %5581 = vmatprep.subr.bf16.mxu0 %v2209
  %5582 = vmatpush1.bf16.msra.mxu0 %v2208
  %5583 = vmatprep.subr.bf16.mxu0 %v2211
  %5584 = vmatpush1.bf16.msra.mxu0 %v2210
  %5585 = vmatprep.subr.bf16.mxu0 %v2213
  %5586 = vmatpush1.bf16.msra.mxu0 %v2212
  %5587 = vmatprep.subr.bf16.mxu0 %v2215
  %5588 = vmatpush1.bf16.msra.mxu0 %v2214
  %5589 = vmatprep.subr.bf16.mxu0 %v2217
  %5590 = vmatpush1.bf16.msra.mxu0 %v2216
  %5591 = vmatprep.subr.bf16.mxu0 %v2219
  %5592 = vmatpush1.bf16.msra.mxu0 %v2218
  %5593 = vmatprep.subr.bf16.mxu0 %v2221
  %5594 = vmatpush1.bf16.msra.mxu0 %v2220
  %5595 = vmatprep.subr.bf16.mxu0 %v2223
  %5596 = vmatpush1.bf16.msra.mxu0 %v2222
  %5597 = vmatprep.mubr.bf16.mxu0 %v5121
  %5598 = vmatmul.mubr.bf16.gmra.mrb[0].mxu0 %v5120
  %v5599 = vpop.f32.mrb[0].mxu0
  %v5600 = vadd.f32 %v5539, %v5599
  %v5601 = vpop.f32.mrb[0].mxu0
  %v5602 = vadd.f32 %v5541, %v5601
  %v5603 = vpop.f32.mrb[0].mxu0
  %v5604 = vadd.f32 %v5543, %v5603
  %v5605 = vpop.f32.mrb[0].mxu0
  %v5606 = vadd.f32 %v5545, %v5605
  %5607 = vmatprep.mubr.bf16.mxu0 %v5146
  %5608 = vmatmul.mubr.bf16.gmra.mrb[0].mxu0 %v5145
  %v5609 = vpop.f32.mrb[0].mxu0
  %v5610 = vadd.f32 %v5549, %v5609
  %v5611 = vpop.f32.mrb[0].mxu0
  %v5612 = vadd.f32 %v5551, %v5611
  %v5613 = vpop.f32.mrb[0].mxu0
  %v5614 = vadd.f32 %v5553, %v5613
  %v5615 = vpop.f32.mrb[0].mxu0
  %v5616 = vadd.f32 %v5555, %v5615
  %5617 = vmatprep.mubr.bf16.mxu0 %v5171
  %5618 = vmatmul.mubr.bf16.gmra.mrb[0].mxu0 %v5170
  %v5619 = vpop.f32.mrb[0].mxu0
  %v5620 = vadd.f32 %v5559, %v5619
  %v5621 = vpop.f32.mrb[0].mxu0
  %v5622 = vadd.f32 %v5561, %v5621
  %v5623 = vpop.f32.mrb[0].mxu0
  %v5624 = vpop.f32.mrb[0].mxu0
  %5625 = vdwg.mxu0
  %5626 = vmatprep.subr.bf16.mxu0 %v2225
  %5627 = vmatpush1.bf16.msra.mxu0 %v2224
  %5628 = vmatprep.subr.bf16.mxu0 %v2227
  %5629 = vmatpush1.bf16.msra.mxu0 %v2226
  %5630 = vmatprep.subr.bf16.mxu0 %v2229
  %5631 = vmatpush1.bf16.msra.mxu0 %v2228
  %5632 = vmatprep.subr.bf16.mxu0 %v2231
  %5633 = vmatpush1.bf16.msra.mxu0 %v2230
  %5634 = vmatprep.subr.bf16.mxu0 %v2233
  %5635 = vmatpush1.bf16.msra.mxu0 %v2232
  %5636 = vmatprep.subr.bf16.mxu0 %v2235
  %5637 = vmatpush1.bf16.msra.mxu0 %v2234
  %5638 = vmatprep.subr.bf16.mxu0 %v2237
  %5639 = vmatpush1.bf16.msra.mxu0 %v2236
  %5640 = vmatprep.subr.bf16.mxu0 %v2239
  %5641 = vmatpush1.bf16.msra.mxu0 %v2238
  %5642 = vmatprep.subr.bf16.mxu0 %v2241
  %5643 = vmatpush1.bf16.msra.mxu0 %v2240
  %5644 = vmatprep.subr.bf16.mxu0 %v2243
  %5645 = vmatpush1.bf16.msra.mxu0 %v2242
  %5646 = vmatprep.subr.bf16.mxu0 %v2245
  %5647 = vmatpush1.bf16.msra.mxu0 %v2244
  %5648 = vmatprep.subr.bf16.mxu0 %v2247
  %5649 = vmatpush1.bf16.msra.mxu0 %v2246
  %5650 = vmatprep.subr.bf16.mxu0 %v2249
  %5651 = vmatpush1.bf16.msra.mxu0 %v2248
  %5652 = vmatprep.subr.bf16.mxu0 %v2251
  %5653 = vmatpush1.bf16.msra.mxu0 %v2250
  %5654 = vmatprep.subr.bf16.mxu0 %v2253
  %5655 = vmatpush1.bf16.msra.mxu0 %v2252
  %5656 = vmatprep.subr.bf16.mxu0 %v2255
  %5657 = vmatpush1.bf16.msra.mxu0 %v2254
  %5658 = vmatprep.mubr.bf16.mxu0 %v5123
  %5659 = vmatmul.mubr.bf16.gmra.mrb[0].mxu0 %v5122
  %v5660 = vpop.f32.mrb[0].mxu0
  %v5661 = vadd.f32 %v5600, %v5660
  %v5662 = vpop.f32.mrb[0].mxu0
  %v5663 = vadd.f32 %v5602, %v5662
  %v5664 = vpop.f32.mrb[0].mxu0
  %v5665 = vadd.f32 %v5604, %v5664
  %v5666 = vpop.f32.mrb[0].mxu0
  %v5667 = vadd.f32 %v5606, %v5666
  %5668 = vmatprep.mubr.bf16.mxu0 %v5148
  %5669 = vmatmul.mubr.bf16.gmra.mrb[0].mxu0 %v5147
  %v5670 = vpop.f32.mrb[0].mxu0
  %v5671 = vadd.f32 %v5610, %v5670
  %v5672 = vpop.f32.mrb[0].mxu0
  %v5673 = vadd.f32 %v5612, %v5672
  %v5674 = vpop.f32.mrb[0].mxu0
  %v5675 = vadd.f32 %v5614, %v5674
  %v5676 = vpop.f32.mrb[0].mxu0
  %v5677 = vadd.f32 %v5616, %v5676
  %5678 = vmatprep.mubr.bf16.mxu0 %v5173
  %5679 = vmatmul.mubr.bf16.gmra.mrb[0].mxu0 %v5172
  %v5680 = vpop.f32.mrb[0].mxu0
  %v5681 = vadd.f32 %v5620, %v5680
  %v5682 = vpop.f32.mrb[0].mxu0
  %v5683 = vadd.f32 %v5622, %v5682
  %v5684 = vpop.f32.mrb[0].mxu0
  %v5685 = vpop.f32.mrb[0].mxu0
  %5686 = vdwg.mxu0
  %5687 = vmatprep.subr.bf16.mxu0 %v2257
  %5688 = vmatpush1.bf16.msra.mxu0 %v2256
  %5689 = vmatprep.subr.bf16.mxu0 %v2259
  %5690 = vmatpush1.bf16.msra.mxu0 %v2258
  %5691 = vmatprep.subr.bf16.mxu0 %v2261
  %5692 = vmatpush1.bf16.msra.mxu0 %v2260
  %5693 = vmatprep.subr.bf16.mxu0 %v2263
  %5694 = vmatpush1.bf16.msra.mxu0 %v2262
  %5695 = vmatprep.subr.bf16.mxu0 %v2265
  %5696 = vmatpush1.bf16.msra.mxu0 %v2264
  %5697 = vmatprep.subr.bf16.mxu0 %v2267
  %5698 = vmatpush1.bf16.msra.mxu0 %v2266
  %5699 = vmatprep.subr.bf16.mxu0 %v2269
  %5700 = vmatpush1.bf16.msra.mxu0 %v2268
  %5701 = vmatprep.subr.bf16.mxu0 %v2271
  %5702 = vmatpush1.bf16.msra.mxu0 %v2270
  %5703 = vmatprep.subr.bf16.mxu0 %v2273
  %5704 = vmatpush1.bf16.msra.mxu0 %v2272
  %5705 = vmatprep.subr.bf16.mxu0 %v2275
  %5706 = vmatpush1.bf16.msra.mxu0 %v2274
  %5707 = vmatprep.subr.bf16.mxu0 %v2277
  %5708 = vmatpush1.bf16.msra.mxu0 %v2276
  %5709 = vmatprep.subr.bf16.mxu0 %v2279
  %5710 = vmatpush1.bf16.msra.mxu0 %v2278
  %5711 = vmatprep.subr.bf16.mxu0 %v2281
  %5712 = vmatpush1.bf16.msra.mxu0 %v2280
  %5713 = vmatprep.subr.bf16.mxu0 %v2283
  %5714 = vmatpush1.bf16.msra.mxu0 %v2282
  %5715 = vmatprep.subr.bf16.mxu0 %v2285
  %5716 = vmatpush1.bf16.msra.mxu0 %v2284
  %5717 = vmatprep.subr.bf16.mxu0 %v2287
  %5718 = vmatpush1.bf16.msra.mxu0 %v2286
  %5719 = vmatprep.mubr.bf16.mxu0 %v5125
  %5720 = vmatmul.mubr.bf16.gmra.mrb[0].mxu0 %v5124
  %v5721 = vpop.f32.mrb[0].mxu0
  %v5722 = vadd.f32 %v5661, %v5721
  %v5723 = vpop.f32.mrb[0].mxu0
  %v5724 = vadd.f32 %v5663, %v5723
  %v5725 = vpop.f32.mrb[0].mxu0
  %v5726 = vadd.f32 %v5665, %v5725
  %v5727 = vpop.f32.mrb[0].mxu0
  %v5728 = vadd.f32 %v5667, %v5727
  %5729 = vmatprep.mubr.bf16.mxu0 %v5150
  %5730 = vmatmul.mubr.bf16.gmra.mrb[0].mxu0 %v5149
  %v5731 = vpop.f32.mrb[0].mxu0
  %v5732 = vadd.f32 %v5671, %v5731
  %v5733 = vpop.f32.mrb[0].mxu0
  %v5734 = vadd.f32 %v5673, %v5733
  %v5735 = vpop.f32.mrb[0].mxu0
  %v5736 = vadd.f32 %v5675, %v5735
  %v5737 = vpop.f32.mrb[0].mxu0
  %v5738 = vadd.f32 %v5677, %v5737
  %5739 = vmatprep.mubr.bf16.mxu0 %v5175
  %5740 = vmatmul.mubr.bf16.gmra.mrb[0].mxu0 %v5174
  %v5741 = vpop.f32.mrb[0].mxu0
  %v5742 = vadd.f32 %v5681, %v5741
  %v5743 = vpop.f32.mrb[0].mxu0
  %v5744 = vadd.f32 %v5683, %v5743
  %v5745 = vpop.f32.mrb[0].mxu0
  %v5746 = vpop.f32.mrb[0].mxu0
  %5747 = vdwg.mxu0
  %5748 = vmatprep.subr.bf16.mxu0 %v2289
  %5749 = vmatpush1.bf16.msra.mxu0 %v2288
  %5750 = vmatprep.subr.bf16.mxu0 %v2291
  %5751 = vmatpush1.bf16.msra.mxu0 %v2290
  %5752 = vmatprep.subr.bf16.mxu0 %v2293
  %5753 = vmatpush1.bf16.msra.mxu0 %v2292
  %5754 = vmatprep.subr.bf16.mxu0 %v2295
  %5755 = vmatpush1.bf16.msra.mxu0 %v2294
  %5756 = vmatprep.subr.bf16.mxu0 %v2297
  %5757 = vmatpush1.bf16.msra.mxu0 %v2296
  %5758 = vmatprep.subr.bf16.mxu0 %v2299
  %5759 = vmatpush1.bf16.msra.mxu0 %v2298
  %5760 = vmatprep.subr.bf16.mxu0 %v2301
  %5761 = vmatpush1.bf16.msra.mxu0 %v2300
  %5762 = vmatprep.subr.bf16.mxu0 %v2303
  %5763 = vmatpush1.bf16.msra.mxu0 %v2302
  %5764 = vmatprep.subr.bf16.mxu0 %v2305
  %5765 = vmatpush1.bf16.msra.mxu0 %v2304
  %5766 = vmatprep.subr.bf16.mxu0 %v2307
  %5767 = vmatpush1.bf16.msra.mxu0 %v2306
  %5768 = vmatprep.subr.bf16.mxu0 %v2309
  %5769 = vmatpush1.bf16.msra.mxu0 %v2308
  %5770 = vmatprep.subr.bf16.mxu0 %v2311
  %5771 = vmatpush1.bf16.msra.mxu0 %v2310
  %5772 = vmatprep.subr.bf16.mxu0 %v2313
  %5773 = vmatpush1.bf16.msra.mxu0 %v2312
  %5774 = vmatprep.subr.bf16.mxu0 %v2315
  %5775 = vmatpush1.bf16.msra.mxu0 %v2314
  %5776 = vmatprep.subr.bf16.mxu0 %v2317
  %5777 = vmatpush1.bf16.msra.mxu0 %v2316
  %5778 = vmatprep.subr.bf16.mxu0 %v2319
  %5779 = vmatpush1.bf16.msra.mxu0 %v2318
  %5780 = vmatprep.mubr.bf16.mxu0 %v5127
  %5781 = vmatmul.mubr.bf16.gmra.mrb[0].mxu0 %v5126
  %v5782 = vpop.f32.mrb[0].mxu0
  %v5783 = vadd.f32 %v5722, %v5782
  %v5784 = vpop.f32.mrb[0].mxu0
  %v5785 = vadd.f32 %v5724, %v5784
  %v5786 = vpop.f32.mrb[0].mxu0
  %v5787 = vadd.f32 %v5726, %v5786
  %v5788 = vpop.f32.mrb[0].mxu0
  %v5789 = vadd.f32 %v5728, %v5788
  %5790 = vmatprep.mubr.bf16.mxu0 %v5152
  %5791 = vmatmul.mubr.bf16.gmra.mrb[0].mxu0 %v5151
  %v5792 = vpop.f32.mrb[0].mxu0
  %v5793 = vadd.f32 %v5732, %v5792
  %v5794 = vpop.f32.mrb[0].mxu0
  %v5795 = vadd.f32 %v5734, %v5794
  %v5796 = vpop.f32.mrb[0].mxu0
  %v5797 = vadd.f32 %v5736, %v5796
  %v5798 = vpop.f32.mrb[0].mxu0
  %v5799 = vadd.f32 %v5738, %v5798
  %5800 = vmatprep.mubr.bf16.mxu0 %v5177
  %5801 = vmatmul.mubr.bf16.gmra.mrb[0].mxu0 %v5176
  %v5802 = vpop.f32.mrb[0].mxu0
  %v5803 = vadd.f32 %v5742, %v5802
  %v5804 = vpop.f32.mrb[0].mxu0
  %v5805 = vadd.f32 %v5744, %v5804
  %v5806 = vpop.f32.mrb[0].mxu0
  %v5807 = vpop.f32.mrb[0].mxu0
  %5808 = vdwg.mxu0
  %5809 = vmatprep.subr.bf16.mxu0 %v2321
  %5810 = vmatpush1.bf16.msra.mxu0 %v2320
  %5811 = vmatprep.subr.bf16.mxu0 %v2323
  %5812 = vmatpush1.bf16.msra.mxu0 %v2322
  %5813 = vmatprep.subr.bf16.mxu0 %v2325
  %5814 = vmatpush1.bf16.msra.mxu0 %v2324
  %5815 = vmatprep.subr.bf16.mxu0 %v2327
  %5816 = vmatpush1.bf16.msra.mxu0 %v2326
  %5817 = vmatprep.subr.bf16.mxu0 %v2329
  %5818 = vmatpush1.bf16.msra.mxu0 %v2328
  %5819 = vmatprep.subr.bf16.mxu0 %v2331
  %5820 = vmatpush1.bf16.msra.mxu0 %v2330
  %5821 = vmatprep.subr.bf16.mxu0 %v2333
  %5822 = vmatpush1.bf16.msra.mxu0 %v2332
  %5823 = vmatprep.subr.bf16.mxu0 %v2335
  %5824 = vmatpush1.bf16.msra.mxu0 %v2334
  %5825 = vmatprep.subr.bf16.mxu0 %v2337
  %5826 = vmatpush1.bf16.msra.mxu0 %v2336
  %5827 = vmatprep.subr.bf16.mxu0 %v2339
  %5828 = vmatpush1.bf16.msra.mxu0 %v2338
  %5829 = vmatprep.subr.bf16.mxu0 %v2341
  %5830 = vmatpush1.bf16.msra.mxu0 %v2340
  %5831 = vmatprep.subr.bf16.mxu0 %v2343
  %5832 = vmatpush1.bf16.msra.mxu0 %v2342
  %5833 = vmatprep.subr.bf16.mxu0 %v2345
  %5834 = vmatpush1.bf16.msra.mxu0 %v2344
  %5835 = vmatprep.subr.bf16.mxu0 %v2347
  %5836 = vmatpush1.bf16.msra.mxu0 %v2346
  %5837 = vmatprep.subr.bf16.mxu0 %v2349
  %5838 = vmatpush1.bf16.msra.mxu0 %v2348
  %5839 = vmatprep.subr.bf16.mxu0 %v2351
  %5840 = vmatpush1.bf16.msra.mxu0 %v2350
  %5841 = vmatprep.mubr.bf16.mxu0 %v5129
  %5842 = vmatmul.mubr.bf16.gmra.mrb[0].mxu0 %v5128
  %v5843 = vpop.f32.mrb[0].mxu0
  %v5844 = vadd.f32 %v5783, %v5843
  %v5845 = vpop.f32.mrb[0].mxu0
  %v5846 = vadd.f32 %v5785, %v5845
  %v5847 = vpop.f32.mrb[0].mxu0
  %v5848 = vadd.f32 %v5787, %v5847
  %v5849 = vpop.f32.mrb[0].mxu0
  %v5850 = vadd.f32 %v5789, %v5849
  %5851 = vmatprep.mubr.bf16.mxu0 %v5154
  %5852 = vmatmul.mubr.bf16.gmra.mrb[0].mxu0 %v5153
  %v5853 = vpop.f32.mrb[0].mxu0
  %v5854 = vadd.f32 %v5793, %v5853
  %v5855 = vpop.f32.mrb[0].mxu0
  %v5856 = vadd.f32 %v5795, %v5855
  %v5857 = vpop.f32.mrb[0].mxu0
  %v5858 = vadd.f32 %v5797, %v5857
  %v5859 = vpop.f32.mrb[0].mxu0
  %v5860 = vadd.f32 %v5799, %v5859
  %5861 = vmatprep.mubr.bf16.mxu0 %v5179
  %5862 = vmatmul.mubr.bf16.gmra.mrb[0].mxu0 %v5178
  %v5863 = vpop.f32.mrb[0].mxu0
  %v5864 = vadd.f32 %v5803, %v5863
  %v5865 = vpop.f32.mrb[0].mxu0
  %v5866 = vadd.f32 %v5805, %v5865
  %v5867 = vpop.f32.mrb[0].mxu0
  %v5868 = vpop.f32.mrb[0].mxu0
  %5869 = vdwg.mxu0
  %5870 = vmatprep.subr.bf16.mxu0 %v2353
  %5871 = vmatpush1.bf16.msra.mxu0 %v2352
  %5872 = vmatprep.subr.bf16.mxu0 %v2355
  %5873 = vmatpush1.bf16.msra.mxu0 %v2354
  %5874 = vmatprep.subr.bf16.mxu0 %v2357
  %5875 = vmatpush1.bf16.msra.mxu0 %v2356
  %5876 = vmatprep.subr.bf16.mxu0 %v2359
  %5877 = vmatpush1.bf16.msra.mxu0 %v2358
  %5878 = vmatprep.subr.bf16.mxu0 %v2361
  %5879 = vmatpush1.bf16.msra.mxu0 %v2360
  %5880 = vmatprep.subr.bf16.mxu0 %v2363
  %5881 = vmatpush1.bf16.msra.mxu0 %v2362
  %5882 = vmatprep.subr.bf16.mxu0 %v2365
  %5883 = vmatpush1.bf16.msra.mxu0 %v2364
  %5884 = vmatprep.subr.bf16.mxu0 %v2367
  %5885 = vmatpush1.bf16.msra.mxu0 %v2366
  %5886 = vmatprep.subr.bf16.mxu0 %v2369
  %5887 = vmatpush1.bf16.msra.mxu0 %v2368
  %5888 = vmatprep.subr.bf16.mxu0 %v2371
  %5889 = vmatpush1.bf16.msra.mxu0 %v2370
  %5890 = vmatprep.subr.bf16.mxu0 %v2373
  %5891 = vmatpush1.bf16.msra.mxu0 %v2372
  %5892 = vmatprep.subr.bf16.mxu0 %v2375
  %5893 = vmatpush1.bf16.msra.mxu0 %v2374
  %5894 = vmatprep.subr.bf16.mxu0 %v2377
  %5895 = vmatpush1.bf16.msra.mxu0 %v2376
  %5896 = vmatprep.subr.bf16.mxu0 %v2379
  %5897 = vmatpush1.bf16.msra.mxu0 %v2378
  %5898 = vmatprep.subr.bf16.mxu0 %v2381
  %5899 = vmatpush1.bf16.msra.mxu0 %v2380
  %5900 = vmatprep.subr.bf16.mxu0 %v2383
  %5901 = vmatpush1.bf16.msra.mxu0 %v2382
  %5902 = vmatprep.mubr.bf16.mxu0 %v5131
  %5903 = vmatmul.mubr.bf16.gmra.mrb[0].mxu0 %v5130
  %v5904 = vpop.f32.mrb[0].mxu0
  %v5905 = vadd.f32 %v5844, %v5904
  %v5906 = vpop.f32.mrb[0].mxu0
  %v5907 = vadd.f32 %v5846, %v5906
  %v5908 = vpop.f32.mrb[0].mxu0
  %v5909 = vadd.f32 %v5848, %v5908
  %v5910 = vpop.f32.mrb[0].mxu0
  %v5911 = vadd.f32 %v5850, %v5910
  %5912 = vmatprep.mubr.bf16.mxu0 %v5156
  %5913 = vmatmul.mubr.bf16.gmra.mrb[0].mxu0 %v5155
  %v5914 = vpop.f32.mrb[0].mxu0
  %v5915 = vadd.f32 %v5854, %v5914
  %v5916 = vpop.f32.mrb[0].mxu0
  %v5917 = vadd.f32 %v5856, %v5916
  %v5918 = vpop.f32.mrb[0].mxu0
  %v5919 = vadd.f32 %v5858, %v5918
  %v5920 = vpop.f32.mrb[0].mxu0
  %v5921 = vadd.f32 %v5860, %v5920
  %5922 = vmatprep.mubr.bf16.mxu0 %v5181
  %5923 = vmatmul.mubr.bf16.gmra.mrb[0].mxu0 %v5180
  %v5924 = vpop.f32.mrb[0].mxu0
  %v5925 = vadd.f32 %v5864, %v5924
  %v5926 = vpop.f32.mrb[0].mxu0
  %v5927 = vadd.f32 %v5866, %v5926
  %v5928 = vpop.f32.mrb[0].mxu0
  %v5929 = vpop.f32.mrb[0].mxu0
  %5930 = vdwg.mxu0
  %5931 = vmatprep.subr.bf16.mxu0 %v2385
  %5932 = vmatpush1.bf16.msra.mxu0 %v2384
  %5933 = vmatprep.subr.bf16.mxu0 %v2387
  %5934 = vmatpush1.bf16.msra.mxu0 %v2386
  %5935 = vmatprep.subr.bf16.mxu0 %v2389
  %5936 = vmatpush1.bf16.msra.mxu0 %v2388
  %5937 = vmatprep.subr.bf16.mxu0 %v2391
  %5938 = vmatpush1.bf16.msra.mxu0 %v2390
  %5939 = vmatprep.subr.bf16.mxu0 %v2393
  %5940 = vmatpush1.bf16.msra.mxu0 %v2392
  %5941 = vmatprep.subr.bf16.mxu0 %v2395
  %5942 = vmatpush1.bf16.msra.mxu0 %v2394
  %5943 = vmatprep.subr.bf16.mxu0 %v2397
  %5944 = vmatpush1.bf16.msra.mxu0 %v2396
  %5945 = vmatprep.subr.bf16.mxu0 %v2399
  %5946 = vmatpush1.bf16.msra.mxu0 %v2398
  %5947 = vmatprep.subr.bf16.mxu0 %v2401
  %5948 = vmatpush1.bf16.msra.mxu0 %v2400
  %5949 = vmatprep.subr.bf16.mxu0 %v2403
  %5950 = vmatpush1.bf16.msra.mxu0 %v2402
  %5951 = vmatprep.subr.bf16.mxu0 %v2405
  %5952 = vmatpush1.bf16.msra.mxu0 %v2404
  %5953 = vmatprep.subr.bf16.mxu0 %v2407
  %5954 = vmatpush1.bf16.msra.mxu0 %v2406
  %5955 = vmatprep.subr.bf16.mxu0 %v2409
  %5956 = vmatpush1.bf16.msra.mxu0 %v2408
  %5957 = vmatprep.subr.bf16.mxu0 %v2411
  %5958 = vmatpush1.bf16.msra.mxu0 %v2410
  %5959 = vmatprep.subr.bf16.mxu0 %v2413
  %5960 = vmatpush1.bf16.msra.mxu0 %v2412
  %5961 = vmatprep.subr.bf16.mxu0 %v2415
  %5962 = vmatpush1.bf16.msra.mxu0 %v2414
  %5963 = vmatprep.mubr.bf16.mxu0 %v5133
  %5964 = vmatmul.mubr.bf16.gmra.mrb[0].mxu0 %v5132
  %v5965 = vpop.f32.mrb[0].mxu0
  %v5966 = vadd.f32 %v5905, %v5965
  %v5967 = vpop.f32.mrb[0].mxu0
  %v5968 = vadd.f32 %v5907, %v5967
  %v5969 = vpop.f32.mrb[0].mxu0
  %v5970 = vadd.f32 %v5909, %v5969
  %v5971 = vpop.f32.mrb[0].mxu0
  %v5972 = vadd.f32 %v5911, %v5971
  %5973 = vmatprep.mubr.bf16.mxu0 %v5158
  %5974 = vmatmul.mubr.bf16.gmra.mrb[0].mxu0 %v5157
  %v5975 = vpop.f32.mrb[0].mxu0
  %v5976 = vadd.f32 %v5915, %v5975
  %v5977 = vpop.f32.mrb[0].mxu0
  %v5978 = vadd.f32 %v5917, %v5977
  %v5979 = vpop.f32.mrb[0].mxu0
  %v5980 = vadd.f32 %v5919, %v5979
  %v5981 = vpop.f32.mrb[0].mxu0
  %v5982 = vadd.f32 %v5921, %v5981
  %5983 = vmatprep.mubr.bf16.mxu0 %v5183
  %5984 = vmatmul.mubr.bf16.gmra.mrb[0].mxu0 %v5182
  %v5985 = vpop.f32.mrb[0].mxu0
  %v5986 = vadd.f32 %v5925, %v5985
  %v5987 = vpop.f32.mrb[0].mxu0
  %v5988 = vadd.f32 %v5927, %v5987
  %v5989 = vpop.f32.mrb[0].mxu0
  %v5990 = vpop.f32.mrb[0].mxu0
  %5991 = vdwg.mxu0
  %5992 = vmatprep.subr.bf16.mxu0 %v2417
  %5993 = vmatpush1.bf16.msra.mxu0 %v2416
  %5994 = vmatprep.subr.bf16.mxu0 %v2419
  %5995 = vmatpush1.bf16.msra.mxu0 %v2418
  %5996 = vmatprep.subr.bf16.mxu0 %v2421
  %5997 = vmatpush1.bf16.msra.mxu0 %v2420
  %5998 = vmatprep.subr.bf16.mxu0 %v2423
  %5999 = vmatpush1.bf16.msra.mxu0 %v2422
  %6000 = vmatprep.subr.bf16.mxu0 %v2425
  %6001 = vmatpush1.bf16.msra.mxu0 %v2424
  %6002 = vmatprep.subr.bf16.mxu0 %v2427
  %6003 = vmatpush1.bf16.msra.mxu0 %v2426
  %6004 = vmatprep.subr.bf16.mxu0 %v2429
  %6005 = vmatpush1.bf16.msra.mxu0 %v2428
  %6006 = vmatprep.subr.bf16.mxu0 %v2431
  %6007 = vmatpush1.bf16.msra.mxu0 %v2430
  %6008 = vmatprep.subr.bf16.mxu0 0
  %6009 = vmatpush1.bf16.msra.mxu0 0
  %6010 = vmatprep.subr.bf16.mxu0 0
  %6011 = vmatpush1.bf16.msra.mxu0 0
  %6012 = vmatprep.subr.bf16.mxu0 0
  %6013 = vmatpush1.bf16.msra.mxu0 0
  %6014 = vmatprep.subr.bf16.mxu0 0
  %6015 = vmatpush1.bf16.msra.mxu0 0
  %6016 = vmatprep.subr.bf16.mxu0 0
  %6017 = vmatpush1.bf16.msra.mxu0 0
  %6018 = vmatprep.subr.bf16.mxu0 0
  %6019 = vmatpush1.bf16.msra.mxu0 0
  %6020 = vmatprep.subr.bf16.mxu0 0
  %6021 = vmatpush1.bf16.msra.mxu0 0
  %6022 = vmatprep.subr.bf16.mxu0 0
  %6023 = vmatpush1.bf16.msra.mxu0 0
  %6024 = vmatprep.mubr.bf16.mxu0 0
  %6025 = vmatmul.mubr.bf16.gmra.mrb[0].mxu0 %v5134
  %v6026 = vpop.f32.mrb[0].mxu0
  %v6027 = vadd.f32 %v5966, %v6026
  %v6028 = vpop.f32.mrb[0].mxu0
  %v6029 = vadd.f32 %v5968, %v6028
  %v6030 = vpop.f32.mrb[0].mxu0
  %v6031 = vadd.f32 %v5970, %v6030
  %v6032 = vpop.f32.mrb[0].mxu0
  %v6033 = vadd.f32 %v5972, %v6032
  %6034 = vmatprep.mubr.bf16.mxu0 0
  %6035 = vmatmul.mubr.bf16.gmra.mrb[0].mxu0 %v5159
  %v6036 = vpop.f32.mrb[0].mxu0
  %v6037 = vadd.f32 %v5976, %v6036
  %v6038 = vpop.f32.mrb[0].mxu0
  %v6039 = vadd.f32 %v5978, %v6038
  %v6040 = vpop.f32.mrb[0].mxu0
  %v6041 = vadd.f32 %v5980, %v6040
  %v6042 = vpop.f32.mrb[0].mxu0
  %v6043 = vadd.f32 %v5982, %v6042
  %6044 = vmatprep.mubr.bf16.mxu0 0
  %6045 = vmatmul.mubr.bf16.gmra.mrb[0].mxu0 %v5184
  %v6046 = vpop.f32.mrb[0].mxu0
  %v6047 = vadd.f32 %v5986, %v6046
  %v6048 = vpop.f32.mrb[0].mxu0
  %v6049 = vadd.f32 %v5988, %v6048
  %v6050 = vpop.f32.mrb[0].mxu0
  %v6051 = vpop.f32.mrb[0].mxu0
  %6052 = vdwg.mxu0
  %v6053 = vmax.f32 %v6027, 0.0
  %v6054 = vmax.f32 %v6029, 0.0
  %v6055 = vmax.f32 %v6031, 0.0
  %v6056 = vmax.f32 %v6033, 0.0
  %v6057 = vmax.f32 %v6037, 0.0
  %v6058 = vmax.f32 %v6039, 0.0
  %v6059 = vmax.f32 %v6041, 0.0
  %v6060 = vmax.f32 %v6043, 0.0
  %v6061 = vmax.f32 %v6047, 0.0
  %v6062 = vmax.f32 %v6049, 0.0
  %s6063 = scalar_lea.vmem %s0, 1500
  %v6064 = vld [vmem:[%s6063] sm:$0xff]
  %v6065 = vld [vmem:[%s6063 + $0x8] sm:$0xff]
  %v6066 = vld [vmem:[%s6063 + $0x10] sm:$0xff]
  %v6067 = vld [vmem:[%s6063 + $0x18] sm:$0xff]
  %v6068 = vld [vmem:[%s6063 + $0x20] sm:$0xff]
  %v6069 = vld [vmem:[%s6063 + $0x28] sm:$0xff]
  %v6070 = vld [vmem:[%s6063 + $0x30] sm:$0xff]
  %v6071 = vld [vmem:[%s6063 + $0x38] sm:$0xff]
  %v6072 = vld [vmem:[%s6063 + $0x40] sm:$0xff]
  %v6073 = vld [vmem:[%s6063 + $0x48] sm:$0xff]
  %v6074 = vld [vmem:[%s6063 + $0x50] sm:$0xff]
  %v6075 = vld [vmem:[%s6063 + $0x58] sm:$0xff]
  %v6076 = vld [vmem:[%s6063 + $0x60] sm:$0xf]
  %v6077 = vld [vmem:[%s6063 + $0x64] sm:$0xff]
  %v6078 = vld [vmem:[%s6063 + $0x6c] sm:$0xff]
  %v6079 = vld [vmem:[%s6063 + $0x74] sm:$0xff]
  %v6080 = vld [vmem:[%s6063 + $0x7c] sm:$0xff]
  %v6081 = vld [vmem:[%s6063 + $0x84] sm:$0xff]
  %v6082 = vld [vmem:[%s6063 + $0x8c] sm:$0xff]
  %v6083 = vld [vmem:[%s6063 + $0x94] sm:$0xff]
  %v6084 = vld [vmem:[%s6063 + $0x9c] sm:$0xff]
  %v6085 = vld [vmem:[%s6063 + $0xa4] sm:$0xff]
  %v6086 = vld [vmem:[%s6063 + $0xac] sm:$0xff]
  %v6087 = vld [vmem:[%s6063 + $0xb4] sm:$0xff]
  %v6088 = vld [vmem:[%s6063 + $0xbc] sm:$0xff]
  %v6089 = vld [vmem:[%s6063 + $0xc4] sm:$0xf]
  %v6090 = vld [vmem:[%s6063 + $0xc8] sm:$0xff]
  %v6091 = vld [vmem:[%s6063 + $0xd0] sm:$0xff]
  %v6092 = vld [vmem:[%s6063 + $0xd8] sm:$0xff]
  %v6093 = vld [vmem:[%s6063 + $0xe0] sm:$0xff]
  %v6094 = vld [vmem:[%s6063 + $0xe8] sm:$0xff]
  %v6095 = vld [vmem:[%s6063 + $0xf0] sm:$0xff]
  %v6096 = vld [vmem:[%s6063 + $0xf8] sm:$0xff]
  %v6097 = vld [vmem:[%s6063 + $0x100] sm:$0xff]
  %v6098 = vld [vmem:[%s6063 + $0x108] sm:$0xff]
  %v6099 = vld [vmem:[%s6063 + $0x110] sm:$0xff]
  %v6100 = vld [vmem:[%s6063 + $0x118] sm:$0xff]
  %v6101 = vld [vmem:[%s6063 + $0x120] sm:$0xff]
  %v6102 = vld [vmem:[%s6063 + $0x128] sm:$0xf]
  %v6103 = vld [vmem:[%s6063 + $0x12c] sm:$0xff]
  %v6104 = vld [vmem:[%s6063 + $0x134] sm:$0xff]
  %v6105 = vld [vmem:[%s6063 + $0x13c] sm:$0xff]
  %v6106 = vld [vmem:[%s6063 + $0x144] sm:$0xff]
  %v6107 = vld [vmem:[%s6063 + $0x14c] sm:$0xff]
  %v6108 = vld [vmem:[%s6063 + $0x154] sm:$0xff]
  %v6109 = vld [vmem:[%s6063 + $0x15c] sm:$0xff]
  %v6110 = vld [vmem:[%s6063 + $0x164] sm:$0xff]
  %v6111 = vld [vmem:[%s6063 + $0x16c] sm:$0xff]
  %v6112 = vld [vmem:[%s6063 + $0x174] sm:$0xff]
  %v6113 = vld [vmem:[%s6063 + $0x17c] sm:$0xff]
  %v6114 = vld [vmem:[%s6063 + $0x184] sm:$0xff]
  %v6115 = vld [vmem:[%s6063 + $0x18c] sm:$0xf]
  %v6116 = vld [vmem:[%s6063 + $0x190] sm:$0x33]
  %v6117 = vld [vmem:[%s6063 + $0x198] sm:$0x33]
  %v6118 = vld [vmem:[%s6063 + $0x1a0] sm:$0x33]
  %v6119 = vld [vmem:[%s6063 + $0x1a8] sm:$0x33]
  %v6120 = vld [vmem:[%s6063 + $0x1b0] sm:$0x33]
  %v6121 = vld [vmem:[%s6063 + $0x1b8] sm:$0x33]
  %v6122 = vld [vmem:[%s6063 + $0x1c0] sm:$0x33]
  %v6123 = vld [vmem:[%s6063 + $0x1c8] sm:$0x33]
  %v6124 = vld [vmem:[%s6063 + $0x1d0] sm:$0x33]
  %v6125 = vld [vmem:[%s6063 + $0x1d8] sm:$0x33]
  %v6126 = vld [vmem:[%s6063 + $0x1e0] sm:$0x33]
  %v6127 = vld [vmem:[%s6063 + $0x1e8] sm:$0x33]
  %v6128 = vld [vmem:[%s6063 + $0x1f0] sm:$0x3]
  %v6194 = vunpack.c.l.b16 %v6064
  %v6195 = vunpack.c.h.b16 %v6064
  %v6196 = vunpack.c.l.b16 %v6065
  %v6197 = vunpack.c.h.b16 %v6065
  %v6198 = vunpack.c.l.b16 %v6066
  %v6199 = vunpack.c.h.b16 %v6066
  %v6200 = vunpack.c.l.b16 %v6067
  %v6201 = vunpack.c.h.b16 %v6067
  %v6202 = vunpack.c.l.b16 %v6068
  %v6203 = vunpack.c.h.b16 %v6068
  %v6204 = vunpack.c.l.b16 %v6069
  %v6205 = vunpack.c.h.b16 %v6069
  %v6206 = vunpack.c.l.b16 %v6070
  %v6207 = vunpack.c.h.b16 %v6070
  %v6208 = vunpack.c.l.b16 %v6071
  %v6209 = vunpack.c.h.b16 %v6071
  %v6210 = vunpack.c.l.b16 %v6072
  %v6211 = vunpack.c.h.b16 %v6072
  %v6212 = vunpack.c.l.b16 %v6073
  %v6213 = vunpack.c.h.b16 %v6073
  %v6214 = vunpack.c.l.b16 %v6074
  %v6215 = vunpack.c.h.b16 %v6074
  %v6216 = vunpack.c.l.b16 %v6075
  %v6217 = vunpack.c.h.b16 %v6075
  %v6218 = vunpack.c.l.b16 %v6076
  %v6219 = vunpack.c.l.b16 %v6077
  %v6220 = vunpack.c.h.b16 %v6077
  %v6221 = vunpack.c.l.b16 %v6078
  %v6222 = vunpack.c.h.b16 %v6078
  %v6223 = vunpack.c.l.b16 %v6079
  %v6224 = vunpack.c.h.b16 %v6079
  %v6225 = vunpack.c.l.b16 %v6080
  %v6226 = vunpack.c.h.b16 %v6080
  %v6227 = vunpack.c.l.b16 %v6081
  %v6228 = vunpack.c.h.b16 %v6081
  %v6229 = vunpack.c.l.b16 %v6082
  %v6230 = vunpack.c.h.b16 %v6082
  %v6231 = vunpack.c.l.b16 %v6083
  %v6232 = vunpack.c.h.b16 %v6083
  %v6233 = vunpack.c.l.b16 %v6084
  %v6234 = vunpack.c.h.b16 %v6084
  %v6235 = vunpack.c.l.b16 %v6085
  %v6236 = vunpack.c.h.b16 %v6085
  %v6237 = vunpack.c.l.b16 %v6086
  %v6238 = vunpack.c.h.b16 %v6086
  %v6239 = vunpack.c.l.b16 %v6087
  %v6240 = vunpack.c.h.b16 %v6087
  %v6241 = vunpack.c.l.b16 %v6088
  %v6242 = vunpack.c.h.b16 %v6088
  %v6243 = vunpack.c.l.b16 %v6089
  %v6244 = vunpack.c.l.b16 %v6090
  %v6245 = vunpack.c.h.b16 %v6090
  %v6246 = vunpack.c.l.b16 %v6091
  %v6247 = vunpack.c.h.b16 %v6091
  %v6248 = vunpack.c.l.b16 %v6092
  %v6249 = vunpack.c.h.b16 %v6092
  %v6250 = vunpack.c.l.b16 %v6093
  %v6251 = vunpack.c.h.b16 %v6093
  %v6252 = vunpack.c.l.b16 %v6094
  %v6253 = vunpack.c.h.b16 %v6094
  %v6254 = vunpack.c.l.b16 %v6095
  %v6255 = vunpack.c.h.b16 %v6095
  %v6256 = vunpack.c.l.b16 %v6096
  %v6257 = vunpack.c.h.b16 %v6096
  %v6258 = vunpack.c.l.b16 %v6097
  %v6259 = vunpack.c.h.b16 %v6097
  %v6260 = vunpack.c.l.b16 %v6098
  %v6261 = vunpack.c.h.b16 %v6098
  %v6262 = vunpack.c.l.b16 %v6099
  %v6263 = vunpack.c.h.b16 %v6099
  %v6264 = vunpack.c.l.b16 %v6100
  %v6265 = vunpack.c.h.b16 %v6100
  %v6266 = vunpack.c.l.b16 %v6101
  %v6267 = vunpack.c.h.b16 %v6101
  %v6268 = vunpack.c.l.b16 %v6102
  %v6269 = vunpack.c.l.b16 %v6103
  %v6270 = vunpack.c.h.b16 %v6103
  %v6271 = vunpack.c.l.b16 %v6104
  %v6272 = vunpack.c.h.b16 %v6104
  %v6273 = vunpack.c.l.b16 %v6105
  %v6274 = vunpack.c.h.b16 %v6105
  %v6275 = vunpack.c.l.b16 %v6106
  %v6276 = vunpack.c.h.b16 %v6106
  %v6277 = vunpack.c.l.b16 %v6107
  %v6278 = vunpack.c.h.b16 %v6107
  %v6279 = vunpack.c.l.b16 %v6108
  %v6280 = vunpack.c.h.b16 %v6108
  %v6281 = vunpack.c.l.b16 %v6109
  %v6282 = vunpack.c.h.b16 %v6109
  %v6283 = vunpack.c.l.b16 %v6110
  %v6284 = vunpack.c.h.b16 %v6110
  %v6285 = vunpack.c.l.b16 %v6111
  %v6286 = vunpack.c.h.b16 %v6111
  %v6287 = vunpack.c.l.b16 %v6112
  %v6288 = vunpack.c.h.b16 %v6112
  %v6289 = vunpack.c.l.b16 %v6113
  %v6290 = vunpack.c.h.b16 %v6113
  %v6291 = vunpack.c.l.b16 %v6114
  %v6292 = vunpack.c.h.b16 %v6114
  %v6293 = vunpack.c.l.b16 %v6115
  %v6294 = vunpack.c.l.b16 %v6116
  %v6295 = vunpack.c.h.b16 %v6116
  %v6296 = vunpack.c.l.b16 %v6117
  %v6297 = vunpack.c.h.b16 %v6117
  %v6298 = vunpack.c.l.b16 %v6118
  %v6299 = vunpack.c.h.b16 %v6118
  %v6300 = vunpack.c.l.b16 %v6119
  %v6301 = vunpack.c.h.b16 %v6119
  %v6302 = vunpack.c.l.b16 %v6120
  %v6303 = vunpack.c.h.b16 %v6120
  %v6304 = vunpack.c.l.b16 %v6121
  %v6305 = vunpack.c.h.b16 %v6121
  %v6306 = vunpack.c.l.b16 %v6122
  %v6307 = vunpack.c.h.b16 %v6122
  %v6308 = vunpack.c.l.b16 %v6123
  %v6309 = vunpack.c.h.b16 %v6123
  %v6310 = vunpack.c.l.b16 %v6124
  %v6311 = vunpack.c.h.b16 %v6124
  %v6312 = vunpack.c.l.b16 %v6125
  %v6313 = vunpack.c.h.b16 %v6125
  %v6314 = vunpack.c.l.b16 %v6126
  %v6315 = vunpack.c.h.b16 %v6126
  %v6316 = vunpack.c.l.b16 %v6127
  %v6317 = vunpack.c.h.b16 %v6127
  %v6318 = vunpack.c.l.b16 %v6128
  %v6319 = vpack.c.b16 %v6219, %v6194
  %v6320 = vpack.c.b16 %v6220, %v6195
  %v6321 = vpack.c.b16 %v6221, %v6196
  %v6322 = vpack.c.b16 %v6222, %v6197
  %v6323 = vpack.c.b16 %v6223, %v6198
  %v6324 = vpack.c.b16 %v6224, %v6199
  %v6325 = vpack.c.b16 %v6225, %v6200
  %v6326 = vpack.c.b16 %v6226, %v6201
  %v6327 = vpack.c.b16 %v6227, %v6202
  %v6328 = vpack.c.b16 %v6228, %v6203
  %v6329 = vpack.c.b16 %v6229, %v6204
  %v6330 = vpack.c.b16 %v6230, %v6205
  %v6331 = vpack.c.b16 %v6231, %v6206
  %v6332 = vpack.c.b16 %v6232, %v6207
  %v6333 = vpack.c.b16 %v6233, %v6208
  %v6334 = vpack.c.b16 %v6234, %v6209
  %v6335 = vpack.c.b16 %v6235, %v6210
  %v6336 = vpack.c.b16 %v6236, %v6211
  %v6337 = vpack.c.b16 %v6237, %v6212
  %v6338 = vpack.c.b16 %v6238, %v6213
  %v6339 = vpack.c.b16 %v6239, %v6214
  %v6340 = vpack.c.b16 %v6240, %v6215
  %v6341 = vpack.c.b16 %v6241, %v6216
  %v6342 = vpack.c.b16 %v6242, %v6217
  %v6343 = vpack.c.b16 %v6243, %v6218
  %v6344 = vpack.c.b16 %v6269, %v6244
  %v6345 = vpack.c.b16 %v6270, %v6245
  %v6346 = vpack.c.b16 %v6271, %v6246
  %v6347 = vpack.c.b16 %v6272, %v6247
  %v6348 = vpack.c.b16 %v6273, %v6248
  %v6349 = vpack.c.b16 %v6274, %v6249
  %v6350 = vpack.c.b16 %v6275, %v6250
  %v6351 = vpack.c.b16 %v6276, %v6251
  %v6352 = vpack.c.b16 %v6277, %v6252
  %v6353 = vpack.c.b16 %v6278, %v6253
  %v6354 = vpack.c.b16 %v6279, %v6254
  %v6355 = vpack.c.b16 %v6280, %v6255
  %v6356 = vpack.c.b16 %v6281, %v6256
  %v6357 = vpack.c.b16 %v6282, %v6257
  %v6358 = vpack.c.b16 %v6283, %v6258
  %v6359 = vpack.c.b16 %v6284, %v6259
  %v6360 = vpack.c.b16 %v6285, %v6260
  %v6361 = vpack.c.b16 %v6286, %v6261
  %v6362 = vpack.c.b16 %v6287, %v6262
  %v6363 = vpack.c.b16 %v6288, %v6263
  %v6364 = vpack.c.b16 %v6289, %v6264
  %v6365 = vpack.c.b16 %v6290, %v6265
  %v6366 = vpack.c.b16 %v6291, %v6266
  %v6367 = vpack.c.b16 %v6292, %v6267
  %v6368 = vpack.c.b16 %v6293, %v6268
  %v6369 = vpack.c.b16 %v6294, %v6294
  %v6370 = vpack.c.b16 %v6295, %v6295
  %v6371 = vpack.c.b16 %v6296, %v6296
  %v6372 = vpack.c.b16 %v6297, %v6297
  %v6373 = vpack.c.b16 %v6298, %v6298
  %v6374 = vpack.c.b16 %v6299, %v6299
  %v6375 = vpack.c.b16 %v6300, %v6300
  %v6376 = vpack.c.b16 %v6301, %v6301
  %v6377 = vpack.c.b16 %v6302, %v6302
  %v6378 = vpack.c.b16 %v6303, %v6303
  %v6379 = vpack.c.b16 %v6304, %v6304
  %v6380 = vpack.c.b16 %v6305, %v6305
  %v6381 = vpack.c.b16 %v6306, %v6306
  %v6382 = vpack.c.b16 %v6307, %v6307
  %v6383 = vpack.c.b16 %v6308, %v6308
  %v6384 = vpack.c.b16 %v6309, %v6309
  %v6385 = vpack.c.b16 %v6310, %v6310
  %v6386 = vpack.c.b16 %v6311, %v6311
  %v6387 = vpack.c.b16 %v6312, %v6312
  %v6388 = vpack.c.b16 %v6313, %v6313
  %v6389 = vpack.c.b16 %v6314, %v6314
  %v6390 = vpack.c.b16 %v6315, %v6315
  %v6391 = vpack.c.b16 %v6316, %v6316
  %v6392 = vpack.c.b16 %v6317, %v6317
  %v6393 = vpack.c.b16 %v6318, %v6318
  %6469 = vmatprep.subr.bf16.mxu0 %v2033
  %6470 = vmatpush1.bf16.msra.mxu0 %v2032
  %6471 = vmatprep.subr.bf16.mxu0 %v2035
  %6472 = vmatpush1.bf16.msra.mxu0 %v2034
  %6473 = vmatprep.subr.bf16.mxu0 %v2037
  %6474 = vmatpush1.bf16.msra.mxu0 %v2036
  %6475 = vmatprep.subr.bf16.mxu0 %v2039
  %6476 = vmatpush1.bf16.msra.mxu0 %v2038
  %6477 = vmatprep.subr.bf16.mxu0 %v2041
  %6478 = vmatpush1.bf16.msra.mxu0 %v2040
  %6479 = vmatprep.subr.bf16.mxu0 %v2043
  %6480 = vmatpush1.bf16.msra.mxu0 %v2042
  %6481 = vmatprep.subr.bf16.mxu0 %v2045
  %6482 = vmatpush1.bf16.msra.mxu0 %v2044
  %6483 = vmatprep.subr.bf16.mxu0 %v2047
  %6484 = vmatpush1.bf16.msra.mxu0 %v2046
  %6485 = vmatprep.subr.bf16.mxu0 %v2049
  %6486 = vmatpush1.bf16.msra.mxu0 %v2048
  %6487 = vmatprep.subr.bf16.mxu0 %v2051
  %6488 = vmatpush1.bf16.msra.mxu0 %v2050
  %6489 = vmatprep.subr.bf16.mxu0 %v2053
  %6490 = vmatpush1.bf16.msra.mxu0 %v2052
  %6491 = vmatprep.subr.bf16.mxu0 %v2055
  %6492 = vmatpush1.bf16.msra.mxu0 %v2054
  %6493 = vmatprep.subr.bf16.mxu0 %v2057
  %6494 = vmatpush1.bf16.msra.mxu0 %v2056
  %6495 = vmatprep.subr.bf16.mxu0 %v2059
  %6496 = vmatpush1.bf16.msra.mxu0 %v2058
  %6497 = vmatprep.subr.bf16.mxu0 %v2061
  %6498 = vmatpush1.bf16.msra.mxu0 %v2060
  %6499 = vmatprep.subr.bf16.mxu0 %v2063
  %6500 = vmatpush1.bf16.msra.mxu0 %v2062
  %6501 = vmatprep.mubr.bf16.mxu0 %v6320
  %6502 = vmatmul.mubr.bf16.gmra.mrb[0].mxu0 %v6319
  %v6503 = vpop.f32.mrb[0].mxu0
  %v6504 = vadd.f32 %v485, %v6503
  %v6505 = vpop.f32.mrb[0].mxu0
  %v6506 = vadd.f32 %v489, %v6505
  %v6507 = vpop.f32.mrb[0].mxu0
  %v6508 = vadd.f32 %v485, %v6507
  %v6509 = vpop.f32.mrb[0].mxu0
  %v6510 = vadd.f32 %v489, %v6509
  %6511 = vmatprep.mubr.bf16.mxu0 %v6345
  %6512 = vmatmul.mubr.bf16.gmra.mrb[0].mxu0 %v6344
  %v6513 = vpop.f32.mrb[0].mxu0
  %v6514 = vadd.f32 %v485, %v6513
  %v6515 = vpop.f32.mrb[0].mxu0
  %v6516 = vadd.f32 %v489, %v6515
  %v6517 = vpop.f32.mrb[0].mxu0
  %v6518 = vadd.f32 %v485, %v6517
  %v6519 = vpop.f32.mrb[0].mxu0
  %v6520 = vadd.f32 %v489, %v6519
  %6521 = vmatprep.mubr.bf16.mxu0 %v6370
  %6522 = vmatmul.mubr.bf16.gmra.mrb[0].mxu0 %v6369
  %v6523 = vpop.f32.mrb[0].mxu0
  %v6524 = vadd.f32 %v485, %v6523
  %v6525 = vpop.f32.mrb[0].mxu0
  %v6526 = vadd.f32 %v489, %v6525
  %v6527 = vpop.f32.mrb[0].mxu0
  %v6528 = vpop.f32.mrb[0].mxu0
  %6529 = vdwg.mxu0
  %6530 = vmatprep.subr.bf16.mxu0 %v2065
  %6531 = vmatpush1.bf16.msra.mxu0 %v2064
  %6532 = vmatprep.subr.bf16.mxu0 %v2067
  %6533 = vmatpush1.bf16.msra.mxu0 %v2066
  %6534 = vmatprep.subr.bf16.mxu0 %v2069
  %6535 = vmatpush1.bf16.msra.mxu0 %v2068
  %6536 = vmatprep.subr.bf16.mxu0 %v2071
  %6537 = vmatpush1.bf16.msra.mxu0 %v2070
  %6538 = vmatprep.subr.bf16.mxu0 %v2073
  %6539 = vmatpush1.bf16.msra.mxu0 %v2072
  %6540 = vmatprep.subr.bf16.mxu0 %v2075
  %6541 = vmatpush1.bf16.msra.mxu0 %v2074
  %6542 = vmatprep.subr.bf16.mxu0 %v2077
  %6543 = vmatpush1.bf16.msra.mxu0 %v2076
  %6544 = vmatprep.subr.bf16.mxu0 %v2079
  %6545 = vmatpush1.bf16.msra.mxu0 %v2078
  %6546 = vmatprep.subr.bf16.mxu0 %v2081
  %6547 = vmatpush1.bf16.msra.mxu0 %v2080
  %6548 = vmatprep.subr.bf16.mxu0 %v2083
  %6549 = vmatpush1.bf16.msra.mxu0 %v2082
  %6550 = vmatprep.subr.bf16.mxu0 %v2085
  %6551 = vmatpush1.bf16.msra.mxu0 %v2084
  %6552 = vmatprep.subr.bf16.mxu0 %v2087
  %6553 = vmatpush1.bf16.msra.mxu0 %v2086
  %6554 = vmatprep.subr.bf16.mxu0 %v2089
  %6555 = vmatpush1.bf16.msra.mxu0 %v2088
  %6556 = vmatprep.subr.bf16.mxu0 %v2091
  %6557 = vmatpush1.bf16.msra.mxu0 %v2090
  %6558 = vmatprep.subr.bf16.mxu0 %v2093
  %6559 = vmatpush1.bf16.msra.mxu0 %v2092
  %6560 = vmatprep.subr.bf16.mxu0 %v2095
  %6561 = vmatpush1.bf16.msra.mxu0 %v2094
  %6562 = vmatprep.mubr.bf16.mxu0 %v6322
  %6563 = vmatmul.mubr.bf16.gmra.mrb[0].mxu0 %v6321
  %v6564 = vpop.f32.mrb[0].mxu0
  %v6565 = vadd.f32 %v6504, %v6564
  %v6566 = vpop.f32.mrb[0].mxu0
  %v6567 = vadd.f32 %v6506, %v6566
  %v6568 = vpop.f32.mrb[0].mxu0
  %v6569 = vadd.f32 %v6508, %v6568
  %v6570 = vpop.f32.mrb[0].mxu0
  %v6571 = vadd.f32 %v6510, %v6570
  %6572 = vmatprep.mubr.bf16.mxu0 %v6347
  %6573 = vmatmul.mubr.bf16.gmra.mrb[0].mxu0 %v6346
  %v6574 = vpop.f32.mrb[0].mxu0
  %v6575 = vadd.f32 %v6514, %v6574
  %v6576 = vpop.f32.mrb[0].mxu0
  %v6577 = vadd.f32 %v6516, %v6576
  %v6578 = vpop.f32.mrb[0].mxu0
  %v6579 = vadd.f32 %v6518, %v6578
  %v6580 = vpop.f32.mrb[0].mxu0
  %v6581 = vadd.f32 %v6520, %v6580
  %6582 = vmatprep.mubr.bf16.mxu0 %v6372
  %6583 = vmatmul.mubr.bf16.gmra.mrb[0].mxu0 %v6371
  %v6584 = vpop.f32.mrb[0].mxu0
  %v6585 = vadd.f32 %v6524, %v6584
  %v6586 = vpop.f32.mrb[0].mxu0
  %v6587 = vadd.f32 %v6526, %v6586
  %v6588 = vpop.f32.mrb[0].mxu0
  %v6589 = vpop.f32.mrb[0].mxu0
  %6590 = vdwg.mxu0
  %6591 = vmatprep.subr.bf16.mxu0 %v2097
  %6592 = vmatpush1.bf16.msra.mxu0 %v2096
  %6593 = vmatprep.subr.bf16.mxu0 %v2099
  %6594 = vmatpush1.bf16.msra.mxu0 %v2098
  %6595 = vmatprep.subr.bf16.mxu0 %v2101
  %6596 = vmatpush1.bf16.msra.mxu0 %v2100
  %6597 = vmatprep.subr.bf16.mxu0 %v2103
  %6598 = vmatpush1.bf16.msra.mxu0 %v2102
  %6599 = vmatprep.subr.bf16.mxu0 %v2105
  %6600 = vmatpush1.bf16.msra.mxu0 %v2104
  %6601 = vmatprep.subr.bf16.mxu0 %v2107
  %6602 = vmatpush1.bf16.msra.mxu0 %v2106
  %6603 = vmatprep.subr.bf16.mxu0 %v2109
  %6604 = vmatpush1.bf16.msra.mxu0 %v2108
  %6605 = vmatprep.subr.bf16.mxu0 %v2111
  %6606 = vmatpush1.bf16.msra.mxu0 %v2110
  %6607 = vmatprep.subr.bf16.mxu0 %v2113
  %6608 = vmatpush1.bf16.msra.mxu0 %v2112
  %6609 = vmatprep.subr.bf16.mxu0 %v2115
  %6610 = vmatpush1.bf16.msra.mxu0 %v2114
  %6611 = vmatprep.subr.bf16.mxu0 %v2117
  %6612 = vmatpush1.bf16.msra.mxu0 %v2116
  %6613 = vmatprep.subr.bf16.mxu0 %v2119
  %6614 = vmatpush1.bf16.msra.mxu0 %v2118
  %6615 = vmatprep.subr.bf16.mxu0 %v2121
  %6616 = vmatpush1.bf16.msra.mxu0 %v2120
  %6617 = vmatprep.subr.bf16.mxu0 %v2123
  %6618 = vmatpush1.bf16.msra.mxu0 %v2122
  %6619 = vmatprep.subr.bf16.mxu0 %v2125
  %6620 = vmatpush1.bf16.msra.mxu0 %v2124
  %6621 = vmatprep.subr.bf16.mxu0 %v2127
  %6622 = vmatpush1.bf16.msra.mxu0 %v2126
  %6623 = vmatprep.mubr.bf16.mxu0 %v6324
  %6624 = vmatmul.mubr.bf16.gmra.mrb[0].mxu0 %v6323
  %v6625 = vpop.f32.mrb[0].mxu0
  %v6626 = vadd.f32 %v6565, %v6625
  %v6627 = vpop.f32.mrb[0].mxu0
  %v6628 = vadd.f32 %v6567, %v6627
  %v6629 = vpop.f32.mrb[0].mxu0
  %v6630 = vadd.f32 %v6569, %v6629
  %v6631 = vpop.f32.mrb[0].mxu0
  %v6632 = vadd.f32 %v6571, %v6631
  %6633 = vmatprep.mubr.bf16.mxu0 %v6349
  %6634 = vmatmul.mubr.bf16.gmra.mrb[0].mxu0 %v6348
  %v6635 = vpop.f32.mrb[0].mxu0
  %v6636 = vadd.f32 %v6575, %v6635
  %v6637 = vpop.f32.mrb[0].mxu0
  %v6638 = vadd.f32 %v6577, %v6637
  %v6639 = vpop.f32.mrb[0].mxu0
  %v6640 = vadd.f32 %v6579, %v6639
  %v6641 = vpop.f32.mrb[0].mxu0
  %v6642 = vadd.f32 %v6581, %v6641
  %6643 = vmatprep.mubr.bf16.mxu0 %v6374
  %6644 = vmatmul.mubr.bf16.gmra.mrb[0].mxu0 %v6373
  %v6645 = vpop.f32.mrb[0].mxu0
  %v6646 = vadd.f32 %v6585, %v6645
  %v6647 = vpop.f32.mrb[0].mxu0
  %v6648 = vadd.f32 %v6587, %v6647
  %v6649 = vpop.f32.mrb[0].mxu0
  %v6650 = vpop.f32.mrb[0].mxu0
  %6651 = vdwg.mxu0
  %6652 = vmatprep.subr.bf16.mxu0 %v2129
  %6653 = vmatpush1.bf16.msra.mxu0 %v2128
  %6654 = vmatprep.subr.bf16.mxu0 %v2131
  %6655 = vmatpush1.bf16.msra.mxu0 %v2130
  %6656 = vmatprep.subr.bf16.mxu0 %v2133
  %6657 = vmatpush1.bf16.msra.mxu0 %v2132
  %6658 = vmatprep.subr.bf16.mxu0 %v2135
  %6659 = vmatpush1.bf16.msra.mxu0 %v2134
  %6660 = vmatprep.subr.bf16.mxu0 %v2137
  %6661 = vmatpush1.bf16.msra.mxu0 %v2136
  %6662 = vmatprep.subr.bf16.mxu0 %v2139
  %6663 = vmatpush1.bf16.msra.mxu0 %v2138
  %6664 = vmatprep.subr.bf16.mxu0 %v2141
  %6665 = vmatpush1.bf16.msra.mxu0 %v2140
  %6666 = vmatprep.subr.bf16.mxu0 %v2143
  %6667 = vmatpush1.bf16.msra.mxu0 %v2142
  %6668 = vmatprep.subr.bf16.mxu0 %v2145
  %6669 = vmatpush1.bf16.msra.mxu0 %v2144
  %6670 = vmatprep.subr.bf16.mxu0 %v2147
  %6671 = vmatpush1.bf16.msra.mxu0 %v2146
  %6672 = vmatprep.subr.bf16.mxu0 %v2149
  %6673 = vmatpush1.bf16.msra.mxu0 %v2148
  %6674 = vmatprep.subr.bf16.mxu0 %v2151
  %6675 = vmatpush1.bf16.msra.mxu0 %v2150
  %6676 = vmatprep.subr.bf16.mxu0 %v2153
  %6677 = vmatpush1.bf16.msra.mxu0 %v2152
  %6678 = vmatprep.subr.bf16.mxu0 %v2155
  %6679 = vmatpush1.bf16.msra.mxu0 %v2154
  %6680 = vmatprep.subr.bf16.mxu0 %v2157
  %6681 = vmatpush1.bf16.msra.mxu0 %v2156
  %6682 = vmatprep.subr.bf16.mxu0 %v2159
  %6683 = vmatpush1.bf16.msra.mxu0 %v2158
  %6684 = vmatprep.mubr.bf16.mxu0 %v6326
  %6685 = vmatmul.mubr.bf16.gmra.mrb[0].mxu0 %v6325
  %v6686 = vpop.f32.mrb[0].mxu0
  %v6687 = vadd.f32 %v6626, %v6686
  %v6688 = vpop.f32.mrb[0].mxu0
  %v6689 = vadd.f32 %v6628, %v6688
  %v6690 = vpop.f32.mrb[0].mxu0
  %v6691 = vadd.f32 %v6630, %v6690
  %v6692 = vpop.f32.mrb[0].mxu0
  %v6693 = vadd.f32 %v6632, %v6692
  %6694 = vmatprep.mubr.bf16.mxu0 %v6351
  %6695 = vmatmul.mubr.bf16.gmra.mrb[0].mxu0 %v6350
  %v6696 = vpop.f32.mrb[0].mxu0
  %v6697 = vadd.f32 %v6636, %v6696
  %v6698 = vpop.f32.mrb[0].mxu0
  %v6699 = vadd.f32 %v6638, %v6698
  %v6700 = vpop.f32.mrb[0].mxu0
  %v6701 = vadd.f32 %v6640, %v6700
  %v6702 = vpop.f32.mrb[0].mxu0
  %v6703 = vadd.f32 %v6642, %v6702
  %6704 = vmatprep.mubr.bf16.mxu0 %v6376
  %6705 = vmatmul.mubr.bf16.gmra.mrb[0].mxu0 %v6375
  %v6706 = vpop.f32.mrb[0].mxu0
  %v6707 = vadd.f32 %v6646, %v6706
  %v6708 = vpop.f32.mrb[0].mxu0
  %v6709 = vadd.f32 %v6648, %v6708
  %v6710 = vpop.f32.mrb[0].mxu0
  %v6711 = vpop.f32.mrb[0].mxu0
  %6712 = vdwg.mxu0
  %6713 = vmatprep.subr.bf16.mxu0 %v2161
  %6714 = vmatpush1.bf16.msra.mxu0 %v2160
  %6715 = vmatprep.subr.bf16.mxu0 %v2163
  %6716 = vmatpush1.bf16.msra.mxu0 %v2162
  %6717 = vmatprep.subr.bf16.mxu0 %v2165
  %6718 = vmatpush1.bf16.msra.mxu0 %v2164
  %6719 = vmatprep.subr.bf16.mxu0 %v2167
  %6720 = vmatpush1.bf16.msra.mxu0 %v2166
  %6721 = vmatprep.subr.bf16.mxu0 %v2169
  %6722 = vmatpush1.bf16.msra.mxu0 %v2168
  %6723 = vmatprep.subr.bf16.mxu0 %v2171
  %6724 = vmatpush1.bf16.msra.mxu0 %v2170
  %6725 = vmatprep.subr.bf16.mxu0 %v2173
  %6726 = vmatpush1.bf16.msra.mxu0 %v2172
  %6727 = vmatprep.subr.bf16.mxu0 %v2175
  %6728 = vmatpush1.bf16.msra.mxu0 %v2174
  %6729 = vmatprep.subr.bf16.mxu0 %v2177
  %6730 = vmatpush1.bf16.msra.mxu0 %v2176
  %6731 = vmatprep.subr.bf16.mxu0 %v2179
  %6732 = vmatpush1.bf16.msra.mxu0 %v2178
  %6733 = vmatprep.subr.bf16.mxu0 %v2181
  %6734 = vmatpush1.bf16.msra.mxu0 %v2180
  %6735 = vmatprep.subr.bf16.mxu0 %v2183
  %6736 = vmatpush1.bf16.msra.mxu0 %v2182
  %6737 = vmatprep.subr.bf16.mxu0 %v2185
  %6738 = vmatpush1.bf16.msra.mxu0 %v2184
  %6739 = vmatprep.subr.bf16.mxu0 %v2187
  %6740 = vmatpush1.bf16.msra.mxu0 %v2186
  %6741 = vmatprep.subr.bf16.mxu0 %v2189
  %6742 = vmatpush1.bf16.msra.mxu0 %v2188
  %6743 = vmatprep.subr.bf16.mxu0 %v2191
  %6744 = vmatpush1.bf16.msra.mxu0 %v2190
  %6745 = vmatprep.mubr.bf16.mxu0 %v6328
  %6746 = vmatmul.mubr.bf16.gmra.mrb[0].mxu0 %v6327
  %v6747 = vpop.f32.mrb[0].mxu0
  %v6748 = vadd.f32 %v6687, %v6747
  %v6749 = vpop.f32.mrb[0].mxu0
  %v6750 = vadd.f32 %v6689, %v6749
  %v6751 = vpop.f32.mrb[0].mxu0
  %v6752 = vadd.f32 %v6691, %v6751
  %v6753 = vpop.f32.mrb[0].mxu0
  %v6754 = vadd.f32 %v6693, %v6753
  %6755 = vmatprep.mubr.bf16.mxu0 %v6353
  %6756 = vmatmul.mubr.bf16.gmra.mrb[0].mxu0 %v6352
  %v6757 = vpop.f32.mrb[0].mxu0
  %v6758 = vadd.f32 %v6697, %v6757
  %v6759 = vpop.f32.mrb[0].mxu0
  %v6760 = vadd.f32 %v6699, %v6759
  %v6761 = vpop.f32.mrb[0].mxu0
  %v6762 = vadd.f32 %v6701, %v6761
  %v6763 = vpop.f32.mrb[0].mxu0
  %v6764 = vadd.f32 %v6703, %v6763
  %6765 = vmatprep.mubr.bf16.mxu0 %v6378
  %6766 = vmatmul.mubr.bf16.gmra.mrb[0].mxu0 %v6377
  %v6767 = vpop.f32.mrb[0].mxu0
  %v6768 = vadd.f32 %v6707, %v6767
  %v6769 = vpop.f32.mrb[0].mxu0
  %v6770 = vadd.f32 %v6709, %v6769
  %v6771 = vpop.f32.mrb[0].mxu0
  %v6772 = vpop.f32.mrb[0].mxu0
  %6773 = vdwg.mxu0
  %6774 = vmatprep.subr.bf16.mxu0 %v2193
  %6775 = vmatpush1.bf16.msra.mxu0 %v2192
  %6776 = vmatprep.subr.bf16.mxu0 %v2195
  %6777 = vmatpush1.bf16.msra.mxu0 %v2194
  %6778 = vmatprep.subr.bf16.mxu0 %v2197
  %6779 = vmatpush1.bf16.msra.mxu0 %v2196
  %6780 = vmatprep.subr.bf16.mxu0 %v2199
  %6781 = vmatpush1.bf16.msra.mxu0 %v2198
  %6782 = vmatprep.subr.bf16.mxu0 %v2201
  %6783 = vmatpush1.bf16.msra.mxu0 %v2200
  %6784 = vmatprep.subr.bf16.mxu0 %v2203
  %6785 = vmatpush1.bf16.msra.mxu0 %v2202
  %6786 = vmatprep.subr.bf16.mxu0 %v2205
  %6787 = vmatpush1.bf16.msra.mxu0 %v2204
  %6788 = vmatprep.subr.bf16.mxu0 %v2207
  %6789 = vmatpush1.bf16.msra.mxu0 %v2206
  %6790 = vmatprep.subr.bf16.mxu0 %v2209
  %6791 = vmatpush1.bf16.msra.mxu0 %v2208
  %6792 = vmatprep.subr.bf16.mxu0 %v2211
  %6793 = vmatpush1.bf16.msra.mxu0 %v2210
  %6794 = vmatprep.subr.bf16.mxu0 %v2213
  %6795 = vmatpush1.bf16.msra.mxu0 %v2212
  %6796 = vmatprep.subr.bf16.mxu0 %v2215
  %6797 = vmatpush1.bf16.msra.mxu0 %v2214
  %6798 = vmatprep.subr.bf16.mxu0 %v2217
  %6799 = vmatpush1.bf16.msra.mxu0 %v2216
  %6800 = vmatprep.subr.bf16.mxu0 %v2219
  %6801 = vmatpush1.bf16.msra.mxu0 %v2218
  %6802 = vmatprep.subr.bf16.mxu0 %v2221
  %6803 = vmatpush1.bf16.msra.mxu0 %v2220
  %6804 = vmatprep.subr.bf16.mxu0 %v2223
  %6805 = vmatpush1.bf16.msra.mxu0 %v2222
  %6806 = vmatprep.mubr.bf16.mxu0 %v6330
  %6807 = vmatmul.mubr.bf16.gmra.mrb[0].mxu0 %v6329
  %v6808 = vpop.f32.mrb[0].mxu0
  %v6809 = vadd.f32 %v6748, %v6808
  %v6810 = vpop.f32.mrb[0].mxu0
  %v6811 = vadd.f32 %v6750, %v6810
  %v6812 = vpop.f32.mrb[0].mxu0
  %v6813 = vadd.f32 %v6752, %v6812
  %v6814 = vpop.f32.mrb[0].mxu0
  %v6815 = vadd.f32 %v6754, %v6814
  %6816 = vmatprep.mubr.bf16.mxu0 %v6355
  %6817 = vmatmul.mubr.bf16.gmra.mrb[0].mxu0 %v6354
  %v6818 = vpop.f32.mrb[0].mxu0
  %v6819 = vadd.f32 %v6758, %v6818
  %v6820 = vpop.f32.mrb[0].mxu0
  %v6821 = vadd.f32 %v6760, %v6820
  %v6822 = vpop.f32.mrb[0].mxu0
  %v6823 = vadd.f32 %v6762, %v6822
  %v6824 = vpop.f32.mrb[0].mxu0
  %v6825 = vadd.f32 %v6764, %v6824
  %6826 = vmatprep.mubr.bf16.mxu0 %v6380
  %6827 = vmatmul.mubr.bf16.gmra.mrb[0].mxu0 %v6379
  %v6828 = vpop.f32.mrb[0].mxu0
  %v6829 = vadd.f32 %v6768, %v6828
  %v6830 = vpop.f32.mrb[0].mxu0
  %v6831 = vadd.f32 %v6770, %v6830
  %v6832 = vpop.f32.mrb[0].mxu0
  %v6833 = vpop.f32.mrb[0].mxu0
  %6834 = vdwg.mxu0
  %6835 = vmatprep.subr.bf16.mxu0 %v2225
  %6836 = vmatpush1.bf16.msra.mxu0 %v2224
  %6837 = vmatprep.subr.bf16.mxu0 %v2227
  %6838 = vmatpush1.bf16.msra.mxu0 %v2226
  %6839 = vmatprep.subr.bf16.mxu0 %v2229
  %6840 = vmatpush1.bf16.msra.mxu0 %v2228
  %6841 = vmatprep.subr.bf16.mxu0 %v2231
  %6842 = vmatpush1.bf16.msra.mxu0 %v2230
  %6843 = vmatprep.subr.bf16.mxu0 %v2233
  %6844 = vmatpush1.bf16.msra.mxu0 %v2232
  %6845 = vmatprep.subr.bf16.mxu0 %v2235
  %6846 = vmatpush1.bf16.msra.mxu0 %v2234
  %6847 = vmatprep.subr.bf16.mxu0 %v2237
  %6848 = vmatpush1.bf16.msra.mxu0 %v2236
  %6849 = vmatprep.subr.bf16.mxu0 %v2239
  %6850 = vmatpush1.bf16.msra.mxu0 %v2238
  %6851 = vmatprep.subr.bf16.mxu0 %v2241
  %6852 = vmatpush1.bf16.msra.mxu0 %v2240
  %6853 = vmatprep.subr.bf16.mxu0 %v2243
  %6854 = vmatpush1.bf16.msra.mxu0 %v2242
  %6855 = vmatprep.subr.bf16.mxu0 %v2245
  %6856 = vmatpush1.bf16.msra.mxu0 %v2244
  %6857 = vmatprep.subr.bf16.mxu0 %v2247
  %6858 = vmatpush1.bf16.msra.mxu0 %v2246
  %6859 = vmatprep.subr.bf16.mxu0 %v2249
  %6860 = vmatpush1.bf16.msra.mxu0 %v2248
  %6861 = vmatprep.subr.bf16.mxu0 %v2251
  %6862 = vmatpush1.bf16.msra.mxu0 %v2250
  %6863 = vmatprep.subr.bf16.mxu0 %v2253
  %6864 = vmatpush1.bf16.msra.mxu0 %v2252
  %6865 = vmatprep.subr.bf16.mxu0 %v2255
  %6866 = vmatpush1.bf16.msra.mxu0 %v2254
  %6867 = vmatprep.mubr.bf16.mxu0 %v6332
  %6868 = vmatmul.mubr.bf16.gmra.mrb[0].mxu0 %v6331
  %v6869 = vpop.f32.mrb[0].mxu0
  %v6870 = vadd.f32 %v6809, %v6869
  %v6871 = vpop.f32.mrb[0].mxu0
  %v6872 = vadd.f32 %v6811, %v6871
  %v6873 = vpop.f32.mrb[0].mxu0
  %v6874 = vadd.f32 %v6813, %v6873
  %v6875 = vpop.f32.mrb[0].mxu0
  %v6876 = vadd.f32 %v6815, %v6875
  %6877 = vmatprep.mubr.bf16.mxu0 %v6357
  %6878 = vmatmul.mubr.bf16.gmra.mrb[0].mxu0 %v6356
  %v6879 = vpop.f32.mrb[0].mxu0
  %v6880 = vadd.f32 %v6819, %v6879
  %v6881 = vpop.f32.mrb[0].mxu0
  %v6882 = vadd.f32 %v6821, %v6881
  %v6883 = vpop.f32.mrb[0].mxu0
  %v6884 = vadd.f32 %v6823, %v6883
  %v6885 = vpop.f32.mrb[0].mxu0
  %v6886 = vadd.f32 %v6825, %v6885
  %6887 = vmatprep.mubr.bf16.mxu0 %v6382
  %6888 = vmatmul.mubr.bf16.gmra.mrb[0].mxu0 %v6381
  %v6889 = vpop.f32.mrb[0].mxu0
  %v6890 = vadd.f32 %v6829, %v6889
  %v6891 = vpop.f32.mrb[0].mxu0
  %v6892 = vadd.f32 %v6831, %v6891
  %v6893 = vpop.f32.mrb[0].mxu0
  %v6894 = vpop.f32.mrb[0].mxu0
  %6895 = vdwg.mxu0
  %6896 = vmatprep.subr.bf16.mxu0 %v2257
  %6897 = vmatpush1.bf16.msra.mxu0 %v2256
  %6898 = vmatprep.subr.bf16.mxu0 %v2259
  %6899 = vmatpush1.bf16.msra.mxu0 %v2258
  %6900 = vmatprep.subr.bf16.mxu0 %v2261
  %6901 = vmatpush1.bf16.msra.mxu0 %v2260
  %6902 = vmatprep.subr.bf16.mxu0 %v2263
  %6903 = vmatpush1.bf16.msra.mxu0 %v2262
  %6904 = vmatprep.subr.bf16.mxu0 %v2265
  %6905 = vmatpush1.bf16.msra.mxu0 %v2264
  %6906 = vmatprep.subr.bf16.mxu0 %v2267
  %6907 = vmatpush1.bf16.msra.mxu0 %v2266
  %6908 = vmatprep.subr.bf16.mxu0 %v2269
  %6909 = vmatpush1.bf16.msra.mxu0 %v2268
  %6910 = vmatprep.subr.bf16.mxu0 %v2271
  %6911 = vmatpush1.bf16.msra.mxu0 %v2270
  %6912 = vmatprep.subr.bf16.mxu0 %v2273
  %6913 = vmatpush1.bf16.msra.mxu0 %v2272
  %6914 = vmatprep.subr.bf16.mxu0 %v2275
  %6915 = vmatpush1.bf16.msra.mxu0 %v2274
  %6916 = vmatprep.subr.bf16.mxu0 %v2277
  %6917 = vmatpush1.bf16.msra.mxu0 %v2276
  %6918 = vmatprep.subr.bf16.mxu0 %v2279
  %6919 = vmatpush1.bf16.msra.mxu0 %v2278
  %6920 = vmatprep.subr.bf16.mxu0 %v2281
  %6921 = vmatpush1.bf16.msra.mxu0 %v2280
  %6922 = vmatprep.subr.bf16.mxu0 %v2283
  %6923 = vmatpush1.bf16.msra.mxu0 %v2282
  %6924 = vmatprep.subr.bf16.mxu0 %v2285
  %6925 = vmatpush1.bf16.msra.mxu0 %v2284
  %6926 = vmatprep.subr.bf16.mxu0 %v2287
  %6927 = vmatpush1.bf16.msra.mxu0 %v2286
  %6928 = vmatprep.mubr.bf16.mxu0 %v6334
  %6929 = vmatmul.mubr.bf16.gmra.mrb[0].mxu0 %v6333
  %v6930 = vpop.f32.mrb[0].mxu0
  %v6931 = vadd.f32 %v6870, %v6930
  %v6932 = vpop.f32.mrb[0].mxu0
  %v6933 = vadd.f32 %v6872, %v6932
  %v6934 = vpop.f32.mrb[0].mxu0
  %v6935 = vadd.f32 %v6874, %v6934
  %v6936 = vpop.f32.mrb[0].mxu0
  %v6937 = vadd.f32 %v6876, %v6936
  %6938 = vmatprep.mubr.bf16.mxu0 %v6359
  %6939 = vmatmul.mubr.bf16.gmra.mrb[0].mxu0 %v6358
  %v6940 = vpop.f32.mrb[0].mxu0
  %v6941 = vadd.f32 %v6880, %v6940
  %v6942 = vpop.f32.mrb[0].mxu0
  %v6943 = vadd.f32 %v6882, %v6942
  %v6944 = vpop.f32.mrb[0].mxu0
  %v6945 = vadd.f32 %v6884, %v6944
  %v6946 = vpop.f32.mrb[0].mxu0
  %v6947 = vadd.f32 %v6886, %v6946
  %6948 = vmatprep.mubr.bf16.mxu0 %v6384
  %6949 = vmatmul.mubr.bf16.gmra.mrb[0].mxu0 %v6383
  %v6950 = vpop.f32.mrb[0].mxu0
  %v6951 = vadd.f32 %v6890, %v6950
  %v6952 = vpop.f32.mrb[0].mxu0
  %v6953 = vadd.f32 %v6892, %v6952
  %v6954 = vpop.f32.mrb[0].mxu0
  %v6955 = vpop.f32.mrb[0].mxu0
  %6956 = vdwg.mxu0
  %6957 = vmatprep.subr.bf16.mxu0 %v2289
  %6958 = vmatpush1.bf16.msra.mxu0 %v2288
  %6959 = vmatprep.subr.bf16.mxu0 %v2291
  %6960 = vmatpush1.bf16.msra.mxu0 %v2290
  %6961 = vmatprep.subr.bf16.mxu0 %v2293
  %6962 = vmatpush1.bf16.msra.mxu0 %v2292
  %6963 = vmatprep.subr.bf16.mxu0 %v2295
  %6964 = vmatpush1.bf16.msra.mxu0 %v2294
  %6965 = vmatprep.subr.bf16.mxu0 %v2297
  %6966 = vmatpush1.bf16.msra.mxu0 %v2296
  %6967 = vmatprep.subr.bf16.mxu0 %v2299
  %6968 = vmatpush1.bf16.msra.mxu0 %v2298
  %6969 = vmatprep.subr.bf16.mxu0 %v2301
  %6970 = vmatpush1.bf16.msra.mxu0 %v2300
  %6971 = vmatprep.subr.bf16.mxu0 %v2303
  %6972 = vmatpush1.bf16.msra.mxu0 %v2302
  %6973 = vmatprep.subr.bf16.mxu0 %v2305
  %6974 = vmatpush1.bf16.msra.mxu0 %v2304
  %6975 = vmatprep.subr.bf16.mxu0 %v2307
  %6976 = vmatpush1.bf16.msra.mxu0 %v2306
  %6977 = vmatprep.subr.bf16.mxu0 %v2309
  %6978 = vmatpush1.bf16.msra.mxu0 %v2308
  %6979 = vmatprep.subr.bf16.mxu0 %v2311
  %6980 = vmatpush1.bf16.msra.mxu0 %v2310
  %6981 = vmatprep.subr.bf16.mxu0 %v2313
  %6982 = vmatpush1.bf16.msra.mxu0 %v2312
  %6983 = vmatprep.subr.bf16.mxu0 %v2315
  %6984 = vmatpush1.bf16.msra.mxu0 %v2314
  %6985 = vmatprep.subr.bf16.mxu0 %v2317
  %6986 = vmatpush1.bf16.msra.mxu0 %v2316
  %6987 = vmatprep.subr.bf16.mxu0 %v2319
  %6988 = vmatpush1.bf16.msra.mxu0 %v2318
  %6989 = vmatprep.mubr.bf16.mxu0 %v6336
  %6990 = vmatmul.mubr.bf16.gmra.mrb[0].mxu0 %v6335
  %v6991 = vpop.f32.mrb[0].mxu0
  %v6992 = vadd.f32 %v6931, %v6991
  %v6993 = vpop.f32.mrb[0].mxu0
  %v6994 = vadd.f32 %v6933, %v6993
  %v6995 = vpop.f32.mrb[0].mxu0
  %v6996 = vadd.f32 %v6935, %v6995
  %v6997 = vpop.f32.mrb[0].mxu0
  %v6998 = vadd.f32 %v6937, %v6997
  %6999 = vmatprep.mubr.bf16.mxu0 %v6361
  %7000 = vmatmul.mubr.bf16.gmra.mrb[0].mxu0 %v6360
  %v7001 = vpop.f32.mrb[0].mxu0
  %v7002 = vadd.f32 %v6941, %v7001
  %v7003 = vpop.f32.mrb[0].mxu0
  %v7004 = vadd.f32 %v6943, %v7003
  %v7005 = vpop.f32.mrb[0].mxu0
  %v7006 = vadd.f32 %v6945, %v7005
  %v7007 = vpop.f32.mrb[0].mxu0
  %v7008 = vadd.f32 %v6947, %v7007
  %7009 = vmatprep.mubr.bf16.mxu0 %v6386
  %7010 = vmatmul.mubr.bf16.gmra.mrb[0].mxu0 %v6385
  %v7011 = vpop.f32.mrb[0].mxu0
  %v7012 = vadd.f32 %v6951, %v7011
  %v7013 = vpop.f32.mrb[0].mxu0
  %v7014 = vadd.f32 %v6953, %v7013
  %v7015 = vpop.f32.mrb[0].mxu0
  %v7016 = vpop.f32.mrb[0].mxu0
  %7017 = vdwg.mxu0
  %7018 = vmatprep.subr.bf16.mxu0 %v2321
  %7019 = vmatpush1.bf16.msra.mxu0 %v2320
  %7020 = vmatprep.subr.bf16.mxu0 %v2323
  %7021 = vmatpush1.bf16.msra.mxu0 %v2322
  %7022 = vmatprep.subr.bf16.mxu0 %v2325
  %7023 = vmatpush1.bf16.msra.mxu0 %v2324
  %7024 = vmatprep.subr.bf16.mxu0 %v2327
  %7025 = vmatpush1.bf16.msra.mxu0 %v2326
  %7026 = vmatprep.subr.bf16.mxu0 %v2329
  %7027 = vmatpush1.bf16.msra.mxu0 %v2328
  %7028 = vmatprep.subr.bf16.mxu0 %v2331
  %7029 = vmatpush1.bf16.msra.mxu0 %v2330
  %7030 = vmatprep.subr.bf16.mxu0 %v2333
  %7031 = vmatpush1.bf16.msra.mxu0 %v2332
  %7032 = vmatprep.subr.bf16.mxu0 %v2335
  %7033 = vmatpush1.bf16.msra.mxu0 %v2334
  %7034 = vmatprep.subr.bf16.mxu0 %v2337
  %7035 = vmatpush1.bf16.msra.mxu0 %v2336
  %7036 = vmatprep.subr.bf16.mxu0 %v2339
  %7037 = vmatpush1.bf16.msra.mxu0 %v2338
  %7038 = vmatprep.subr.bf16.mxu0 %v2341
  %7039 = vmatpush1.bf16.msra.mxu0 %v2340
  %7040 = vmatprep.subr.bf16.mxu0 %v2343
  %7041 = vmatpush1.bf16.msra.mxu0 %v2342
  %7042 = vmatprep.subr.bf16.mxu0 %v2345
  %7043 = vmatpush1.bf16.msra.mxu0 %v2344
  %7044 = vmatprep.subr.bf16.mxu0 %v2347
  %7045 = vmatpush1.bf16.msra.mxu0 %v2346
  %7046 = vmatprep.subr.bf16.mxu0 %v2349
  %7047 = vmatpush1.bf16.msra.mxu0 %v2348
  %7048 = vmatprep.subr.bf16.mxu0 %v2351
  %7049 = vmatpush1.bf16.msra.mxu0 %v2350
  %7050 = vmatprep.mubr.bf16.mxu0 %v6338
  %7051 = vmatmul.mubr.bf16.gmra.mrb[0].mxu0 %v6337
  %v7052 = vpop.f32.mrb[0].mxu0
  %v7053 = vadd.f32 %v6992, %v7052
  %v7054 = vpop.f32.mrb[0].mxu0
  %v7055 = vadd.f32 %v6994, %v7054
  %v7056 = vpop.f32.mrb[0].mxu0
  %v7057 = vadd.f32 %v6996, %v7056
  %v7058 = vpop.f32.mrb[0].mxu0
  %v7059 = vadd.f32 %v6998, %v7058
  %7060 = vmatprep.mubr.bf16.mxu0 %v6363
  %7061 = vmatmul.mubr.bf16.gmra.mrb[0].mxu0 %v6362
  %v7062 = vpop.f32.mrb[0].mxu0
  %v7063 = vadd.f32 %v7002, %v7062
  %v7064 = vpop.f32.mrb[0].mxu0
  %v7065 = vadd.f32 %v7004, %v7064
  %v7066 = vpop.f32.mrb[0].mxu0
  %v7067 = vadd.f32 %v7006, %v7066
  %v7068 = vpop.f32.mrb[0].mxu0
  %v7069 = vadd.f32 %v7008, %v7068
  %7070 = vmatprep.mubr.bf16.mxu0 %v6388
  %7071 = vmatmul.mubr.bf16.gmra.mrb[0].mxu0 %v6387
  %v7072 = vpop.f32.mrb[0].mxu0
  %v7073 = vadd.f32 %v7012, %v7072
  %v7074 = vpop.f32.mrb[0].mxu0
  %v7075 = vadd.f32 %v7014, %v7074
  %v7076 = vpop.f32.mrb[0].mxu0
  %v7077 = vpop.f32.mrb[0].mxu0
  %7078 = vdwg.mxu0
  %7079 = vmatprep.subr.bf16.mxu0 %v2353
  %7080 = vmatpush1.bf16.msra.mxu0 %v2352
  %7081 = vmatprep.subr.bf16.mxu0 %v2355
  %7082 = vmatpush1.bf16.msra.mxu0 %v2354
  %7083 = vmatprep.subr.bf16.mxu0 %v2357
  %7084 = vmatpush1.bf16.msra.mxu0 %v2356
  %7085 = vmatprep.subr.bf16.mxu0 %v2359
  %7086 = vmatpush1.bf16.msra.mxu0 %v2358
  %7087 = vmatprep.subr.bf16.mxu0 %v2361
  %7088 = vmatpush1.bf16.msra.mxu0 %v2360
  %7089 = vmatprep.subr.bf16.mxu0 %v2363
  %7090 = vmatpush1.bf16.msra.mxu0 %v2362
  %7091 = vmatprep.subr.bf16.mxu0 %v2365
  %7092 = vmatpush1.bf16.msra.mxu0 %v2364
  %7093 = vmatprep.subr.bf16.mxu0 %v2367
  %7094 = vmatpush1.bf16.msra.mxu0 %v2366
  %7095 = vmatprep.subr.bf16.mxu0 %v2369
  %7096 = vmatpush1.bf16.msra.mxu0 %v2368
  %7097 = vmatprep.subr.bf16.mxu0 %v2371
  %7098 = vmatpush1.bf16.msra.mxu0 %v2370
  %7099 = vmatprep.subr.bf16.mxu0 %v2373
  %7100 = vmatpush1.bf16.msra.mxu0 %v2372
  %7101 = vmatprep.subr.bf16.mxu0 %v2375
  %7102 = vmatpush1.bf16.msra.mxu0 %v2374
  %7103 = vmatprep.subr.bf16.mxu0 %v2377
  %7104 = vmatpush1.bf16.msra.mxu0 %v2376
  %7105 = vmatprep.subr.bf16.mxu0 %v2379
  %7106 = vmatpush1.bf16.msra.mxu0 %v2378
  %7107 = vmatprep.subr.bf16.mxu0 %v2381
  %7108 = vmatpush1.bf16.msra.mxu0 %v2380
  %7109 = vmatprep.subr.bf16.mxu0 %v2383
  %7110 = vmatpush1.bf16.msra.mxu0 %v2382
  %7111 = vmatprep.mubr.bf16.mxu0 %v6340
  %7112 = vmatmul.mubr.bf16.gmra.mrb[0].mxu0 %v6339
  %v7113 = vpop.f32.mrb[0].mxu0
  %v7114 = vadd.f32 %v7053, %v7113
  %v7115 = vpop.f32.mrb[0].mxu0
  %v7116 = vadd.f32 %v7055, %v7115
  %v7117 = vpop.f32.mrb[0].mxu0
  %v7118 = vadd.f32 %v7057, %v7117
  %v7119 = vpop.f32.mrb[0].mxu0
  %v7120 = vadd.f32 %v7059, %v7119
  %7121 = vmatprep.mubr.bf16.mxu0 %v6365
  %7122 = vmatmul.mubr.bf16.gmra.mrb[0].mxu0 %v6364
  %v7123 = vpop.f32.mrb[0].mxu0
  %v7124 = vadd.f32 %v7063, %v7123
  %v7125 = vpop.f32.mrb[0].mxu0
  %v7126 = vadd.f32 %v7065, %v7125
  %v7127 = vpop.f32.mrb[0].mxu0
  %v7128 = vadd.f32 %v7067, %v7127
  %v7129 = vpop.f32.mrb[0].mxu0
  %v7130 = vadd.f32 %v7069, %v7129
  %7131 = vmatprep.mubr.bf16.mxu0 %v6390
  %7132 = vmatmul.mubr.bf16.gmra.mrb[0].mxu0 %v6389
  %v7133 = vpop.f32.mrb[0].mxu0
  %v7134 = vadd.f32 %v7073, %v7133
  %v7135 = vpop.f32.mrb[0].mxu0
  %v7136 = vadd.f32 %v7075, %v7135
  %v7137 = vpop.f32.mrb[0].mxu0
  %v7138 = vpop.f32.mrb[0].mxu0
  %7139 = vdwg.mxu0
  %7140 = vmatprep.subr.bf16.mxu0 %v2385
  %7141 = vmatpush1.bf16.msra.mxu0 %v2384
  %7142 = vmatprep.subr.bf16.mxu0 %v2387
  %7143 = vmatpush1.bf16.msra.mxu0 %v2386
  %7144 = vmatprep.subr.bf16.mxu0 %v2389
  %7145 = vmatpush1.bf16.msra.mxu0 %v2388
  %7146 = vmatprep.subr.bf16.mxu0 %v2391
  %7147 = vmatpush1.bf16.msra.mxu0 %v2390
  %7148 = vmatprep.subr.bf16.mxu0 %v2393
  %7149 = vmatpush1.bf16.msra.mxu0 %v2392
  %7150 = vmatprep.subr.bf16.mxu0 %v2395
  %7151 = vmatpush1.bf16.msra.mxu0 %v2394
  %7152 = vmatprep.subr.bf16.mxu0 %v2397
  %7153 = vmatpush1.bf16.msra.mxu0 %v2396
  %7154 = vmatprep.subr.bf16.mxu0 %v2399
  %7155 = vmatpush1.bf16.msra.mxu0 %v2398
  %7156 = vmatprep.subr.bf16.mxu0 %v2401
  %7157 = vmatpush1.bf16.msra.mxu0 %v2400
  %7158 = vmatprep.subr.bf16.mxu0 %v2403
  %7159 = vmatpush1.bf16.msra.mxu0 %v2402
  %7160 = vmatprep.subr.bf16.mxu0 %v2405
  %7161 = vmatpush1.bf16.msra.mxu0 %v2404
  %7162 = vmatprep.subr.bf16.mxu0 %v2407
  %7163 = vmatpush1.bf16.msra.mxu0 %v2406
  %7164 = vmatprep.subr.bf16.mxu0 %v2409
  %7165 = vmatpush1.bf16.msra.mxu0 %v2408
  %7166 = vmatprep.subr.bf16.mxu0 %v2411
  %7167 = vmatpush1.bf16.msra.mxu0 %v2410
  %7168 = vmatprep.subr.bf16.mxu0 %v2413
  %7169 = vmatpush1.bf16.msra.mxu0 %v2412
  %7170 = vmatprep.subr.bf16.mxu0 %v2415
  %7171 = vmatpush1.bf16.msra.mxu0 %v2414
  %7172 = vmatprep.mubr.bf16.mxu0 %v6342
  %7173 = vmatmul.mubr.bf16.gmra.mrb[0].mxu0 %v6341
  %v7174 = vpop.f32.mrb[0].mxu0
  %v7175 = vadd.f32 %v7114, %v7174
  %v7176 = vpop.f32.mrb[0].mxu0
  %v7177 = vadd.f32 %v7116, %v7176
  %v7178 = vpop.f32.mrb[0].mxu0
  %v7179 = vadd.f32 %v7118, %v7178
  %v7180 = vpop.f32.mrb[0].mxu0
  %v7181 = vadd.f32 %v7120, %v7180
  %7182 = vmatprep.mubr.bf16.mxu0 %v6367
  %7183 = vmatmul.mubr.bf16.gmra.mrb[0].mxu0 %v6366
  %v7184 = vpop.f32.mrb[0].mxu0
  %v7185 = vadd.f32 %v7124, %v7184
  %v7186 = vpop.f32.mrb[0].mxu0
  %v7187 = vadd.f32 %v7126, %v7186
  %v7188 = vpop.f32.mrb[0].mxu0
  %v7189 = vadd.f32 %v7128, %v7188
  %v7190 = vpop.f32.mrb[0].mxu0
  %v7191 = vadd.f32 %v7130, %v7190
  %7192 = vmatprep.mubr.bf16.mxu0 %v6392
  %7193 = vmatmul.mubr.bf16.gmra.mrb[0].mxu0 %v6391
  %v7194 = vpop.f32.mrb[0].mxu0
  %v7195 = vadd.f32 %v7134, %v7194
  %v7196 = vpop.f32.mrb[0].mxu0
  %v7197 = vadd.f32 %v7136, %v7196
  %v7198 = vpop.f32.mrb[0].mxu0
  %v7199 = vpop.f32.mrb[0].mxu0
  %7200 = vdwg.mxu0
  %7201 = vmatprep.subr.bf16.mxu0 %v2417
  %7202 = vmatpush1.bf16.msra.mxu0 %v2416
  %7203 = vmatprep.subr.bf16.mxu0 %v2419
  %7204 = vmatpush1.bf16.msra.mxu0 %v2418
  %7205 = vmatprep.subr.bf16.mxu0 %v2421
  %7206 = vmatpush1.bf16.msra.mxu0 %v2420
  %7207 = vmatprep.subr.bf16.mxu0 %v2423
  %7208 = vmatpush1.bf16.msra.mxu0 %v2422
  %7209 = vmatprep.subr.bf16.mxu0 %v2425
  %7210 = vmatpush1.bf16.msra.mxu0 %v2424
  %7211 = vmatprep.subr.bf16.mxu0 %v2427
  %7212 = vmatpush1.bf16.msra.mxu0 %v2426
  %7213 = vmatprep.subr.bf16.mxu0 %v2429
  %7214 = vmatpush1.bf16.msra.mxu0 %v2428
  %7215 = vmatprep.subr.bf16.mxu0 %v2431
  %7216 = vmatpush1.bf16.msra.mxu0 %v2430
  %7217 = vmatprep.subr.bf16.mxu0 0
  %7218 = vmatpush1.bf16.msra.mxu0 0
  %7219 = vmatprep.subr.bf16.mxu0 0
  %7220 = vmatpush1.bf16.msra.mxu0 0
  %7221 = vmatprep.subr.bf16.mxu0 0
  %7222 = vmatpush1.bf16.msra.mxu0 0
  %7223 = vmatprep.subr.bf16.mxu0 0
  %7224 = vmatpush1.bf16.msra.mxu0 0
  %7225 = vmatprep.subr.bf16.mxu0 0
  %7226 = vmatpush1.bf16.msra.mxu0 0
  %7227 = vmatprep.subr.bf16.mxu0 0
  %7228 = vmatpush1.bf16.msra.mxu0 0
  %7229 = vmatprep.subr.bf16.mxu0 0
  %7230 = vmatpush1.bf16.msra.mxu0 0
  %7231 = vmatprep.subr.bf16.mxu0 0
  %7232 = vmatpush1.bf16.msra.mxu0 0
  %7233 = vmatprep.mubr.bf16.mxu0 0
  %7234 = vmatmul.mubr.bf16.gmra.mrb[0].mxu0 %v6343
  %v7235 = vpop.f32.mrb[0].mxu0
  %v7236 = vadd.f32 %v7175, %v7235
  %v7237 = vpop.f32.mrb[0].mxu0
  %v7238 = vadd.f32 %v7177, %v7237
  %v7239 = vpop.f32.mrb[0].mxu0
  %v7240 = vadd.f32 %v7179, %v7239
  %v7241 = vpop.f32.mrb[0].mxu0
  %v7242 = vadd.f32 %v7181, %v7241
  %7243 = vmatprep.mubr.bf16.mxu0 0
  %7244 = vmatmul.mubr.bf16.gmra.mrb[0].mxu0 %v6368
  %v7245 = vpop.f32.mrb[0].mxu0
  %v7246 = vadd.f32 %v7185, %v7245
  %v7247 = vpop.f32.mrb[0].mxu0
  %v7248 = vadd.f32 %v7187, %v7247
  %v7249 = vpop.f32.mrb[0].mxu0
  %v7250 = vadd.f32 %v7189, %v7249
  %v7251 = vpop.f32.mrb[0].mxu0
  %v7252 = vadd.f32 %v7191, %v7251
  %7253 = vmatprep.mubr.bf16.mxu0 0
  %7254 = vmatmul.mubr.bf16.gmra.mrb[0].mxu0 %v6393
  %v7255 = vpop.f32.mrb[0].mxu0
  %v7256 = vadd.f32 %v7195, %v7255
  %v7257 = vpop.f32.mrb[0].mxu0
  %v7258 = vadd.f32 %v7197, %v7257
  %v7259 = vpop.f32.mrb[0].mxu0
  %v7260 = vpop.f32.mrb[0].mxu0
  %7261 = vdwg.mxu0
  %v7262 = vmax.f32 %v7236, 0.0
  %v7263 = vmax.f32 %v7238, 0.0
  %v7264 = vmax.f32 %v7240, 0.0
  %v7265 = vmax.f32 %v7242, 0.0
  %v7266 = vmax.f32 %v7246, 0.0
  %v7267 = vmax.f32 %v7248, 0.0
  %v7268 = vmax.f32 %v7250, 0.0
  %v7269 = vmax.f32 %v7252, 0.0
  %v7270 = vmax.f32 %v7256, 0.0
  %v7271 = vmax.f32 %v7258, 0.0
  %v7272 = vmax.f32 %v6053, %v7262
  %v7273 = vmax.f32 %v6054, %v7263
  %v7274 = vmax.f32 %v6055, %v7264
  %v7275 = vmax.f32 %v6056, %v7265
  %v7276 = vmax.f32 %v6057, %v7266
  %v7277 = vmax.f32 %v6058, %v7267
  %v7278 = vmax.f32 %v6059, %v7268
  %v7279 = vmax.f32 %v6060, %v7269
  %v7280 = vmax.f32 %v6061, %v7270
  %v7281 = vmax.f32 %v6062, %v7271
  %v7282 = vmax.f32 %v4844, %v7272
  %v7283 = vmax.f32 %v4845, %v7273
  %v7284 = vmax.f32 %v4846, %v7274
  %v7285 = vmax.f32 %v4847, %v7275
  %v7286 = vmax.f32 %v4848, %v7276
  %v7287 = vmax.f32 %v4849, %v7277
  %v7288 = vmax.f32 %v4850, %v7278
  %v7289 = vmax.f32 %v4851, %v7279
  %v7290 = vmax.f32 %v4852, %v7280
  %v7291 = vmax.f32 %v4853, %v7281
  %v7292 = vpack.c.bf16 %v7284, %v7282
  %v7293 = vpack.c.bf16 %v7285, %v7283
  %v7294 = vpack.c.bf16 %v7288, %v7286
  %v7295 = vpack.c.bf16 %v7289, %v7287
  %v7296 = vpack.c.bf16 %v7290, %v7290
  %v7297 = vpack.c.bf16 %v7291, %v7291
  %v7304 = vunpack.c.l.b16 %v7292
  %v7305 = vunpack.c.l.b16 %v7293
  %v7306 = vunpack.c.h.b16 %v7292
  %v7307 = vunpack.c.h.b16 %v7293
  %v7308 = vunpack.c.l.b16 %v7294
  %v7309 = vunpack.c.l.b16 %v7295
  %v7310 = vunpack.c.h.b16 %v7294
  %v7311 = vunpack.c.h.b16 %v7295
  %v7312 = vunpack.c.l.b16 %v7296
  %v7313 = vunpack.c.l.b16 %v7297
  %v7314 = vpack.c.b16 %v7305, %v7304
  %v7315 = vpack.c.b16 %v7307, %v7306
  %v7316 = vpack.c.b16 %v7309, %v7308
  %v7317 = vpack.c.b16 %v7311, %v7310
  %v7318 = vpack.c.b16 %v7313, %v7312
  %vm7324 = vcmask 1043456
  %vm7325 = vcmask 523268
  %vm7326 = vmor %vm7325, %vm7324
  %7327 = vst.msk [vmem:[%s3] sm:$0xff] %vm7326, %v7314
  %7328 = vst.msk [vmem:[%s3 + $0x8] sm:$0xff] %vm7326, %v7315
  %7329 = vst.msk [vmem:[%s3 + $0x10] sm:$0xff] %vm7326, %v7316
  %7330 = vst.msk [vmem:[%s3 + $0x18] sm:$0xff] %vm7326, %v7317
  %vm7331 = vcmask 1041408
  %vm7332 = vcmask 521220
  %vm7333 = vmor %vm7332, %vm7331
  %7334 = vst.msk [vmem:[%s3 + $0x20] sm:$0x33] %vm7333, %v7318
  // Predicated region
  $region14: #{siamese_forward.4} parent=0 // pred_check
    _
  $region15: #{siamese_forward.4} parent=0 // pred_check_branch
    %7336 = sbr.rel (0) target = $region17
  $region16: #{siamese_forward.4} parent=0 // pred_region
    _
  $region17: #{siamese_forward.4} parent=0 // pred_fallthru
    _
  // Predicated region
  $region18: #{siamese_forward.4} parent=0 // pred_check
    _
  $region19: #{siamese_forward.4} parent=0 // pred_check_branch
    %7338 = sbr.rel (0) target = $region21
  $region20: #{siamese_forward.4} parent=0 // pred_region
    _
  $region21: #{siamese_forward.4} parent=0 // pred_fallthru
    _

</llo_original>
